<compile_context>
chip_gen: v7x
topology: tpu7x:2x2x1
jax: 0.10.0
libtpu: 0.0.40
codegen_flags: <defaults>
</compile_context>

<pallas_src>
import functools

import jax
import jax.numpy as jnp
from jax import lax
from jax.experimental import pallas as pl
from jax.experimental.pallas import tpu as pltpu

_EPS = 1e-5  # BatchNorm2d default eps


# ---------------------------------------------------------------------------
# Pallas kernel: concat(160ch) -> 3x3 conv (BN folded) -> PReLU -> 1x1 conv.
# ---------------------------------------------------------------------------
def _lastconv_kernel(x_ref, u3_ref, u2_ref, u1_ref, w1_ref, b1_ref, alpha_ref,
                     w2_ref, mask_ref, out_ref, *, W):
    """Fused "lastconv" stage, one batch element per grid step.

    x_ref    : (1, 64, N)   skip features, N = H*W flattened into lanes
    u*_ref   : (1, 32, N)   upsampled pyramid branches (branch3, branch2, branch1)
    w1_ref   : (9, 64, 160) 3x3 conv weights, tap-major, BN scale folded in
    b1_ref   : (64, 1)      BN-folded bias of the 3x3 conv
    alpha_ref: (1, 1)       shared PReLU slope (SMEM)
    w2_ref   : (64, 64)     final 1x1 conv weights (no bias)
    mask_ref : (9, 1, N)    border masks for the shift-based taps
    out_ref  : (1, 64, N)
    """
    # Fused channel concat (channels on the sublane/contraction side, the
    # flattened spatial axis stays in lanes -> lane-dense everywhere).
    xcat = jnp.concatenate(
        [x_ref[0], u3_ref[0], u2_ref[0], u1_ref[0]], axis=0)        # (160, N)

    # 3x3 conv as 9 lane-dense MXU matmuls (Cout, Cin) @ (Cin, N).  Spatial
    # taps are realized as lane shifts + precomputed border masks instead of
    # per-tap patch slicing/reshaping or a zero-padded scratch buffer.
    # Center tap first, with the BN-folded bias initializing the accumulator.
    acc = jnp.dot(w1_ref[4], xcat, preferred_element_type=jnp.float32)
    acc = acc + b1_ref[...]                                          # (64, N)
    for t in (0, 1, 2, 3, 5, 6, 7, 8):
        dy, dx = t // 3 - 1, t % 3 - 1
        off = dy * W + dx
        z = jnp.dot(w1_ref[t], xcat, preferred_element_type=jnp.float32)
        # Want z_shift[p] = z[p + off]; any lane that wraps across an image
        # border is zeroed by the mask.  (jnp.roll lowers to two lane slices
        # + a concat; pltpu.roll would move this onto the XLU slot.)
        z = jnp.roll(z, -off, axis=1)
        acc = acc + z * mask_ref[t]

    # PReLU with a single shared slope (nn.PReLU() default).
    a = alpha_ref[0, 0]
    act = jnp.where(acc >= 0.0, acc, a * acc)

    # Final 1x1 conv, 64 -> 64, bias-free.  Output stays lane-dense.
    out = jnp.dot(w2_ref[...], act, preferred_element_type=jnp.float32)
    out_ref[0] = out.astype(out_ref.dtype)


def _lastconv_pallas(x, up3, up2, up1, p):
    """x: (B,64,H,W); up*: (B,32,H,W) upsampled branches; p: parameter dict."""
    B, C, H, W = x.shape
    Cb = up3.shape[1]
    Cmid, Cin, KH, KW = p["lc_w1"].shape          # (64, 160, 3, 3)
    Cout = p["lc_w2"].shape[0]
    assert KH == 3 and KW == 3 and Cin == C + 3 * Cb
    N = H * W

    # Fold eval-mode BatchNorm into the 3x3 conv.
    scale = p["lc_gamma"] / jnp.sqrt(p["lc_var"] + _EPS)
    w1 = (p["lc_w1"] * scale[:, None, None, None]).astype(jnp.float32)
    b1 = (p["lc_beta"] - p["lc_mean"] * scale).reshape(Cmid, 1).astype(jnp.float32)
    # Tap-major weights: one (Cout, Cin) matrix per 3x3 tap.
    w1_taps = jnp.transpose(w1, (2, 3, 0, 1)).reshape(9, Cmid, Cin)
    w2 = p["lc_w2"].reshape(Cout, Cmid).astype(jnp.float32)
    alpha = jnp.reshape(p["lc_alpha"], (1, 1)).astype(jnp.float32)

    # Flatten spatial into the lane axis (free reshape on contiguous NCHW).
    xf = x.reshape(B, C, N).astype(jnp.float32)
    u3f = up3.reshape(B, Cb, N).astype(jnp.float32)
    u2f = up2.reshape(B, Cb, N).astype(jnp.float32)
    u1f = up1.reshape(B, Cb, N).astype(jnp.float32)

    # Border masks for the shift-based 3x3 taps.
    ys = jnp.arange(H).reshape(H, 1)
    xs = jnp.arange(W).reshape(1, W)
    mask_list = []
    for t in range(9):
        dy, dx = t // 3 - 1, t % 3 - 1
        m = ((ys + dy >= 0) & (ys + dy < H) & (xs + dx >= 0) & (xs + dx < W))
        mask_list.append(m.reshape(1, N))
    masks = jnp.stack(mask_list, axis=0).astype(jnp.float32)        # (9, 1, N)

    kernel = functools.partial(_lastconv_kernel, W=W)

    flops = 2 * B * N * (9 * Cin * Cmid + Cmid * Cout)
    bytes_accessed = 4 * (B * N * (Cin + Cout) + 9 * Cmid * Cin
                          + Cmid * Cout + Cmid + 9 * N)

    out = pl.pallas_call(
        kernel,
        out_shape=jax.ShapeDtypeStruct((B, Cout, N), jnp.float32),
        grid_spec=pltpu.PrefetchScalarGridSpec(
            num_scalar_prefetch=0,
            grid=(B,),
            in_specs=[
                pl.BlockSpec((1, C, N), lambda b: (b, 0, 0)),
                pl.BlockSpec((1, Cb, N), lambda b: (b, 0, 0)),
                pl.BlockSpec((1, Cb, N), lambda b: (b, 0, 0)),
                pl.BlockSpec((1, Cb, N), lambda b: (b, 0, 0)),
                pl.BlockSpec((9, Cmid, Cin), lambda b: (0, 0, 0)),
                pl.BlockSpec((Cmid, 1), lambda b: (0, 0)),
                pl.BlockSpec(memory_space=pltpu.MemorySpace.SMEM),
                pl.BlockSpec((Cout, Cmid), lambda b: (0, 0)),
                pl.BlockSpec((9, 1, N), lambda b: (0, 0, 0)),
            ],
            out_specs=pl.BlockSpec((1, Cout, N), lambda b: (b, 0, 0)),
        ),
        compiler_params=pltpu.CompilerParams(
            dimension_semantics=("parallel",),
            vmem_limit_bytes=32 * 1024 * 1024,   # ample headroom over ~5 MiB used
        ),
        cost_estimate=pl.CostEstimate(flops=flops, transcendentals=0,
                                      bytes_accessed=int(bytes_accessed)),
    )(xf, u3f, u2f, u1f, w1_taps, b1, alpha, w2, masks)

    return out.reshape(B, Cout, H, W)


# ---------------------------------------------------------------------------
# Pyramid branches (tiny tensors) + full forward.
# ---------------------------------------------------------------------------
def _branch(x, k, w, gamma, beta, mean, var, alpha, out_hw):
    """AvgPool(k,k) -> 1x1 conv (BN folded) -> PReLU -> bilinear upsample."""
    B, C, H, W = x.shape
    Hk, Wk = (H // k) * k, (W // k) * k
    pooled = x[:, :, :Hk, :Wk].reshape(B, C, H // k, k, W // k, k).mean(axis=(3, 5))
    scale = gamma / jnp.sqrt(var + _EPS)
    w_eff = w.reshape(w.shape[0], C) * scale[:, None]
    b_eff = beta - mean * scale
    y = jnp.einsum("oc,bchw->bohw", w_eff, pooled) + b_eff[None, :, None, None]
    y = jnp.where(y >= 0.0, y, alpha * y)
    # F.upsample(mode='bilinear') == align_corners=False == jax.image.resize.
    return jax.image.resize(y, (B, w.shape[0], out_hw[0], out_hw[1]),
                            method="bilinear")


def stereo_feature_forward(x, p):
    """x: (B, 64, H, W) NCHW.  Returns (B, 64, H, W)."""
    B, C, H, W = x.shape
    up1 = _branch(x, 30, p["b1_w"], p["b1_gamma"], p["b1_beta"], p["b1_mean"],
                  p["b1_var"], p["b1_alpha"], (H, W))
    up2 = _branch(x, 10, p["b2_w"], p["b2_gamma"], p["b2_beta"], p["b2_mean"],
                  p["b2_var"], p["b2_alpha"], (H, W))
    up3 = _branch(x, 5, p["b3_w"], p["b3_gamma"], p["b3_beta"], p["b3_mean"],
                  p["b3_var"], p["b3_alpha"], (H, W))
    # Concat order matches torch.cat((skip, branch3, branch2, branch1), 1);
    # the concat itself is fused into the Pallas kernel.
    return _lastconv_pallas(x, up3, up2, up1, p)


# ---------------------------------------------------------------------------
# Pure-JAX reference (lax.conv / reduce_window based).
# ---------------------------------------------------------------------------
def _stereo_feature_reference(x, p):
    B, C, H, W = x.shape
    dn = ("NCHW", "OIHW", "NCHW")

    def branch(prefix, k):
        pooled = lax.reduce_window(x, 0.0, lax.add, (1, 1, k, k), (1, 1, k, k),
                                   "VALID") / float(k * k)
        y = lax.conv_general_dilated(pooled, p[prefix + "_w"], (1, 1), "VALID",
                                     dimension_numbers=dn)
        scale = p[prefix + "_gamma"] / jnp.sqrt(p[prefix + "_var"] + _EPS)
        shift = p[prefix + "_beta"] - p[prefix + "_mean"] * scale
        y = y * scale[None, :, None, None] + shift[None, :, None, None]
        y = jnp.where(y >= 0.0, y, p[prefix + "_alpha"] * y)
        return jax.image.resize(y, (B, y.shape[1], H, W), method="bilinear")

    u1 = branch("b1", 30)
    u2 = branch("b2", 10)
    u3 = branch("b3", 5)
    cat = jnp.concatenate([x, u3, u2, u1], axis=1)

    y = lax.conv_general_dilated(cat, p["lc_w1"], (1, 1), "SAME",
                                 dimension_numbers=dn)
    scale = p["lc_gamma"] / jnp.sqrt(p["lc_var"] + _EPS)
    shift = p["lc_beta"] - p["lc_mean"] * scale
    y = y * scale[None, :, None, None] + shift[None, :, None, None]
    y = jnp.where(y >= 0.0, y, p["lc_alpha"] * y)
    y = lax.conv_general_dilated(y, p["lc_w2"], (1, 1), "VALID",
                                 dimension_numbers=dn)
    return y


if __name__ == "__main__":
    # Smallest spatial size that satisfies the AvgPool2d((30,30)) branch.
    B, C, H, W = 2, 64, 30, 30

    key = jax.random.PRNGKey(0)
    ks = list(jax.random.split(key, 32))

    def nk():
        return ks.pop()

    x = jax.random.normal(nk(), (B, C, H, W), jnp.float32)

    p = {}
    for name in ("b1", "b2", "b3"):
        p[name + "_w"] = 0.1 * jax.random.normal(nk(), (32, C, 1, 1), jnp.float32)
        p[name + "_gamma"] = 1.0 + 0.1 * jax.random.normal(nk(), (32,), jnp.float32)
        p[name + "_beta"] = 0.1 * jax.random.normal(nk(), (32,), jnp.float32)
        p[name + "_mean"] = 0.1 * jax.random.normal(nk(), (32,), jnp.float32)
        p[name + "_var"] = jax.random.uniform(nk(), (32,), jnp.float32, 0.5, 1.5)
        p[name + "_alpha"] = jnp.float32(0.25)        # nn.PReLU() default

    p["lc_w1"] = 0.05 * jax.random.normal(nk(), (64, 160, 3, 3), jnp.float32)
    p["lc_gamma"] = 1.0 + 0.1 * jax.random.normal(nk(), (64,), jnp.float32)
    p["lc_beta"] = 0.1 * jax.random.normal(nk(), (64,), jnp.float32)
    p["lc_mean"] = 0.1 * jax.random.normal(nk(), (64,), jnp.float32)
    p["lc_var"] = jax.random.uniform(nk(), (64,), jnp.float32, 0.5, 1.5)
    p["lc_alpha"] = jnp.float32(0.25)
    p["lc_w2"] = 0.1 * jax.random.normal(nk(), (64, 64, 1, 1), jnp.float32)

    out = stereo_feature_forward(x, p)
    out = jax.block_until_ready(out)

    ref = _stereo_feature_reference(x, p)
    assert out.shape == (B, 64, H, W)
    max_err = jnp.max(jnp.abs(out - ref))
    assert jnp.allclose(out, ref, rtol=1e-3, atol=1e-3), (
        f"mismatch vs reference (max abs err {max_err})")

    print("KERNEL_OK")
</pallas_src>

<mosaic_0001>
module attributes {stable_mosaic.version = 11 : i64} {
  func.func @_lastconv_kernel(%arg0: i32, %arg1: memref<1x64x900xf32, #tpu.memory_space<vmem>>, %arg2: memref<1x32x900xf32, #tpu.memory_space<vmem>>, %arg3: memref<1x32x900xf32, #tpu.memory_space<vmem>>, %arg4: memref<1x32x900xf32, #tpu.memory_space<vmem>>, %arg5: memref<9x64x160xf32, #tpu.memory_space<vmem>>, %arg6: memref<64x1xf32, #tpu.memory_space<vmem>>, %arg7: memref<1x1xf32, #tpu.memory_space<smem>>, %arg8: memref<64x64xf32, #tpu.memory_space<vmem>>, %arg9: memref<9x1x900xf32, #tpu.memory_space<vmem>>, %arg10: memref<1x64x900xf32, #tpu.memory_space<vmem>>) attributes {dimension_semantics = [#tpu.dimension_semantics<parallel>], iteration_bounds = array<i64: 2>, scalar_prefetch = 0 : i64, scratch_operands = 0 : i64, tpu.core_type = #tpu.core_type<tc>, window_params = [{transform_indices = @transform_0, window_bounds = array<i64: 1, 64, 900>}, {transform_indices = @transform_1, window_bounds = array<i64: 1, 32, 900>}, {transform_indices = @transform_2, window_bounds = array<i64: 1, 32, 900>}, {transform_indices = @transform_3, window_bounds = array<i64: 1, 32, 900>}, {pipeline_mode = #tpu.pipeline_mode<synchronous>, transform_indices = @transform_4, window_bounds = array<i64: 9, 64, 160>}, {pipeline_mode = #tpu.pipeline_mode<synchronous>, transform_indices = @transform_5, window_bounds = array<i64: 64, 1>}, {transform_indices = @transform_6, window_bounds = array<i64: 1, 1>}, {pipeline_mode = #tpu.pipeline_mode<synchronous>, transform_indices = @transform_7, window_bounds = array<i64: 64, 64>}, {pipeline_mode = #tpu.pipeline_mode<synchronous>, transform_indices = @transform_8, window_bounds = array<i64: 9, 1, 900>}, {transform_indices = @transform_9, window_bounds = array<i64: 1, 64, 900>}]} {
    %c0 = arith.constant 0 : index
    %c0_0 = arith.constant 0 : index
    %c0_1 = arith.constant 0 : index
    %0 = vector.load %arg1[%c0, %c0_0, %c0_1] : memref<1x64x900xf32, #tpu.memory_space<vmem>>, vector<1x64x900xf32>
    %1 = vector.shape_cast %0 : vector<1x64x900xf32> to vector<64x900xf32>
    %c0_2 = arith.constant 0 : index
    %c0_3 = arith.constant 0 : index
    %c0_4 = arith.constant 0 : index
    %2 = vector.load %arg2[%c0_2, %c0_3, %c0_4] : memref<1x32x900xf32, #tpu.memory_space<vmem>>, vector<1x32x900xf32>
    %3 = vector.shape_cast %2 : vector<1x32x900xf32> to vector<32x900xf32>
    %c0_5 = arith.constant 0 : index
    %c0_6 = arith.constant 0 : index
    %c0_7 = arith.constant 0 : index
    %4 = vector.load %arg3[%c0_5, %c0_6, %c0_7] : memref<1x32x900xf32, #tpu.memory_space<vmem>>, vector<1x32x900xf32>
    %5 = vector.shape_cast %4 : vector<1x32x900xf32> to vector<32x900xf32>
    %c0_8 = arith.constant 0 : index
    %c0_9 = arith.constant 0 : index
    %c0_10 = arith.constant 0 : index
    %6 = vector.load %arg4[%c0_8, %c0_9, %c0_10] : memref<1x32x900xf32, #tpu.memory_space<vmem>>, vector<1x32x900xf32>
    %7 = vector.shape_cast %6 : vector<1x32x900xf32> to vector<32x900xf32>
    %8 = tpu.concatenate %1, %3, %5, %7 in 0 : vector<64x900xf32>, vector<32x900xf32>, vector<32x900xf32>, vector<32x900xf32> -> vector<160x900xf32>
    %c4 = arith.constant 4 : index
    %c0_11 = arith.constant 0 : index
    %c0_12 = arith.constant 0 : index
    %9 = vector.load %arg5[%c4, %c0_11, %c0_12] : memref<9x64x160xf32, #tpu.memory_space<vmem>>, vector<1x64x160xf32>
    %10 = vector.shape_cast %9 : vector<1x64x160xf32> to vector<64x160xf32>
    %cst = arith.constant dense<0.000000e+00> : vector<64x900xf32>
    %11 = tpu.matmul %10, %8, %cst {dimension_numbers = #tpu.dot_dimension_numbers<[1], [0], [0], [1], [0, 0, 1, 1], [], []>} : vector<64x160xf32>, vector<160x900xf32>, vector<64x900xf32> -> vector<64x900xf32>
    %c0_13 = arith.constant 0 : index
    %c0_14 = arith.constant 0 : index
    %12 = vector.load %arg6[%c0_13, %c0_14] : memref<64x1xf32, #tpu.memory_space<vmem>>, vector<64x1xf32>
    %13 = vector.broadcast %12 : vector<64x1xf32> to vector<64x900xf32>
    %14 = arith.addf %11, %13 : vector<64x900xf32>
    %c0_15 = arith.constant 0 : index
    %c0_16 = arith.constant 0 : index
    %c0_17 = arith.constant 0 : index
    %15 = vector.load %arg5[%c0_15, %c0_16, %c0_17] : memref<9x64x160xf32, #tpu.memory_space<vmem>>, vector<1x64x160xf32>
    %16 = vector.shape_cast %15 : vector<1x64x160xf32> to vector<64x160xf32>
    %cst_18 = arith.constant dense<0.000000e+00> : vector<64x900xf32>
    %17 = tpu.matmul %16, %8, %cst_18 {dimension_numbers = #tpu.dot_dimension_numbers<[1], [0], [0], [1], [0, 0, 1, 1], [], []>} : vector<64x160xf32>, vector<160x900xf32>, vector<64x900xf32> -> vector<64x900xf32>
    %18 = vector.extract_strided_slice %17 {offsets = [0, 869], sizes = [64, 31], strides = [1, 1]} : vector<64x900xf32> to vector<64x31xf32>
    %19 = vector.extract_strided_slice %17 {offsets = [0, 0], sizes = [64, 869], strides = [1, 1]} : vector<64x900xf32> to vector<64x869xf32>
    %20 = tpu.concatenate %18, %19 in 1 : vector<64x31xf32>, vector<64x869xf32> -> vector<64x900xf32>
    %c0_19 = arith.constant 0 : index
    %c0_20 = arith.constant 0 : index
    %c0_21 = arith.constant 0 : index
    %21 = vector.load %arg9[%c0_19, %c0_20, %c0_21] : memref<9x1x900xf32, #tpu.memory_space<vmem>>, vector<1x1x900xf32>
    %22 = vector.shape_cast %21 : vector<1x1x900xf32> to vector<1x900xf32>
    %23 = vector.broadcast %22 : vector<1x900xf32> to vector<64x900xf32>
    %24 = arith.mulf %20, %23 : vector<64x900xf32>
    %25 = arith.addf %14, %24 : vector<64x900xf32>
    %c1 = arith.constant 1 : index
    %c0_22 = arith.constant 0 : index
    %c0_23 = arith.constant 0 : index
    %26 = vector.load %arg5[%c1, %c0_22, %c0_23] : memref<9x64x160xf32, #tpu.memory_space<vmem>>, vector<1x64x160xf32>
    %27 = vector.shape_cast %26 : vector<1x64x160xf32> to vector<64x160xf32>
    %cst_24 = arith.constant dense<0.000000e+00> : vector<64x900xf32>
    %28 = tpu.matmul %27, %8, %cst_24 {dimension_numbers = #tpu.dot_dimension_numbers<[1], [0], [0], [1], [0, 0, 1, 1], [], []>} : vector<64x160xf32>, vector<160x900xf32>, vector<64x900xf32> -> vector<64x900xf32>
    %29 = vector.extract_strided_slice %28 {offsets = [0, 870], sizes = [64, 30], strides = [1, 1]} : vector<64x900xf32> to vector<64x30xf32>
    %30 = vector.extract_strided_slice %28 {offsets = [0, 0], sizes = [64, 870], strides = [1, 1]} : vector<64x900xf32> to vector<64x870xf32>
    %31 = tpu.concatenate %29, %30 in 1 : vector<64x30xf32>, vector<64x870xf32> -> vector<64x900xf32>
    %c1_25 = arith.constant 1 : index
    %c0_26 = arith.constant 0 : index
    %c0_27 = arith.constant 0 : index
    %32 = vector.load %arg9[%c1_25, %c0_26, %c0_27] : memref<9x1x900xf32, #tpu.memory_space<vmem>>, vector<1x1x900xf32>
    %33 = vector.shape_cast %32 : vector<1x1x900xf32> to vector<1x900xf32>
    %34 = vector.broadcast %33 : vector<1x900xf32> to vector<64x900xf32>
    %35 = arith.mulf %31, %34 : vector<64x900xf32>
    %36 = arith.addf %25, %35 : vector<64x900xf32>
    %c2 = arith.constant 2 : index
    %c0_28 = arith.constant 0 : index
    %c0_29 = arith.constant 0 : index
    %37 = vector.load %arg5[%c2, %c0_28, %c0_29] : memref<9x64x160xf32, #tpu.memory_space<vmem>>, vector<1x64x160xf32>
    %38 = vector.shape_cast %37 : vector<1x64x160xf32> to vector<64x160xf32>
    %cst_30 = arith.constant dense<0.000000e+00> : vector<64x900xf32>
    %39 = tpu.matmul %38, %8, %cst_30 {dimension_numbers = #tpu.dot_dimension_numbers<[1], [0], [0], [1], [0, 0, 1, 1], [], []>} : vector<64x160xf32>, vector<160x900xf32>, vector<64x900xf32> -> vector<64x900xf32>
    %40 = vector.extract_strided_slice %39 {offsets = [0, 871], sizes = [64, 29], strides = [1, 1]} : vector<64x900xf32> to vector<64x29xf32>
    %41 = vector.extract_strided_slice %39 {offsets = [0, 0], sizes = [64, 871], strides = [1, 1]} : vector<64x900xf32> to vector<64x871xf32>
    %42 = tpu.concatenate %40, %41 in 1 : vector<64x29xf32>, vector<64x871xf32> -> vector<64x900xf32>
    %c2_31 = arith.constant 2 : index
    %c0_32 = arith.constant 0 : index
    %c0_33 = arith.constant 0 : index
    %43 = vector.load %arg9[%c2_31, %c0_32, %c0_33] : memref<9x1x900xf32, #tpu.memory_space<vmem>>, vector<1x1x900xf32>
    %44 = vector.shape_cast %43 : vector<1x1x900xf32> to vector<1x900xf32>
    %45 = vector.broadcast %44 : vector<1x900xf32> to vector<64x900xf32>
    %46 = arith.mulf %42, %45 : vector<64x900xf32>
    %47 = arith.addf %36, %46 : vector<64x900xf32>
    %c3 = arith.constant 3 : index
    %c0_34 = arith.constant 0 : index
    %c0_35 = arith.constant 0 : index
    %48 = vector.load %arg5[%c3, %c0_34, %c0_35] : memref<9x64x160xf32, #tpu.memory_space<vmem>>, vector<1x64x160xf32>
    %49 = vector.shape_cast %48 : vector<1x64x160xf32> to vector<64x160xf32>
    %cst_36 = arith.constant dense<0.000000e+00> : vector<64x900xf32>
    %50 = tpu.matmul %49, %8, %cst_36 {dimension_numbers = #tpu.dot_dimension_numbers<[1], [0], [0], [1], [0, 0, 1, 1], [], []>} : vector<64x160xf32>, vector<160x900xf32>, vector<64x900xf32> -> vector<64x900xf32>
    %51 = vector.extract_strided_slice %50 {offsets = [0, 899], sizes = [64, 1], strides = [1, 1]} : vector<64x900xf32> to vector<64x1xf32>
    %52 = vector.extract_strided_slice %50 {offsets = [0, 0], sizes = [64, 899], strides = [1, 1]} : vector<64x900xf32> to vector<64x899xf32>
    %53 = tpu.concatenate %51, %52 in 1 : vector<64x1xf32>, vector<64x899xf32> -> vector<64x900xf32>
    %c3_37 = arith.constant 3 : index
    %c0_38 = arith.constant 0 : index
    %c0_39 = arith.constant 0 : index
    %54 = vector.load %arg9[%c3_37, %c0_38, %c0_39] : memref<9x1x900xf32, #tpu.memory_space<vmem>>, vector<1x1x900xf32>
    %55 = vector.shape_cast %54 : vector<1x1x900xf32> to vector<1x900xf32>
    %56 = vector.broadcast %55 : vector<1x900xf32> to vector<64x900xf32>
    %57 = arith.mulf %53, %56 : vector<64x900xf32>
    %58 = arith.addf %47, %57 : vector<64x900xf32>
    %c5 = arith.constant 5 : index
    %c0_40 = arith.constant 0 : index
    %c0_41 = arith.constant 0 : index
    %59 = vector.load %arg5[%c5, %c0_40, %c0_41] : memref<9x64x160xf32, #tpu.memory_space<vmem>>, vector<1x64x160xf32>
    %60 = vector.shape_cast %59 : vector<1x64x160xf32> to vector<64x160xf32>
    %cst_42 = arith.constant dense<0.000000e+00> : vector<64x900xf32>
    %61 = tpu.matmul %60, %8, %cst_42 {dimension_numbers = #tpu.dot_dimension_numbers<[1], [0], [0], [1], [0, 0, 1, 1], [], []>} : vector<64x160xf32>, vector<160x900xf32>, vector<64x900xf32> -> vector<64x900xf32>
    %62 = vector.extract_strided_slice %61 {offsets = [0, 1], sizes = [64, 899], strides = [1, 1]} : vector<64x900xf32> to vector<64x899xf32>
    %63 = vector.extract_strided_slice %61 {offsets = [0, 0], sizes = [64, 1], strides = [1, 1]} : vector<64x900xf32> to vector<64x1xf32>
    %64 = tpu.concatenate %62, %63 in 1 : vector<64x899xf32>, vector<64x1xf32> -> vector<64x900xf32>
    %c5_43 = arith.constant 5 : index
    %c0_44 = arith.constant 0 : index
    %c0_45 = arith.constant 0 : index
    %65 = vector.load %arg9[%c5_43, %c0_44, %c0_45] : memref<9x1x900xf32, #tpu.memory_space<vmem>>, vector<1x1x900xf32>
    %66 = vector.shape_cast %65 : vector<1x1x900xf32> to vector<1x900xf32>
    %67 = vector.broadcast %66 : vector<1x900xf32> to vector<64x900xf32>
    %68 = arith.mulf %64, %67 : vector<64x900xf32>
    %69 = arith.addf %58, %68 : vector<64x900xf32>
    %c6 = arith.constant 6 : index
    %c0_46 = arith.constant 0 : index
    %c0_47 = arith.constant 0 : index
    %70 = vector.load %arg5[%c6, %c0_46, %c0_47] : memref<9x64x160xf32, #tpu.memory_space<vmem>>, vector<1x64x160xf32>
    %71 = vector.shape_cast %70 : vector<1x64x160xf32> to vector<64x160xf32>
    %cst_48 = arith.constant dense<0.000000e+00> : vector<64x900xf32>
    %72 = tpu.matmul %71, %8, %cst_48 {dimension_numbers = #tpu.dot_dimension_numbers<[1], [0], [0], [1], [0, 0, 1, 1], [], []>} : vector<64x160xf32>, vector<160x900xf32>, vector<64x900xf32> -> vector<64x900xf32>
    %73 = vector.extract_strided_slice %72 {offsets = [0, 29], sizes = [64, 871], strides = [1, 1]} : vector<64x900xf32> to vector<64x871xf32>
    %74 = vector.extract_strided_slice %72 {offsets = [0, 0], sizes = [64, 29], strides = [1, 1]} : vector<64x900xf32> to vector<64x29xf32>
    %75 = tpu.concatenate %73, %74 in 1 : vector<64x871xf32>, vector<64x29xf32> -> vector<64x900xf32>
    %c6_49 = arith.constant 6 : index
    %c0_50 = arith.constant 0 : index
    %c0_51 = arith.constant 0 : index
    %76 = vector.load %arg9[%c6_49, %c0_50, %c0_51] : memref<9x1x900xf32, #tpu.memory_space<vmem>>, vector<1x1x900xf32>
    %77 = vector.shape_cast %76 : vector<1x1x900xf32> to vector<1x900xf32>
    %78 = vector.broadcast %77 : vector<1x900xf32> to vector<64x900xf32>
    %79 = arith.mulf %75, %78 : vector<64x900xf32>
    %80 = arith.addf %69, %79 : vector<64x900xf32>
    %c7 = arith.constant 7 : index
    %c0_52 = arith.constant 0 : index
    %c0_53 = arith.constant 0 : index
    %81 = vector.load %arg5[%c7, %c0_52, %c0_53] : memref<9x64x160xf32, #tpu.memory_space<vmem>>, vector<1x64x160xf32>
    %82 = vector.shape_cast %81 : vector<1x64x160xf32> to vector<64x160xf32>
    %cst_54 = arith.constant dense<0.000000e+00> : vector<64x900xf32>
    %83 = tpu.matmul %82, %8, %cst_54 {dimension_numbers = #tpu.dot_dimension_numbers<[1], [0], [0], [1], [0, 0, 1, 1], [], []>} : vector<64x160xf32>, vector<160x900xf32>, vector<64x900xf32> -> vector<64x900xf32>
    %84 = vector.extract_strided_slice %83 {offsets = [0, 30], sizes = [64, 870], strides = [1, 1]} : vector<64x900xf32> to vector<64x870xf32>
    %85 = vector.extract_strided_slice %83 {offsets = [0, 0], sizes = [64, 30], strides = [1, 1]} : vector<64x900xf32> to vector<64x30xf32>
    %86 = tpu.concatenate %84, %85 in 1 : vector<64x870xf32>, vector<64x30xf32> -> vector<64x900xf32>
    %c7_55 = arith.constant 7 : index
    %c0_56 = arith.constant 0 : index
    %c0_57 = arith.constant 0 : index
    %87 = vector.load %arg9[%c7_55, %c0_56, %c0_57] : memref<9x1x900xf32, #tpu.memory_space<vmem>>, vector<1x1x900xf32>
    %88 = vector.shape_cast %87 : vector<1x1x900xf32> to vector<1x900xf32>
    %89 = vector.broadcast %88 : vector<1x900xf32> to vector<64x900xf32>
    %90 = arith.mulf %86, %89 : vector<64x900xf32>
    %91 = arith.addf %80, %90 : vector<64x900xf32>
    %c8 = arith.constant 8 : index
    %c0_58 = arith.constant 0 : index
    %c0_59 = arith.constant 0 : index
    %92 = vector.load %arg5[%c8, %c0_58, %c0_59] : memref<9x64x160xf32, #tpu.memory_space<vmem>>, vector<1x64x160xf32>
    %93 = vector.shape_cast %92 : vector<1x64x160xf32> to vector<64x160xf32>
    %cst_60 = arith.constant dense<0.000000e+00> : vector<64x900xf32>
    %94 = tpu.matmul %93, %8, %cst_60 {dimension_numbers = #tpu.dot_dimension_numbers<[1], [0], [0], [1], [0, 0, 1, 1], [], []>} : vector<64x160xf32>, vector<160x900xf32>, vector<64x900xf32> -> vector<64x900xf32>
    %95 = vector.extract_strided_slice %94 {offsets = [0, 31], sizes = [64, 869], strides = [1, 1]} : vector<64x900xf32> to vector<64x869xf32>
    %96 = vector.extract_strided_slice %94 {offsets = [0, 0], sizes = [64, 31], strides = [1, 1]} : vector<64x900xf32> to vector<64x31xf32>
    %97 = tpu.concatenate %95, %96 in 1 : vector<64x869xf32>, vector<64x31xf32> -> vector<64x900xf32>
    %c8_61 = arith.constant 8 : index
    %c0_62 = arith.constant 0 : index
    %c0_63 = arith.constant 0 : index
    %98 = vector.load %arg9[%c8_61, %c0_62, %c0_63] : memref<9x1x900xf32, #tpu.memory_space<vmem>>, vector<1x1x900xf32>
    %99 = vector.shape_cast %98 : vector<1x1x900xf32> to vector<1x900xf32>
    %100 = vector.broadcast %99 : vector<1x900xf32> to vector<64x900xf32>
    %101 = arith.mulf %97, %100 : vector<64x900xf32>
    %102 = arith.addf %91, %101 : vector<64x900xf32>
    %c0_64 = arith.constant 0 : index
    %c0_65 = arith.constant 0 : index
    %103 = memref.load %arg7[%c0_64, %c0_65] : memref<1x1xf32, #tpu.memory_space<smem>>
    %cst_66 = arith.constant 0.000000e+00 : f32
    %104 = vector.broadcast %cst_66 : f32 to vector<64x900xf32>
    %105 = arith.cmpf oge, %102, %104 : vector<64x900xf32>
    %106 = vector.broadcast %103 : f32 to vector<64x900xf32>
    %107 = arith.mulf %106, %102 : vector<64x900xf32>
    %108 = arith.select %105, %102, %107 : vector<64x900xi1>, vector<64x900xf32>
    %c0_67 = arith.constant 0 : index
    %c0_68 = arith.constant 0 : index
    %109 = vector.load %arg8[%c0_67, %c0_68] : memref<64x64xf32, #tpu.memory_space<vmem>>, vector<64x64xf32>
    %cst_69 = arith.constant dense<0.000000e+00> : vector<64x900xf32>
    %110 = tpu.matmul %109, %108, %cst_69 {dimension_numbers = #tpu.dot_dimension_numbers<[1], [0], [0], [1], [0, 0, 1, 1], [], []>} : vector<64x64xf32>, vector<64x900xf32>, vector<64x900xf32> -> vector<64x900xf32>
    %c0_70 = arith.constant 0 : index
    %c0_71 = arith.constant 0 : index
    %c0_72 = arith.constant 0 : index
    %111 = vector.load %arg10[%c0_70, %c0_71, %c0_72] : memref<1x64x900xf32, #tpu.memory_space<vmem>>, vector<1x64x900xf32>
    %112 = vector.shape_cast %111 : vector<1x64x900xf32> to vector<64x900xf32>
    %113 = vector.shape_cast %110 : vector<64x900xf32> to vector<1x64x900xf32>
    tpu.vector_store %arg10[%c0_70, %c0_71, %c0_72], %113 {strides = array<i32>} : memref<1x64x900xf32, #tpu.memory_space<vmem>>, vector<1x64x900xf32>,
    return
  }
  func.func @transform_0(%arg0: i32) -> (i32, i32, i32) {
    %c0_i32 = arith.constant 0 : i32
    %c0_i32_0 = arith.constant 0 : i32
    %c0_i32_1 = arith.constant 0 : i32
    return %arg0, %c0_i32, %c0_i32_0 : i32, i32, i32
  }
  func.func @transform_1(%arg0: i32) -> (i32, i32, i32) {
    %c0_i32 = arith.constant 0 : i32
    %c0_i32_0 = arith.constant 0 : i32
    %c0_i32_1 = arith.constant 0 : i32
    return %arg0, %c0_i32, %c0_i32_0 : i32, i32, i32
  }
  func.func @transform_2(%arg0: i32) -> (i32, i32, i32) {
    %c0_i32 = arith.constant 0 : i32
    %c0_i32_0 = arith.constant 0 : i32
    %c0_i32_1 = arith.constant 0 : i32
    return %arg0, %c0_i32, %c0_i32_0 : i32, i32, i32
  }
  func.func @transform_3(%arg0: i32) -> (i32, i32, i32) {
    %c0_i32 = arith.constant 0 : i32
    %c0_i32_0 = arith.constant 0 : i32
    %c0_i32_1 = arith.constant 0 : i32
    return %arg0, %c0_i32, %c0_i32_0 : i32, i32, i32
  }
  func.func @transform_4(%arg0: i32) -> (i32, i32, i32) {
    %c0_i32 = arith.constant 0 : i32
    %c0_i32_0 = arith.constant 0 : i32
    %c0_i32_1 = arith.constant 0 : i32
    %c0_i32_2 = arith.constant 0 : i32
    return %c0_i32, %c0_i32_0, %c0_i32_1 : i32, i32, i32
  }
  func.func @transform_5(%arg0: i32) -> (i32, i32) {
    %c0_i32 = arith.constant 0 : i32
    %c0_i32_0 = arith.constant 0 : i32
    %c0_i32_1 = arith.constant 0 : i32
    return %c0_i32, %c0_i32_0 : i32, i32
  }
  func.func @transform_6(%arg0: i32) -> (i32, i32) {
    %c0_i32 = arith.constant 0 : i32
    %c0_i32_0 = arith.constant 0 : i32
    %c0_i32_1 = arith.constant 0 : i32
    return %c0_i32, %c0_i32_0 : i32, i32
  }
  func.func @transform_7(%arg0: i32) -> (i32, i32) {
    %c0_i32 = arith.constant 0 : i32
    %c0_i32_0 = arith.constant 0 : i32
    %c0_i32_1 = arith.constant 0 : i32
    return %c0_i32, %c0_i32_0 : i32, i32
  }
  func.func @transform_8(%arg0: i32) -> (i32, i32, i32) {
    %c0_i32 = arith.constant 0 : i32
    %c0_i32_0 = arith.constant 0 : i32
    %c0_i32_1 = arith.constant 0 : i32
    %c0_i32_2 = arith.constant 0 : i32
    return %c0_i32, %c0_i32_0, %c0_i32_1 : i32, i32, i32
  }
  func.func @transform_9(%arg0: i32) -> (i32, i32, i32) {
    %c0_i32 = arith.constant 0 : i32
    %c0_i32_0 = arith.constant 0 : i32
    %c0_i32_1 = arith.constant 0 : i32
    return %arg0, %c0_i32, %c0_i32_0 : i32, i32, i32
  }
}

</mosaic_0001>

<llo_original>
// kernel: tpu_custom_call.1
$region0: #{tpu_custom_call.1}
  #allocation0 [shape = 'u32[]', space=smem, size = 0x4, offset = 0x4, fixed_abs, tag = 'smem constant byte address 0x4 - core index']
  #allocation1 [shape = 'u32[144,128]{1,0:T(1,128)}', space=vmem, size = 0x12000, scoped, tag = 'internal scratch']
  #allocation2 [shape = 'f32[1,1]{1,0:T(1,128)S(6)}', space=smem, size = 0x200, scoped, tag = 'scoped memory for tpu_custom_call.1']
  %s0 = inlined_call_operand.hbm [shape: f32[2,64,900], index: 0, kind: input, shape index: {}]
  %s1 = inlined_call_operand.hbm [shape: f32[2,32,900], index: 1, kind: input, shape index: {}]
  %s2 = inlined_call_operand.hbm [shape: f32[2,32,900], index: 2, kind: input, shape index: {}]
  %s3 = inlined_call_operand.hbm [shape: f32[2,32,900], index: 3, kind: input, shape index: {}]
  %s4 = inlined_call_operand.hbm [shape: f32[9,64,160], index: 4, kind: input, shape index: {}]
  %s5 = inlined_call_operand.vmem [shape: f32[64,1], index: 5, kind: input, shape index: {}]
  %s6 = inlined_call_operand.<no memory space> [shape: f32[1,1], index: 6, kind: input, shape index: {}]
  %s7 = inlined_call_operand.hbm [shape: f32[64,64], index: 7, kind: input, shape index: {}]
  %s8 = inlined_call_operand.vmem [shape: f32[9,1,900], index: 8, kind: input, shape index: {}]
  %s9 = inlined_call_operand.hbm [shape: f32[2,64,900], index: 9, kind: output, shape index: {}]
  %s10 = sld [smem:[#allocation0]]
  $region93: #{tpu_custom_call.1} parent=0
    _
  %s12 = ssub.s32 1, %s10
  %s13 = scalar_select 0, %s12, %s10
  %14 = sst [smem:[#allocation2]] %s6
  $region1: #{tpu_custom_call.1} parent=0
    #allocation3 [shape = 'u8[524288]{0}', space=vmem, size = 0x80000, scoped, tag = 'input window, operand 0']
    #allocation4 [shape = 's32[2]{0}', space=sflag, size = 0x8, scoped, tag = 'scoped memory for tpu_custom_call.1']
    #allocation5 [shape = 's32[2]{0}', space=sflag, size = 0x8, scoped, tag = 'scoped memory for tpu_custom_call.1']
    #allocation6 [shape = 'u8[262144]{0}', space=vmem, size = 0x40000, scoped, tag = 'input window, operand 1']
    #allocation7 [shape = 's32[2]{0}', space=sflag, size = 0x8, scoped, tag = 'scoped memory for tpu_custom_call.1']
    #allocation8 [shape = 'u8[262144]{0}', space=vmem, size = 0x40000, scoped, tag = 'input window, operand 2']
    #allocation9 [shape = 'u8[262144]{0}', space=vmem, size = 0x40000, scoped, tag = 'input window, operand 3']
    #allocation10 [shape = 's32[2]{0}', space=sflag, size = 0x8, scoped, tag = 'scoped memory for tpu_custom_call.1']
    #allocation11 [shape = 'u8[589824]{0}', space=vmem, size = 0x90000, scoped, tag = 'input window, operand 4, single buffered']
    #allocation12 [shape = 'u8[32768]{0}', space=vmem, size = 0x8000, scoped, tag = 'input window, operand 7, single buffered']
    #allocation13 [shape = 's32[1]{0}', space=sflag, size = 0x4, scoped, tag = 'scoped memory for tpu_custom_call.1']
    #allocation14 [shape = 'u8[524288]{0}', space=vmem, size = 0x80000, scoped, tag = 'output window, operand 0']
    %15 = vsyncpa [#allocation4], 0
    %s16 = scalar_lea.sflag [#allocation4], 1
    %17 = vsyncpa %s16, 0
    %18 = vsyncpa [#allocation7], 0
    %s19 = scalar_lea.sflag [#allocation7], 1
    %20 = vsyncpa %s19, 0
    %21 = vsyncpa [#allocation10], 0
    %s22 = scalar_lea.sflag [#allocation10], 1
    %23 = vsyncpa %s22, 0
    %24 = vsyncpa [#allocation13], 0
    %25 = vsyncpa [#allocation5], 0
    %s26 = scalar_lea.sflag [#allocation5], 1
    %27 = vsyncpa %s26, 0
    loop: start=0, step=1, limit=4
    $region2: #{tpu_custom_call.1} parent=1 // loop_pre_header
      _
    $region3: #{tpu_custom_call.1} parent=1 // loop_header
      %s29 = sphi 0, %s33
      %p30 = scmp.ge.s32.totalorder %s29, 4
      %s39 = sphi 0, %s41
      %s42 = sphi 0, %s39
      %s43 = sphi 0, %s42
      %s59 = sphi 0, %s43
      %s65 = sphi 0, %s67
      %s68 = sphi 0, %s65
      %s69 = sphi 0, %s68
      %s85 = sphi 0, %s69
      %s91 = sphi 0, %s93
      %s94 = sphi 0, %s91
      %s95 = sphi 0, %s94
      %s111 = sphi 0, %s95
      %s117 = sphi 0, %s119
      %s120 = sphi 0, %s117
      %s121 = sphi 0, %s120
      %s137 = sphi 0, %s121
      %s141 = sphi 0, %s141
      %s143 = sphi 0, %s141
      %s144 = sphi 0, %s143
      %s158 = sphi 0, %s144
      %s162 = sphi 0, %s162
      %s164 = sphi 0, %s162
      %s165 = sphi 0, %s164
      %s179 = sphi 0, %s165
      %s183 = sphi 0, %s183
      %s185 = sphi 0, %s183
      %s186 = sphi 0, %s185
      %s200 = sphi 0, %s186
      %s204 = sphi 0, %s204
      %s206 = sphi 0, %s204
      %s207 = sphi 0, %s206
      %s221 = sphi 0, %s207
      %s225 = sphi 0, %s225
      %s227 = sphi 0, %s225
      %s228 = sphi 0, %s227
      %s242 = sphi 0, %s228
      %s248 = sphi 0, %s250
      %s251 = sphi 0, %s248
      %s252 = sphi 0, %s251
      %s268 = sphi 0, %s252
    $region4: #{tpu_custom_call.1} parent=1 // loop_header_branch
      %32 = sbr.rel (%p30) target = $region8
    $region5: #{tpu_custom_call.1} parent=1 // loop_body
      %s34 = ssub.s32 %s29, 1
      %s35 = ssub.s32 %s29, 2
      %s36 = sadd.s32 %s29, 1
      %s37 = ssub.s32 %s29, %s36
      %p38 = scmp.eq.s32.totalorder %s37, 0
      %s40 = sadd.s32 %s39, 1
      %s41 = scalar_select %p38, %s39, %s40
      %p44 = pneg %p38
      %p45 = scmp.eq.s32.totalorder %s29, 1
      %p46 = por %p44, %p45
      %p47 = scmp.ne.s32.totalorder %s39, %s42
      %p48 = scmp.eq.s32.totalorder %s29, 0
      %p49 = por %p47, %p48
      %p50 = scmp.ne.s32.totalorder %s39, %s42
      %p51 = scmp.eq.s32.totalorder %s34, 1
      %p52 = por %p50, %p51
      %p53 = scmp.ne.s32.totalorder %s42, %s43
      %p54 = scmp.eq.s32.totalorder %s34, 0
      %p55 = por %p53, %p54
      %p56 = scmp.ne.s32.totalorder %s42, %s43
      %p57 = scmp.eq.s32.totalorder %s35, 1
      %p58 = por %p56, %p57
      %p60 = scmp.ne.s32.totalorder %s43, %s59
      %p61 = scmp.eq.s32.totalorder %s35, 0
      %p62 = por %p60, %p61
      %s63 = ssub.s32 %s29, %s36
      %p64 = scmp.eq.s32.totalorder %s63, 0
      %s66 = sadd.s32 %s65, 1
      %s67 = scalar_select %p64, %s65, %s66
      %p70 = pneg %p64
      %p71 = scmp.eq.s32.totalorder %s29, 1
      %p72 = por %p70, %p71
      %p73 = scmp.ne.s32.totalorder %s65, %s68
      %p74 = scmp.eq.s32.totalorder %s29, 0
      %p75 = por %p73, %p74
      %p76 = scmp.ne.s32.totalorder %s65, %s68
      %p77 = scmp.eq.s32.totalorder %s34, 1
      %p78 = por %p76, %p77
      %p79 = scmp.ne.s32.totalorder %s68, %s69
      %p80 = scmp.eq.s32.totalorder %s34, 0
      %p81 = por %p79, %p80
      %p82 = scmp.ne.s32.totalorder %s68, %s69
      %p83 = scmp.eq.s32.totalorder %s35, 1
      %p84 = por %p82, %p83
      %p86 = scmp.ne.s32.totalorder %s69, %s85
      %p87 = scmp.eq.s32.totalorder %s35, 0
      %p88 = por %p86, %p87
      %s89 = ssub.s32 %s29, %s36
      %p90 = scmp.eq.s32.totalorder %s89, 0
      %s92 = sadd.s32 %s91, 1
      %s93 = scalar_select %p90, %s91, %s92
      %p96 = pneg %p90
      %p97 = scmp.eq.s32.totalorder %s29, 1
      %p98 = por %p96, %p97
      %p99 = scmp.ne.s32.totalorder %s91, %s94
      %p100 = scmp.eq.s32.totalorder %s29, 0
      %p101 = por %p99, %p100
      %p102 = scmp.ne.s32.totalorder %s91, %s94
      %p103 = scmp.eq.s32.totalorder %s34, 1
      %p104 = por %p102, %p103
      %p105 = scmp.ne.s32.totalorder %s94, %s95
      %p106 = scmp.eq.s32.totalorder %s34, 0
      %p107 = por %p105, %p106
      %p108 = scmp.ne.s32.totalorder %s94, %s95
      %p109 = scmp.eq.s32.totalorder %s35, 1
      %p110 = por %p108, %p109
      %p112 = scmp.ne.s32.totalorder %s95, %s111
      %p113 = scmp.eq.s32.totalorder %s35, 0
      %p114 = por %p112, %p113
      %s115 = ssub.s32 %s29, %s36
      %p116 = scmp.eq.s32.totalorder %s115, 0
      %s118 = sadd.s32 %s117, 1
      %s119 = scalar_select %p116, %s117, %s118
      %p122 = pneg %p116
      %p123 = scmp.eq.s32.totalorder %s29, 1
      %p124 = por %p122, %p123
      %p125 = scmp.ne.s32.totalorder %s117, %s120
      %p126 = scmp.eq.s32.totalorder %s29, 0
      %p127 = por %p125, %p126
      %p128 = scmp.ne.s32.totalorder %s117, %s120
      %p129 = scmp.eq.s32.totalorder %s34, 1
      %p130 = por %p128, %p129
      %p131 = scmp.ne.s32.totalorder %s120, %s121
      %p132 = scmp.eq.s32.totalorder %s34, 0
      %p133 = por %p131, %p132
      %p134 = scmp.ne.s32.totalorder %s120, %s121
      %p135 = scmp.eq.s32.totalorder %s35, 1
      %p136 = por %p134, %p135
      %p138 = scmp.ne.s32.totalorder %s121, %s137
      %p139 = scmp.eq.s32.totalorder %s35, 0
      %p140 = por %p138, %p139
      %s142 = sadd.s32 %s141, 1
      %p145 = scmp.eq.s32.totalorder %s29, 1
      %p146 = scmp.ne.s32.totalorder %s141, %s143
      %p147 = scmp.eq.s32.totalorder %s29, 0
      %p148 = por %p146, %p147
      %p149 = scmp.ne.s32.totalorder %s141, %s143
      %p150 = scmp.eq.s32.totalorder %s34, 1
      %p151 = por %p149, %p150
      %p152 = scmp.ne.s32.totalorder %s143, %s144
      %p153 = scmp.eq.s32.totalorder %s34, 0
      %p154 = por %p152, %p153
      %p155 = scmp.ne.s32.totalorder %s143, %s144
      %p156 = scmp.eq.s32.totalorder %s35, 1
      %p157 = por %p155, %p156
      %p159 = scmp.ne.s32.totalorder %s144, %s158
      %p160 = scmp.eq.s32.totalorder %s35, 0
      %p161 = por %p159, %p160
      %s163 = sadd.s32 %s162, 1
      %p166 = scmp.eq.s32.totalorder %s29, 1
      %p167 = scmp.ne.s32.totalorder %s162, %s164
      %p168 = scmp.eq.s32.totalorder %s29, 0
      %p169 = por %p167, %p168
      %p170 = scmp.ne.s32.totalorder %s162, %s164
      %p171 = scmp.eq.s32.totalorder %s34, 1
      %p172 = por %p170, %p171
      %p173 = scmp.ne.s32.totalorder %s164, %s165
      %p174 = scmp.eq.s32.totalorder %s34, 0
      %p175 = por %p173, %p174
      %p176 = scmp.ne.s32.totalorder %s164, %s165
      %p177 = scmp.eq.s32.totalorder %s35, 1
      %p178 = por %p176, %p177
      %p180 = scmp.ne.s32.totalorder %s165, %s179
      %p181 = scmp.eq.s32.totalorder %s35, 0
      %p182 = por %p180, %p181
      %s184 = sadd.s32 %s183, 1
      %p187 = scmp.eq.s32.totalorder %s29, 1
      %p188 = scmp.ne.s32.totalorder %s183, %s185
      %p189 = scmp.eq.s32.totalorder %s29, 0
      %p190 = por %p188, %p189
      %p191 = scmp.ne.s32.totalorder %s183, %s185
      %p192 = scmp.eq.s32.totalorder %s34, 1
      %p193 = por %p191, %p192
      %p194 = scmp.ne.s32.totalorder %s185, %s186
      %p195 = scmp.eq.s32.totalorder %s34, 0
      %p196 = por %p194, %p195
      %p197 = scmp.ne.s32.totalorder %s185, %s186
      %p198 = scmp.eq.s32.totalorder %s35, 1
      %p199 = por %p197, %p198
      %p201 = scmp.ne.s32.totalorder %s186, %s200
      %p202 = scmp.eq.s32.totalorder %s35, 0
      %p203 = por %p201, %p202
      %s205 = sadd.s32 %s204, 1
      %p208 = scmp.eq.s32.totalorder %s29, 1
      %p209 = scmp.ne.s32.totalorder %s204, %s206
      %p210 = scmp.eq.s32.totalorder %s29, 0
      %p211 = por %p209, %p210
      %p212 = scmp.ne.s32.totalorder %s204, %s206
      %p213 = scmp.eq.s32.totalorder %s34, 1
      %p214 = por %p212, %p213
      %p215 = scmp.ne.s32.totalorder %s206, %s207
      %p216 = scmp.eq.s32.totalorder %s34, 0
      %p217 = por %p215, %p216
      %p218 = scmp.ne.s32.totalorder %s206, %s207
      %p219 = scmp.eq.s32.totalorder %s35, 1
      %p220 = por %p218, %p219
      %p222 = scmp.ne.s32.totalorder %s207, %s221
      %p223 = scmp.eq.s32.totalorder %s35, 0
      %p224 = por %p222, %p223
      %s226 = sadd.s32 %s225, 1
      %p229 = scmp.eq.s32.totalorder %s29, 1
      %p230 = scmp.ne.s32.totalorder %s225, %s227
      %p231 = scmp.eq.s32.totalorder %s29, 0
      %p232 = por %p230, %p231
      %p233 = scmp.ne.s32.totalorder %s225, %s227
      %p234 = scmp.eq.s32.totalorder %s34, 1
      %p235 = por %p233, %p234
      %p236 = scmp.ne.s32.totalorder %s227, %s228
      %p237 = scmp.eq.s32.totalorder %s34, 0
      %p238 = por %p236, %p237
      %p239 = scmp.ne.s32.totalorder %s227, %s228
      %p240 = scmp.eq.s32.totalorder %s35, 1
      %p241 = por %p239, %p240
      %p243 = scmp.ne.s32.totalorder %s228, %s242
      %p244 = scmp.eq.s32.totalorder %s35, 0
      %p245 = por %p243, %p244
      %s246 = ssub.s32 %s29, %s36
      %p247 = scmp.eq.s32.totalorder %s246, 0
      %s249 = sadd.s32 %s248, 1
      %s250 = scalar_select %p247, %s248, %s249
      %p253 = pneg %p247
      %p254 = scmp.eq.s32.totalorder %s29, 1
      %p255 = por %p253, %p254
      %p256 = scmp.ne.s32.totalorder %s248, %s251
      %p257 = scmp.eq.s32.totalorder %s29, 0
      %p258 = por %p256, %p257
      %p259 = scmp.ne.s32.totalorder %s248, %s251
      %p260 = scmp.eq.s32.totalorder %s34, 1
      %p261 = por %p259, %p260
      %p262 = scmp.ne.s32.totalorder %s251, %s252
      %p263 = scmp.eq.s32.totalorder %s34, 0
      %p264 = por %p262, %p263
      %p265 = scmp.ne.s32.totalorder %s251, %s252
      %p266 = scmp.eq.s32.totalorder %s35, 1
      %p267 = por %p265, %p266
      %p269 = scmp.ne.s32.totalorder %s252, %s268
      %p270 = scmp.eq.s32.totalorder %s35, 0
      %p271 = por %p269, %p270
      %p272 = scmp.le.s32.totalorder 1, %s29
      %p273 = scmp.lt.s32.totalorder %s29, 3
      %p274 = pnand %p272, %p273
      %p275 = pneg %p274
      // Predicated region
      $region9: #{tpu_custom_call.1} parent=5 // pred_check
        _
      $region10: #{tpu_custom_call.1} parent=5 // pred_check_branch
        %277 = sbr.rel (%p274) target = $region12
      $region11: #{tpu_custom_call.1} parent=5 // pred_region
        %s278 = ssub.s32 %s29, 1
        // Predicated region
        $region13: #{tpu_custom_call.1} parent=11 // pred_check
          %p279 = pneg %p154
        $region14: #{tpu_custom_call.1} parent=11 // pred_check_branch
          %281 = sbr.rel (%p279) target = $region16
        $region15: #{tpu_custom_call.1} parent=11 // pred_region
          %s283 = ssub.s32 18432, 18432
          %284 = vsyncadd [#allocation10], %s283
          %s285 = sshll.u32 [#allocation11], 4
          %s286 = int_to_ptr.vmem [resolvable:$true] %s285
          %291 = dma.hbm_to_vmem [thread:$0]  %s4, 18432, %s286, [#allocation10], 256, 256, 16
        $region16: #{tpu_custom_call.1} parent=11 // pred_fallthru
          _
        // Predicated region
        $region17: #{tpu_custom_call.1} parent=11 // pred_check
          %p292 = pneg %p175
        $region18: #{tpu_custom_call.1} parent=11 // pred_check_branch
          %294 = sbr.rel (%p292) target = $region20
        $region19: #{tpu_custom_call.1} parent=11 // pred_region
          _
        $region20: #{tpu_custom_call.1} parent=11 // pred_fallthru
          _
        // Predicated region
        $region21: #{tpu_custom_call.1} parent=11 // pred_check
          %p295 = pneg %p196
        $region22: #{tpu_custom_call.1} parent=11 // pred_check_branch
          %297 = sbr.rel (%p295) target = $region24
        $region23: #{tpu_custom_call.1} parent=11 // pred_region
          _
        $region24: #{tpu_custom_call.1} parent=11 // pred_fallthru
          _
        // Predicated region
        $region25: #{tpu_custom_call.1} parent=11 // pred_check
          %p298 = pneg %p217
        $region26: #{tpu_custom_call.1} parent=11 // pred_check_branch
          %300 = sbr.rel (%p298) target = $region28
        $region27: #{tpu_custom_call.1} parent=11 // pred_region
          %s302 = ssub.s32 1024, 1024
          %303 = vsyncadd [#allocation13], %s302
          %s304 = sshll.u32 [#allocation12], 4
          %s305 = int_to_ptr.vmem [resolvable:$true] %s304
          %310 = dma.hbm_to_vmem [thread:$0]  %s7, 1024, %s305, [#allocation13], 128, 128, 8
        $region28: #{tpu_custom_call.1} parent=11 // pred_fallthru
          _
        // Predicated region
        $region29: #{tpu_custom_call.1} parent=11 // pred_check
          %p311 = pneg %p238
        $region30: #{tpu_custom_call.1} parent=11 // pred_check_branch
          %313 = sbr.rel (%p311) target = $region32
        $region31: #{tpu_custom_call.1} parent=11 // pred_region
          _
        $region32: #{tpu_custom_call.1} parent=11 // pred_fallthru
          _
      $region12: #{tpu_custom_call.1} parent=5 // pred_fallthru
        _
      %p314 = scmp.lt.s32.totalorder %s29, 2
      // Predicated region
      $region33: #{tpu_custom_call.1} parent=5 // pred_check
        %p315 = pneg %p314
      $region34: #{tpu_custom_call.1} parent=5 // pred_check_branch
        %317 = sbr.rel (%p315) target = $region36
      $region35: #{tpu_custom_call.1} parent=5 // pred_region
        // Predicated region
        $region37: #{tpu_custom_call.1} parent=35 // pred_check
          %p318 = pneg %p49
        $region38: #{tpu_custom_call.1} parent=35 // pred_check_branch
          %320 = sbr.rel (%p318) target = $region40
        $region39: #{tpu_custom_call.1} parent=35 // pred_region
          %s321 = sand.u32 %s39, 1
          %s322 = scalar_lea.sflag [#allocation4], %s321
          %s323 = sand.u32 %s39, 1
          %s324 = smul.addr %s323, 512
          %s325 = scalar_lea.vmem [#allocation3], %s324
          %s327 = ssub.s32 8192, 8192
          %328 = vsyncadd %s322, %s327
          %s329 = smul.addr %s29, 64
          %s330 = smul.addr %s329, 128
          %s331 = scalar_lea.hbm %s0, %s330
          %s332 = sshll.u32 %s325, 4
          %s333 = int_to_ptr.vmem [resolvable:$true] %s332
          %338 = dma.hbm_to_vmem [thread:$0]  %s331, 8192, %s333, %s322, 1024, 1024, 64
        $region40: #{tpu_custom_call.1} parent=35 // pred_fallthru
          _
        // Predicated region
        $region41: #{tpu_custom_call.1} parent=35 // pred_check
          %p339 = pneg %p75
        $region42: #{tpu_custom_call.1} parent=35 // pred_check_branch
          %341 = sbr.rel (%p339) target = $region44
        $region43: #{tpu_custom_call.1} parent=35 // pred_region
          %s342 = sand.u32 %s29, 1
          %s343 = scalar_lea.sflag [#allocation7], %s342
          %s344 = sand.u32 %s65, 1
          %s345 = smul.addr %s344, 256
          %s346 = scalar_lea.vmem [#allocation6], %s345
          %s348 = ssub.s32 4096, 4096
          %349 = vsyncadd %s343, %s348
          %s350 = smul.addr %s29, 32
          %s351 = smul.addr %s350, 128
          %s352 = scalar_lea.hbm %s1, %s351
          %s353 = sshll.u32 %s346, 4
          %s354 = int_to_ptr.vmem [resolvable:$true] %s353
          %359 = dma.hbm_to_vmem [thread:$0]  %s352, 4096, %s354, %s343, 1024, 1024, 64
        $region44: #{tpu_custom_call.1} parent=35 // pred_fallthru
          _
        // Predicated region
        $region45: #{tpu_custom_call.1} parent=35 // pred_check
          %p360 = pneg %p101
        $region46: #{tpu_custom_call.1} parent=35 // pred_check_branch
          %362 = sbr.rel (%p360) target = $region48
        $region47: #{tpu_custom_call.1} parent=35 // pred_region
          %s363 = sand.u32 %s29, 1
          %s364 = scalar_lea.sflag [#allocation7], %s363
          %s365 = sand.u32 %s91, 1
          %s366 = smul.addr %s365, 256
          %s367 = scalar_lea.vmem [#allocation8], %s366
          %s369 = ssub.s32 4096, 4096
          %370 = vsyncadd %s364, %s369
          %s371 = smul.addr %s29, 32
          %s372 = smul.addr %s371, 128
          %s373 = scalar_lea.hbm %s2, %s372
          %s374 = sshll.u32 %s367, 4
          %s375 = int_to_ptr.vmem [resolvable:$true] %s374
          %380 = dma.hbm_to_vmem [thread:$0]  %s373, 4096, %s375, %s364, 1024, 1024, 64
        $region48: #{tpu_custom_call.1} parent=35 // pred_fallthru
          _
        // Predicated region
        $region49: #{tpu_custom_call.1} parent=35 // pred_check
          %p381 = pneg %p127
        $region50: #{tpu_custom_call.1} parent=35 // pred_check_branch
          %383 = sbr.rel (%p381) target = $region52
        $region51: #{tpu_custom_call.1} parent=35 // pred_region
          %s384 = sand.u32 %s29, 1
          %s385 = scalar_lea.sflag [#allocation10], %s384
          %s386 = sand.u32 %s117, 1
          %s387 = smul.addr %s386, 256
          %s388 = scalar_lea.vmem [#allocation9], %s387
          %s390 = ssub.s32 4096, 4096
          %391 = vsyncadd %s385, %s390
          %s392 = smul.addr %s29, 32
          %s393 = smul.addr %s392, 128
          %s394 = scalar_lea.hbm %s3, %s393
          %s395 = sshll.u32 %s388, 4
          %s396 = int_to_ptr.vmem [resolvable:$true] %s395
          %401 = dma.hbm_to_vmem [thread:$0]  %s394, 4096, %s396, %s385, 1024, 1024, 64
        $region52: #{tpu_custom_call.1} parent=35 // pred_fallthru
          _
      $region36: #{tpu_custom_call.1} parent=5 // pred_fallthru
        _
      %p402 = scmp.le.s32.totalorder 1, %s29
      %p403 = scmp.lt.s32.totalorder %s29, 3
      %p404 = pnand %p402, %p403
      %p405 = pneg %p404
      // Predicated region
      $region53: #{tpu_custom_call.1} parent=5 // pred_check
        _
      $region54: #{tpu_custom_call.1} parent=5 // pred_check_branch
        %407 = sbr.rel (%p404) target = $region56
      $region55: #{tpu_custom_call.1} parent=5 // pred_region
        %s408 = ssub.s32 %s29, 1
        %s409 = sand.u32 %s42, 1
        %s410 = scalar_lea.sflag [#allocation4], %s409
        %s411 = sand.u32 %s42, 1
        %s412 = smul.addr %s411, 512
        %s413 = scalar_lea.vmem [#allocation3], %s412
        // Predicated region
        $region57: #{tpu_custom_call.1} parent=55 // pred_check
          %p414 = pneg %p55
        $region58: #{tpu_custom_call.1} parent=55 // pred_check_branch
          %416 = sbr.rel (%p414) target = $region60
        $region59: #{tpu_custom_call.1} parent=55 // pred_region
          %417 = dma.done %s410, 8192
        $region60: #{tpu_custom_call.1} parent=55 // pred_fallthru
          _
        %s418 = sand.u32 %s34, 1
        %s419 = scalar_lea.sflag [#allocation7], %s418
        %s420 = sand.u32 %s68, 1
        %s421 = smul.addr %s420, 256
        %s422 = scalar_lea.vmem [#allocation6], %s421
        // Predicated region
        $region61: #{tpu_custom_call.1} parent=55 // pred_check
          %p423 = pneg %p81
        $region62: #{tpu_custom_call.1} parent=55 // pred_check_branch
          %425 = sbr.rel (%p423) target = $region64
        $region63: #{tpu_custom_call.1} parent=55 // pred_region
          %426 = dma.done %s419, 4096
        $region64: #{tpu_custom_call.1} parent=55 // pred_fallthru
          _
        %s427 = sand.u32 %s34, 1
        %s428 = scalar_lea.sflag [#allocation7], %s427
        %s429 = sand.u32 %s94, 1
        %s430 = smul.addr %s429, 256
        %s431 = scalar_lea.vmem [#allocation8], %s430
        // Predicated region
        $region65: #{tpu_custom_call.1} parent=55 // pred_check
          %p432 = pneg %p107
        $region66: #{tpu_custom_call.1} parent=55 // pred_check_branch
          %434 = sbr.rel (%p432) target = $region68
        $region67: #{tpu_custom_call.1} parent=55 // pred_region
          %435 = dma.done %s428, 4096
        $region68: #{tpu_custom_call.1} parent=55 // pred_fallthru
          _
        %s436 = sand.u32 %s34, 1
        %s437 = scalar_lea.sflag [#allocation10], %s436
        %s438 = sand.u32 %s120, 1
        %s439 = smul.addr %s438, 256
        %s440 = scalar_lea.vmem [#allocation9], %s439
        // Predicated region
        $region69: #{tpu_custom_call.1} parent=55 // pred_check
          %p441 = pneg %p133
        $region70: #{tpu_custom_call.1} parent=55 // pred_check_branch
          %443 = sbr.rel (%p441) target = $region72
        $region71: #{tpu_custom_call.1} parent=55 // pred_region
          %444 = dma.done %s437, 4096
        $region72: #{tpu_custom_call.1} parent=55 // pred_fallthru
          _
        // Predicated region
        $region73: #{tpu_custom_call.1} parent=55 // pred_check
          %p445 = pneg %p154
        $region74: #{tpu_custom_call.1} parent=55 // pred_check_branch
          %447 = sbr.rel (%p445) target = $region76
        $region75: #{tpu_custom_call.1} parent=55 // pred_region
          %448 = dma.done [#allocation10], 18432
        $region76: #{tpu_custom_call.1} parent=55 // pred_fallthru
          _
        // Predicated region
        $region77: #{tpu_custom_call.1} parent=55 // pred_check
          %p449 = pneg %p217
        $region78: #{tpu_custom_call.1} parent=55 // pred_check_branch
          %451 = sbr.rel (%p449) target = $region80
        $region79: #{tpu_custom_call.1} parent=55 // pred_region
          %452 = dma.done [#allocation13], 1024
        $region80: #{tpu_custom_call.1} parent=55 // pred_fallthru
          _
        %s453 = sand.u32 %s42, 1
        %s454 = scalar_lea.sflag [#allocation4], %s453
        %s455 = sand.u32 %s42, 1
        %s456 = smul.addr %s455, 512
        %s457 = scalar_lea.vmem [#allocation3], %s456
        %p458 = pneg %p55
        %p459 = pneg %p52
        %s460 = sand.u32 %s34, 1
        %s461 = scalar_lea.sflag [#allocation7], %s460
        %s462 = sand.u32 %s68, 1
        %s463 = smul.addr %s462, 256
        %s464 = scalar_lea.vmem [#allocation6], %s463
        %p465 = pneg %p81
        %p466 = pneg %p78
        %s467 = sand.u32 %s34, 1
        %s468 = scalar_lea.sflag [#allocation7], %s467
        %s469 = sand.u32 %s94, 1
        %s470 = smul.addr %s469, 256
        %s471 = scalar_lea.vmem [#allocation8], %s470
        %p472 = pneg %p107
        %p473 = pneg %p104
        %s474 = sand.u32 %s34, 1
        %s475 = scalar_lea.sflag [#allocation10], %s474
        %s476 = sand.u32 %s120, 1
        %s477 = smul.addr %s476, 256
        %s478 = scalar_lea.vmem [#allocation9], %s477
        %p479 = pneg %p133
        %p480 = pneg %p130
        %p481 = pneg %p154
        %p482 = pneg %p151
        %p483 = pneg %p175
        %p484 = pneg %p172
        %p485 = pneg %p196
        %p486 = pneg %p193
        %p487 = pneg %p217
        %p488 = pneg %p214
        %p489 = pneg %p238
        %p490 = pneg %p235
        %p491 = pneg %p264
        %p492 = pneg %p261
        %s493 = sand.u32 %s251, 1
        %s494 = scalar_lea.sflag [#allocation5], %s493
        %s495 = sand.u32 %s251, 1
        %s496 = smul.addr %s495, 512
        %s497 = scalar_lea.vmem [#allocation14], %s496
        %v498 = vld [vmem:[%s413] sm:$0xff]
        %v499 = vld [vmem:[%s413 + $0x8] sm:$0xff]
        %v500 = vld [vmem:[%s413 + $0x10] sm:$0xff]
        %v501 = vld [vmem:[%s413 + $0x18] sm:$0xff]
        %v502 = vld [vmem:[%s413 + $0x20] sm:$0xff]
        %v503 = vld [vmem:[%s413 + $0x28] sm:$0xff]
        %v504 = vld [vmem:[%s413 + $0x30] sm:$0xff]
        %v505 = vld [vmem:[%s413 + $0x38] sm:$0xff]
        %v506 = vld [vmem:[%s413 + $0x40] sm:$0xff]
        %v507 = vld [vmem:[%s413 + $0x48] sm:$0xff]
        %v508 = vld [vmem:[%s413 + $0x50] sm:$0xff]
        %v509 = vld [vmem:[%s413 + $0x58] sm:$0xff]
        %v510 = vld [vmem:[%s413 + $0x60] sm:$0xff]
        %v511 = vld [vmem:[%s413 + $0x68] sm:$0xff]
        %v512 = vld [vmem:[%s413 + $0x70] sm:$0xff]
        %v513 = vld [vmem:[%s413 + $0x78] sm:$0xff]
        %v514 = vld [vmem:[%s413 + $0x80] sm:$0xff]
        %v515 = vld [vmem:[%s413 + $0x88] sm:$0xff]
        %v516 = vld [vmem:[%s413 + $0x90] sm:$0xff]
        %v517 = vld [vmem:[%s413 + $0x98] sm:$0xff]
        %v518 = vld [vmem:[%s413 + $0xa0] sm:$0xff]
        %v519 = vld [vmem:[%s413 + $0xa8] sm:$0xff]
        %v520 = vld [vmem:[%s413 + $0xb0] sm:$0xff]
        %v521 = vld [vmem:[%s413 + $0xb8] sm:$0xff]
        %v522 = vld [vmem:[%s413 + $0xc0] sm:$0xff]
        %v523 = vld [vmem:[%s413 + $0xc8] sm:$0xff]
        %v524 = vld [vmem:[%s413 + $0xd0] sm:$0xff]
        %v525 = vld [vmem:[%s413 + $0xd8] sm:$0xff]
        %v526 = vld [vmem:[%s413 + $0xe0] sm:$0xff]
        %v527 = vld [vmem:[%s413 + $0xe8] sm:$0xff]
        %v528 = vld [vmem:[%s413 + $0xf0] sm:$0xff]
        %v529 = vld [vmem:[%s413 + $0xf8] sm:$0xff]
        %v530 = vld [vmem:[%s413 + $0x100] sm:$0xff]
        %v531 = vld [vmem:[%s413 + $0x108] sm:$0xff]
        %v532 = vld [vmem:[%s413 + $0x110] sm:$0xff]
        %v533 = vld [vmem:[%s413 + $0x118] sm:$0xff]
        %v534 = vld [vmem:[%s413 + $0x120] sm:$0xff]
        %v535 = vld [vmem:[%s413 + $0x128] sm:$0xff]
        %v536 = vld [vmem:[%s413 + $0x130] sm:$0xff]
        %v537 = vld [vmem:[%s413 + $0x138] sm:$0xff]
        %v538 = vld [vmem:[%s413 + $0x140] sm:$0xff]
        %v539 = vld [vmem:[%s413 + $0x148] sm:$0xff]
        %v540 = vld [vmem:[%s413 + $0x150] sm:$0xff]
        %v541 = vld [vmem:[%s413 + $0x158] sm:$0xff]
        %v542 = vld [vmem:[%s413 + $0x160] sm:$0xff]
        %v543 = vld [vmem:[%s413 + $0x168] sm:$0xff]
        %v544 = vld [vmem:[%s413 + $0x170] sm:$0xff]
        %v545 = vld [vmem:[%s413 + $0x178] sm:$0xff]
        %v546 = vld [vmem:[%s413 + $0x180] sm:$0xff]
        %v547 = vld [vmem:[%s413 + $0x188] sm:$0xff]
        %v548 = vld [vmem:[%s413 + $0x190] sm:$0xff]
        %v549 = vld [vmem:[%s413 + $0x198] sm:$0xff]
        %v550 = vld [vmem:[%s413 + $0x1a0] sm:$0xff]
        %v551 = vld [vmem:[%s413 + $0x1a8] sm:$0xff]
        %v552 = vld [vmem:[%s413 + $0x1b0] sm:$0xff]
        %v553 = vld [vmem:[%s413 + $0x1b8] sm:$0xff]
        %v554 = vld [vmem:[%s413 + $0x1c0] sm:$0xff]
        %v555 = vld [vmem:[%s413 + $0x1c8] sm:$0xff]
        %v556 = vld [vmem:[%s413 + $0x1d0] sm:$0xff]
        %v557 = vld [vmem:[%s413 + $0x1d8] sm:$0xff]
        %v558 = vld [vmem:[%s413 + $0x1e0] sm:$0xff]
        %v559 = vld [vmem:[%s413 + $0x1e8] sm:$0xff]
        %v560 = vld [vmem:[%s413 + $0x1f0] sm:$0xff]
        %v561 = vld [vmem:[%s413 + $0x1f8] sm:$0xff]
        %v562 = vld [vmem:[%s422] sm:$0xff]
        %v563 = vld [vmem:[%s422 + $0x8] sm:$0xff]
        %v564 = vld [vmem:[%s422 + $0x10] sm:$0xff]
        %v565 = vld [vmem:[%s422 + $0x18] sm:$0xff]
        %v566 = vld [vmem:[%s422 + $0x20] sm:$0xff]
        %v567 = vld [vmem:[%s422 + $0x28] sm:$0xff]
        %v568 = vld [vmem:[%s422 + $0x30] sm:$0xff]
        %v569 = vld [vmem:[%s422 + $0x38] sm:$0xff]
        %v570 = vld [vmem:[%s422 + $0x40] sm:$0xff]
        %v571 = vld [vmem:[%s422 + $0x48] sm:$0xff]
        %v572 = vld [vmem:[%s422 + $0x50] sm:$0xff]
        %v573 = vld [vmem:[%s422 + $0x58] sm:$0xff]
        %v574 = vld [vmem:[%s422 + $0x60] sm:$0xff]
        %v575 = vld [vmem:[%s422 + $0x68] sm:$0xff]
        %v576 = vld [vmem:[%s422 + $0x70] sm:$0xff]
        %v577 = vld [vmem:[%s422 + $0x78] sm:$0xff]
        %v578 = vld [vmem:[%s422 + $0x80] sm:$0xff]
        %v579 = vld [vmem:[%s422 + $0x88] sm:$0xff]
        %v580 = vld [vmem:[%s422 + $0x90] sm:$0xff]
        %v581 = vld [vmem:[%s422 + $0x98] sm:$0xff]
        %v582 = vld [vmem:[%s422 + $0xa0] sm:$0xff]
        %v583 = vld [vmem:[%s422 + $0xa8] sm:$0xff]
        %v584 = vld [vmem:[%s422 + $0xb0] sm:$0xff]
        %v585 = vld [vmem:[%s422 + $0xb8] sm:$0xff]
        %v586 = vld [vmem:[%s422 + $0xc0] sm:$0xff]
        %v587 = vld [vmem:[%s422 + $0xc8] sm:$0xff]
        %v588 = vld [vmem:[%s422 + $0xd0] sm:$0xff]
        %v589 = vld [vmem:[%s422 + $0xd8] sm:$0xff]
        %v590 = vld [vmem:[%s422 + $0xe0] sm:$0xff]
        %v591 = vld [vmem:[%s422 + $0xe8] sm:$0xff]
        %v592 = vld [vmem:[%s422 + $0xf0] sm:$0xff]
        %v593 = vld [vmem:[%s422 + $0xf8] sm:$0xff]
        %v594 = vld [vmem:[%s431] sm:$0xff]
        %v595 = vld [vmem:[%s431 + $0x8] sm:$0xff]
        %v596 = vld [vmem:[%s431 + $0x10] sm:$0xff]
        %v597 = vld [vmem:[%s431 + $0x18] sm:$0xff]
        %v598 = vld [vmem:[%s431 + $0x20] sm:$0xff]
        %v599 = vld [vmem:[%s431 + $0x28] sm:$0xff]
        %v600 = vld [vmem:[%s431 + $0x30] sm:$0xff]
        %v601 = vld [vmem:[%s431 + $0x38] sm:$0xff]
        %v602 = vld [vmem:[%s431 + $0x40] sm:$0xff]
        %v603 = vld [vmem:[%s431 + $0x48] sm:$0xff]
        %v604 = vld [vmem:[%s431 + $0x50] sm:$0xff]
        %v605 = vld [vmem:[%s431 + $0x58] sm:$0xff]
        %v606 = vld [vmem:[%s431 + $0x60] sm:$0xff]
        %v607 = vld [vmem:[%s431 + $0x68] sm:$0xff]
        %v608 = vld [vmem:[%s431 + $0x70] sm:$0xff]
        %v609 = vld [vmem:[%s431 + $0x78] sm:$0xff]
        %v610 = vld [vmem:[%s431 + $0x80] sm:$0xff]
        %v611 = vld [vmem:[%s431 + $0x88] sm:$0xff]
        %v612 = vld [vmem:[%s431 + $0x90] sm:$0xff]
        %v613 = vld [vmem:[%s431 + $0x98] sm:$0xff]
        %v614 = vld [vmem:[%s431 + $0xa0] sm:$0xff]
        %v615 = vld [vmem:[%s431 + $0xa8] sm:$0xff]
        %v616 = vld [vmem:[%s431 + $0xb0] sm:$0xff]
        %v617 = vld [vmem:[%s431 + $0xb8] sm:$0xff]
        %v618 = vld [vmem:[%s431 + $0xc0] sm:$0xff]
        %v619 = vld [vmem:[%s431 + $0xc8] sm:$0xff]
        %v620 = vld [vmem:[%s431 + $0xd0] sm:$0xff]
        %v621 = vld [vmem:[%s431 + $0xd8] sm:$0xff]
        %v622 = vld [vmem:[%s431 + $0xe0] sm:$0xff]
        %v623 = vld [vmem:[%s431 + $0xe8] sm:$0xff]
        %v624 = vld [vmem:[%s431 + $0xf0] sm:$0xff]
        %v625 = vld [vmem:[%s431 + $0xf8] sm:$0xff]
        %v626 = vld [vmem:[%s440] sm:$0xff]
        %v627 = vld [vmem:[%s440 + $0x8] sm:$0xff]
        %v628 = vld [vmem:[%s440 + $0x10] sm:$0xff]
        %v629 = vld [vmem:[%s440 + $0x18] sm:$0xff]
        %v630 = vld [vmem:[%s440 + $0x20] sm:$0xff]
        %v631 = vld [vmem:[%s440 + $0x28] sm:$0xff]
        %v632 = vld [vmem:[%s440 + $0x30] sm:$0xff]
        %v633 = vld [vmem:[%s440 + $0x38] sm:$0xff]
        %v634 = vld [vmem:[%s440 + $0x40] sm:$0xff]
        %v635 = vld [vmem:[%s440 + $0x48] sm:$0xff]
        %v636 = vld [vmem:[%s440 + $0x50] sm:$0xff]
        %v637 = vld [vmem:[%s440 + $0x58] sm:$0xff]
        %v638 = vld [vmem:[%s440 + $0x60] sm:$0xff]
        %v639 = vld [vmem:[%s440 + $0x68] sm:$0xff]
        %v640 = vld [vmem:[%s440 + $0x70] sm:$0xff]
        %v641 = vld [vmem:[%s440 + $0x78] sm:$0xff]
        %v642 = vld [vmem:[%s440 + $0x80] sm:$0xff]
        %v643 = vld [vmem:[%s440 + $0x88] sm:$0xff]
        %v644 = vld [vmem:[%s440 + $0x90] sm:$0xff]
        %v645 = vld [vmem:[%s440 + $0x98] sm:$0xff]
        %v646 = vld [vmem:[%s440 + $0xa0] sm:$0xff]
        %v647 = vld [vmem:[%s440 + $0xa8] sm:$0xff]
        %v648 = vld [vmem:[%s440 + $0xb0] sm:$0xff]
        %v649 = vld [vmem:[%s440 + $0xb8] sm:$0xff]
        %v650 = vld [vmem:[%s440 + $0xc0] sm:$0xff]
        %v651 = vld [vmem:[%s440 + $0xc8] sm:$0xff]
        %v652 = vld [vmem:[%s440 + $0xd0] sm:$0xff]
        %v653 = vld [vmem:[%s440 + $0xd8] sm:$0xff]
        %v654 = vld [vmem:[%s440 + $0xe0] sm:$0xff]
        %v655 = vld [vmem:[%s440 + $0xe8] sm:$0xff]
        %v656 = vld [vmem:[%s440 + $0xf0] sm:$0xff]
        %v657 = vld [vmem:[%s440 + $0xf8] sm:$0xff]
        %s658 = scalar_lea.vmem [#allocation11], 512
        %v659 = vld [vmem:[%s658] sm:$0xff]
        %v660 = vld [vmem:[%s658 + $0x8] sm:$0xff]
        %v661 = vld [vmem:[%s658 + $0x10] sm:$0xff]
        %v662 = vld [vmem:[%s658 + $0x18] sm:$0xff]
        %v663 = vld [vmem:[%s658 + $0x20] sm:$0xff]
        %v664 = vld [vmem:[%s658 + $0x28] sm:$0xff]
        %v665 = vld [vmem:[%s658 + $0x30] sm:$0xff]
        %v666 = vld [vmem:[%s658 + $0x38] sm:$0xff]
        %v667 = vld [vmem:[%s658 + $0x40] sm:$0xff]
        %v668 = vld [vmem:[%s658 + $0x48] sm:$0xff]
        %v669 = vld [vmem:[%s658 + $0x50] sm:$0xff]
        %v670 = vld [vmem:[%s658 + $0x58] sm:$0xff]
        %v671 = vld [vmem:[%s658 + $0x60] sm:$0xff]
        %v672 = vld [vmem:[%s658 + $0x68] sm:$0xff]
        %v673 = vld [vmem:[%s658 + $0x70] sm:$0xff]
        %v674 = vld [vmem:[%s658 + $0x78] sm:$0xff]
        %v675 = vld [vmem:[%s5] sm:$0xff]
        %v676 = vld [vmem:[%s5 + $0x8] sm:$0xff]
        %v677 = vld [vmem:[%s5 + $0x10] sm:$0xff]
        %v678 = vld [vmem:[%s5 + $0x18] sm:$0xff]
        %v679 = vld [vmem:[%s5 + $0x20] sm:$0xff]
        %v680 = vld [vmem:[%s5 + $0x28] sm:$0xff]
        %v681 = vld [vmem:[%s5 + $0x30] sm:$0xff]
        %v682 = vld [vmem:[%s5 + $0x38] sm:$0xff]
        %684 = vset.pattern.permute.xlu0 0
        %685 = vperm.xlu0 %684, %v675
        %v686 = vpop.permute.xlu0 %685
        %689 = vset.pattern.permute.xlu0 0
        %690 = vperm.xlu0 %689, %v676
        %v691 = vpop.permute.xlu0 %690
        %694 = vset.pattern.permute.xlu0 0
        %695 = vperm.xlu0 %694, %v677
        %v696 = vpop.permute.xlu0 %695
        %699 = vset.pattern.permute.xlu0 0
        %700 = vperm.xlu0 %699, %v678
        %v701 = vpop.permute.xlu0 %700
        %704 = vset.pattern.permute.xlu0 0
        %705 = vperm.xlu0 %704, %v679
        %v706 = vpop.permute.xlu0 %705
        %709 = vset.pattern.permute.xlu0 0
        %710 = vperm.xlu0 %709, %v680
        %v711 = vpop.permute.xlu0 %710
        %714 = vset.pattern.permute.xlu0 0
        %715 = vperm.xlu0 %714, %v681
        %v716 = vpop.permute.xlu0 %715
        %719 = vset.pattern.permute.xlu0 0
        %720 = vperm.xlu0 %719, %v682
        %v721 = vpop.permute.xlu0 %720
        %vm723 = vcmask 261120
        %v725 = vsel %vm723, %v660, 0
        %v728 = vsel %vm723, %v662, 0
        %v731 = vsel %vm723, %v664, 0
        %v734 = vsel %vm723, %v666, 0
        %v737 = vsel %vm723, %v668, 0
        %v740 = vsel %vm723, %v670, 0
        %v743 = vsel %vm723, %v672, 0
        %v746 = vsel %vm723, %v674, 0
        %748 = vmatprep.subr.mxu0 %v499
        %749 = vmatpush1.msra.mxu0 %v498
        %750 = vmatprep.subr.mxu0 %v507
        %751 = vmatpush1.msra.mxu0 %v506
        %752 = vmatprep.subr.mxu0 %v515
        %753 = vmatpush1.msra.mxu0 %v514
        %754 = vmatprep.subr.mxu0 %v523
        %755 = vmatpush1.msra.mxu0 %v522
        %756 = vmatprep.subr.mxu0 %v531
        %757 = vmatpush1.msra.mxu0 %v530
        %758 = vmatprep.subr.mxu0 %v539
        %759 = vmatpush1.msra.mxu0 %v538
        %760 = vmatprep.subr.mxu0 %v547
        %761 = vmatpush1.msra.mxu0 %v546
        %762 = vmatprep.subr.mxu0 %v555
        %763 = vmatpush1.msra.mxu0 %v554
        %764 = vmatprep.subr.mxu0 %v563
        %765 = vmatpush1.msra.mxu0 %v562
        %766 = vmatprep.subr.mxu0 %v571
        %767 = vmatpush1.msra.mxu0 %v570
        %768 = vmatprep.subr.mxu0 %v579
        %769 = vmatpush1.msra.mxu0 %v578
        %770 = vmatprep.subr.mxu0 %v587
        %771 = vmatpush1.msra.mxu0 %v586
        %772 = vmatprep.subr.mxu0 %v595
        %773 = vmatpush1.msra.mxu0 %v594
        %774 = vmatprep.subr.mxu0 %v603
        %775 = vmatpush1.msra.mxu0 %v602
        %776 = vmatprep.subr.mxu0 %v611
        %777 = vmatpush1.msra.mxu0 %v610
        %778 = vmatprep.subr.mxu0 %v619
        %779 = vmatpush1.msra.mxu0 %v618
        %780 = vmatprep.subr.mxu0 %v627
        %781 = vmatpush1.msra.mxu0 %v626
        %782 = vmatprep.subr.mxu0 %v635
        %783 = vmatpush1.msra.mxu0 %v634
        %784 = vmatprep.subr.mxu0 %v643
        %785 = vmatpush1.msra.mxu0 %v642
        %786 = vmatprep.subr.mxu0 %v651
        %787 = vmatpush1.msra.mxu0 %v650
        %788 = vmatprep.subr.mxu0 0.0
        %789 = vmatpush1.msra.mxu0 0.0
        %790 = vmatprep.subr.mxu0 0.0
        %791 = vmatpush1.msra.mxu0 0.0
        %792 = vmatprep.subr.mxu0 0.0
        %793 = vmatpush1.msra.mxu0 0.0
        %794 = vmatprep.subr.mxu0 0.0
        %795 = vmatpush1.msra.mxu0 0.0
        %796 = vmatprep.subr.mxu0 0.0
        %797 = vmatpush1.msra.mxu0 0.0
        %798 = vmatprep.subr.mxu0 0.0
        %799 = vmatpush1.msra.mxu0 0.0
        %800 = vmatprep.subr.mxu0 0.0
        %801 = vmatpush1.msra.mxu0 0.0
        %802 = vmatprep.subr.mxu0 0.0
        %803 = vmatpush1.msra.mxu0 0.0
        %804 = vmatprep.subr.mxu0 0.0
        %805 = vmatpush1.msra.mxu0 0.0
        %806 = vmatprep.subr.mxu0 0.0
        %807 = vmatpush1.msra.mxu0 0.0
        %808 = vmatprep.subr.mxu0 0.0
        %809 = vmatpush1.msra.mxu0 0.0
        %810 = vmatprep.subr.mxu0 0.0
        %811 = vmatpush1.msra.mxu0 0.0
        %812 = vmatprep.mubr.f32.mxu0 %v725
        %813 = vmatmul.mubr.f32.gmra.mrb[0].mxu0 %v659
        %v814 = vpop.f32.mrb[0].mxu0
        %v815 = vadd.f32 %v686, %v814
        %v816 = vpop.f32.mrb[0].mxu0
        %v817 = vadd.f32 %v686, %v816
        %818 = vmatprep.mubr.f32.mxu0 %v728
        %819 = vmatmul.mubr.f32.gmra.mrb[0].mxu0 %v661
        %v820 = vpop.f32.mrb[0].mxu0
        %v821 = vadd.f32 %v691, %v820
        %v822 = vpop.f32.mrb[0].mxu0
        %v823 = vadd.f32 %v691, %v822
        %824 = vmatprep.mubr.f32.mxu0 %v731
        %825 = vmatmul.mubr.f32.gmra.mrb[0].mxu0 %v663
        %v826 = vpop.f32.mrb[0].mxu0
        %v827 = vadd.f32 %v696, %v826
        %v828 = vpop.f32.mrb[0].mxu0
        %v829 = vadd.f32 %v696, %v828
        %830 = vmatprep.mubr.f32.mxu0 %v734
        %831 = vmatmul.mubr.f32.gmra.mrb[0].mxu0 %v665
        %v832 = vpop.f32.mrb[0].mxu0
        %v833 = vadd.f32 %v701, %v832
        %v834 = vpop.f32.mrb[0].mxu0
        %v835 = vadd.f32 %v701, %v834
        %836 = vmatprep.mubr.f32.mxu0 %v737
        %837 = vmatmul.mubr.f32.gmra.mrb[0].mxu0 %v667
        %v838 = vpop.f32.mrb[0].mxu0
        %v839 = vadd.f32 %v706, %v838
        %v840 = vpop.f32.mrb[0].mxu0
        %v841 = vadd.f32 %v706, %v840
        %842 = vmatprep.mubr.f32.mxu0 %v740
        %843 = vmatmul.mubr.f32.gmra.mrb[0].mxu0 %v669
        %v844 = vpop.f32.mrb[0].mxu0
        %v845 = vadd.f32 %v711, %v844
        %v846 = vpop.f32.mrb[0].mxu0
        %v847 = vadd.f32 %v711, %v846
        %848 = vmatprep.mubr.f32.mxu0 %v743
        %849 = vmatmul.mubr.f32.gmra.mrb[0].mxu0 %v671
        %v850 = vpop.f32.mrb[0].mxu0
        %v851 = vadd.f32 %v716, %v850
        %v852 = vpop.f32.mrb[0].mxu0
        %v853 = vadd.f32 %v716, %v852
        %854 = vmatprep.mubr.f32.mxu0 %v746
        %855 = vmatmul.mubr.f32.gmra.mrb[0].mxu0 %v673
        %v856 = vpop.f32.mrb[0].mxu0
        %v857 = vadd.f32 %v721, %v856
        %v858 = vpop.f32.mrb[0].mxu0
        %v859 = vadd.f32 %v721, %v858
        %860 = vdwg.mxu0
        %861 = vmatprep.subr.mxu0 %v501
        %862 = vmatpush1.msra.mxu0 %v500
        %863 = vmatprep.subr.mxu0 %v509
        %864 = vmatpush1.msra.mxu0 %v508
        %865 = vmatprep.subr.mxu0 %v517
        %866 = vmatpush1.msra.mxu0 %v516
        %867 = vmatprep.subr.mxu0 %v525
        %868 = vmatpush1.msra.mxu0 %v524
        %869 = vmatprep.subr.mxu0 %v533
        %870 = vmatpush1.msra.mxu0 %v532
        %871 = vmatprep.subr.mxu0 %v541
        %872 = vmatpush1.msra.mxu0 %v540
        %873 = vmatprep.subr.mxu0 %v549
        %874 = vmatpush1.msra.mxu0 %v548
        %875 = vmatprep.subr.mxu0 %v557
        %876 = vmatpush1.msra.mxu0 %v556
        %877 = vmatprep.subr.mxu0 %v565
        %878 = vmatpush1.msra.mxu0 %v564
        %879 = vmatprep.subr.mxu0 %v573
        %880 = vmatpush1.msra.mxu0 %v572
        %881 = vmatprep.subr.mxu0 %v581
        %882 = vmatpush1.msra.mxu0 %v580
        %883 = vmatprep.subr.mxu0 %v589
        %884 = vmatpush1.msra.mxu0 %v588
        %885 = vmatprep.subr.mxu0 %v597
        %886 = vmatpush1.msra.mxu0 %v596
        %887 = vmatprep.subr.mxu0 %v605
        %888 = vmatpush1.msra.mxu0 %v604
        %889 = vmatprep.subr.mxu0 %v613
        %890 = vmatpush1.msra.mxu0 %v612
        %891 = vmatprep.subr.mxu0 %v621
        %892 = vmatpush1.msra.mxu0 %v620
        %893 = vmatprep.subr.mxu0 %v629
        %894 = vmatpush1.msra.mxu0 %v628
        %895 = vmatprep.subr.mxu0 %v637
        %896 = vmatpush1.msra.mxu0 %v636
        %897 = vmatprep.subr.mxu0 %v645
        %898 = vmatpush1.msra.mxu0 %v644
        %899 = vmatprep.subr.mxu0 %v653
        %900 = vmatpush1.msra.mxu0 %v652
        %901 = vmatprep.subr.mxu0 0.0
        %902 = vmatpush1.msra.mxu0 0.0
        %903 = vmatprep.subr.mxu0 0.0
        %904 = vmatpush1.msra.mxu0 0.0
        %905 = vmatprep.subr.mxu0 0.0
        %906 = vmatpush1.msra.mxu0 0.0
        %907 = vmatprep.subr.mxu0 0.0
        %908 = vmatpush1.msra.mxu0 0.0
        %909 = vmatprep.subr.mxu0 0.0
        %910 = vmatpush1.msra.mxu0 0.0
        %911 = vmatprep.subr.mxu0 0.0
        %912 = vmatpush1.msra.mxu0 0.0
        %913 = vmatprep.subr.mxu0 0.0
        %914 = vmatpush1.msra.mxu0 0.0
        %915 = vmatprep.subr.mxu0 0.0
        %916 = vmatpush1.msra.mxu0 0.0
        %917 = vmatprep.subr.mxu0 0.0
        %918 = vmatpush1.msra.mxu0 0.0
        %919 = vmatprep.subr.mxu0 0.0
        %920 = vmatpush1.msra.mxu0 0.0
        %921 = vmatprep.subr.mxu0 0.0
        %922 = vmatpush1.msra.mxu0 0.0
        %923 = vmatprep.subr.mxu0 0.0
        %924 = vmatpush1.msra.mxu0 0.0
        %925 = vmatprep.mubr.f32.mxu0 %v725
        %926 = vmatmul.mubr.f32.gmra.mrb[0].mxu0 %v659
        %v927 = vpop.f32.mrb[0].mxu0
        %v928 = vadd.f32 %v686, %v927
        %v929 = vpop.f32.mrb[0].mxu0
        %v930 = vadd.f32 %v686, %v929
        %931 = vmatprep.mubr.f32.mxu0 %v728
        %932 = vmatmul.mubr.f32.gmra.mrb[0].mxu0 %v661
        %v933 = vpop.f32.mrb[0].mxu0
        %v934 = vadd.f32 %v691, %v933
        %v935 = vpop.f32.mrb[0].mxu0
        %v936 = vadd.f32 %v691, %v935
        %937 = vmatprep.mubr.f32.mxu0 %v731
        %938 = vmatmul.mubr.f32.gmra.mrb[0].mxu0 %v663
        %v939 = vpop.f32.mrb[0].mxu0
        %v940 = vadd.f32 %v696, %v939
        %v941 = vpop.f32.mrb[0].mxu0
        %v942 = vadd.f32 %v696, %v941
        %943 = vmatprep.mubr.f32.mxu0 %v734
        %944 = vmatmul.mubr.f32.gmra.mrb[0].mxu0 %v665
        %v945 = vpop.f32.mrb[0].mxu0
        %v946 = vadd.f32 %v701, %v945
        %v947 = vpop.f32.mrb[0].mxu0
        %v948 = vadd.f32 %v701, %v947
        %949 = vmatprep.mubr.f32.mxu0 %v737
        %950 = vmatmul.mubr.f32.gmra.mrb[0].mxu0 %v667
        %v951 = vpop.f32.mrb[0].mxu0
        %v952 = vadd.f32 %v706, %v951
        %v953 = vpop.f32.mrb[0].mxu0
        %v954 = vadd.f32 %v706, %v953
        %955 = vmatprep.mubr.f32.mxu0 %v740
        %956 = vmatmul.mubr.f32.gmra.mrb[0].mxu0 %v669
        %v957 = vpop.f32.mrb[0].mxu0
        %v958 = vadd.f32 %v711, %v957
        %v959 = vpop.f32.mrb[0].mxu0
        %v960 = vadd.f32 %v711, %v959
        %961 = vmatprep.mubr.f32.mxu0 %v743
        %962 = vmatmul.mubr.f32.gmra.mrb[0].mxu0 %v671
        %v963 = vpop.f32.mrb[0].mxu0
        %v964 = vadd.f32 %v716, %v963
        %v965 = vpop.f32.mrb[0].mxu0
        %v966 = vadd.f32 %v716, %v965
        %967 = vmatprep.mubr.f32.mxu0 %v746
        %968 = vmatmul.mubr.f32.gmra.mrb[0].mxu0 %v673
        %v969 = vpop.f32.mrb[0].mxu0
        %v970 = vadd.f32 %v721, %v969
        %v971 = vpop.f32.mrb[0].mxu0
        %v972 = vadd.f32 %v721, %v971
        %973 = vdwg.mxu0
        %974 = vmatprep.subr.mxu0 %v503
        %975 = vmatpush1.msra.mxu0 %v502
        %976 = vmatprep.subr.mxu0 %v511
        %977 = vmatpush1.msra.mxu0 %v510
        %978 = vmatprep.subr.mxu0 %v519
        %979 = vmatpush1.msra.mxu0 %v518
        %980 = vmatprep.subr.mxu0 %v527
        %981 = vmatpush1.msra.mxu0 %v526
        %982 = vmatprep.subr.mxu0 %v535
        %983 = vmatpush1.msra.mxu0 %v534
        %984 = vmatprep.subr.mxu0 %v543
        %985 = vmatpush1.msra.mxu0 %v542
        %986 = vmatprep.subr.mxu0 %v551
        %987 = vmatpush1.msra.mxu0 %v550
        %988 = vmatprep.subr.mxu0 %v559
        %989 = vmatpush1.msra.mxu0 %v558
        %990 = vmatprep.subr.mxu0 %v567
        %991 = vmatpush1.msra.mxu0 %v566
        %992 = vmatprep.subr.mxu0 %v575
        %993 = vmatpush1.msra.mxu0 %v574
        %994 = vmatprep.subr.mxu0 %v583
        %995 = vmatpush1.msra.mxu0 %v582
        %996 = vmatprep.subr.mxu0 %v591
        %997 = vmatpush1.msra.mxu0 %v590
        %998 = vmatprep.subr.mxu0 %v599
        %999 = vmatpush1.msra.mxu0 %v598
        %1000 = vmatprep.subr.mxu0 %v607
        %1001 = vmatpush1.msra.mxu0 %v606
        %1002 = vmatprep.subr.mxu0 %v615
        %1003 = vmatpush1.msra.mxu0 %v614
        %1004 = vmatprep.subr.mxu0 %v623
        %1005 = vmatpush1.msra.mxu0 %v622
        %1006 = vmatprep.subr.mxu0 %v631
        %1007 = vmatpush1.msra.mxu0 %v630
        %1008 = vmatprep.subr.mxu0 %v639
        %1009 = vmatpush1.msra.mxu0 %v638
        %1010 = vmatprep.subr.mxu0 %v647
        %1011 = vmatpush1.msra.mxu0 %v646
        %1012 = vmatprep.subr.mxu0 %v655
        %1013 = vmatpush1.msra.mxu0 %v654
        %1014 = vmatprep.subr.mxu0 0.0
        %1015 = vmatpush1.msra.mxu0 0.0
        %1016 = vmatprep.subr.mxu0 0.0
        %1017 = vmatpush1.msra.mxu0 0.0
        %1018 = vmatprep.subr.mxu0 0.0
        %1019 = vmatpush1.msra.mxu0 0.0
        %1020 = vmatprep.subr.mxu0 0.0
        %1021 = vmatpush1.msra.mxu0 0.0
        %1022 = vmatprep.subr.mxu0 0.0
        %1023 = vmatpush1.msra.mxu0 0.0
        %1024 = vmatprep.subr.mxu0 0.0
        %1025 = vmatpush1.msra.mxu0 0.0
        %1026 = vmatprep.subr.mxu0 0.0
        %1027 = vmatpush1.msra.mxu0 0.0
        %1028 = vmatprep.subr.mxu0 0.0
        %1029 = vmatpush1.msra.mxu0 0.0
        %1030 = vmatprep.subr.mxu0 0.0
        %1031 = vmatpush1.msra.mxu0 0.0
        %1032 = vmatprep.subr.mxu0 0.0
        %1033 = vmatpush1.msra.mxu0 0.0
        %1034 = vmatprep.subr.mxu0 0.0
        %1035 = vmatpush1.msra.mxu0 0.0
        %1036 = vmatprep.subr.mxu0 0.0
        %1037 = vmatpush1.msra.mxu0 0.0
        %1038 = vmatprep.mubr.f32.mxu0 %v725
        %1039 = vmatmul.mubr.f32.gmra.mrb[0].mxu0 %v659
        %v1040 = vpop.f32.mrb[0].mxu0
        %v1041 = vadd.f32 %v686, %v1040
        %v1042 = vpop.f32.mrb[0].mxu0
        %v1043 = vadd.f32 %v686, %v1042
        %1044 = vmatprep.mubr.f32.mxu0 %v728
        %1045 = vmatmul.mubr.f32.gmra.mrb[0].mxu0 %v661
        %v1046 = vpop.f32.mrb[0].mxu0
        %v1047 = vadd.f32 %v691, %v1046
        %v1048 = vpop.f32.mrb[0].mxu0
        %v1049 = vadd.f32 %v691, %v1048
        %1050 = vmatprep.mubr.f32.mxu0 %v731
        %1051 = vmatmul.mubr.f32.gmra.mrb[0].mxu0 %v663
        %v1052 = vpop.f32.mrb[0].mxu0
        %v1053 = vadd.f32 %v696, %v1052
        %v1054 = vpop.f32.mrb[0].mxu0
        %v1055 = vadd.f32 %v696, %v1054
        %1056 = vmatprep.mubr.f32.mxu0 %v734
        %1057 = vmatmul.mubr.f32.gmra.mrb[0].mxu0 %v665
        %v1058 = vpop.f32.mrb[0].mxu0
        %v1059 = vadd.f32 %v701, %v1058
        %v1060 = vpop.f32.mrb[0].mxu0
        %v1061 = vadd.f32 %v701, %v1060
        %1062 = vmatprep.mubr.f32.mxu0 %v737
        %1063 = vmatmul.mubr.f32.gmra.mrb[0].mxu0 %v667
        %v1064 = vpop.f32.mrb[0].mxu0
        %v1065 = vadd.f32 %v706, %v1064
        %v1066 = vpop.f32.mrb[0].mxu0
        %v1067 = vadd.f32 %v706, %v1066
        %1068 = vmatprep.mubr.f32.mxu0 %v740
        %1069 = vmatmul.mubr.f32.gmra.mrb[0].mxu0 %v669
        %v1070 = vpop.f32.mrb[0].mxu0
        %v1071 = vadd.f32 %v711, %v1070
        %v1072 = vpop.f32.mrb[0].mxu0
        %v1073 = vadd.f32 %v711, %v1072
        %1074 = vmatprep.mubr.f32.mxu0 %v743
        %1075 = vmatmul.mubr.f32.gmra.mrb[0].mxu0 %v671
        %v1076 = vpop.f32.mrb[0].mxu0
        %v1077 = vadd.f32 %v716, %v1076
        %v1078 = vpop.f32.mrb[0].mxu0
        %v1079 = vadd.f32 %v716, %v1078
        %1080 = vmatprep.mubr.f32.mxu0 %v746
        %1081 = vmatmul.mubr.f32.gmra.mrb[0].mxu0 %v673
        %v1082 = vpop.f32.mrb[0].mxu0
        %v1083 = vadd.f32 %v721, %v1082
        %v1084 = vpop.f32.mrb[0].mxu0
        %v1085 = vadd.f32 %v721, %v1084
        %1086 = vdwg.mxu0
        %1087 = vmatprep.subr.mxu0 %v505
        %1088 = vmatpush1.msra.mxu0 %v504
        %1089 = vmatprep.subr.mxu0 %v513
        %1090 = vmatpush1.msra.mxu0 %v512
        %1091 = vmatprep.subr.mxu0 %v521
        %1092 = vmatpush1.msra.mxu0 %v520
        %1093 = vmatprep.subr.mxu0 %v529
        %1094 = vmatpush1.msra.mxu0 %v528
        %1095 = vmatprep.subr.mxu0 %v537
        %1096 = vmatpush1.msra.mxu0 %v536
        %1097 = vmatprep.subr.mxu0 %v545
        %1098 = vmatpush1.msra.mxu0 %v544
        %1099 = vmatprep.subr.mxu0 %v553
        %1100 = vmatpush1.msra.mxu0 %v552
        %1101 = vmatprep.subr.mxu0 %v561
        %1102 = vmatpush1.msra.mxu0 %v560
        %1103 = vmatprep.subr.mxu0 %v569
        %1104 = vmatpush1.msra.mxu0 %v568
        %1105 = vmatprep.subr.mxu0 %v577
        %1106 = vmatpush1.msra.mxu0 %v576
        %1107 = vmatprep.subr.mxu0 %v585
        %1108 = vmatpush1.msra.mxu0 %v584
        %1109 = vmatprep.subr.mxu0 %v593
        %1110 = vmatpush1.msra.mxu0 %v592
        %1111 = vmatprep.subr.mxu0 %v601
        %1112 = vmatpush1.msra.mxu0 %v600
        %1113 = vmatprep.subr.mxu0 %v609
        %1114 = vmatpush1.msra.mxu0 %v608
        %1115 = vmatprep.subr.mxu0 %v617
        %1116 = vmatpush1.msra.mxu0 %v616
        %1117 = vmatprep.subr.mxu0 %v625
        %1118 = vmatpush1.msra.mxu0 %v624
        %1119 = vmatprep.subr.mxu0 %v633
        %1120 = vmatpush1.msra.mxu0 %v632
        %1121 = vmatprep.subr.mxu0 %v641
        %1122 = vmatpush1.msra.mxu0 %v640
        %1123 = vmatprep.subr.mxu0 %v649
        %1124 = vmatpush1.msra.mxu0 %v648
        %1125 = vmatprep.subr.mxu0 %v657
        %1126 = vmatpush1.msra.mxu0 %v656
        %1127 = vmatprep.subr.mxu0 0.0
        %1128 = vmatpush1.msra.mxu0 0.0
        %1129 = vmatprep.subr.mxu0 0.0
        %1130 = vmatpush1.msra.mxu0 0.0
        %1131 = vmatprep.subr.mxu0 0.0
        %1132 = vmatpush1.msra.mxu0 0.0
        %1133 = vmatprep.subr.mxu0 0.0
        %1134 = vmatpush1.msra.mxu0 0.0
        %1135 = vmatprep.subr.mxu0 0.0
        %1136 = vmatpush1.msra.mxu0 0.0
        %1137 = vmatprep.subr.mxu0 0.0
        %1138 = vmatpush1.msra.mxu0 0.0
        %1139 = vmatprep.subr.mxu0 0.0
        %1140 = vmatpush1.msra.mxu0 0.0
        %1141 = vmatprep.subr.mxu0 0.0
        %1142 = vmatpush1.msra.mxu0 0.0
        %1143 = vmatprep.subr.mxu0 0.0
        %1144 = vmatpush1.msra.mxu0 0.0
        %1145 = vmatprep.subr.mxu0 0.0
        %1146 = vmatpush1.msra.mxu0 0.0
        %1147 = vmatprep.subr.mxu0 0.0
        %1148 = vmatpush1.msra.mxu0 0.0
        %1149 = vmatprep.subr.mxu0 0.0
        %1150 = vmatpush1.msra.mxu0 0.0
        %1151 = vmatprep.mubr.f32.mxu0 %v725
        %1152 = vmatmul.mubr.f32.gmra.mrb[0].mxu0 %v659
        %v1153 = vpop.f32.mrb[0].mxu0
        %v1154 = vadd.f32 %v686, %v1153
        %v1155 = vpop.f32.mrb[0].mxu0
        %v1156 = vadd.f32 %v686, %v1155
        %1157 = vmatprep.mubr.f32.mxu0 %v728
        %1158 = vmatmul.mubr.f32.gmra.mrb[0].mxu0 %v661
        %v1159 = vpop.f32.mrb[0].mxu0
        %v1160 = vadd.f32 %v691, %v1159
        %v1161 = vpop.f32.mrb[0].mxu0
        %v1162 = vadd.f32 %v691, %v1161
        %1163 = vmatprep.mubr.f32.mxu0 %v731
        %1164 = vmatmul.mubr.f32.gmra.mrb[0].mxu0 %v663
        %v1165 = vpop.f32.mrb[0].mxu0
        %v1166 = vadd.f32 %v696, %v1165
        %v1167 = vpop.f32.mrb[0].mxu0
        %v1168 = vadd.f32 %v696, %v1167
        %1169 = vmatprep.mubr.f32.mxu0 %v734
        %1170 = vmatmul.mubr.f32.gmra.mrb[0].mxu0 %v665
        %v1171 = vpop.f32.mrb[0].mxu0
        %v1172 = vadd.f32 %v701, %v1171
        %v1173 = vpop.f32.mrb[0].mxu0
        %v1174 = vadd.f32 %v701, %v1173
        %1175 = vmatprep.mubr.f32.mxu0 %v737
        %1176 = vmatmul.mubr.f32.gmra.mrb[0].mxu0 %v667
        %v1177 = vpop.f32.mrb[0].mxu0
        %v1178 = vadd.f32 %v706, %v1177
        %v1179 = vpop.f32.mrb[0].mxu0
        %v1180 = vadd.f32 %v706, %v1179
        %1181 = vmatprep.mubr.f32.mxu0 %v740
        %1182 = vmatmul.mubr.f32.gmra.mrb[0].mxu0 %v669
        %v1183 = vpop.f32.mrb[0].mxu0
        %v1184 = vadd.f32 %v711, %v1183
        %v1185 = vpop.f32.mrb[0].mxu0
        %v1186 = vadd.f32 %v711, %v1185
        %1187 = vmatprep.mubr.f32.mxu0 %v743
        %1188 = vmatmul.mubr.f32.gmra.mrb[0].mxu0 %v671
        %v1189 = vpop.f32.mrb[0].mxu0
        %v1190 = vadd.f32 %v716, %v1189
        %v1191 = vpop.f32.mrb[0].mxu0
        %v1192 = vadd.f32 %v716, %v1191
        %1193 = vmatprep.mubr.f32.mxu0 %v746
        %1194 = vmatmul.mubr.f32.gmra.mrb[0].mxu0 %v673
        %v1195 = vpop.f32.mrb[0].mxu0
        %v1196 = vadd.f32 %v721, %v1195
        %v1197 = vpop.f32.mrb[0].mxu0
        %v1198 = vadd.f32 %v721, %v1197
        %1199 = vdwg.mxu0
        %v1200 = vld [vmem:[#allocation11] sm:$0xff]
        %v1201 = vld [vmem:[#allocation11 + $0x8] sm:$0xff]
        %v1202 = vld [vmem:[#allocation11 + $0x10] sm:$0xff]
        %v1203 = vld [vmem:[#allocation11 + $0x18] sm:$0xff]
        %v1204 = vld [vmem:[#allocation11 + $0x20] sm:$0xff]
        %v1205 = vld [vmem:[#allocation11 + $0x28] sm:$0xff]
        %v1206 = vld [vmem:[#allocation11 + $0x30] sm:$0xff]
        %v1207 = vld [vmem:[#allocation11 + $0x38] sm:$0xff]
        %v1208 = vld [vmem:[#allocation11 + $0x40] sm:$0xff]
        %v1209 = vld [vmem:[#allocation11 + $0x48] sm:$0xff]
        %v1210 = vld [vmem:[#allocation11 + $0x50] sm:$0xff]
        %v1211 = vld [vmem:[#allocation11 + $0x58] sm:$0xff]
        %v1212 = vld [vmem:[#allocation11 + $0x60] sm:$0xff]
        %v1213 = vld [vmem:[#allocation11 + $0x68] sm:$0xff]
        %v1214 = vld [vmem:[#allocation11 + $0x70] sm:$0xff]
        %v1215 = vld [vmem:[#allocation11 + $0x78] sm:$0xff]
        %v1217 = vsel %vm723, %v1201, 0
        %v1220 = vsel %vm723, %v1203, 0
        %v1223 = vsel %vm723, %v1205, 0
        %v1226 = vsel %vm723, %v1207, 0
        %v1229 = vsel %vm723, %v1209, 0
        %v1232 = vsel %vm723, %v1211, 0
        %v1235 = vsel %vm723, %v1213, 0
        %v1238 = vsel %vm723, %v1215, 0
        %1240 = vmatprep.subr.mxu0 %v499
        %1241 = vmatpush1.msra.mxu0 %v498
        %1242 = vmatprep.subr.mxu0 %v507
        %1243 = vmatpush1.msra.mxu0 %v506
        %1244 = vmatprep.subr.mxu0 %v515
        %1245 = vmatpush1.msra.mxu0 %v514
        %1246 = vmatprep.subr.mxu0 %v523
        %1247 = vmatpush1.msra.mxu0 %v522
        %1248 = vmatprep.subr.mxu0 %v531
        %1249 = vmatpush1.msra.mxu0 %v530
        %1250 = vmatprep.subr.mxu0 %v539
        %1251 = vmatpush1.msra.mxu0 %v538
        %1252 = vmatprep.subr.mxu0 %v547
        %1253 = vmatpush1.msra.mxu0 %v546
        %1254 = vmatprep.subr.mxu0 %v555
        %1255 = vmatpush1.msra.mxu0 %v554
        %1256 = vmatprep.subr.mxu0 %v563
        %1257 = vmatpush1.msra.mxu0 %v562
        %1258 = vmatprep.subr.mxu0 %v571
        %1259 = vmatpush1.msra.mxu0 %v570
        %1260 = vmatprep.subr.mxu0 %v579
        %1261 = vmatpush1.msra.mxu0 %v578
        %1262 = vmatprep.subr.mxu0 %v587
        %1263 = vmatpush1.msra.mxu0 %v586
        %1264 = vmatprep.subr.mxu0 %v595
        %1265 = vmatpush1.msra.mxu0 %v594
        %1266 = vmatprep.subr.mxu0 %v603
        %1267 = vmatpush1.msra.mxu0 %v602
        %1268 = vmatprep.subr.mxu0 %v611
        %1269 = vmatpush1.msra.mxu0 %v610
        %1270 = vmatprep.subr.mxu0 %v619
        %1271 = vmatpush1.msra.mxu0 %v618
        %1272 = vmatprep.subr.mxu0 %v627
        %1273 = vmatpush1.msra.mxu0 %v626
        %1274 = vmatprep.subr.mxu0 %v635
        %1275 = vmatpush1.msra.mxu0 %v634
        %1276 = vmatprep.subr.mxu0 %v643
        %1277 = vmatpush1.msra.mxu0 %v642
        %1278 = vmatprep.subr.mxu0 %v651
        %1279 = vmatpush1.msra.mxu0 %v650
        %1280 = vmatprep.subr.mxu0 0.0
        %1281 = vmatpush1.msra.mxu0 0.0
        %1282 = vmatprep.subr.mxu0 0.0
        %1283 = vmatpush1.msra.mxu0 0.0
        %1284 = vmatprep.subr.mxu0 0.0
        %1285 = vmatpush1.msra.mxu0 0.0
        %1286 = vmatprep.subr.mxu0 0.0
        %1287 = vmatpush1.msra.mxu0 0.0
        %1288 = vmatprep.subr.mxu0 0.0
        %1289 = vmatpush1.msra.mxu0 0.0
        %1290 = vmatprep.subr.mxu0 0.0
        %1291 = vmatpush1.msra.mxu0 0.0
        %1292 = vmatprep.subr.mxu0 0.0
        %1293 = vmatpush1.msra.mxu0 0.0
        %1294 = vmatprep.subr.mxu0 0.0
        %1295 = vmatpush1.msra.mxu0 0.0
        %1296 = vmatprep.subr.mxu0 0.0
        %1297 = vmatpush1.msra.mxu0 0.0
        %1298 = vmatprep.subr.mxu0 0.0
        %1299 = vmatpush1.msra.mxu0 0.0
        %1300 = vmatprep.subr.mxu0 0.0
        %1301 = vmatpush1.msra.mxu0 0.0
        %1302 = vmatprep.subr.mxu0 0.0
        %1303 = vmatpush1.msra.mxu0 0.0
        %1304 = vmatprep.mubr.f32.mxu0 %v1217
        %1305 = vmatmul.mubr.f32.gmra.mrb[0].mxu0 %v1200
        %v1306 = vpop.f32.mrb[0].mxu0
        %v1307 = vadd.f32 0.0, %v1306
        %v1308 = vpop.f32.mrb[0].mxu0
        %v1309 = vadd.f32 0.0, %v1308
        %1310 = vmatprep.mubr.f32.mxu0 %v1220
        %1311 = vmatmul.mubr.f32.gmra.mrb[0].mxu0 %v1202
        %v1312 = vpop.f32.mrb[0].mxu0
        %v1313 = vadd.f32 0.0, %v1312
        %v1314 = vpop.f32.mrb[0].mxu0
        %v1315 = vadd.f32 0.0, %v1314
        %1316 = vmatprep.mubr.f32.mxu0 %v1223
        %1317 = vmatmul.mubr.f32.gmra.mrb[0].mxu0 %v1204
        %v1318 = vpop.f32.mrb[0].mxu0
        %v1319 = vadd.f32 0.0, %v1318
        %v1320 = vpop.f32.mrb[0].mxu0
        %v1321 = vadd.f32 0.0, %v1320
        %1322 = vmatprep.mubr.f32.mxu0 %v1226
        %1323 = vmatmul.mubr.f32.gmra.mrb[0].mxu0 %v1206
        %v1324 = vpop.f32.mrb[0].mxu0
        %v1325 = vadd.f32 0.0, %v1324
        %v1326 = vpop.f32.mrb[0].mxu0
        %v1327 = vadd.f32 0.0, %v1326
        %1328 = vmatprep.mubr.f32.mxu0 %v1229
        %1329 = vmatmul.mubr.f32.gmra.mrb[0].mxu0 %v1208
        %v1330 = vpop.f32.mrb[0].mxu0
        %v1331 = vadd.f32 0.0, %v1330
        %v1332 = vpop.f32.mrb[0].mxu0
        %v1333 = vadd.f32 0.0, %v1332
        %1334 = vmatprep.mubr.f32.mxu0 %v1232
        %1335 = vmatmul.mubr.f32.gmra.mrb[0].mxu0 %v1210
        %v1336 = vpop.f32.mrb[0].mxu0
        %v1337 = vadd.f32 0.0, %v1336
        %v1338 = vpop.f32.mrb[0].mxu0
        %v1339 = vadd.f32 0.0, %v1338
        %1340 = vmatprep.mubr.f32.mxu0 %v1235
        %1341 = vmatmul.mubr.f32.gmra.mrb[0].mxu0 %v1212
        %v1342 = vpop.f32.mrb[0].mxu0
        %v1343 = vadd.f32 0.0, %v1342
        %v1344 = vpop.f32.mrb[0].mxu0
        %v1345 = vadd.f32 0.0, %v1344
        %1346 = vmatprep.mubr.f32.mxu0 %v1238
        %1347 = vmatmul.mubr.f32.gmra.mrb[0].mxu0 %v1214
        %v1348 = vpop.f32.mrb[0].mxu0
        %v1349 = vadd.f32 0.0, %v1348
        %v1350 = vpop.f32.mrb[0].mxu0
        %v1351 = vadd.f32 0.0, %v1350
        %1352 = vdwg.mxu0
        %1353 = vmatprep.subr.mxu0 %v501
        %1354 = vmatpush1.msra.mxu0 %v500
        %1355 = vmatprep.subr.mxu0 %v509
        %1356 = vmatpush1.msra.mxu0 %v508
        %1357 = vmatprep.subr.mxu0 %v517
        %1358 = vmatpush1.msra.mxu0 %v516
        %1359 = vmatprep.subr.mxu0 %v525
        %1360 = vmatpush1.msra.mxu0 %v524
        %1361 = vmatprep.subr.mxu0 %v533
        %1362 = vmatpush1.msra.mxu0 %v532
        %1363 = vmatprep.subr.mxu0 %v541
        %1364 = vmatpush1.msra.mxu0 %v540
        %1365 = vmatprep.subr.mxu0 %v549
        %1366 = vmatpush1.msra.mxu0 %v548
        %1367 = vmatprep.subr.mxu0 %v557
        %1368 = vmatpush1.msra.mxu0 %v556
        %1369 = vmatprep.subr.mxu0 %v565
        %1370 = vmatpush1.msra.mxu0 %v564
        %1371 = vmatprep.subr.mxu0 %v573
        %1372 = vmatpush1.msra.mxu0 %v572
        %1373 = vmatprep.subr.mxu0 %v581
        %1374 = vmatpush1.msra.mxu0 %v580
        %1375 = vmatprep.subr.mxu0 %v589
        %1376 = vmatpush1.msra.mxu0 %v588
        %1377 = vmatprep.subr.mxu0 %v597
        %1378 = vmatpush1.msra.mxu0 %v596
        %1379 = vmatprep.subr.mxu0 %v605
        %1380 = vmatpush1.msra.mxu0 %v604
        %1381 = vmatprep.subr.mxu0 %v613
        %1382 = vmatpush1.msra.mxu0 %v612
        %1383 = vmatprep.subr.mxu0 %v621
        %1384 = vmatpush1.msra.mxu0 %v620
        %1385 = vmatprep.subr.mxu0 %v629
        %1386 = vmatpush1.msra.mxu0 %v628
        %1387 = vmatprep.subr.mxu0 %v637
        %1388 = vmatpush1.msra.mxu0 %v636
        %1389 = vmatprep.subr.mxu0 %v645
        %1390 = vmatpush1.msra.mxu0 %v644
        %1391 = vmatprep.subr.mxu0 %v653
        %1392 = vmatpush1.msra.mxu0 %v652
        %1393 = vmatprep.subr.mxu0 0.0
        %1394 = vmatpush1.msra.mxu0 0.0
        %1395 = vmatprep.subr.mxu0 0.0
        %1396 = vmatpush1.msra.mxu0 0.0
        %1397 = vmatprep.subr.mxu0 0.0
        %1398 = vmatpush1.msra.mxu0 0.0
        %1399 = vmatprep.subr.mxu0 0.0
        %1400 = vmatpush1.msra.mxu0 0.0
        %1401 = vmatprep.subr.mxu0 0.0
        %1402 = vmatpush1.msra.mxu0 0.0
        %1403 = vmatprep.subr.mxu0 0.0
        %1404 = vmatpush1.msra.mxu0 0.0
        %1405 = vmatprep.subr.mxu0 0.0
        %1406 = vmatpush1.msra.mxu0 0.0
        %1407 = vmatprep.subr.mxu0 0.0
        %1408 = vmatpush1.msra.mxu0 0.0
        %1409 = vmatprep.subr.mxu0 0.0
        %1410 = vmatpush1.msra.mxu0 0.0
        %1411 = vmatprep.subr.mxu0 0.0
        %1412 = vmatpush1.msra.mxu0 0.0
        %1413 = vmatprep.subr.mxu0 0.0
        %1414 = vmatpush1.msra.mxu0 0.0
        %1415 = vmatprep.subr.mxu0 0.0
        %1416 = vmatpush1.msra.mxu0 0.0
        %1417 = vmatprep.mubr.f32.mxu0 %v1217
        %1418 = vmatmul.mubr.f32.gmra.mrb[0].mxu0 %v1200
        %v1419 = vpop.f32.mrb[0].mxu0
        %v1420 = vadd.f32 0.0, %v1419
        %v1421 = vpop.f32.mrb[0].mxu0
        %v1422 = vadd.f32 0.0, %v1421
        %1423 = vmatprep.mubr.f32.mxu0 %v1220
        %1424 = vmatmul.mubr.f32.gmra.mrb[0].mxu0 %v1202
        %v1425 = vpop.f32.mrb[0].mxu0
        %v1426 = vadd.f32 0.0, %v1425
        %v1427 = vpop.f32.mrb[0].mxu0
        %v1428 = vadd.f32 0.0, %v1427
        %1429 = vmatprep.mubr.f32.mxu0 %v1223
        %1430 = vmatmul.mubr.f32.gmra.mrb[0].mxu0 %v1204
        %v1431 = vpop.f32.mrb[0].mxu0
        %v1432 = vadd.f32 0.0, %v1431
        %v1433 = vpop.f32.mrb[0].mxu0
        %v1434 = vadd.f32 0.0, %v1433
        %1435 = vmatprep.mubr.f32.mxu0 %v1226
        %1436 = vmatmul.mubr.f32.gmra.mrb[0].mxu0 %v1206
        %v1437 = vpop.f32.mrb[0].mxu0
        %v1438 = vadd.f32 0.0, %v1437
        %v1439 = vpop.f32.mrb[0].mxu0
        %v1440 = vadd.f32 0.0, %v1439
        %1441 = vmatprep.mubr.f32.mxu0 %v1229
        %1442 = vmatmul.mubr.f32.gmra.mrb[0].mxu0 %v1208
        %v1443 = vpop.f32.mrb[0].mxu0
        %v1444 = vadd.f32 0.0, %v1443
        %v1445 = vpop.f32.mrb[0].mxu0
        %v1446 = vadd.f32 0.0, %v1445
        %1447 = vmatprep.mubr.f32.mxu0 %v1232
        %1448 = vmatmul.mubr.f32.gmra.mrb[0].mxu0 %v1210
        %v1449 = vpop.f32.mrb[0].mxu0
        %v1450 = vadd.f32 0.0, %v1449
        %v1451 = vpop.f32.mrb[0].mxu0
        %v1452 = vadd.f32 0.0, %v1451
        %1453 = vmatprep.mubr.f32.mxu0 %v1235
        %1454 = vmatmul.mubr.f32.gmra.mrb[0].mxu0 %v1212
        %v1455 = vpop.f32.mrb[0].mxu0
        %v1456 = vadd.f32 0.0, %v1455
        %v1457 = vpop.f32.mrb[0].mxu0
        %v1458 = vadd.f32 0.0, %v1457
        %1459 = vmatprep.mubr.f32.mxu0 %v1238
        %1460 = vmatmul.mubr.f32.gmra.mrb[0].mxu0 %v1214
        %v1461 = vpop.f32.mrb[0].mxu0
        %v1462 = vadd.f32 0.0, %v1461
        %v1463 = vpop.f32.mrb[0].mxu0
        %v1464 = vadd.f32 0.0, %v1463
        %1465 = vdwg.mxu0
        %1466 = vmatprep.subr.mxu0 %v503
        %1467 = vmatpush1.msra.mxu0 %v502
        %1468 = vmatprep.subr.mxu0 %v511
        %1469 = vmatpush1.msra.mxu0 %v510
        %1470 = vmatprep.subr.mxu0 %v519
        %1471 = vmatpush1.msra.mxu0 %v518
        %1472 = vmatprep.subr.mxu0 %v527
        %1473 = vmatpush1.msra.mxu0 %v526
        %1474 = vmatprep.subr.mxu0 %v535
        %1475 = vmatpush1.msra.mxu0 %v534
        %1476 = vmatprep.subr.mxu0 %v543
        %1477 = vmatpush1.msra.mxu0 %v542
        %1478 = vmatprep.subr.mxu0 %v551
        %1479 = vmatpush1.msra.mxu0 %v550
        %1480 = vmatprep.subr.mxu0 %v559
        %1481 = vmatpush1.msra.mxu0 %v558
        %1482 = vmatprep.subr.mxu0 %v567
        %1483 = vmatpush1.msra.mxu0 %v566
        %1484 = vmatprep.subr.mxu0 %v575
        %1485 = vmatpush1.msra.mxu0 %v574
        %1486 = vmatprep.subr.mxu0 %v583
        %1487 = vmatpush1.msra.mxu0 %v582
        %1488 = vmatprep.subr.mxu0 %v591
        %1489 = vmatpush1.msra.mxu0 %v590
        %1490 = vmatprep.subr.mxu0 %v599
        %1491 = vmatpush1.msra.mxu0 %v598
        %1492 = vmatprep.subr.mxu0 %v607
        %1493 = vmatpush1.msra.mxu0 %v606
        %1494 = vmatprep.subr.mxu0 %v615
        %1495 = vmatpush1.msra.mxu0 %v614
        %1496 = vmatprep.subr.mxu0 %v623
        %1497 = vmatpush1.msra.mxu0 %v622
        %1498 = vmatprep.subr.mxu0 %v631
        %1499 = vmatpush1.msra.mxu0 %v630
        %1500 = vmatprep.subr.mxu0 %v639
        %1501 = vmatpush1.msra.mxu0 %v638
        %1502 = vmatprep.subr.mxu0 %v647
        %1503 = vmatpush1.msra.mxu0 %v646
        %1504 = vmatprep.subr.mxu0 %v655
        %1505 = vmatpush1.msra.mxu0 %v654
        %1506 = vmatprep.subr.mxu0 0.0
        %1507 = vmatpush1.msra.mxu0 0.0
        %1508 = vmatprep.subr.mxu0 0.0
        %1509 = vmatpush1.msra.mxu0 0.0
        %1510 = vmatprep.subr.mxu0 0.0
        %1511 = vmatpush1.msra.mxu0 0.0
        %1512 = vmatprep.subr.mxu0 0.0
        %1513 = vmatpush1.msra.mxu0 0.0
        %1514 = vmatprep.subr.mxu0 0.0
        %1515 = vmatpush1.msra.mxu0 0.0
        %1516 = vmatprep.subr.mxu0 0.0
        %1517 = vmatpush1.msra.mxu0 0.0
        %1518 = vmatprep.subr.mxu0 0.0
        %1519 = vmatpush1.msra.mxu0 0.0
        %1520 = vmatprep.subr.mxu0 0.0
        %1521 = vmatpush1.msra.mxu0 0.0
        %1522 = vmatprep.subr.mxu0 0.0
        %1523 = vmatpush1.msra.mxu0 0.0
        %1524 = vmatprep.subr.mxu0 0.0
        %1525 = vmatpush1.msra.mxu0 0.0
        %1526 = vmatprep.subr.mxu0 0.0
        %1527 = vmatpush1.msra.mxu0 0.0
        %1528 = vmatprep.subr.mxu0 0.0
        %1529 = vmatpush1.msra.mxu0 0.0
        %1530 = vmatprep.mubr.f32.mxu0 %v1217
        %1531 = vmatmul.mubr.f32.gmra.mrb[0].mxu0 %v1200
        %v1532 = vpop.f32.mrb[0].mxu0
        %v1533 = vadd.f32 0.0, %v1532
        %v1534 = vpop.f32.mrb[0].mxu0
        %v1535 = vadd.f32 0.0, %v1534
        %1536 = vmatprep.mubr.f32.mxu0 %v1220
        %1537 = vmatmul.mubr.f32.gmra.mrb[0].mxu0 %v1202
        %v1538 = vpop.f32.mrb[0].mxu0
        %v1539 = vadd.f32 0.0, %v1538
        %v1540 = vpop.f32.mrb[0].mxu0
        %v1541 = vadd.f32 0.0, %v1540
        %1542 = vmatprep.mubr.f32.mxu0 %v1223
        %1543 = vmatmul.mubr.f32.gmra.mrb[0].mxu0 %v1204
        %v1544 = vpop.f32.mrb[0].mxu0
        %v1545 = vadd.f32 0.0, %v1544
        %v1546 = vpop.f32.mrb[0].mxu0
        %v1547 = vadd.f32 0.0, %v1546
        %1548 = vmatprep.mubr.f32.mxu0 %v1226
        %1549 = vmatmul.mubr.f32.gmra.mrb[0].mxu0 %v1206
        %v1550 = vpop.f32.mrb[0].mxu0
        %v1551 = vadd.f32 0.0, %v1550
        %v1552 = vpop.f32.mrb[0].mxu0
        %v1553 = vadd.f32 0.0, %v1552
        %1554 = vmatprep.mubr.f32.mxu0 %v1229
        %1555 = vmatmul.mubr.f32.gmra.mrb[0].mxu0 %v1208
        %v1556 = vpop.f32.mrb[0].mxu0
        %v1557 = vadd.f32 0.0, %v1556
        %v1558 = vpop.f32.mrb[0].mxu0
        %v1559 = vadd.f32 0.0, %v1558
        %1560 = vmatprep.mubr.f32.mxu0 %v1232
        %1561 = vmatmul.mubr.f32.gmra.mrb[0].mxu0 %v1210
        %v1562 = vpop.f32.mrb[0].mxu0
        %v1563 = vadd.f32 0.0, %v1562
        %v1564 = vpop.f32.mrb[0].mxu0
        %v1565 = vadd.f32 0.0, %v1564
        %1566 = vmatprep.mubr.f32.mxu0 %v1235
        %1567 = vmatmul.mubr.f32.gmra.mrb[0].mxu0 %v1212
        %v1568 = vpop.f32.mrb[0].mxu0
        %v1569 = vadd.f32 0.0, %v1568
        %v1570 = vpop.f32.mrb[0].mxu0
        %v1571 = vadd.f32 0.0, %v1570
        %1572 = vmatprep.mubr.f32.mxu0 %v1238
        %1573 = vmatmul.mubr.f32.gmra.mrb[0].mxu0 %v1214
        %v1574 = vpop.f32.mrb[0].mxu0
        %v1575 = vadd.f32 0.0, %v1574
        %v1576 = vpop.f32.mrb[0].mxu0
        %v1577 = vadd.f32 0.0, %v1576
        %1578 = vdwg.mxu0
        %1579 = vmatprep.subr.mxu0 %v505
        %1580 = vmatpush1.msra.mxu0 %v504
        %1581 = vmatprep.subr.mxu0 %v513
        %1582 = vmatpush1.msra.mxu0 %v512
        %1583 = vmatprep.subr.mxu0 %v521
        %1584 = vmatpush1.msra.mxu0 %v520
        %1585 = vmatprep.subr.mxu0 %v529
        %1586 = vmatpush1.msra.mxu0 %v528
        %1587 = vmatprep.subr.mxu0 %v537
        %1588 = vmatpush1.msra.mxu0 %v536
        %1589 = vmatprep.subr.mxu0 %v545
        %1590 = vmatpush1.msra.mxu0 %v544
        %1591 = vmatprep.subr.mxu0 %v553
        %1592 = vmatpush1.msra.mxu0 %v552
        %1593 = vmatprep.subr.mxu0 %v561
        %1594 = vmatpush1.msra.mxu0 %v560
        %1595 = vmatprep.subr.mxu0 %v569
        %1596 = vmatpush1.msra.mxu0 %v568
        %1597 = vmatprep.subr.mxu0 %v577
        %1598 = vmatpush1.msra.mxu0 %v576
        %1599 = vmatprep.subr.mxu0 %v585
        %1600 = vmatpush1.msra.mxu0 %v584
        %1601 = vmatprep.subr.mxu0 %v593
        %1602 = vmatpush1.msra.mxu0 %v592
        %1603 = vmatprep.subr.mxu0 %v601
        %1604 = vmatpush1.msra.mxu0 %v600
        %1605 = vmatprep.subr.mxu0 %v609
        %1606 = vmatpush1.msra.mxu0 %v608
        %1607 = vmatprep.subr.mxu0 %v617
        %1608 = vmatpush1.msra.mxu0 %v616
        %1609 = vmatprep.subr.mxu0 %v625
        %1610 = vmatpush1.msra.mxu0 %v624
        %1611 = vmatprep.subr.mxu0 %v633
        %1612 = vmatpush1.msra.mxu0 %v632
        %1613 = vmatprep.subr.mxu0 %v641
        %1614 = vmatpush1.msra.mxu0 %v640
        %1615 = vmatprep.subr.mxu0 %v649
        %1616 = vmatpush1.msra.mxu0 %v648
        %1617 = vmatprep.subr.mxu0 %v657
        %1618 = vmatpush1.msra.mxu0 %v656
        %1619 = vmatprep.subr.mxu0 0.0
        %1620 = vmatpush1.msra.mxu0 0.0
        %1621 = vmatprep.subr.mxu0 0.0
        %1622 = vmatpush1.msra.mxu0 0.0
        %1623 = vmatprep.subr.mxu0 0.0
        %1624 = vmatpush1.msra.mxu0 0.0
        %1625 = vmatprep.subr.mxu0 0.0
        %1626 = vmatpush1.msra.mxu0 0.0
        %1627 = vmatprep.subr.mxu0 0.0
        %1628 = vmatpush1.msra.mxu0 0.0
        %1629 = vmatprep.subr.mxu0 0.0
        %1630 = vmatpush1.msra.mxu0 0.0
        %1631 = vmatprep.subr.mxu0 0.0
        %1632 = vmatpush1.msra.mxu0 0.0
        %1633 = vmatprep.subr.mxu0 0.0
        %1634 = vmatpush1.msra.mxu0 0.0
        %1635 = vmatprep.subr.mxu0 0.0
        %1636 = vmatpush1.msra.mxu0 0.0
        %1637 = vmatprep.subr.mxu0 0.0
        %1638 = vmatpush1.msra.mxu0 0.0
        %1639 = vmatprep.subr.mxu0 0.0
        %1640 = vmatpush1.msra.mxu0 0.0
        %1641 = vmatprep.subr.mxu0 0.0
        %1642 = vmatpush1.msra.mxu0 0.0
        %1643 = vmatprep.mubr.f32.mxu0 %v1217
        %1644 = vmatmul.mubr.f32.gmra.mrb[0].mxu0 %v1200
        %v1645 = vpop.f32.mrb[0].mxu0
        %v1646 = vadd.f32 0.0, %v1645
        %v1647 = vpop.f32.mrb[0].mxu0
        %v1648 = vadd.f32 0.0, %v1647
        %1649 = vmatprep.mubr.f32.mxu0 %v1220
        %1650 = vmatmul.mubr.f32.gmra.mrb[0].mxu0 %v1202
        %v1651 = vpop.f32.mrb[0].mxu0
        %v1652 = vadd.f32 0.0, %v1651
        %v1653 = vpop.f32.mrb[0].mxu0
        %v1654 = vadd.f32 0.0, %v1653
        %1655 = vmatprep.mubr.f32.mxu0 %v1223
        %1656 = vmatmul.mubr.f32.gmra.mrb[0].mxu0 %v1204
        %v1657 = vpop.f32.mrb[0].mxu0
        %v1658 = vadd.f32 0.0, %v1657
        %v1659 = vpop.f32.mrb[0].mxu0
        %v1660 = vadd.f32 0.0, %v1659
        %1661 = vmatprep.mubr.f32.mxu0 %v1226
        %1662 = vmatmul.mubr.f32.gmra.mrb[0].mxu0 %v1206
        %v1663 = vpop.f32.mrb[0].mxu0
        %v1664 = vadd.f32 0.0, %v1663
        %v1665 = vpop.f32.mrb[0].mxu0
        %v1666 = vadd.f32 0.0, %v1665
        %1667 = vmatprep.mubr.f32.mxu0 %v1229
        %1668 = vmatmul.mubr.f32.gmra.mrb[0].mxu0 %v1208
        %v1669 = vpop.f32.mrb[0].mxu0
        %v1670 = vadd.f32 0.0, %v1669
        %v1671 = vpop.f32.mrb[0].mxu0
        %v1672 = vadd.f32 0.0, %v1671
        %1673 = vmatprep.mubr.f32.mxu0 %v1232
        %1674 = vmatmul.mubr.f32.gmra.mrb[0].mxu0 %v1210
        %v1675 = vpop.f32.mrb[0].mxu0
        %v1676 = vadd.f32 0.0, %v1675
        %v1677 = vpop.f32.mrb[0].mxu0
        %v1678 = vadd.f32 0.0, %v1677
        %1679 = vmatprep.mubr.f32.mxu0 %v1235
        %1680 = vmatmul.mubr.f32.gmra.mrb[0].mxu0 %v1212
        %v1681 = vpop.f32.mrb[0].mxu0
        %v1682 = vadd.f32 0.0, %v1681
        %v1683 = vpop.f32.mrb[0].mxu0
        %v1684 = vadd.f32 0.0, %v1683
        %1685 = vmatprep.mubr.f32.mxu0 %v1238
        %1686 = vmatmul.mubr.f32.gmra.mrb[0].mxu0 %v1214
        %v1687 = vpop.f32.mrb[0].mxu0
        %v1688 = vadd.f32 0.0, %v1687
        %v1689 = vpop.f32.mrb[0].mxu0
        %v1690 = vadd.f32 0.0, %v1689
        %1691 = vdwg.mxu0
        %1708 = vrot.lane.b32.xlu0 %v1646, 27
        %v1709 = vpop.permute.xlu0 %1708
        %1710 = vrot.lane.b32.xlu0 %v1648, 27
        %v1711 = vpop.permute.xlu0 %1710
        %1712 = vrot.lane.b32.xlu0 %v1652, 27
        %v1713 = vpop.permute.xlu0 %1712
        %1714 = vrot.lane.b32.xlu0 %v1654, 27
        %v1715 = vpop.permute.xlu0 %1714
        %1716 = vrot.lane.b32.xlu0 %v1658, 27
        %v1717 = vpop.permute.xlu0 %1716
        %1718 = vrot.lane.b32.xlu0 %v1660, 27
        %v1719 = vpop.permute.xlu0 %1718
        %1720 = vrot.lane.b32.xlu0 %v1664, 27
        %v1721 = vpop.permute.xlu0 %1720
        %1722 = vrot.lane.b32.xlu0 %v1666, 27
        %v1723 = vpop.permute.xlu0 %1722
        %1724 = vrot.lane.b32.xlu0 %v1670, 27
        %v1725 = vpop.permute.xlu0 %1724
        %1726 = vrot.lane.b32.xlu0 %v1672, 27
        %v1727 = vpop.permute.xlu0 %1726
        %1728 = vrot.lane.b32.xlu0 %v1676, 27
        %v1729 = vpop.permute.xlu0 %1728
        %1730 = vrot.lane.b32.xlu0 %v1678, 27
        %v1731 = vpop.permute.xlu0 %1730
        %1732 = vrot.lane.b32.xlu0 %v1682, 27
        %v1733 = vpop.permute.xlu0 %1732
        %1734 = vrot.lane.b32.xlu0 %v1684, 27
        %v1735 = vpop.permute.xlu0 %1734
        %1736 = vrot.lane.b32.xlu0 %v1688, 27
        %v1737 = vpop.permute.xlu0 %1736
        %1738 = vrot.lane.b32.xlu0 %v1690, 27
        %v1739 = vpop.permute.xlu0 %1738
        %vm1740 = vcmask 220160
        %v1741 = vsel %vm1740, %v1709, %v1711
        %v1742 = vsel %vm1740, %v1713, %v1715
        %v1743 = vsel %vm1740, %v1717, %v1719
        %v1744 = vsel %vm1740, %v1721, %v1723
        %v1745 = vsel %vm1740, %v1725, %v1727
        %v1746 = vsel %vm1740, %v1729, %v1731
        %v1747 = vsel %vm1740, %v1733, %v1735
        %v1748 = vsel %vm1740, %v1737, %v1739
        %1805 = vrot.lane.b32.xlu0 %v1307, 31
        %v1806 = vpop.permute.xlu0 %1805
        %1807 = vrot.lane.b32.xlu0 %v1309, 31
        %v1808 = vpop.permute.xlu0 %1807
        %1809 = vrot.lane.b32.xlu0 %v1420, 31
        %v1810 = vpop.permute.xlu0 %1809
        %1811 = vrot.lane.b32.xlu0 %v1422, 31
        %v1812 = vpop.permute.xlu0 %1811
        %1813 = vrot.lane.b32.xlu0 %v1533, 31
        %v1814 = vpop.permute.xlu0 %1813
        %1815 = vrot.lane.b32.xlu0 %v1535, 31
        %v1816 = vpop.permute.xlu0 %1815
        %1817 = vrot.lane.b32.xlu0 %v1646, 31
        %v1818 = vpop.permute.xlu0 %1817
        %1819 = vrot.lane.b32.xlu0 %v1313, 31
        %v1820 = vpop.permute.xlu0 %1819
        %1821 = vrot.lane.b32.xlu0 %v1315, 31
        %v1822 = vpop.permute.xlu0 %1821
        %1823 = vrot.lane.b32.xlu0 %v1426, 31
        %v1824 = vpop.permute.xlu0 %1823
        %1825 = vrot.lane.b32.xlu0 %v1428, 31
        %v1826 = vpop.permute.xlu0 %1825
        %1827 = vrot.lane.b32.xlu0 %v1539, 31
        %v1828 = vpop.permute.xlu0 %1827
        %1829 = vrot.lane.b32.xlu0 %v1541, 31
        %v1830 = vpop.permute.xlu0 %1829
        %1831 = vrot.lane.b32.xlu0 %v1652, 31
        %v1832 = vpop.permute.xlu0 %1831
        %1833 = vrot.lane.b32.xlu0 %v1319, 31
        %v1834 = vpop.permute.xlu0 %1833
        %1835 = vrot.lane.b32.xlu0 %v1321, 31
        %v1836 = vpop.permute.xlu0 %1835
        %1837 = vrot.lane.b32.xlu0 %v1432, 31
        %v1838 = vpop.permute.xlu0 %1837
        %1839 = vrot.lane.b32.xlu0 %v1434, 31
        %v1840 = vpop.permute.xlu0 %1839
        %1841 = vrot.lane.b32.xlu0 %v1545, 31
        %v1842 = vpop.permute.xlu0 %1841
        %1843 = vrot.lane.b32.xlu0 %v1547, 31
        %v1844 = vpop.permute.xlu0 %1843
        %1845 = vrot.lane.b32.xlu0 %v1658, 31
        %v1846 = vpop.permute.xlu0 %1845
        %1847 = vrot.lane.b32.xlu0 %v1325, 31
        %v1848 = vpop.permute.xlu0 %1847
        %1849 = vrot.lane.b32.xlu0 %v1327, 31
        %v1850 = vpop.permute.xlu0 %1849
        %1851 = vrot.lane.b32.xlu0 %v1438, 31
        %v1852 = vpop.permute.xlu0 %1851
        %1853 = vrot.lane.b32.xlu0 %v1440, 31
        %v1854 = vpop.permute.xlu0 %1853
        %1855 = vrot.lane.b32.xlu0 %v1551, 31
        %v1856 = vpop.permute.xlu0 %1855
        %1857 = vrot.lane.b32.xlu0 %v1553, 31
        %v1858 = vpop.permute.xlu0 %1857
        %1859 = vrot.lane.b32.xlu0 %v1664, 31
        %v1860 = vpop.permute.xlu0 %1859
        %1861 = vrot.lane.b32.xlu0 %v1331, 31
        %v1862 = vpop.permute.xlu0 %1861
        %1863 = vrot.lane.b32.xlu0 %v1333, 31
        %v1864 = vpop.permute.xlu0 %1863
        %1865 = vrot.lane.b32.xlu0 %v1444, 31
        %v1866 = vpop.permute.xlu0 %1865
        %1867 = vrot.lane.b32.xlu0 %v1446, 31
        %v1868 = vpop.permute.xlu0 %1867
        %1869 = vrot.lane.b32.xlu0 %v1557, 31
        %v1870 = vpop.permute.xlu0 %1869
        %1871 = vrot.lane.b32.xlu0 %v1559, 31
        %v1872 = vpop.permute.xlu0 %1871
        %1873 = vrot.lane.b32.xlu0 %v1670, 31
        %v1874 = vpop.permute.xlu0 %1873
        %1875 = vrot.lane.b32.xlu0 %v1337, 31
        %v1876 = vpop.permute.xlu0 %1875
        %1877 = vrot.lane.b32.xlu0 %v1339, 31
        %v1878 = vpop.permute.xlu0 %1877
        %1879 = vrot.lane.b32.xlu0 %v1450, 31
        %v1880 = vpop.permute.xlu0 %1879
        %1881 = vrot.lane.b32.xlu0 %v1452, 31
        %v1882 = vpop.permute.xlu0 %1881
        %1883 = vrot.lane.b32.xlu0 %v1563, 31
        %v1884 = vpop.permute.xlu0 %1883
        %1885 = vrot.lane.b32.xlu0 %v1565, 31
        %v1886 = vpop.permute.xlu0 %1885
        %1887 = vrot.lane.b32.xlu0 %v1676, 31
        %v1888 = vpop.permute.xlu0 %1887
        %1889 = vrot.lane.b32.xlu0 %v1343, 31
        %v1890 = vpop.permute.xlu0 %1889
        %1891 = vrot.lane.b32.xlu0 %v1345, 31
        %v1892 = vpop.permute.xlu0 %1891
        %1893 = vrot.lane.b32.xlu0 %v1456, 31
        %v1894 = vpop.permute.xlu0 %1893
        %1895 = vrot.lane.b32.xlu0 %v1458, 31
        %v1896 = vpop.permute.xlu0 %1895
        %1897 = vrot.lane.b32.xlu0 %v1569, 31
        %v1898 = vpop.permute.xlu0 %1897
        %1899 = vrot.lane.b32.xlu0 %v1571, 31
        %v1900 = vpop.permute.xlu0 %1899
        %1901 = vrot.lane.b32.xlu0 %v1682, 31
        %v1902 = vpop.permute.xlu0 %1901
        %1903 = vrot.lane.b32.xlu0 %v1349, 31
        %v1904 = vpop.permute.xlu0 %1903
        %1905 = vrot.lane.b32.xlu0 %v1351, 31
        %v1906 = vpop.permute.xlu0 %1905
        %1907 = vrot.lane.b32.xlu0 %v1462, 31
        %v1908 = vpop.permute.xlu0 %1907
        %1909 = vrot.lane.b32.xlu0 %v1464, 31
        %v1910 = vpop.permute.xlu0 %1909
        %1911 = vrot.lane.b32.xlu0 %v1575, 31
        %v1912 = vpop.permute.xlu0 %1911
        %1913 = vrot.lane.b32.xlu0 %v1577, 31
        %v1914 = vpop.permute.xlu0 %1913
        %1915 = vrot.lane.b32.xlu0 %v1688, 31
        %v1916 = vpop.permute.xlu0 %1915
        %vm1917 = vcmask 252928
        %v1918 = vsel %vm1917, %v1806, %v1808
        %v1919 = vsel %vm1917, %v1808, %v1810
        %v1920 = vsel %vm1917, %v1810, %v1812
        %v1921 = vsel %vm1917, %v1812, %v1814
        %v1922 = vsel %vm1917, %v1814, %v1816
        %v1923 = vsel %vm1917, %v1816, %v1818
        %v1924 = vsel %vm1917, %v1820, %v1822
        %v1925 = vsel %vm1917, %v1822, %v1824
        %v1926 = vsel %vm1917, %v1824, %v1826
        %v1927 = vsel %vm1917, %v1826, %v1828
        %v1928 = vsel %vm1917, %v1828, %v1830
        %v1929 = vsel %vm1917, %v1830, %v1832
        %v1930 = vsel %vm1917, %v1834, %v1836
        %v1931 = vsel %vm1917, %v1836, %v1838
        %v1932 = vsel %vm1917, %v1838, %v1840
        %v1933 = vsel %vm1917, %v1840, %v1842
        %v1934 = vsel %vm1917, %v1842, %v1844
        %v1935 = vsel %vm1917, %v1844, %v1846
        %v1936 = vsel %vm1917, %v1848, %v1850
        %v1937 = vsel %vm1917, %v1850, %v1852
        %v1938 = vsel %vm1917, %v1852, %v1854
        %v1939 = vsel %vm1917, %v1854, %v1856
        %v1940 = vsel %vm1917, %v1856, %v1858
        %v1941 = vsel %vm1917, %v1858, %v1860
        %v1942 = vsel %vm1917, %v1862, %v1864
        %v1943 = vsel %vm1917, %v1864, %v1866
        %v1944 = vsel %vm1917, %v1866, %v1868
        %v1945 = vsel %vm1917, %v1868, %v1870
        %v1946 = vsel %vm1917, %v1870, %v1872
        %v1947 = vsel %vm1917, %v1872, %v1874
        %v1948 = vsel %vm1917, %v1876, %v1878
        %v1949 = vsel %vm1917, %v1878, %v1880
        %v1950 = vsel %vm1917, %v1880, %v1882
        %v1951 = vsel %vm1917, %v1882, %v1884
        %v1952 = vsel %vm1917, %v1884, %v1886
        %v1953 = vsel %vm1917, %v1886, %v1888
        %v1954 = vsel %vm1917, %v1890, %v1892
        %v1955 = vsel %vm1917, %v1892, %v1894
        %v1956 = vsel %vm1917, %v1894, %v1896
        %v1957 = vsel %vm1917, %v1896, %v1898
        %v1958 = vsel %vm1917, %v1898, %v1900
        %v1959 = vsel %vm1917, %v1900, %v1902
        %v1960 = vsel %vm1917, %v1904, %v1906
        %v1961 = vsel %vm1917, %v1906, %v1908
        %v1962 = vsel %vm1917, %v1908, %v1910
        %v1963 = vsel %vm1917, %v1910, %v1912
        %v1964 = vsel %vm1917, %v1912, %v1914
        %v1965 = vsel %vm1917, %v1914, %v1916
        %v2030 = vsel %vm1917, %v1741, %v1806
        %v2031 = vsel %vm1917, %v1742, %v1820
        %v2032 = vsel %vm1917, %v1743, %v1834
        %v2033 = vsel %vm1917, %v1744, %v1848
        %v2034 = vsel %vm1917, %v1745, %v1862
        %v2035 = vsel %vm1917, %v1746, %v1876
        %v2036 = vsel %vm1917, %v1747, %v1890
        %v2037 = vsel %vm1917, %v1748, %v1904
        %v2038 = vld [vmem:[%s8] sm:$0xff]
        %v2040 = vlaneseq
        %v2041 = vshrl.u32 %v2040, 7
        %v2042 = vsub.s32 0, %v2041
        %v2043 = vrot.slane %v2038, %v2042
        %v2044 = vlaneseq
        %v2045 = vshrl.u32 %v2044, 7
        %v2046 = vsub.s32 1, %v2045
        %v2047 = vrot.slane %v2038, %v2046
        %v2048 = vlaneseq
        %v2049 = vshrl.u32 %v2048, 7
        %v2050 = vsub.s32 2, %v2049
        %v2051 = vrot.slane %v2038, %v2050
        %v2052 = vlaneseq
        %v2053 = vshrl.u32 %v2052, 7
        %v2054 = vsub.s32 3, %v2053
        %v2055 = vrot.slane %v2038, %v2054
        %v2056 = vlaneseq
        %v2057 = vshrl.u32 %v2056, 7
        %v2058 = vsub.s32 4, %v2057
        %v2059 = vrot.slane %v2038, %v2058
        %v2060 = vlaneseq
        %v2061 = vshrl.u32 %v2060, 7
        %v2062 = vsub.s32 5, %v2061
        %v2063 = vrot.slane %v2038, %v2062
        %v2064 = vlaneseq
        %v2065 = vshrl.u32 %v2064, 7
        %v2066 = vsub.s32 6, %v2065
        %v2067 = vrot.slane %v2038, %v2066
        %v2068 = vlaneseq
        %v2069 = vshrl.u32 %v2068, 7
        %v2070 = vsub.s32 7, %v2069
        %v2071 = vrot.slane %v2038, %v2070
        %v2080 = vmul.f32 %v2030, %v2043
        %v2081 = vmul.f32 %v1918, %v2047
        %v2082 = vmul.f32 %v1919, %v2051
        %v2083 = vmul.f32 %v1920, %v2055
        %v2084 = vmul.f32 %v1921, %v2059
        %v2085 = vmul.f32 %v1922, %v2063
        %v2086 = vmul.f32 %v1923, %v2067
        %v2087 = vmul.f32 %v1818, %v2071
        %v2088 = vmul.f32 %v2031, %v2043
        %v2089 = vmul.f32 %v1924, %v2047
        %v2090 = vmul.f32 %v1925, %v2051
        %v2091 = vmul.f32 %v1926, %v2055
        %v2092 = vmul.f32 %v1927, %v2059
        %v2093 = vmul.f32 %v1928, %v2063
        %v2094 = vmul.f32 %v1929, %v2067
        %v2095 = vmul.f32 %v1832, %v2071
        %v2096 = vmul.f32 %v2032, %v2043
        %v2097 = vmul.f32 %v1930, %v2047
        %v2098 = vmul.f32 %v1931, %v2051
        %v2099 = vmul.f32 %v1932, %v2055
        %v2100 = vmul.f32 %v1933, %v2059
        %v2101 = vmul.f32 %v1934, %v2063
        %v2102 = vmul.f32 %v1935, %v2067
        %v2103 = vmul.f32 %v1846, %v2071
        %v2104 = vmul.f32 %v2033, %v2043
        %v2105 = vmul.f32 %v1936, %v2047
        %v2106 = vmul.f32 %v1937, %v2051
        %v2107 = vmul.f32 %v1938, %v2055
        %v2108 = vmul.f32 %v1939, %v2059
        %v2109 = vmul.f32 %v1940, %v2063
        %v2110 = vmul.f32 %v1941, %v2067
        %v2111 = vmul.f32 %v1860, %v2071
        %v2112 = vmul.f32 %v2034, %v2043
        %v2113 = vmul.f32 %v1942, %v2047
        %v2114 = vmul.f32 %v1943, %v2051
        %v2115 = vmul.f32 %v1944, %v2055
        %v2116 = vmul.f32 %v1945, %v2059
        %v2117 = vmul.f32 %v1946, %v2063
        %v2118 = vmul.f32 %v1947, %v2067
        %v2119 = vmul.f32 %v1874, %v2071
        %v2120 = vmul.f32 %v2035, %v2043
        %v2121 = vmul.f32 %v1948, %v2047
        %v2122 = vmul.f32 %v1949, %v2051
        %v2123 = vmul.f32 %v1950, %v2055
        %v2124 = vmul.f32 %v1951, %v2059
        %v2125 = vmul.f32 %v1952, %v2063
        %v2126 = vmul.f32 %v1953, %v2067
        %v2127 = vmul.f32 %v1888, %v2071
        %v2128 = vmul.f32 %v2036, %v2043
        %v2129 = vmul.f32 %v1954, %v2047
        %v2130 = vmul.f32 %v1955, %v2051
        %v2131 = vmul.f32 %v1956, %v2055
        %v2132 = vmul.f32 %v1957, %v2059
        %v2133 = vmul.f32 %v1958, %v2063
        %v2134 = vmul.f32 %v1959, %v2067
        %v2135 = vmul.f32 %v1902, %v2071
        %v2136 = vmul.f32 %v2037, %v2043
        %v2137 = vmul.f32 %v1960, %v2047
        %v2138 = vmul.f32 %v1961, %v2051
        %v2139 = vmul.f32 %v1962, %v2055
        %v2140 = vmul.f32 %v1963, %v2059
        %v2141 = vmul.f32 %v1964, %v2063
        %v2142 = vmul.f32 %v1965, %v2067
        %v2143 = vmul.f32 %v1916, %v2071
        %v2144 = vadd.f32 %v815, %v2080
        %v2145 = vadd.f32 %v817, %v2081
        %v2146 = vadd.f32 %v928, %v2082
        %v2147 = vadd.f32 %v930, %v2083
        %v2148 = vadd.f32 %v1041, %v2084
        %v2149 = vadd.f32 %v1043, %v2085
        %v2150 = vadd.f32 %v1154, %v2086
        %v2151 = vadd.f32 %v1156, %v2087
        %v2152 = vadd.f32 %v821, %v2088
        %v2153 = vadd.f32 %v823, %v2089
        %v2154 = vadd.f32 %v934, %v2090
        %v2155 = vadd.f32 %v936, %v2091
        %v2156 = vadd.f32 %v1047, %v2092
        %v2157 = vadd.f32 %v1049, %v2093
        %v2158 = vadd.f32 %v1160, %v2094
        %v2159 = vadd.f32 %v1162, %v2095
        %v2160 = vadd.f32 %v827, %v2096
        %v2161 = vadd.f32 %v829, %v2097
        %v2162 = vadd.f32 %v940, %v2098
        %v2163 = vadd.f32 %v942, %v2099
        %v2164 = vadd.f32 %v1053, %v2100
        %v2165 = vadd.f32 %v1055, %v2101
        %v2166 = vadd.f32 %v1166, %v2102
        %v2167 = vadd.f32 %v1168, %v2103
        %v2168 = vadd.f32 %v833, %v2104
        %v2169 = vadd.f32 %v835, %v2105
        %v2170 = vadd.f32 %v946, %v2106
        %v2171 = vadd.f32 %v948, %v2107
        %v2172 = vadd.f32 %v1059, %v2108
        %v2173 = vadd.f32 %v1061, %v2109
        %v2174 = vadd.f32 %v1172, %v2110
        %v2175 = vadd.f32 %v1174, %v2111
        %v2176 = vadd.f32 %v839, %v2112
        %v2177 = vadd.f32 %v841, %v2113
        %v2178 = vadd.f32 %v952, %v2114
        %v2179 = vadd.f32 %v954, %v2115
        %v2180 = vadd.f32 %v1065, %v2116
        %v2181 = vadd.f32 %v1067, %v2117
        %v2182 = vadd.f32 %v1178, %v2118
        %v2183 = vadd.f32 %v1180, %v2119
        %v2184 = vadd.f32 %v845, %v2120
        %v2185 = vadd.f32 %v847, %v2121
        %v2186 = vadd.f32 %v958, %v2122
        %v2187 = vadd.f32 %v960, %v2123
        %v2188 = vadd.f32 %v1071, %v2124
        %v2189 = vadd.f32 %v1073, %v2125
        %v2190 = vadd.f32 %v1184, %v2126
        %v2191 = vadd.f32 %v1186, %v2127
        %v2192 = vadd.f32 %v851, %v2128
        %v2193 = vadd.f32 %v853, %v2129
        %v2194 = vadd.f32 %v964, %v2130
        %v2195 = vadd.f32 %v966, %v2131
        %v2196 = vadd.f32 %v1077, %v2132
        %v2197 = vadd.f32 %v1079, %v2133
        %v2198 = vadd.f32 %v1190, %v2134
        %v2199 = vadd.f32 %v1192, %v2135
        %v2200 = vadd.f32 %v857, %v2136
        %v2201 = vadd.f32 %v859, %v2137
        %v2202 = vadd.f32 %v970, %v2138
        %v2203 = vadd.f32 %v972, %v2139
        %v2204 = vadd.f32 %v1083, %v2140
        %v2205 = vadd.f32 %v1085, %v2141
        %v2206 = vadd.f32 %v1196, %v2142
        %v2207 = vadd.f32 %v1198, %v2143
        %s2208 = scalar_lea.vmem [#allocation11], 128
        %v2209 = vld [vmem:[%s2208] sm:$0xff]
        %v2210 = vld [vmem:[%s2208 + $0x8] sm:$0xff]
        %v2211 = vld [vmem:[%s2208 + $0x10] sm:$0xff]
        %v2212 = vld [vmem:[%s2208 + $0x18] sm:$0xff]
        %v2213 = vld [vmem:[%s2208 + $0x20] sm:$0xff]
        %v2214 = vld [vmem:[%s2208 + $0x28] sm:$0xff]
        %v2215 = vld [vmem:[%s2208 + $0x30] sm:$0xff]
        %v2216 = vld [vmem:[%s2208 + $0x38] sm:$0xff]
        %v2217 = vld [vmem:[%s2208 + $0x40] sm:$0xff]
        %v2218 = vld [vmem:[%s2208 + $0x48] sm:$0xff]
        %v2219 = vld [vmem:[%s2208 + $0x50] sm:$0xff]
        %v2220 = vld [vmem:[%s2208 + $0x58] sm:$0xff]
        %v2221 = vld [vmem:[%s2208 + $0x60] sm:$0xff]
        %v2222 = vld [vmem:[%s2208 + $0x68] sm:$0xff]
        %v2223 = vld [vmem:[%s2208 + $0x70] sm:$0xff]
        %v2224 = vld [vmem:[%s2208 + $0x78] sm:$0xff]
        %v2226 = vsel %vm723, %v2210, 0
        %v2229 = vsel %vm723, %v2212, 0
        %v2232 = vsel %vm723, %v2214, 0
        %v2235 = vsel %vm723, %v2216, 0
        %v2238 = vsel %vm723, %v2218, 0
        %v2241 = vsel %vm723, %v2220, 0
        %v2244 = vsel %vm723, %v2222, 0
        %v2247 = vsel %vm723, %v2224, 0
        %2249 = vmatprep.subr.mxu0 %v499
        %2250 = vmatpush1.msra.mxu0 %v498
        %2251 = vmatprep.subr.mxu0 %v507
        %2252 = vmatpush1.msra.mxu0 %v506
        %2253 = vmatprep.subr.mxu0 %v515
        %2254 = vmatpush1.msra.mxu0 %v514
        %2255 = vmatprep.subr.mxu0 %v523
        %2256 = vmatpush1.msra.mxu0 %v522
        %2257 = vmatprep.subr.mxu0 %v531
        %2258 = vmatpush1.msra.mxu0 %v530
        %2259 = vmatprep.subr.mxu0 %v539
        %2260 = vmatpush1.msra.mxu0 %v538
        %2261 = vmatprep.subr.mxu0 %v547
        %2262 = vmatpush1.msra.mxu0 %v546
        %2263 = vmatprep.subr.mxu0 %v555
        %2264 = vmatpush1.msra.mxu0 %v554
        %2265 = vmatprep.subr.mxu0 %v563
        %2266 = vmatpush1.msra.mxu0 %v562
        %2267 = vmatprep.subr.mxu0 %v571
        %2268 = vmatpush1.msra.mxu0 %v570
        %2269 = vmatprep.subr.mxu0 %v579
        %2270 = vmatpush1.msra.mxu0 %v578
        %2271 = vmatprep.subr.mxu0 %v587
        %2272 = vmatpush1.msra.mxu0 %v586
        %2273 = vmatprep.subr.mxu0 %v595
        %2274 = vmatpush1.msra.mxu0 %v594
        %2275 = vmatprep.subr.mxu0 %v603
        %2276 = vmatpush1.msra.mxu0 %v602
        %2277 = vmatprep.subr.mxu0 %v611
        %2278 = vmatpush1.msra.mxu0 %v610
        %2279 = vmatprep.subr.mxu0 %v619
        %2280 = vmatpush1.msra.mxu0 %v618
        %2281 = vmatprep.subr.mxu0 %v627
        %2282 = vmatpush1.msra.mxu0 %v626
        %2283 = vmatprep.subr.mxu0 %v635
        %2284 = vmatpush1.msra.mxu0 %v634
        %2285 = vmatprep.subr.mxu0 %v643
        %2286 = vmatpush1.msra.mxu0 %v642
        %2287 = vmatprep.subr.mxu0 %v651
        %2288 = vmatpush1.msra.mxu0 %v650
        %2289 = vmatprep.subr.mxu0 0.0
        %2290 = vmatpush1.msra.mxu0 0.0
        %2291 = vmatprep.subr.mxu0 0.0
        %2292 = vmatpush1.msra.mxu0 0.0
        %2293 = vmatprep.subr.mxu0 0.0
        %2294 = vmatpush1.msra.mxu0 0.0
        %2295 = vmatprep.subr.mxu0 0.0
        %2296 = vmatpush1.msra.mxu0 0.0
        %2297 = vmatprep.subr.mxu0 0.0
        %2298 = vmatpush1.msra.mxu0 0.0
        %2299 = vmatprep.subr.mxu0 0.0
        %2300 = vmatpush1.msra.mxu0 0.0
        %2301 = vmatprep.subr.mxu0 0.0
        %2302 = vmatpush1.msra.mxu0 0.0
        %2303 = vmatprep.subr.mxu0 0.0
        %2304 = vmatpush1.msra.mxu0 0.0
        %2305 = vmatprep.subr.mxu0 0.0
        %2306 = vmatpush1.msra.mxu0 0.0
        %2307 = vmatprep.subr.mxu0 0.0
        %2308 = vmatpush1.msra.mxu0 0.0
        %2309 = vmatprep.subr.mxu0 0.0
        %2310 = vmatpush1.msra.mxu0 0.0
        %2311 = vmatprep.subr.mxu0 0.0
        %2312 = vmatpush1.msra.mxu0 0.0
        %2313 = vmatprep.mubr.f32.mxu0 %v2226
        %2314 = vmatmul.mubr.f32.gmra.mrb[0].mxu0 %v2209
        %v2315 = vpop.f32.mrb[0].mxu0
        %v2316 = vadd.f32 0.0, %v2315
        %v2317 = vpop.f32.mrb[0].mxu0
        %v2318 = vadd.f32 0.0, %v2317
        %2319 = vmatprep.mubr.f32.mxu0 %v2229
        %2320 = vmatmul.mubr.f32.gmra.mrb[0].mxu0 %v2211
        %v2321 = vpop.f32.mrb[0].mxu0
        %v2322 = vadd.f32 0.0, %v2321
        %v2323 = vpop.f32.mrb[0].mxu0
        %v2324 = vadd.f32 0.0, %v2323
        %2325 = vmatprep.mubr.f32.mxu0 %v2232
        %2326 = vmatmul.mubr.f32.gmra.mrb[0].mxu0 %v2213
        %v2327 = vpop.f32.mrb[0].mxu0
        %v2328 = vadd.f32 0.0, %v2327
        %v2329 = vpop.f32.mrb[0].mxu0
        %v2330 = vadd.f32 0.0, %v2329
        %2331 = vmatprep.mubr.f32.mxu0 %v2235
        %2332 = vmatmul.mubr.f32.gmra.mrb[0].mxu0 %v2215
        %v2333 = vpop.f32.mrb[0].mxu0
        %v2334 = vadd.f32 0.0, %v2333
        %v2335 = vpop.f32.mrb[0].mxu0
        %v2336 = vadd.f32 0.0, %v2335
        %2337 = vmatprep.mubr.f32.mxu0 %v2238
        %2338 = vmatmul.mubr.f32.gmra.mrb[0].mxu0 %v2217
        %v2339 = vpop.f32.mrb[0].mxu0
        %v2340 = vadd.f32 0.0, %v2339
        %v2341 = vpop.f32.mrb[0].mxu0
        %v2342 = vadd.f32 0.0, %v2341
        %2343 = vmatprep.mubr.f32.mxu0 %v2241
        %2344 = vmatmul.mubr.f32.gmra.mrb[0].mxu0 %v2219
        %v2345 = vpop.f32.mrb[0].mxu0
        %v2346 = vadd.f32 0.0, %v2345
        %v2347 = vpop.f32.mrb[0].mxu0
        %v2348 = vadd.f32 0.0, %v2347
        %2349 = vmatprep.mubr.f32.mxu0 %v2244
        %2350 = vmatmul.mubr.f32.gmra.mrb[0].mxu0 %v2221
        %v2351 = vpop.f32.mrb[0].mxu0
        %v2352 = vadd.f32 0.0, %v2351
        %v2353 = vpop.f32.mrb[0].mxu0
        %v2354 = vadd.f32 0.0, %v2353
        %2355 = vmatprep.mubr.f32.mxu0 %v2247
        %2356 = vmatmul.mubr.f32.gmra.mrb[0].mxu0 %v2223
        %v2357 = vpop.f32.mrb[0].mxu0
        %v2358 = vadd.f32 0.0, %v2357
        %v2359 = vpop.f32.mrb[0].mxu0
        %v2360 = vadd.f32 0.0, %v2359
        %2361 = vdwg.mxu0
        %2362 = vmatprep.subr.mxu0 %v501
        %2363 = vmatpush1.msra.mxu0 %v500
        %2364 = vmatprep.subr.mxu0 %v509
        %2365 = vmatpush1.msra.mxu0 %v508
        %2366 = vmatprep.subr.mxu0 %v517
        %2367 = vmatpush1.msra.mxu0 %v516
        %2368 = vmatprep.subr.mxu0 %v525
        %2369 = vmatpush1.msra.mxu0 %v524
        %2370 = vmatprep.subr.mxu0 %v533
        %2371 = vmatpush1.msra.mxu0 %v532
        %2372 = vmatprep.subr.mxu0 %v541
        %2373 = vmatpush1.msra.mxu0 %v540
        %2374 = vmatprep.subr.mxu0 %v549
        %2375 = vmatpush1.msra.mxu0 %v548
        %2376 = vmatprep.subr.mxu0 %v557
        %2377 = vmatpush1.msra.mxu0 %v556
        %2378 = vmatprep.subr.mxu0 %v565
        %2379 = vmatpush1.msra.mxu0 %v564
        %2380 = vmatprep.subr.mxu0 %v573
        %2381 = vmatpush1.msra.mxu0 %v572
        %2382 = vmatprep.subr.mxu0 %v581
        %2383 = vmatpush1.msra.mxu0 %v580
        %2384 = vmatprep.subr.mxu0 %v589
        %2385 = vmatpush1.msra.mxu0 %v588
        %2386 = vmatprep.subr.mxu0 %v597
        %2387 = vmatpush1.msra.mxu0 %v596
        %2388 = vmatprep.subr.mxu0 %v605
        %2389 = vmatpush1.msra.mxu0 %v604
        %2390 = vmatprep.subr.mxu0 %v613
        %2391 = vmatpush1.msra.mxu0 %v612
        %2392 = vmatprep.subr.mxu0 %v621
        %2393 = vmatpush1.msra.mxu0 %v620
        %2394 = vmatprep.subr.mxu0 %v629
        %2395 = vmatpush1.msra.mxu0 %v628
        %2396 = vmatprep.subr.mxu0 %v637
        %2397 = vmatpush1.msra.mxu0 %v636
        %2398 = vmatprep.subr.mxu0 %v645
        %2399 = vmatpush1.msra.mxu0 %v644
        %2400 = vmatprep.subr.mxu0 %v653
        %2401 = vmatpush1.msra.mxu0 %v652
        %2402 = vmatprep.subr.mxu0 0.0
        %2403 = vmatpush1.msra.mxu0 0.0
        %2404 = vmatprep.subr.mxu0 0.0
        %2405 = vmatpush1.msra.mxu0 0.0
        %2406 = vmatprep.subr.mxu0 0.0
        %2407 = vmatpush1.msra.mxu0 0.0
        %2408 = vmatprep.subr.mxu0 0.0
        %2409 = vmatpush1.msra.mxu0 0.0
        %2410 = vmatprep.subr.mxu0 0.0
        %2411 = vmatpush1.msra.mxu0 0.0
        %2412 = vmatprep.subr.mxu0 0.0
        %2413 = vmatpush1.msra.mxu0 0.0
        %2414 = vmatprep.subr.mxu0 0.0
        %2415 = vmatpush1.msra.mxu0 0.0
        %2416 = vmatprep.subr.mxu0 0.0
        %2417 = vmatpush1.msra.mxu0 0.0
        %2418 = vmatprep.subr.mxu0 0.0
        %2419 = vmatpush1.msra.mxu0 0.0
        %2420 = vmatprep.subr.mxu0 0.0
        %2421 = vmatpush1.msra.mxu0 0.0
        %2422 = vmatprep.subr.mxu0 0.0
        %2423 = vmatpush1.msra.mxu0 0.0
        %2424 = vmatprep.subr.mxu0 0.0
        %2425 = vmatpush1.msra.mxu0 0.0
        %2426 = vmatprep.mubr.f32.mxu0 %v2226
        %2427 = vmatmul.mubr.f32.gmra.mrb[0].mxu0 %v2209
        %v2428 = vpop.f32.mrb[0].mxu0
        %v2429 = vadd.f32 0.0, %v2428
        %v2430 = vpop.f32.mrb[0].mxu0
        %v2431 = vadd.f32 0.0, %v2430
        %2432 = vmatprep.mubr.f32.mxu0 %v2229
        %2433 = vmatmul.mubr.f32.gmra.mrb[0].mxu0 %v2211
        %v2434 = vpop.f32.mrb[0].mxu0
        %v2435 = vadd.f32 0.0, %v2434
        %v2436 = vpop.f32.mrb[0].mxu0
        %v2437 = vadd.f32 0.0, %v2436
        %2438 = vmatprep.mubr.f32.mxu0 %v2232
        %2439 = vmatmul.mubr.f32.gmra.mrb[0].mxu0 %v2213
        %v2440 = vpop.f32.mrb[0].mxu0
        %v2441 = vadd.f32 0.0, %v2440
        %v2442 = vpop.f32.mrb[0].mxu0
        %v2443 = vadd.f32 0.0, %v2442
        %2444 = vmatprep.mubr.f32.mxu0 %v2235
        %2445 = vmatmul.mubr.f32.gmra.mrb[0].mxu0 %v2215
        %v2446 = vpop.f32.mrb[0].mxu0
        %v2447 = vadd.f32 0.0, %v2446
        %v2448 = vpop.f32.mrb[0].mxu0
        %v2449 = vadd.f32 0.0, %v2448
        %2450 = vmatprep.mubr.f32.mxu0 %v2238
        %2451 = vmatmul.mubr.f32.gmra.mrb[0].mxu0 %v2217
        %v2452 = vpop.f32.mrb[0].mxu0
        %v2453 = vadd.f32 0.0, %v2452
        %v2454 = vpop.f32.mrb[0].mxu0
        %v2455 = vadd.f32 0.0, %v2454
        %2456 = vmatprep.mubr.f32.mxu0 %v2241
        %2457 = vmatmul.mubr.f32.gmra.mrb[0].mxu0 %v2219
        %v2458 = vpop.f32.mrb[0].mxu0
        %v2459 = vadd.f32 0.0, %v2458
        %v2460 = vpop.f32.mrb[0].mxu0
        %v2461 = vadd.f32 0.0, %v2460
        %2462 = vmatprep.mubr.f32.mxu0 %v2244
        %2463 = vmatmul.mubr.f32.gmra.mrb[0].mxu0 %v2221
        %v2464 = vpop.f32.mrb[0].mxu0
        %v2465 = vadd.f32 0.0, %v2464
        %v2466 = vpop.f32.mrb[0].mxu0
        %v2467 = vadd.f32 0.0, %v2466
        %2468 = vmatprep.mubr.f32.mxu0 %v2247
        %2469 = vmatmul.mubr.f32.gmra.mrb[0].mxu0 %v2223
        %v2470 = vpop.f32.mrb[0].mxu0
        %v2471 = vadd.f32 0.0, %v2470
        %v2472 = vpop.f32.mrb[0].mxu0
        %v2473 = vadd.f32 0.0, %v2472
        %2474 = vdwg.mxu0
        %2475 = vmatprep.subr.mxu0 %v503
        %2476 = vmatpush1.msra.mxu0 %v502
        %2477 = vmatprep.subr.mxu0 %v511
        %2478 = vmatpush1.msra.mxu0 %v510
        %2479 = vmatprep.subr.mxu0 %v519
        %2480 = vmatpush1.msra.mxu0 %v518
        %2481 = vmatprep.subr.mxu0 %v527
        %2482 = vmatpush1.msra.mxu0 %v526
        %2483 = vmatprep.subr.mxu0 %v535
        %2484 = vmatpush1.msra.mxu0 %v534
        %2485 = vmatprep.subr.mxu0 %v543
        %2486 = vmatpush1.msra.mxu0 %v542
        %2487 = vmatprep.subr.mxu0 %v551
        %2488 = vmatpush1.msra.mxu0 %v550
        %2489 = vmatprep.subr.mxu0 %v559
        %2490 = vmatpush1.msra.mxu0 %v558
        %2491 = vmatprep.subr.mxu0 %v567
        %2492 = vmatpush1.msra.mxu0 %v566
        %2493 = vmatprep.subr.mxu0 %v575
        %2494 = vmatpush1.msra.mxu0 %v574
        %2495 = vmatprep.subr.mxu0 %v583
        %2496 = vmatpush1.msra.mxu0 %v582
        %2497 = vmatprep.subr.mxu0 %v591
        %2498 = vmatpush1.msra.mxu0 %v590
        %2499 = vmatprep.subr.mxu0 %v599
        %2500 = vmatpush1.msra.mxu0 %v598
        %2501 = vmatprep.subr.mxu0 %v607
        %2502 = vmatpush1.msra.mxu0 %v606
        %2503 = vmatprep.subr.mxu0 %v615
        %2504 = vmatpush1.msra.mxu0 %v614
        %2505 = vmatprep.subr.mxu0 %v623
        %2506 = vmatpush1.msra.mxu0 %v622
        %2507 = vmatprep.subr.mxu0 %v631
        %2508 = vmatpush1.msra.mxu0 %v630
        %2509 = vmatprep.subr.mxu0 %v639
        %2510 = vmatpush1.msra.mxu0 %v638
        %2511 = vmatprep.subr.mxu0 %v647
        %2512 = vmatpush1.msra.mxu0 %v646
        %2513 = vmatprep.subr.mxu0 %v655
        %2514 = vmatpush1.msra.mxu0 %v654
        %2515 = vmatprep.subr.mxu0 0.0
        %2516 = vmatpush1.msra.mxu0 0.0
        %2517 = vmatprep.subr.mxu0 0.0
        %2518 = vmatpush1.msra.mxu0 0.0
        %2519 = vmatprep.subr.mxu0 0.0
        %2520 = vmatpush1.msra.mxu0 0.0
        %2521 = vmatprep.subr.mxu0 0.0
        %2522 = vmatpush1.msra.mxu0 0.0
        %2523 = vmatprep.subr.mxu0 0.0
        %2524 = vmatpush1.msra.mxu0 0.0
        %2525 = vmatprep.subr.mxu0 0.0
        %2526 = vmatpush1.msra.mxu0 0.0
        %2527 = vmatprep.subr.mxu0 0.0
        %2528 = vmatpush1.msra.mxu0 0.0
        %2529 = vmatprep.subr.mxu0 0.0
        %2530 = vmatpush1.msra.mxu0 0.0
        %2531 = vmatprep.subr.mxu0 0.0
        %2532 = vmatpush1.msra.mxu0 0.0
        %2533 = vmatprep.subr.mxu0 0.0
        %2534 = vmatpush1.msra.mxu0 0.0
        %2535 = vmatprep.subr.mxu0 0.0
        %2536 = vmatpush1.msra.mxu0 0.0
        %2537 = vmatprep.subr.mxu0 0.0
        %2538 = vmatpush1.msra.mxu0 0.0
        %2539 = vmatprep.mubr.f32.mxu0 %v2226
        %2540 = vmatmul.mubr.f32.gmra.mrb[0].mxu0 %v2209
        %v2541 = vpop.f32.mrb[0].mxu0
        %v2542 = vadd.f32 0.0, %v2541
        %v2543 = vpop.f32.mrb[0].mxu0
        %v2544 = vadd.f32 0.0, %v2543
        %2545 = vmatprep.mubr.f32.mxu0 %v2229
        %2546 = vmatmul.mubr.f32.gmra.mrb[0].mxu0 %v2211
        %v2547 = vpop.f32.mrb[0].mxu0
        %v2548 = vadd.f32 0.0, %v2547
        %v2549 = vpop.f32.mrb[0].mxu0
        %v2550 = vadd.f32 0.0, %v2549
        %2551 = vmatprep.mubr.f32.mxu0 %v2232
        %2552 = vmatmul.mubr.f32.gmra.mrb[0].mxu0 %v2213
        %v2553 = vpop.f32.mrb[0].mxu0
        %v2554 = vadd.f32 0.0, %v2553
        %v2555 = vpop.f32.mrb[0].mxu0
        %v2556 = vadd.f32 0.0, %v2555
        %2557 = vmatprep.mubr.f32.mxu0 %v2235
        %2558 = vmatmul.mubr.f32.gmra.mrb[0].mxu0 %v2215
        %v2559 = vpop.f32.mrb[0].mxu0
        %v2560 = vadd.f32 0.0, %v2559
        %v2561 = vpop.f32.mrb[0].mxu0
        %v2562 = vadd.f32 0.0, %v2561
        %2563 = vmatprep.mubr.f32.mxu0 %v2238
        %2564 = vmatmul.mubr.f32.gmra.mrb[0].mxu0 %v2217
        %v2565 = vpop.f32.mrb[0].mxu0
        %v2566 = vadd.f32 0.0, %v2565
        %v2567 = vpop.f32.mrb[0].mxu0
        %v2568 = vadd.f32 0.0, %v2567
        %2569 = vmatprep.mubr.f32.mxu0 %v2241
        %2570 = vmatmul.mubr.f32.gmra.mrb[0].mxu0 %v2219
        %v2571 = vpop.f32.mrb[0].mxu0
        %v2572 = vadd.f32 0.0, %v2571
        %v2573 = vpop.f32.mrb[0].mxu0
        %v2574 = vadd.f32 0.0, %v2573
        %2575 = vmatprep.mubr.f32.mxu0 %v2244
        %2576 = vmatmul.mubr.f32.gmra.mrb[0].mxu0 %v2221
        %v2577 = vpop.f32.mrb[0].mxu0
        %v2578 = vadd.f32 0.0, %v2577
        %v2579 = vpop.f32.mrb[0].mxu0
        %v2580 = vadd.f32 0.0, %v2579
        %2581 = vmatprep.mubr.f32.mxu0 %v2247
        %2582 = vmatmul.mubr.f32.gmra.mrb[0].mxu0 %v2223
        %v2583 = vpop.f32.mrb[0].mxu0
        %v2584 = vadd.f32 0.0, %v2583
        %v2585 = vpop.f32.mrb[0].mxu0
        %v2586 = vadd.f32 0.0, %v2585
        %2587 = vdwg.mxu0
        %2588 = vmatprep.subr.mxu0 %v505
        %2589 = vmatpush1.msra.mxu0 %v504
        %2590 = vmatprep.subr.mxu0 %v513
        %2591 = vmatpush1.msra.mxu0 %v512
        %2592 = vmatprep.subr.mxu0 %v521
        %2593 = vmatpush1.msra.mxu0 %v520
        %2594 = vmatprep.subr.mxu0 %v529
        %2595 = vmatpush1.msra.mxu0 %v528
        %2596 = vmatprep.subr.mxu0 %v537
        %2597 = vmatpush1.msra.mxu0 %v536
        %2598 = vmatprep.subr.mxu0 %v545
        %2599 = vmatpush1.msra.mxu0 %v544
        %2600 = vmatprep.subr.mxu0 %v553
        %2601 = vmatpush1.msra.mxu0 %v552
        %2602 = vmatprep.subr.mxu0 %v561
        %2603 = vmatpush1.msra.mxu0 %v560
        %2604 = vmatprep.subr.mxu0 %v569
        %2605 = vmatpush1.msra.mxu0 %v568
        %2606 = vmatprep.subr.mxu0 %v577
        %2607 = vmatpush1.msra.mxu0 %v576
        %2608 = vmatprep.subr.mxu0 %v585
        %2609 = vmatpush1.msra.mxu0 %v584
        %2610 = vmatprep.subr.mxu0 %v593
        %2611 = vmatpush1.msra.mxu0 %v592
        %2612 = vmatprep.subr.mxu0 %v601
        %2613 = vmatpush1.msra.mxu0 %v600
        %2614 = vmatprep.subr.mxu0 %v609
        %2615 = vmatpush1.msra.mxu0 %v608
        %2616 = vmatprep.subr.mxu0 %v617
        %2617 = vmatpush1.msra.mxu0 %v616
        %2618 = vmatprep.subr.mxu0 %v625
        %2619 = vmatpush1.msra.mxu0 %v624
        %2620 = vmatprep.subr.mxu0 %v633
        %2621 = vmatpush1.msra.mxu0 %v632
        %2622 = vmatprep.subr.mxu0 %v641
        %2623 = vmatpush1.msra.mxu0 %v640
        %2624 = vmatprep.subr.mxu0 %v649
        %2625 = vmatpush1.msra.mxu0 %v648
        %2626 = vmatprep.subr.mxu0 %v657
        %2627 = vmatpush1.msra.mxu0 %v656
        %2628 = vmatprep.subr.mxu0 0.0
        %2629 = vmatpush1.msra.mxu0 0.0
        %2630 = vmatprep.subr.mxu0 0.0
        %2631 = vmatpush1.msra.mxu0 0.0
        %2632 = vmatprep.subr.mxu0 0.0
        %2633 = vmatpush1.msra.mxu0 0.0
        %2634 = vmatprep.subr.mxu0 0.0
        %2635 = vmatpush1.msra.mxu0 0.0
        %2636 = vmatprep.subr.mxu0 0.0
        %2637 = vmatpush1.msra.mxu0 0.0
        %2638 = vmatprep.subr.mxu0 0.0
        %2639 = vmatpush1.msra.mxu0 0.0
        %2640 = vmatprep.subr.mxu0 0.0
        %2641 = vmatpush1.msra.mxu0 0.0
        %2642 = vmatprep.subr.mxu0 0.0
        %2643 = vmatpush1.msra.mxu0 0.0
        %2644 = vmatprep.subr.mxu0 0.0
        %2645 = vmatpush1.msra.mxu0 0.0
        %2646 = vmatprep.subr.mxu0 0.0
        %2647 = vmatpush1.msra.mxu0 0.0
        %2648 = vmatprep.subr.mxu0 0.0
        %2649 = vmatpush1.msra.mxu0 0.0
        %2650 = vmatprep.subr.mxu0 0.0
        %2651 = vmatpush1.msra.mxu0 0.0
        %2652 = vmatprep.mubr.f32.mxu0 %v2226
        %2653 = vmatmul.mubr.f32.gmra.mrb[0].mxu0 %v2209
        %v2654 = vpop.f32.mrb[0].mxu0
        %v2655 = vadd.f32 0.0, %v2654
        %v2656 = vpop.f32.mrb[0].mxu0
        %v2657 = vadd.f32 0.0, %v2656
        %2658 = vmatprep.mubr.f32.mxu0 %v2229
        %2659 = vmatmul.mubr.f32.gmra.mrb[0].mxu0 %v2211
        %v2660 = vpop.f32.mrb[0].mxu0
        %v2661 = vadd.f32 0.0, %v2660
        %v2662 = vpop.f32.mrb[0].mxu0
        %v2663 = vadd.f32 0.0, %v2662
        %2664 = vmatprep.mubr.f32.mxu0 %v2232
        %2665 = vmatmul.mubr.f32.gmra.mrb[0].mxu0 %v2213
        %v2666 = vpop.f32.mrb[0].mxu0
        %v2667 = vadd.f32 0.0, %v2666
        %v2668 = vpop.f32.mrb[0].mxu0
        %v2669 = vadd.f32 0.0, %v2668
        %2670 = vmatprep.mubr.f32.mxu0 %v2235
        %2671 = vmatmul.mubr.f32.gmra.mrb[0].mxu0 %v2215
        %v2672 = vpop.f32.mrb[0].mxu0
        %v2673 = vadd.f32 0.0, %v2672
        %v2674 = vpop.f32.mrb[0].mxu0
        %v2675 = vadd.f32 0.0, %v2674
        %2676 = vmatprep.mubr.f32.mxu0 %v2238
        %2677 = vmatmul.mubr.f32.gmra.mrb[0].mxu0 %v2217
        %v2678 = vpop.f32.mrb[0].mxu0
        %v2679 = vadd.f32 0.0, %v2678
        %v2680 = vpop.f32.mrb[0].mxu0
        %v2681 = vadd.f32 0.0, %v2680
        %2682 = vmatprep.mubr.f32.mxu0 %v2241
        %2683 = vmatmul.mubr.f32.gmra.mrb[0].mxu0 %v2219
        %v2684 = vpop.f32.mrb[0].mxu0
        %v2685 = vadd.f32 0.0, %v2684
        %v2686 = vpop.f32.mrb[0].mxu0
        %v2687 = vadd.f32 0.0, %v2686
        %2688 = vmatprep.mubr.f32.mxu0 %v2244
        %2689 = vmatmul.mubr.f32.gmra.mrb[0].mxu0 %v2221
        %v2690 = vpop.f32.mrb[0].mxu0
        %v2691 = vadd.f32 0.0, %v2690
        %v2692 = vpop.f32.mrb[0].mxu0
        %v2693 = vadd.f32 0.0, %v2692
        %2694 = vmatprep.mubr.f32.mxu0 %v2247
        %2695 = vmatmul.mubr.f32.gmra.mrb[0].mxu0 %v2223
        %v2696 = vpop.f32.mrb[0].mxu0
        %v2697 = vadd.f32 0.0, %v2696
        %v2698 = vpop.f32.mrb[0].mxu0
        %v2699 = vadd.f32 0.0, %v2698
        %2700 = vdwg.mxu0
        %2717 = vrot.lane.b32.xlu0 %v2655, 26
        %v2718 = vpop.permute.xlu0 %2717
        %2719 = vrot.lane.b32.xlu0 %v2657, 26
        %v2720 = vpop.permute.xlu0 %2719
        %2721 = vrot.lane.b32.xlu0 %v2661, 26
        %v2722 = vpop.permute.xlu0 %2721
        %2723 = vrot.lane.b32.xlu0 %v2663, 26
        %v2724 = vpop.permute.xlu0 %2723
        %2725 = vrot.lane.b32.xlu0 %v2667, 26
        %v2726 = vpop.permute.xlu0 %2725
        %2727 = vrot.lane.b32.xlu0 %v2669, 26
        %v2728 = vpop.permute.xlu0 %2727
        %2729 = vrot.lane.b32.xlu0 %v2673, 26
        %v2730 = vpop.permute.xlu0 %2729
        %2731 = vrot.lane.b32.xlu0 %v2675, 26
        %v2732 = vpop.permute.xlu0 %2731
        %2733 = vrot.lane.b32.xlu0 %v2679, 26
        %v2734 = vpop.permute.xlu0 %2733
        %2735 = vrot.lane.b32.xlu0 %v2681, 26
        %v2736 = vpop.permute.xlu0 %2735
        %2737 = vrot.lane.b32.xlu0 %v2685, 26
        %v2738 = vpop.permute.xlu0 %2737
        %2739 = vrot.lane.b32.xlu0 %v2687, 26
        %v2740 = vpop.permute.xlu0 %2739
        %2741 = vrot.lane.b32.xlu0 %v2691, 26
        %v2742 = vpop.permute.xlu0 %2741
        %2743 = vrot.lane.b32.xlu0 %v2693, 26
        %v2744 = vpop.permute.xlu0 %2743
        %2745 = vrot.lane.b32.xlu0 %v2697, 26
        %v2746 = vpop.permute.xlu0 %2745
        %2747 = vrot.lane.b32.xlu0 %v2699, 26
        %v2748 = vpop.permute.xlu0 %2747
        %vm2749 = vcmask 211968
        %v2750 = vsel %vm2749, %v2718, %v2720
        %v2751 = vsel %vm2749, %v2722, %v2724
        %v2752 = vsel %vm2749, %v2726, %v2728
        %v2753 = vsel %vm2749, %v2730, %v2732
        %v2754 = vsel %vm2749, %v2734, %v2736
        %v2755 = vsel %vm2749, %v2738, %v2740
        %v2756 = vsel %vm2749, %v2742, %v2744
        %v2757 = vsel %vm2749, %v2746, %v2748
        %2814 = vrot.lane.b32.xlu0 %v2316, 30
        %v2815 = vpop.permute.xlu0 %2814
        %2816 = vrot.lane.b32.xlu0 %v2318, 30
        %v2817 = vpop.permute.xlu0 %2816
        %2818 = vrot.lane.b32.xlu0 %v2429, 30
        %v2819 = vpop.permute.xlu0 %2818
        %2820 = vrot.lane.b32.xlu0 %v2431, 30
        %v2821 = vpop.permute.xlu0 %2820
        %2822 = vrot.lane.b32.xlu0 %v2542, 30
        %v2823 = vpop.permute.xlu0 %2822
        %2824 = vrot.lane.b32.xlu0 %v2544, 30
        %v2825 = vpop.permute.xlu0 %2824
        %2826 = vrot.lane.b32.xlu0 %v2655, 30
        %v2827 = vpop.permute.xlu0 %2826
        %2828 = vrot.lane.b32.xlu0 %v2322, 30
        %v2829 = vpop.permute.xlu0 %2828
        %2830 = vrot.lane.b32.xlu0 %v2324, 30
        %v2831 = vpop.permute.xlu0 %2830
        %2832 = vrot.lane.b32.xlu0 %v2435, 30
        %v2833 = vpop.permute.xlu0 %2832
        %2834 = vrot.lane.b32.xlu0 %v2437, 30
        %v2835 = vpop.permute.xlu0 %2834
        %2836 = vrot.lane.b32.xlu0 %v2548, 30
        %v2837 = vpop.permute.xlu0 %2836
        %2838 = vrot.lane.b32.xlu0 %v2550, 30
        %v2839 = vpop.permute.xlu0 %2838
        %2840 = vrot.lane.b32.xlu0 %v2661, 30
        %v2841 = vpop.permute.xlu0 %2840
        %2842 = vrot.lane.b32.xlu0 %v2328, 30
        %v2843 = vpop.permute.xlu0 %2842
        %2844 = vrot.lane.b32.xlu0 %v2330, 30
        %v2845 = vpop.permute.xlu0 %2844
        %2846 = vrot.lane.b32.xlu0 %v2441, 30
        %v2847 = vpop.permute.xlu0 %2846
        %2848 = vrot.lane.b32.xlu0 %v2443, 30
        %v2849 = vpop.permute.xlu0 %2848
        %2850 = vrot.lane.b32.xlu0 %v2554, 30
        %v2851 = vpop.permute.xlu0 %2850
        %2852 = vrot.lane.b32.xlu0 %v2556, 30
        %v2853 = vpop.permute.xlu0 %2852
        %2854 = vrot.lane.b32.xlu0 %v2667, 30
        %v2855 = vpop.permute.xlu0 %2854
        %2856 = vrot.lane.b32.xlu0 %v2334, 30
        %v2857 = vpop.permute.xlu0 %2856
        %2858 = vrot.lane.b32.xlu0 %v2336, 30
        %v2859 = vpop.permute.xlu0 %2858
        %2860 = vrot.lane.b32.xlu0 %v2447, 30
        %v2861 = vpop.permute.xlu0 %2860
        %2862 = vrot.lane.b32.xlu0 %v2449, 30
        %v2863 = vpop.permute.xlu0 %2862
        %2864 = vrot.lane.b32.xlu0 %v2560, 30
        %v2865 = vpop.permute.xlu0 %2864
        %2866 = vrot.lane.b32.xlu0 %v2562, 30
        %v2867 = vpop.permute.xlu0 %2866
        %2868 = vrot.lane.b32.xlu0 %v2673, 30
        %v2869 = vpop.permute.xlu0 %2868
        %2870 = vrot.lane.b32.xlu0 %v2340, 30
        %v2871 = vpop.permute.xlu0 %2870
        %2872 = vrot.lane.b32.xlu0 %v2342, 30
        %v2873 = vpop.permute.xlu0 %2872
        %2874 = vrot.lane.b32.xlu0 %v2453, 30
        %v2875 = vpop.permute.xlu0 %2874
        %2876 = vrot.lane.b32.xlu0 %v2455, 30
        %v2877 = vpop.permute.xlu0 %2876
        %2878 = vrot.lane.b32.xlu0 %v2566, 30
        %v2879 = vpop.permute.xlu0 %2878
        %2880 = vrot.lane.b32.xlu0 %v2568, 30
        %v2881 = vpop.permute.xlu0 %2880
        %2882 = vrot.lane.b32.xlu0 %v2679, 30
        %v2883 = vpop.permute.xlu0 %2882
        %2884 = vrot.lane.b32.xlu0 %v2346, 30
        %v2885 = vpop.permute.xlu0 %2884
        %2886 = vrot.lane.b32.xlu0 %v2348, 30
        %v2887 = vpop.permute.xlu0 %2886
        %2888 = vrot.lane.b32.xlu0 %v2459, 30
        %v2889 = vpop.permute.xlu0 %2888
        %2890 = vrot.lane.b32.xlu0 %v2461, 30
        %v2891 = vpop.permute.xlu0 %2890
        %2892 = vrot.lane.b32.xlu0 %v2572, 30
        %v2893 = vpop.permute.xlu0 %2892
        %2894 = vrot.lane.b32.xlu0 %v2574, 30
        %v2895 = vpop.permute.xlu0 %2894
        %2896 = vrot.lane.b32.xlu0 %v2685, 30
        %v2897 = vpop.permute.xlu0 %2896
        %2898 = vrot.lane.b32.xlu0 %v2352, 30
        %v2899 = vpop.permute.xlu0 %2898
        %2900 = vrot.lane.b32.xlu0 %v2354, 30
        %v2901 = vpop.permute.xlu0 %2900
        %2902 = vrot.lane.b32.xlu0 %v2465, 30
        %v2903 = vpop.permute.xlu0 %2902
        %2904 = vrot.lane.b32.xlu0 %v2467, 30
        %v2905 = vpop.permute.xlu0 %2904
        %2906 = vrot.lane.b32.xlu0 %v2578, 30
        %v2907 = vpop.permute.xlu0 %2906
        %2908 = vrot.lane.b32.xlu0 %v2580, 30
        %v2909 = vpop.permute.xlu0 %2908
        %2910 = vrot.lane.b32.xlu0 %v2691, 30
        %v2911 = vpop.permute.xlu0 %2910
        %2912 = vrot.lane.b32.xlu0 %v2358, 30
        %v2913 = vpop.permute.xlu0 %2912
        %2914 = vrot.lane.b32.xlu0 %v2360, 30
        %v2915 = vpop.permute.xlu0 %2914
        %2916 = vrot.lane.b32.xlu0 %v2471, 30
        %v2917 = vpop.permute.xlu0 %2916
        %2918 = vrot.lane.b32.xlu0 %v2473, 30
        %v2919 = vpop.permute.xlu0 %2918
        %2920 = vrot.lane.b32.xlu0 %v2584, 30
        %v2921 = vpop.permute.xlu0 %2920
        %2922 = vrot.lane.b32.xlu0 %v2586, 30
        %v2923 = vpop.permute.xlu0 %2922
        %2924 = vrot.lane.b32.xlu0 %v2697, 30
        %v2925 = vpop.permute.xlu0 %2924
        %vm2926 = vcmask 244736
        %v2927 = vsel %vm2926, %v2815, %v2817
        %v2928 = vsel %vm2926, %v2817, %v2819
        %v2929 = vsel %vm2926, %v2819, %v2821
        %v2930 = vsel %vm2926, %v2821, %v2823
        %v2931 = vsel %vm2926, %v2823, %v2825
        %v2932 = vsel %vm2926, %v2825, %v2827
        %v2933 = vsel %vm2926, %v2829, %v2831
        %v2934 = vsel %vm2926, %v2831, %v2833
        %v2935 = vsel %vm2926, %v2833, %v2835
        %v2936 = vsel %vm2926, %v2835, %v2837
        %v2937 = vsel %vm2926, %v2837, %v2839
        %v2938 = vsel %vm2926, %v2839, %v2841
        %v2939 = vsel %vm2926, %v2843, %v2845
        %v2940 = vsel %vm2926, %v2845, %v2847
        %v2941 = vsel %vm2926, %v2847, %v2849
        %v2942 = vsel %vm2926, %v2849, %v2851
        %v2943 = vsel %vm2926, %v2851, %v2853
        %v2944 = vsel %vm2926, %v2853, %v2855
        %v2945 = vsel %vm2926, %v2857, %v2859
        %v2946 = vsel %vm2926, %v2859, %v2861
        %v2947 = vsel %vm2926, %v2861, %v2863
        %v2948 = vsel %vm2926, %v2863, %v2865
        %v2949 = vsel %vm2926, %v2865, %v2867
        %v2950 = vsel %vm2926, %v2867, %v2869
        %v2951 = vsel %vm2926, %v2871, %v2873
        %v2952 = vsel %vm2926, %v2873, %v2875
        %v2953 = vsel %vm2926, %v2875, %v2877
        %v2954 = vsel %vm2926, %v2877, %v2879
        %v2955 = vsel %vm2926, %v2879, %v2881
        %v2956 = vsel %vm2926, %v2881, %v2883
        %v2957 = vsel %vm2926, %v2885, %v2887
        %v2958 = vsel %vm2926, %v2887, %v2889
        %v2959 = vsel %vm2926, %v2889, %v2891
        %v2960 = vsel %vm2926, %v2891, %v2893
        %v2961 = vsel %vm2926, %v2893, %v2895
        %v2962 = vsel %vm2926, %v2895, %v2897
        %v2963 = vsel %vm2926, %v2899, %v2901
        %v2964 = vsel %vm2926, %v2901, %v2903
        %v2965 = vsel %vm2926, %v2903, %v2905
        %v2966 = vsel %vm2926, %v2905, %v2907
        %v2967 = vsel %vm2926, %v2907, %v2909
        %v2968 = vsel %vm2926, %v2909, %v2911
        %v2969 = vsel %vm2926, %v2913, %v2915
        %v2970 = vsel %vm2926, %v2915, %v2917
        %v2971 = vsel %vm2926, %v2917, %v2919
        %v2972 = vsel %vm2926, %v2919, %v2921
        %v2973 = vsel %vm2926, %v2921, %v2923
        %v2974 = vsel %vm2926, %v2923, %v2925
        %v3039 = vsel %vm2926, %v2750, %v2815
        %v3040 = vsel %vm2926, %v2751, %v2829
        %v3041 = vsel %vm2926, %v2752, %v2843
        %v3042 = vsel %vm2926, %v2753, %v2857
        %v3043 = vsel %vm2926, %v2754, %v2871
        %v3044 = vsel %vm2926, %v2755, %v2885
        %v3045 = vsel %vm2926, %v2756, %v2899
        %v3046 = vsel %vm2926, %v2757, %v2913
        %s3047 = scalar_lea.vmem %s8, 8
        %v3048 = vld [vmem:[%s3047] sm:$0xff]
        %v3050 = vlaneseq
        %v3051 = vshrl.u32 %v3050, 7
        %v3052 = vsub.s32 0, %v3051
        %v3053 = vrot.slane %v3048, %v3052
        %v3054 = vlaneseq
        %v3055 = vshrl.u32 %v3054, 7
        %v3056 = vsub.s32 1, %v3055
        %v3057 = vrot.slane %v3048, %v3056
        %v3058 = vlaneseq
        %v3059 = vshrl.u32 %v3058, 7
        %v3060 = vsub.s32 2, %v3059
        %v3061 = vrot.slane %v3048, %v3060
        %v3062 = vlaneseq
        %v3063 = vshrl.u32 %v3062, 7
        %v3064 = vsub.s32 3, %v3063
        %v3065 = vrot.slane %v3048, %v3064
        %v3066 = vlaneseq
        %v3067 = vshrl.u32 %v3066, 7
        %v3068 = vsub.s32 4, %v3067
        %v3069 = vrot.slane %v3048, %v3068
        %v3070 = vlaneseq
        %v3071 = vshrl.u32 %v3070, 7
        %v3072 = vsub.s32 5, %v3071
        %v3073 = vrot.slane %v3048, %v3072
        %v3074 = vlaneseq
        %v3075 = vshrl.u32 %v3074, 7
        %v3076 = vsub.s32 6, %v3075
        %v3077 = vrot.slane %v3048, %v3076
        %v3078 = vlaneseq
        %v3079 = vshrl.u32 %v3078, 7
        %v3080 = vsub.s32 7, %v3079
        %v3081 = vrot.slane %v3048, %v3080
        %v3090 = vmul.f32 %v3039, %v3053
        %v3091 = vmul.f32 %v2927, %v3057
        %v3092 = vmul.f32 %v2928, %v3061
        %v3093 = vmul.f32 %v2929, %v3065
        %v3094 = vmul.f32 %v2930, %v3069
        %v3095 = vmul.f32 %v2931, %v3073
        %v3096 = vmul.f32 %v2932, %v3077
        %v3097 = vmul.f32 %v2827, %v3081
        %v3098 = vmul.f32 %v3040, %v3053
        %v3099 = vmul.f32 %v2933, %v3057
        %v3100 = vmul.f32 %v2934, %v3061
        %v3101 = vmul.f32 %v2935, %v3065
        %v3102 = vmul.f32 %v2936, %v3069
        %v3103 = vmul.f32 %v2937, %v3073
        %v3104 = vmul.f32 %v2938, %v3077
        %v3105 = vmul.f32 %v2841, %v3081
        %v3106 = vmul.f32 %v3041, %v3053
        %v3107 = vmul.f32 %v2939, %v3057
        %v3108 = vmul.f32 %v2940, %v3061
        %v3109 = vmul.f32 %v2941, %v3065
        %v3110 = vmul.f32 %v2942, %v3069
        %v3111 = vmul.f32 %v2943, %v3073
        %v3112 = vmul.f32 %v2944, %v3077
        %v3113 = vmul.f32 %v2855, %v3081
        %v3114 = vmul.f32 %v3042, %v3053
        %v3115 = vmul.f32 %v2945, %v3057
        %v3116 = vmul.f32 %v2946, %v3061
        %v3117 = vmul.f32 %v2947, %v3065
        %v3118 = vmul.f32 %v2948, %v3069
        %v3119 = vmul.f32 %v2949, %v3073
        %v3120 = vmul.f32 %v2950, %v3077
        %v3121 = vmul.f32 %v2869, %v3081
        %v3122 = vmul.f32 %v3043, %v3053
        %v3123 = vmul.f32 %v2951, %v3057
        %v3124 = vmul.f32 %v2952, %v3061
        %v3125 = vmul.f32 %v2953, %v3065
        %v3126 = vmul.f32 %v2954, %v3069
        %v3127 = vmul.f32 %v2955, %v3073
        %v3128 = vmul.f32 %v2956, %v3077
        %v3129 = vmul.f32 %v2883, %v3081
        %v3130 = vmul.f32 %v3044, %v3053
        %v3131 = vmul.f32 %v2957, %v3057
        %v3132 = vmul.f32 %v2958, %v3061
        %v3133 = vmul.f32 %v2959, %v3065
        %v3134 = vmul.f32 %v2960, %v3069
        %v3135 = vmul.f32 %v2961, %v3073
        %v3136 = vmul.f32 %v2962, %v3077
        %v3137 = vmul.f32 %v2897, %v3081
        %v3138 = vmul.f32 %v3045, %v3053
        %v3139 = vmul.f32 %v2963, %v3057
        %v3140 = vmul.f32 %v2964, %v3061
        %v3141 = vmul.f32 %v2965, %v3065
        %v3142 = vmul.f32 %v2966, %v3069
        %v3143 = vmul.f32 %v2967, %v3073
        %v3144 = vmul.f32 %v2968, %v3077
        %v3145 = vmul.f32 %v2911, %v3081
        %v3146 = vmul.f32 %v3046, %v3053
        %v3147 = vmul.f32 %v2969, %v3057
        %v3148 = vmul.f32 %v2970, %v3061
        %v3149 = vmul.f32 %v2971, %v3065
        %v3150 = vmul.f32 %v2972, %v3069
        %v3151 = vmul.f32 %v2973, %v3073
        %v3152 = vmul.f32 %v2974, %v3077
        %v3153 = vmul.f32 %v2925, %v3081
        %v3154 = vadd.f32 %v2144, %v3090
        %v3155 = vadd.f32 %v2145, %v3091
        %v3156 = vadd.f32 %v2146, %v3092
        %v3157 = vadd.f32 %v2147, %v3093
        %v3158 = vadd.f32 %v2148, %v3094
        %v3159 = vadd.f32 %v2149, %v3095
        %v3160 = vadd.f32 %v2150, %v3096
        %v3161 = vadd.f32 %v2151, %v3097
        %v3162 = vadd.f32 %v2152, %v3098
        %v3163 = vadd.f32 %v2153, %v3099
        %v3164 = vadd.f32 %v2154, %v3100
        %v3165 = vadd.f32 %v2155, %v3101
        %v3166 = vadd.f32 %v2156, %v3102
        %v3167 = vadd.f32 %v2157, %v3103
        %v3168 = vadd.f32 %v2158, %v3104
        %v3169 = vadd.f32 %v2159, %v3105
        %v3170 = vadd.f32 %v2160, %v3106
        %v3171 = vadd.f32 %v2161, %v3107
        %v3172 = vadd.f32 %v2162, %v3108
        %v3173 = vadd.f32 %v2163, %v3109
        %v3174 = vadd.f32 %v2164, %v3110
        %v3175 = vadd.f32 %v2165, %v3111
        %v3176 = vadd.f32 %v2166, %v3112
        %v3177 = vadd.f32 %v2167, %v3113
        %v3178 = vadd.f32 %v2168, %v3114
        %v3179 = vadd.f32 %v2169, %v3115
        %v3180 = vadd.f32 %v2170, %v3116
        %v3181 = vadd.f32 %v2171, %v3117
        %v3182 = vadd.f32 %v2172, %v3118
        %v3183 = vadd.f32 %v2173, %v3119
        %v3184 = vadd.f32 %v2174, %v3120
        %v3185 = vadd.f32 %v2175, %v3121
        %v3186 = vadd.f32 %v2176, %v3122
        %v3187 = vadd.f32 %v2177, %v3123
        %v3188 = vadd.f32 %v2178, %v3124
        %v3189 = vadd.f32 %v2179, %v3125
        %v3190 = vadd.f32 %v2180, %v3126
        %v3191 = vadd.f32 %v2181, %v3127
        %v3192 = vadd.f32 %v2182, %v3128
        %v3193 = vadd.f32 %v2183, %v3129
        %v3194 = vadd.f32 %v2184, %v3130
        %v3195 = vadd.f32 %v2185, %v3131
        %v3196 = vadd.f32 %v2186, %v3132
        %v3197 = vadd.f32 %v2187, %v3133
        %v3198 = vadd.f32 %v2188, %v3134
        %v3199 = vadd.f32 %v2189, %v3135
        %v3200 = vadd.f32 %v2190, %v3136
        %v3201 = vadd.f32 %v2191, %v3137
        %v3202 = vadd.f32 %v2192, %v3138
        %v3203 = vadd.f32 %v2193, %v3139
        %v3204 = vadd.f32 %v2194, %v3140
        %v3205 = vadd.f32 %v2195, %v3141
        %v3206 = vadd.f32 %v2196, %v3142
        %v3207 = vadd.f32 %v2197, %v3143
        %v3208 = vadd.f32 %v2198, %v3144
        %v3209 = vadd.f32 %v2199, %v3145
        %v3210 = vadd.f32 %v2200, %v3146
        %v3211 = vadd.f32 %v2201, %v3147
        %v3212 = vadd.f32 %v2202, %v3148
        %v3213 = vadd.f32 %v2203, %v3149
        %v3214 = vadd.f32 %v2204, %v3150
        %v3215 = vadd.f32 %v2205, %v3151
        %v3216 = vadd.f32 %v2206, %v3152
        %v3217 = vadd.f32 %v2207, %v3153
        %s3218 = scalar_lea.vmem [#allocation11], 256
        %v3219 = vld [vmem:[%s3218] sm:$0xff]
        %v3220 = vld [vmem:[%s3218 + $0x8] sm:$0xff]
        %v3221 = vld [vmem:[%s3218 + $0x10] sm:$0xff]
        %v3222 = vld [vmem:[%s3218 + $0x18] sm:$0xff]
        %v3223 = vld [vmem:[%s3218 + $0x20] sm:$0xff]
        %v3224 = vld [vmem:[%s3218 + $0x28] sm:$0xff]
        %v3225 = vld [vmem:[%s3218 + $0x30] sm:$0xff]
        %v3226 = vld [vmem:[%s3218 + $0x38] sm:$0xff]
        %v3227 = vld [vmem:[%s3218 + $0x40] sm:$0xff]
        %v3228 = vld [vmem:[%s3218 + $0x48] sm:$0xff]
        %v3229 = vld [vmem:[%s3218 + $0x50] sm:$0xff]
        %v3230 = vld [vmem:[%s3218 + $0x58] sm:$0xff]
        %v3231 = vld [vmem:[%s3218 + $0x60] sm:$0xff]
        %v3232 = vld [vmem:[%s3218 + $0x68] sm:$0xff]
        %v3233 = vld [vmem:[%s3218 + $0x70] sm:$0xff]
        %v3234 = vld [vmem:[%s3218 + $0x78] sm:$0xff]
        %v3236 = vsel %vm723, %v3220, 0
        %v3239 = vsel %vm723, %v3222, 0
        %v3242 = vsel %vm723, %v3224, 0
        %v3245 = vsel %vm723, %v3226, 0
        %v3248 = vsel %vm723, %v3228, 0
        %v3251 = vsel %vm723, %v3230, 0
        %v3254 = vsel %vm723, %v3232, 0
        %v3257 = vsel %vm723, %v3234, 0
        %3259 = vmatprep.subr.mxu0 %v499
        %3260 = vmatpush1.msra.mxu0 %v498
        %3261 = vmatprep.subr.mxu0 %v507
        %3262 = vmatpush1.msra.mxu0 %v506
        %3263 = vmatprep.subr.mxu0 %v515
        %3264 = vmatpush1.msra.mxu0 %v514
        %3265 = vmatprep.subr.mxu0 %v523
        %3266 = vmatpush1.msra.mxu0 %v522
        %3267 = vmatprep.subr.mxu0 %v531
        %3268 = vmatpush1.msra.mxu0 %v530
        %3269 = vmatprep.subr.mxu0 %v539
        %3270 = vmatpush1.msra.mxu0 %v538
        %3271 = vmatprep.subr.mxu0 %v547
        %3272 = vmatpush1.msra.mxu0 %v546
        %3273 = vmatprep.subr.mxu0 %v555
        %3274 = vmatpush1.msra.mxu0 %v554
        %3275 = vmatprep.subr.mxu0 %v563
        %3276 = vmatpush1.msra.mxu0 %v562
        %3277 = vmatprep.subr.mxu0 %v571
        %3278 = vmatpush1.msra.mxu0 %v570
        %3279 = vmatprep.subr.mxu0 %v579
        %3280 = vmatpush1.msra.mxu0 %v578
        %3281 = vmatprep.subr.mxu0 %v587
        %3282 = vmatpush1.msra.mxu0 %v586
        %3283 = vmatprep.subr.mxu0 %v595
        %3284 = vmatpush1.msra.mxu0 %v594
        %3285 = vmatprep.subr.mxu0 %v603
        %3286 = vmatpush1.msra.mxu0 %v602
        %3287 = vmatprep.subr.mxu0 %v611
        %3288 = vmatpush1.msra.mxu0 %v610
        %3289 = vmatprep.subr.mxu0 %v619
        %3290 = vmatpush1.msra.mxu0 %v618
        %3291 = vmatprep.subr.mxu0 %v627
        %3292 = vmatpush1.msra.mxu0 %v626
        %3293 = vmatprep.subr.mxu0 %v635
        %3294 = vmatpush1.msra.mxu0 %v634
        %3295 = vmatprep.subr.mxu0 %v643
        %3296 = vmatpush1.msra.mxu0 %v642
        %3297 = vmatprep.subr.mxu0 %v651
        %3298 = vmatpush1.msra.mxu0 %v650
        %3299 = vmatprep.subr.mxu0 0.0
        %3300 = vmatpush1.msra.mxu0 0.0
        %3301 = vmatprep.subr.mxu0 0.0
        %3302 = vmatpush1.msra.mxu0 0.0
        %3303 = vmatprep.subr.mxu0 0.0
        %3304 = vmatpush1.msra.mxu0 0.0
        %3305 = vmatprep.subr.mxu0 0.0
        %3306 = vmatpush1.msra.mxu0 0.0
        %3307 = vmatprep.subr.mxu0 0.0
        %3308 = vmatpush1.msra.mxu0 0.0
        %3309 = vmatprep.subr.mxu0 0.0
        %3310 = vmatpush1.msra.mxu0 0.0
        %3311 = vmatprep.subr.mxu0 0.0
        %3312 = vmatpush1.msra.mxu0 0.0
        %3313 = vmatprep.subr.mxu0 0.0
        %3314 = vmatpush1.msra.mxu0 0.0
        %3315 = vmatprep.subr.mxu0 0.0
        %3316 = vmatpush1.msra.mxu0 0.0
        %3317 = vmatprep.subr.mxu0 0.0
        %3318 = vmatpush1.msra.mxu0 0.0
        %3319 = vmatprep.subr.mxu0 0.0
        %3320 = vmatpush1.msra.mxu0 0.0
        %3321 = vmatprep.subr.mxu0 0.0
        %3322 = vmatpush1.msra.mxu0 0.0
        %3323 = vmatprep.mubr.f32.mxu0 %v3236
        %3324 = vmatmul.mubr.f32.gmra.mrb[0].mxu0 %v3219
        %v3325 = vpop.f32.mrb[0].mxu0
        %v3326 = vadd.f32 0.0, %v3325
        %v3327 = vpop.f32.mrb[0].mxu0
        %v3328 = vadd.f32 0.0, %v3327
        %3329 = vmatprep.mubr.f32.mxu0 %v3239
        %3330 = vmatmul.mubr.f32.gmra.mrb[0].mxu0 %v3221
        %v3331 = vpop.f32.mrb[0].mxu0
        %v3332 = vadd.f32 0.0, %v3331
        %v3333 = vpop.f32.mrb[0].mxu0
        %v3334 = vadd.f32 0.0, %v3333
        %3335 = vmatprep.mubr.f32.mxu0 %v3242
        %3336 = vmatmul.mubr.f32.gmra.mrb[0].mxu0 %v3223
        %v3337 = vpop.f32.mrb[0].mxu0
        %v3338 = vadd.f32 0.0, %v3337
        %v3339 = vpop.f32.mrb[0].mxu0
        %v3340 = vadd.f32 0.0, %v3339
        %3341 = vmatprep.mubr.f32.mxu0 %v3245
        %3342 = vmatmul.mubr.f32.gmra.mrb[0].mxu0 %v3225
        %v3343 = vpop.f32.mrb[0].mxu0
        %v3344 = vadd.f32 0.0, %v3343
        %v3345 = vpop.f32.mrb[0].mxu0
        %v3346 = vadd.f32 0.0, %v3345
        %3347 = vmatprep.mubr.f32.mxu0 %v3248
        %3348 = vmatmul.mubr.f32.gmra.mrb[0].mxu0 %v3227
        %v3349 = vpop.f32.mrb[0].mxu0
        %v3350 = vadd.f32 0.0, %v3349
        %v3351 = vpop.f32.mrb[0].mxu0
        %v3352 = vadd.f32 0.0, %v3351
        %3353 = vmatprep.mubr.f32.mxu0 %v3251
        %3354 = vmatmul.mubr.f32.gmra.mrb[0].mxu0 %v3229
        %v3355 = vpop.f32.mrb[0].mxu0
        %v3356 = vadd.f32 0.0, %v3355
        %v3357 = vpop.f32.mrb[0].mxu0
        %v3358 = vadd.f32 0.0, %v3357
        %3359 = vmatprep.mubr.f32.mxu0 %v3254
        %3360 = vmatmul.mubr.f32.gmra.mrb[0].mxu0 %v3231
        %v3361 = vpop.f32.mrb[0].mxu0
        %v3362 = vadd.f32 0.0, %v3361
        %v3363 = vpop.f32.mrb[0].mxu0
        %v3364 = vadd.f32 0.0, %v3363
        %3365 = vmatprep.mubr.f32.mxu0 %v3257
        %3366 = vmatmul.mubr.f32.gmra.mrb[0].mxu0 %v3233
        %v3367 = vpop.f32.mrb[0].mxu0
        %v3368 = vadd.f32 0.0, %v3367
        %v3369 = vpop.f32.mrb[0].mxu0
        %v3370 = vadd.f32 0.0, %v3369
        %3371 = vdwg.mxu0
        %3372 = vmatprep.subr.mxu0 %v501
        %3373 = vmatpush1.msra.mxu0 %v500
        %3374 = vmatprep.subr.mxu0 %v509
        %3375 = vmatpush1.msra.mxu0 %v508
        %3376 = vmatprep.subr.mxu0 %v517
        %3377 = vmatpush1.msra.mxu0 %v516
        %3378 = vmatprep.subr.mxu0 %v525
        %3379 = vmatpush1.msra.mxu0 %v524
        %3380 = vmatprep.subr.mxu0 %v533
        %3381 = vmatpush1.msra.mxu0 %v532
        %3382 = vmatprep.subr.mxu0 %v541
        %3383 = vmatpush1.msra.mxu0 %v540
        %3384 = vmatprep.subr.mxu0 %v549
        %3385 = vmatpush1.msra.mxu0 %v548
        %3386 = vmatprep.subr.mxu0 %v557
        %3387 = vmatpush1.msra.mxu0 %v556
        %3388 = vmatprep.subr.mxu0 %v565
        %3389 = vmatpush1.msra.mxu0 %v564
        %3390 = vmatprep.subr.mxu0 %v573
        %3391 = vmatpush1.msra.mxu0 %v572
        %3392 = vmatprep.subr.mxu0 %v581
        %3393 = vmatpush1.msra.mxu0 %v580
        %3394 = vmatprep.subr.mxu0 %v589
        %3395 = vmatpush1.msra.mxu0 %v588
        %3396 = vmatprep.subr.mxu0 %v597
        %3397 = vmatpush1.msra.mxu0 %v596
        %3398 = vmatprep.subr.mxu0 %v605
        %3399 = vmatpush1.msra.mxu0 %v604
        %3400 = vmatprep.subr.mxu0 %v613
        %3401 = vmatpush1.msra.mxu0 %v612
        %3402 = vmatprep.subr.mxu0 %v621
        %3403 = vmatpush1.msra.mxu0 %v620
        %3404 = vmatprep.subr.mxu0 %v629
        %3405 = vmatpush1.msra.mxu0 %v628
        %3406 = vmatprep.subr.mxu0 %v637
        %3407 = vmatpush1.msra.mxu0 %v636
        %3408 = vmatprep.subr.mxu0 %v645
        %3409 = vmatpush1.msra.mxu0 %v644
        %3410 = vmatprep.subr.mxu0 %v653
        %3411 = vmatpush1.msra.mxu0 %v652
        %3412 = vmatprep.subr.mxu0 0.0
        %3413 = vmatpush1.msra.mxu0 0.0
        %3414 = vmatprep.subr.mxu0 0.0
        %3415 = vmatpush1.msra.mxu0 0.0
        %3416 = vmatprep.subr.mxu0 0.0
        %3417 = vmatpush1.msra.mxu0 0.0
        %3418 = vmatprep.subr.mxu0 0.0
        %3419 = vmatpush1.msra.mxu0 0.0
        %3420 = vmatprep.subr.mxu0 0.0
        %3421 = vmatpush1.msra.mxu0 0.0
        %3422 = vmatprep.subr.mxu0 0.0
        %3423 = vmatpush1.msra.mxu0 0.0
        %3424 = vmatprep.subr.mxu0 0.0
        %3425 = vmatpush1.msra.mxu0 0.0
        %3426 = vmatprep.subr.mxu0 0.0
        %3427 = vmatpush1.msra.mxu0 0.0
        %3428 = vmatprep.subr.mxu0 0.0
        %3429 = vmatpush1.msra.mxu0 0.0
        %3430 = vmatprep.subr.mxu0 0.0
        %3431 = vmatpush1.msra.mxu0 0.0
        %3432 = vmatprep.subr.mxu0 0.0
        %3433 = vmatpush1.msra.mxu0 0.0
        %3434 = vmatprep.subr.mxu0 0.0
        %3435 = vmatpush1.msra.mxu0 0.0
        %3436 = vmatprep.mubr.f32.mxu0 %v3236
        %3437 = vmatmul.mubr.f32.gmra.mrb[0].mxu0 %v3219
        %v3438 = vpop.f32.mrb[0].mxu0
        %v3439 = vadd.f32 0.0, %v3438
        %v3440 = vpop.f32.mrb[0].mxu0
        %v3441 = vadd.f32 0.0, %v3440
        %3442 = vmatprep.mubr.f32.mxu0 %v3239
        %3443 = vmatmul.mubr.f32.gmra.mrb[0].mxu0 %v3221
        %v3444 = vpop.f32.mrb[0].mxu0
        %v3445 = vadd.f32 0.0, %v3444
        %v3446 = vpop.f32.mrb[0].mxu0
        %v3447 = vadd.f32 0.0, %v3446
        %3448 = vmatprep.mubr.f32.mxu0 %v3242
        %3449 = vmatmul.mubr.f32.gmra.mrb[0].mxu0 %v3223
        %v3450 = vpop.f32.mrb[0].mxu0
        %v3451 = vadd.f32 0.0, %v3450
        %v3452 = vpop.f32.mrb[0].mxu0
        %v3453 = vadd.f32 0.0, %v3452
        %3454 = vmatprep.mubr.f32.mxu0 %v3245
        %3455 = vmatmul.mubr.f32.gmra.mrb[0].mxu0 %v3225
        %v3456 = vpop.f32.mrb[0].mxu0
        %v3457 = vadd.f32 0.0, %v3456
        %v3458 = vpop.f32.mrb[0].mxu0
        %v3459 = vadd.f32 0.0, %v3458
        %3460 = vmatprep.mubr.f32.mxu0 %v3248
        %3461 = vmatmul.mubr.f32.gmra.mrb[0].mxu0 %v3227
        %v3462 = vpop.f32.mrb[0].mxu0
        %v3463 = vadd.f32 0.0, %v3462
        %v3464 = vpop.f32.mrb[0].mxu0
        %v3465 = vadd.f32 0.0, %v3464
        %3466 = vmatprep.mubr.f32.mxu0 %v3251
        %3467 = vmatmul.mubr.f32.gmra.mrb[0].mxu0 %v3229
        %v3468 = vpop.f32.mrb[0].mxu0
        %v3469 = vadd.f32 0.0, %v3468
        %v3470 = vpop.f32.mrb[0].mxu0
        %v3471 = vadd.f32 0.0, %v3470
        %3472 = vmatprep.mubr.f32.mxu0 %v3254
        %3473 = vmatmul.mubr.f32.gmra.mrb[0].mxu0 %v3231
        %v3474 = vpop.f32.mrb[0].mxu0
        %v3475 = vadd.f32 0.0, %v3474
        %v3476 = vpop.f32.mrb[0].mxu0
        %v3477 = vadd.f32 0.0, %v3476
        %3478 = vmatprep.mubr.f32.mxu0 %v3257
        %3479 = vmatmul.mubr.f32.gmra.mrb[0].mxu0 %v3233
        %v3480 = vpop.f32.mrb[0].mxu0
        %v3481 = vadd.f32 0.0, %v3480
        %v3482 = vpop.f32.mrb[0].mxu0
        %v3483 = vadd.f32 0.0, %v3482
        %3484 = vdwg.mxu0
        %3485 = vmatprep.subr.mxu0 %v503
        %3486 = vmatpush1.msra.mxu0 %v502
        %3487 = vmatprep.subr.mxu0 %v511
        %3488 = vmatpush1.msra.mxu0 %v510
        %3489 = vmatprep.subr.mxu0 %v519
        %3490 = vmatpush1.msra.mxu0 %v518
        %3491 = vmatprep.subr.mxu0 %v527
        %3492 = vmatpush1.msra.mxu0 %v526
        %3493 = vmatprep.subr.mxu0 %v535
        %3494 = vmatpush1.msra.mxu0 %v534
        %3495 = vmatprep.subr.mxu0 %v543
        %3496 = vmatpush1.msra.mxu0 %v542
        %3497 = vmatprep.subr.mxu0 %v551
        %3498 = vmatpush1.msra.mxu0 %v550
        %3499 = vmatprep.subr.mxu0 %v559
        %3500 = vmatpush1.msra.mxu0 %v558
        %3501 = vmatprep.subr.mxu0 %v567
        %3502 = vmatpush1.msra.mxu0 %v566
        %3503 = vmatprep.subr.mxu0 %v575
        %3504 = vmatpush1.msra.mxu0 %v574
        %3505 = vmatprep.subr.mxu0 %v583
        %3506 = vmatpush1.msra.mxu0 %v582
        %3507 = vmatprep.subr.mxu0 %v591
        %3508 = vmatpush1.msra.mxu0 %v590
        %3509 = vmatprep.subr.mxu0 %v599
        %3510 = vmatpush1.msra.mxu0 %v598
        %3511 = vmatprep.subr.mxu0 %v607
        %3512 = vmatpush1.msra.mxu0 %v606
        %3513 = vmatprep.subr.mxu0 %v615
        %3514 = vmatpush1.msra.mxu0 %v614
        %3515 = vmatprep.subr.mxu0 %v623
        %3516 = vmatpush1.msra.mxu0 %v622
        %3517 = vmatprep.subr.mxu0 %v631
        %3518 = vmatpush1.msra.mxu0 %v630
        %3519 = vmatprep.subr.mxu0 %v639
        %3520 = vmatpush1.msra.mxu0 %v638
        %3521 = vmatprep.subr.mxu0 %v647
        %3522 = vmatpush1.msra.mxu0 %v646
        %3523 = vmatprep.subr.mxu0 %v655
        %3524 = vmatpush1.msra.mxu0 %v654
        %3525 = vmatprep.subr.mxu0 0.0
        %3526 = vmatpush1.msra.mxu0 0.0
        %3527 = vmatprep.subr.mxu0 0.0
        %3528 = vmatpush1.msra.mxu0 0.0
        %3529 = vmatprep.subr.mxu0 0.0
        %3530 = vmatpush1.msra.mxu0 0.0
        %3531 = vmatprep.subr.mxu0 0.0
        %3532 = vmatpush1.msra.mxu0 0.0
        %3533 = vmatprep.subr.mxu0 0.0
        %3534 = vmatpush1.msra.mxu0 0.0
        %3535 = vmatprep.subr.mxu0 0.0
        %3536 = vmatpush1.msra.mxu0 0.0
        %3537 = vmatprep.subr.mxu0 0.0
        %3538 = vmatpush1.msra.mxu0 0.0
        %3539 = vmatprep.subr.mxu0 0.0
        %3540 = vmatpush1.msra.mxu0 0.0
        %3541 = vmatprep.subr.mxu0 0.0
        %3542 = vmatpush1.msra.mxu0 0.0
        %3543 = vmatprep.subr.mxu0 0.0
        %3544 = vmatpush1.msra.mxu0 0.0
        %3545 = vmatprep.subr.mxu0 0.0
        %3546 = vmatpush1.msra.mxu0 0.0
        %3547 = vmatprep.subr.mxu0 0.0
        %3548 = vmatpush1.msra.mxu0 0.0
        %3549 = vmatprep.mubr.f32.mxu0 %v3236
        %3550 = vmatmul.mubr.f32.gmra.mrb[0].mxu0 %v3219
        %v3551 = vpop.f32.mrb[0].mxu0
        %v3552 = vadd.f32 0.0, %v3551
        %v3553 = vpop.f32.mrb[0].mxu0
        %v3554 = vadd.f32 0.0, %v3553
        %3555 = vmatprep.mubr.f32.mxu0 %v3239
        %3556 = vmatmul.mubr.f32.gmra.mrb[0].mxu0 %v3221
        %v3557 = vpop.f32.mrb[0].mxu0
        %v3558 = vadd.f32 0.0, %v3557
        %v3559 = vpop.f32.mrb[0].mxu0
        %v3560 = vadd.f32 0.0, %v3559
        %3561 = vmatprep.mubr.f32.mxu0 %v3242
        %3562 = vmatmul.mubr.f32.gmra.mrb[0].mxu0 %v3223
        %v3563 = vpop.f32.mrb[0].mxu0
        %v3564 = vadd.f32 0.0, %v3563
        %v3565 = vpop.f32.mrb[0].mxu0
        %v3566 = vadd.f32 0.0, %v3565
        %3567 = vmatprep.mubr.f32.mxu0 %v3245
        %3568 = vmatmul.mubr.f32.gmra.mrb[0].mxu0 %v3225
        %v3569 = vpop.f32.mrb[0].mxu0
        %v3570 = vadd.f32 0.0, %v3569
        %v3571 = vpop.f32.mrb[0].mxu0
        %v3572 = vadd.f32 0.0, %v3571
        %3573 = vmatprep.mubr.f32.mxu0 %v3248
        %3574 = vmatmul.mubr.f32.gmra.mrb[0].mxu0 %v3227
        %v3575 = vpop.f32.mrb[0].mxu0
        %v3576 = vadd.f32 0.0, %v3575
        %v3577 = vpop.f32.mrb[0].mxu0
        %v3578 = vadd.f32 0.0, %v3577
        %3579 = vmatprep.mubr.f32.mxu0 %v3251
        %3580 = vmatmul.mubr.f32.gmra.mrb[0].mxu0 %v3229
        %v3581 = vpop.f32.mrb[0].mxu0
        %v3582 = vadd.f32 0.0, %v3581
        %v3583 = vpop.f32.mrb[0].mxu0
        %v3584 = vadd.f32 0.0, %v3583
        %3585 = vmatprep.mubr.f32.mxu0 %v3254
        %3586 = vmatmul.mubr.f32.gmra.mrb[0].mxu0 %v3231
        %v3587 = vpop.f32.mrb[0].mxu0
        %v3588 = vadd.f32 0.0, %v3587
        %v3589 = vpop.f32.mrb[0].mxu0
        %v3590 = vadd.f32 0.0, %v3589
        %3591 = vmatprep.mubr.f32.mxu0 %v3257
        %3592 = vmatmul.mubr.f32.gmra.mrb[0].mxu0 %v3233
        %v3593 = vpop.f32.mrb[0].mxu0
        %v3594 = vadd.f32 0.0, %v3593
        %v3595 = vpop.f32.mrb[0].mxu0
        %v3596 = vadd.f32 0.0, %v3595
        %3597 = vdwg.mxu0
        %3598 = vmatprep.subr.mxu0 %v505
        %3599 = vmatpush1.msra.mxu0 %v504
        %3600 = vmatprep.subr.mxu0 %v513
        %3601 = vmatpush1.msra.mxu0 %v512
        %3602 = vmatprep.subr.mxu0 %v521
        %3603 = vmatpush1.msra.mxu0 %v520
        %3604 = vmatprep.subr.mxu0 %v529
        %3605 = vmatpush1.msra.mxu0 %v528
        %3606 = vmatprep.subr.mxu0 %v537
        %3607 = vmatpush1.msra.mxu0 %v536
        %3608 = vmatprep.subr.mxu0 %v545
        %3609 = vmatpush1.msra.mxu0 %v544
        %3610 = vmatprep.subr.mxu0 %v553
        %3611 = vmatpush1.msra.mxu0 %v552
        %3612 = vmatprep.subr.mxu0 %v561
        %3613 = vmatpush1.msra.mxu0 %v560
        %3614 = vmatprep.subr.mxu0 %v569
        %3615 = vmatpush1.msra.mxu0 %v568
        %3616 = vmatprep.subr.mxu0 %v577
        %3617 = vmatpush1.msra.mxu0 %v576
        %3618 = vmatprep.subr.mxu0 %v585
        %3619 = vmatpush1.msra.mxu0 %v584
        %3620 = vmatprep.subr.mxu0 %v593
        %3621 = vmatpush1.msra.mxu0 %v592
        %3622 = vmatprep.subr.mxu0 %v601
        %3623 = vmatpush1.msra.mxu0 %v600
        %3624 = vmatprep.subr.mxu0 %v609
        %3625 = vmatpush1.msra.mxu0 %v608
        %3626 = vmatprep.subr.mxu0 %v617
        %3627 = vmatpush1.msra.mxu0 %v616
        %3628 = vmatprep.subr.mxu0 %v625
        %3629 = vmatpush1.msra.mxu0 %v624
        %3630 = vmatprep.subr.mxu0 %v633
        %3631 = vmatpush1.msra.mxu0 %v632
        %3632 = vmatprep.subr.mxu0 %v641
        %3633 = vmatpush1.msra.mxu0 %v640
        %3634 = vmatprep.subr.mxu0 %v649
        %3635 = vmatpush1.msra.mxu0 %v648
        %3636 = vmatprep.subr.mxu0 %v657
        %3637 = vmatpush1.msra.mxu0 %v656
        %3638 = vmatprep.subr.mxu0 0.0
        %3639 = vmatpush1.msra.mxu0 0.0
        %3640 = vmatprep.subr.mxu0 0.0
        %3641 = vmatpush1.msra.mxu0 0.0
        %3642 = vmatprep.subr.mxu0 0.0
        %3643 = vmatpush1.msra.mxu0 0.0
        %3644 = vmatprep.subr.mxu0 0.0
        %3645 = vmatpush1.msra.mxu0 0.0
        %3646 = vmatprep.subr.mxu0 0.0
        %3647 = vmatpush1.msra.mxu0 0.0
        %3648 = vmatprep.subr.mxu0 0.0
        %3649 = vmatpush1.msra.mxu0 0.0
        %3650 = vmatprep.subr.mxu0 0.0
        %3651 = vmatpush1.msra.mxu0 0.0
        %3652 = vmatprep.subr.mxu0 0.0
        %3653 = vmatpush1.msra.mxu0 0.0
        %3654 = vmatprep.subr.mxu0 0.0
        %3655 = vmatpush1.msra.mxu0 0.0
        %3656 = vmatprep.subr.mxu0 0.0
        %3657 = vmatpush1.msra.mxu0 0.0
        %3658 = vmatprep.subr.mxu0 0.0
        %3659 = vmatpush1.msra.mxu0 0.0
        %3660 = vmatprep.subr.mxu0 0.0
        %3661 = vmatpush1.msra.mxu0 0.0
        %3662 = vmatprep.mubr.f32.mxu0 %v3236
        %3663 = vmatmul.mubr.f32.gmra.mrb[0].mxu0 %v3219
        %v3664 = vpop.f32.mrb[0].mxu0
        %v3665 = vadd.f32 0.0, %v3664
        %v3666 = vpop.f32.mrb[0].mxu0
        %v3667 = vadd.f32 0.0, %v3666
        %3668 = vmatprep.mubr.f32.mxu0 %v3239
        %3669 = vmatmul.mubr.f32.gmra.mrb[0].mxu0 %v3221
        %v3670 = vpop.f32.mrb[0].mxu0
        %v3671 = vadd.f32 0.0, %v3670
        %v3672 = vpop.f32.mrb[0].mxu0
        %v3673 = vadd.f32 0.0, %v3672
        %3674 = vmatprep.mubr.f32.mxu0 %v3242
        %3675 = vmatmul.mubr.f32.gmra.mrb[0].mxu0 %v3223
        %v3676 = vpop.f32.mrb[0].mxu0
        %v3677 = vadd.f32 0.0, %v3676
        %v3678 = vpop.f32.mrb[0].mxu0
        %v3679 = vadd.f32 0.0, %v3678
        %3680 = vmatprep.mubr.f32.mxu0 %v3245
        %3681 = vmatmul.mubr.f32.gmra.mrb[0].mxu0 %v3225
        %v3682 = vpop.f32.mrb[0].mxu0
        %v3683 = vadd.f32 0.0, %v3682
        %v3684 = vpop.f32.mrb[0].mxu0
        %v3685 = vadd.f32 0.0, %v3684
        %3686 = vmatprep.mubr.f32.mxu0 %v3248
        %3687 = vmatmul.mubr.f32.gmra.mrb[0].mxu0 %v3227
        %v3688 = vpop.f32.mrb[0].mxu0
        %v3689 = vadd.f32 0.0, %v3688
        %v3690 = vpop.f32.mrb[0].mxu0
        %v3691 = vadd.f32 0.0, %v3690
        %3692 = vmatprep.mubr.f32.mxu0 %v3251
        %3693 = vmatmul.mubr.f32.gmra.mrb[0].mxu0 %v3229
        %v3694 = vpop.f32.mrb[0].mxu0
        %v3695 = vadd.f32 0.0, %v3694
        %v3696 = vpop.f32.mrb[0].mxu0
        %v3697 = vadd.f32 0.0, %v3696
        %3698 = vmatprep.mubr.f32.mxu0 %v3254
        %3699 = vmatmul.mubr.f32.gmra.mrb[0].mxu0 %v3231
        %v3700 = vpop.f32.mrb[0].mxu0
        %v3701 = vadd.f32 0.0, %v3700
        %v3702 = vpop.f32.mrb[0].mxu0
        %v3703 = vadd.f32 0.0, %v3702
        %3704 = vmatprep.mubr.f32.mxu0 %v3257
        %3705 = vmatmul.mubr.f32.gmra.mrb[0].mxu0 %v3233
        %v3706 = vpop.f32.mrb[0].mxu0
        %v3707 = vadd.f32 0.0, %v3706
        %v3708 = vpop.f32.mrb[0].mxu0
        %v3709 = vadd.f32 0.0, %v3708
        %3710 = vdwg.mxu0
        %3727 = vrot.lane.b32.xlu0 %v3665, 25
        %v3728 = vpop.permute.xlu0 %3727
        %3729 = vrot.lane.b32.xlu0 %v3667, 25
        %v3730 = vpop.permute.xlu0 %3729
        %3731 = vrot.lane.b32.xlu0 %v3671, 25
        %v3732 = vpop.permute.xlu0 %3731
        %3733 = vrot.lane.b32.xlu0 %v3673, 25
        %v3734 = vpop.permute.xlu0 %3733
        %3735 = vrot.lane.b32.xlu0 %v3677, 25
        %v3736 = vpop.permute.xlu0 %3735
        %3737 = vrot.lane.b32.xlu0 %v3679, 25
        %v3738 = vpop.permute.xlu0 %3737
        %3739 = vrot.lane.b32.xlu0 %v3683, 25
        %v3740 = vpop.permute.xlu0 %3739
        %3741 = vrot.lane.b32.xlu0 %v3685, 25
        %v3742 = vpop.permute.xlu0 %3741
        %3743 = vrot.lane.b32.xlu0 %v3689, 25
        %v3744 = vpop.permute.xlu0 %3743
        %3745 = vrot.lane.b32.xlu0 %v3691, 25
        %v3746 = vpop.permute.xlu0 %3745
        %3747 = vrot.lane.b32.xlu0 %v3695, 25
        %v3748 = vpop.permute.xlu0 %3747
        %3749 = vrot.lane.b32.xlu0 %v3697, 25
        %v3750 = vpop.permute.xlu0 %3749
        %3751 = vrot.lane.b32.xlu0 %v3701, 25
        %v3752 = vpop.permute.xlu0 %3751
        %3753 = vrot.lane.b32.xlu0 %v3703, 25
        %v3754 = vpop.permute.xlu0 %3753
        %3755 = vrot.lane.b32.xlu0 %v3707, 25
        %v3756 = vpop.permute.xlu0 %3755
        %3757 = vrot.lane.b32.xlu0 %v3709, 25
        %v3758 = vpop.permute.xlu0 %3757
        %vm3759 = vcmask 203776
        %v3760 = vsel %vm3759, %v3728, %v3730
        %v3761 = vsel %vm3759, %v3732, %v3734
        %v3762 = vsel %vm3759, %v3736, %v3738
        %v3763 = vsel %vm3759, %v3740, %v3742
        %v3764 = vsel %vm3759, %v3744, %v3746
        %v3765 = vsel %vm3759, %v3748, %v3750
        %v3766 = vsel %vm3759, %v3752, %v3754
        %v3767 = vsel %vm3759, %v3756, %v3758
        %3824 = vrot.lane.b32.xlu0 %v3326, 29
        %v3825 = vpop.permute.xlu0 %3824
        %3826 = vrot.lane.b32.xlu0 %v3328, 29
        %v3827 = vpop.permute.xlu0 %3826
        %3828 = vrot.lane.b32.xlu0 %v3439, 29
        %v3829 = vpop.permute.xlu0 %3828
        %3830 = vrot.lane.b32.xlu0 %v3441, 29
        %v3831 = vpop.permute.xlu0 %3830
        %3832 = vrot.lane.b32.xlu0 %v3552, 29
        %v3833 = vpop.permute.xlu0 %3832
        %3834 = vrot.lane.b32.xlu0 %v3554, 29
        %v3835 = vpop.permute.xlu0 %3834
        %3836 = vrot.lane.b32.xlu0 %v3665, 29
        %v3837 = vpop.permute.xlu0 %3836
        %3838 = vrot.lane.b32.xlu0 %v3332, 29
        %v3839 = vpop.permute.xlu0 %3838
        %3840 = vrot.lane.b32.xlu0 %v3334, 29
        %v3841 = vpop.permute.xlu0 %3840
        %3842 = vrot.lane.b32.xlu0 %v3445, 29
        %v3843 = vpop.permute.xlu0 %3842
        %3844 = vrot.lane.b32.xlu0 %v3447, 29
        %v3845 = vpop.permute.xlu0 %3844
        %3846 = vrot.lane.b32.xlu0 %v3558, 29
        %v3847 = vpop.permute.xlu0 %3846
        %3848 = vrot.lane.b32.xlu0 %v3560, 29
        %v3849 = vpop.permute.xlu0 %3848
        %3850 = vrot.lane.b32.xlu0 %v3671, 29
        %v3851 = vpop.permute.xlu0 %3850
        %3852 = vrot.lane.b32.xlu0 %v3338, 29
        %v3853 = vpop.permute.xlu0 %3852
        %3854 = vrot.lane.b32.xlu0 %v3340, 29
        %v3855 = vpop.permute.xlu0 %3854
        %3856 = vrot.lane.b32.xlu0 %v3451, 29
        %v3857 = vpop.permute.xlu0 %3856
        %3858 = vrot.lane.b32.xlu0 %v3453, 29
        %v3859 = vpop.permute.xlu0 %3858
        %3860 = vrot.lane.b32.xlu0 %v3564, 29
        %v3861 = vpop.permute.xlu0 %3860
        %3862 = vrot.lane.b32.xlu0 %v3566, 29
        %v3863 = vpop.permute.xlu0 %3862
        %3864 = vrot.lane.b32.xlu0 %v3677, 29
        %v3865 = vpop.permute.xlu0 %3864
        %3866 = vrot.lane.b32.xlu0 %v3344, 29
        %v3867 = vpop.permute.xlu0 %3866
        %3868 = vrot.lane.b32.xlu0 %v3346, 29
        %v3869 = vpop.permute.xlu0 %3868
        %3870 = vrot.lane.b32.xlu0 %v3457, 29
        %v3871 = vpop.permute.xlu0 %3870
        %3872 = vrot.lane.b32.xlu0 %v3459, 29
        %v3873 = vpop.permute.xlu0 %3872
        %3874 = vrot.lane.b32.xlu0 %v3570, 29
        %v3875 = vpop.permute.xlu0 %3874
        %3876 = vrot.lane.b32.xlu0 %v3572, 29
        %v3877 = vpop.permute.xlu0 %3876
        %3878 = vrot.lane.b32.xlu0 %v3683, 29
        %v3879 = vpop.permute.xlu0 %3878
        %3880 = vrot.lane.b32.xlu0 %v3350, 29
        %v3881 = vpop.permute.xlu0 %3880
        %3882 = vrot.lane.b32.xlu0 %v3352, 29
        %v3883 = vpop.permute.xlu0 %3882
        %3884 = vrot.lane.b32.xlu0 %v3463, 29
        %v3885 = vpop.permute.xlu0 %3884
        %3886 = vrot.lane.b32.xlu0 %v3465, 29
        %v3887 = vpop.permute.xlu0 %3886
        %3888 = vrot.lane.b32.xlu0 %v3576, 29
        %v3889 = vpop.permute.xlu0 %3888
        %3890 = vrot.lane.b32.xlu0 %v3578, 29
        %v3891 = vpop.permute.xlu0 %3890
        %3892 = vrot.lane.b32.xlu0 %v3689, 29
        %v3893 = vpop.permute.xlu0 %3892
        %3894 = vrot.lane.b32.xlu0 %v3356, 29
        %v3895 = vpop.permute.xlu0 %3894
        %3896 = vrot.lane.b32.xlu0 %v3358, 29
        %v3897 = vpop.permute.xlu0 %3896
        %3898 = vrot.lane.b32.xlu0 %v3469, 29
        %v3899 = vpop.permute.xlu0 %3898
        %3900 = vrot.lane.b32.xlu0 %v3471, 29
        %v3901 = vpop.permute.xlu0 %3900
        %3902 = vrot.lane.b32.xlu0 %v3582, 29
        %v3903 = vpop.permute.xlu0 %3902
        %3904 = vrot.lane.b32.xlu0 %v3584, 29
        %v3905 = vpop.permute.xlu0 %3904
        %3906 = vrot.lane.b32.xlu0 %v3695, 29
        %v3907 = vpop.permute.xlu0 %3906
        %3908 = vrot.lane.b32.xlu0 %v3362, 29
        %v3909 = vpop.permute.xlu0 %3908
        %3910 = vrot.lane.b32.xlu0 %v3364, 29
        %v3911 = vpop.permute.xlu0 %3910
        %3912 = vrot.lane.b32.xlu0 %v3475, 29
        %v3913 = vpop.permute.xlu0 %3912
        %3914 = vrot.lane.b32.xlu0 %v3477, 29
        %v3915 = vpop.permute.xlu0 %3914
        %3916 = vrot.lane.b32.xlu0 %v3588, 29
        %v3917 = vpop.permute.xlu0 %3916
        %3918 = vrot.lane.b32.xlu0 %v3590, 29
        %v3919 = vpop.permute.xlu0 %3918
        %3920 = vrot.lane.b32.xlu0 %v3701, 29
        %v3921 = vpop.permute.xlu0 %3920
        %3922 = vrot.lane.b32.xlu0 %v3368, 29
        %v3923 = vpop.permute.xlu0 %3922
        %3924 = vrot.lane.b32.xlu0 %v3370, 29
        %v3925 = vpop.permute.xlu0 %3924
        %3926 = vrot.lane.b32.xlu0 %v3481, 29
        %v3927 = vpop.permute.xlu0 %3926
        %3928 = vrot.lane.b32.xlu0 %v3483, 29
        %v3929 = vpop.permute.xlu0 %3928
        %3930 = vrot.lane.b32.xlu0 %v3594, 29
        %v3931 = vpop.permute.xlu0 %3930
        %3932 = vrot.lane.b32.xlu0 %v3596, 29
        %v3933 = vpop.permute.xlu0 %3932
        %3934 = vrot.lane.b32.xlu0 %v3707, 29
        %v3935 = vpop.permute.xlu0 %3934
        %vm3936 = vcmask 236544
        %v3937 = vsel %vm3936, %v3825, %v3827
        %v3938 = vsel %vm3936, %v3827, %v3829
        %v3939 = vsel %vm3936, %v3829, %v3831
        %v3940 = vsel %vm3936, %v3831, %v3833
        %v3941 = vsel %vm3936, %v3833, %v3835
        %v3942 = vsel %vm3936, %v3835, %v3837
        %v3943 = vsel %vm3936, %v3839, %v3841
        %v3944 = vsel %vm3936, %v3841, %v3843
        %v3945 = vsel %vm3936, %v3843, %v3845
        %v3946 = vsel %vm3936, %v3845, %v3847
        %v3947 = vsel %vm3936, %v3847, %v3849
        %v3948 = vsel %vm3936, %v3849, %v3851
        %v3949 = vsel %vm3936, %v3853, %v3855
        %v3950 = vsel %vm3936, %v3855, %v3857
        %v3951 = vsel %vm3936, %v3857, %v3859
        %v3952 = vsel %vm3936, %v3859, %v3861
        %v3953 = vsel %vm3936, %v3861, %v3863
        %v3954 = vsel %vm3936, %v3863, %v3865
        %v3955 = vsel %vm3936, %v3867, %v3869
        %v3956 = vsel %vm3936, %v3869, %v3871
        %v3957 = vsel %vm3936, %v3871, %v3873
        %v3958 = vsel %vm3936, %v3873, %v3875
        %v3959 = vsel %vm3936, %v3875, %v3877
        %v3960 = vsel %vm3936, %v3877, %v3879
        %v3961 = vsel %vm3936, %v3881, %v3883
        %v3962 = vsel %vm3936, %v3883, %v3885
        %v3963 = vsel %vm3936, %v3885, %v3887
        %v3964 = vsel %vm3936, %v3887, %v3889
        %v3965 = vsel %vm3936, %v3889, %v3891
        %v3966 = vsel %vm3936, %v3891, %v3893
        %v3967 = vsel %vm3936, %v3895, %v3897
        %v3968 = vsel %vm3936, %v3897, %v3899
        %v3969 = vsel %vm3936, %v3899, %v3901
        %v3970 = vsel %vm3936, %v3901, %v3903
        %v3971 = vsel %vm3936, %v3903, %v3905
        %v3972 = vsel %vm3936, %v3905, %v3907
        %v3973 = vsel %vm3936, %v3909, %v3911
        %v3974 = vsel %vm3936, %v3911, %v3913
        %v3975 = vsel %vm3936, %v3913, %v3915
        %v3976 = vsel %vm3936, %v3915, %v3917
        %v3977 = vsel %vm3936, %v3917, %v3919
        %v3978 = vsel %vm3936, %v3919, %v3921
        %v3979 = vsel %vm3936, %v3923, %v3925
        %v3980 = vsel %vm3936, %v3925, %v3927
        %v3981 = vsel %vm3936, %v3927, %v3929
        %v3982 = vsel %vm3936, %v3929, %v3931
        %v3983 = vsel %vm3936, %v3931, %v3933
        %v3984 = vsel %vm3936, %v3933, %v3935
        %v4049 = vsel %vm3936, %v3760, %v3825
        %v4050 = vsel %vm3936, %v3761, %v3839
        %v4051 = vsel %vm3936, %v3762, %v3853
        %v4052 = vsel %vm3936, %v3763, %v3867
        %v4053 = vsel %vm3936, %v3764, %v3881
        %v4054 = vsel %vm3936, %v3765, %v3895
        %v4055 = vsel %vm3936, %v3766, %v3909
        %v4056 = vsel %vm3936, %v3767, %v3923
        %s4057 = scalar_lea.vmem %s8, 16
        %v4058 = vld [vmem:[%s4057] sm:$0xff]
        %v4060 = vlaneseq
        %v4061 = vshrl.u32 %v4060, 7
        %v4062 = vsub.s32 0, %v4061
        %v4063 = vrot.slane %v4058, %v4062
        %v4064 = vlaneseq
        %v4065 = vshrl.u32 %v4064, 7
        %v4066 = vsub.s32 1, %v4065
        %v4067 = vrot.slane %v4058, %v4066
        %v4068 = vlaneseq
        %v4069 = vshrl.u32 %v4068, 7
        %v4070 = vsub.s32 2, %v4069
        %v4071 = vrot.slane %v4058, %v4070
        %v4072 = vlaneseq
        %v4073 = vshrl.u32 %v4072, 7
        %v4074 = vsub.s32 3, %v4073
        %v4075 = vrot.slane %v4058, %v4074
        %v4076 = vlaneseq
        %v4077 = vshrl.u32 %v4076, 7
        %v4078 = vsub.s32 4, %v4077
        %v4079 = vrot.slane %v4058, %v4078
        %v4080 = vlaneseq
        %v4081 = vshrl.u32 %v4080, 7
        %v4082 = vsub.s32 5, %v4081
        %v4083 = vrot.slane %v4058, %v4082
        %v4084 = vlaneseq
        %v4085 = vshrl.u32 %v4084, 7
        %v4086 = vsub.s32 6, %v4085
        %v4087 = vrot.slane %v4058, %v4086
        %v4088 = vlaneseq
        %v4089 = vshrl.u32 %v4088, 7
        %v4090 = vsub.s32 7, %v4089
        %v4091 = vrot.slane %v4058, %v4090
        %v4100 = vmul.f32 %v4049, %v4063
        %v4101 = vmul.f32 %v3937, %v4067
        %v4102 = vmul.f32 %v3938, %v4071
        %v4103 = vmul.f32 %v3939, %v4075
        %v4104 = vmul.f32 %v3940, %v4079
        %v4105 = vmul.f32 %v3941, %v4083
        %v4106 = vmul.f32 %v3942, %v4087
        %v4107 = vmul.f32 %v3837, %v4091
        %v4108 = vmul.f32 %v4050, %v4063
        %v4109 = vmul.f32 %v3943, %v4067
        %v4110 = vmul.f32 %v3944, %v4071
        %v4111 = vmul.f32 %v3945, %v4075
        %v4112 = vmul.f32 %v3946, %v4079
        %v4113 = vmul.f32 %v3947, %v4083
        %v4114 = vmul.f32 %v3948, %v4087
        %v4115 = vmul.f32 %v3851, %v4091
        %v4116 = vmul.f32 %v4051, %v4063
        %v4117 = vmul.f32 %v3949, %v4067
        %v4118 = vmul.f32 %v3950, %v4071
        %v4119 = vmul.f32 %v3951, %v4075
        %v4120 = vmul.f32 %v3952, %v4079
        %v4121 = vmul.f32 %v3953, %v4083
        %v4122 = vmul.f32 %v3954, %v4087
        %v4123 = vmul.f32 %v3865, %v4091
        %v4124 = vmul.f32 %v4052, %v4063
        %v4125 = vmul.f32 %v3955, %v4067
        %v4126 = vmul.f32 %v3956, %v4071
        %v4127 = vmul.f32 %v3957, %v4075
        %v4128 = vmul.f32 %v3958, %v4079
        %v4129 = vmul.f32 %v3959, %v4083
        %v4130 = vmul.f32 %v3960, %v4087
        %v4131 = vmul.f32 %v3879, %v4091
        %v4132 = vmul.f32 %v4053, %v4063
        %v4133 = vmul.f32 %v3961, %v4067
        %v4134 = vmul.f32 %v3962, %v4071
        %v4135 = vmul.f32 %v3963, %v4075
        %v4136 = vmul.f32 %v3964, %v4079
        %v4137 = vmul.f32 %v3965, %v4083
        %v4138 = vmul.f32 %v3966, %v4087
        %v4139 = vmul.f32 %v3893, %v4091
        %v4140 = vmul.f32 %v4054, %v4063
        %v4141 = vmul.f32 %v3967, %v4067
        %v4142 = vmul.f32 %v3968, %v4071
        %v4143 = vmul.f32 %v3969, %v4075
        %v4144 = vmul.f32 %v3970, %v4079
        %v4145 = vmul.f32 %v3971, %v4083
        %v4146 = vmul.f32 %v3972, %v4087
        %v4147 = vmul.f32 %v3907, %v4091
        %v4148 = vmul.f32 %v4055, %v4063
        %v4149 = vmul.f32 %v3973, %v4067
        %v4150 = vmul.f32 %v3974, %v4071
        %v4151 = vmul.f32 %v3975, %v4075
        %v4152 = vmul.f32 %v3976, %v4079
        %v4153 = vmul.f32 %v3977, %v4083
        %v4154 = vmul.f32 %v3978, %v4087
        %v4155 = vmul.f32 %v3921, %v4091
        %v4156 = vmul.f32 %v4056, %v4063
        %v4157 = vmul.f32 %v3979, %v4067
        %v4158 = vmul.f32 %v3980, %v4071
        %v4159 = vmul.f32 %v3981, %v4075
        %v4160 = vmul.f32 %v3982, %v4079
        %v4161 = vmul.f32 %v3983, %v4083
        %v4162 = vmul.f32 %v3984, %v4087
        %v4163 = vmul.f32 %v3935, %v4091
        %v4164 = vadd.f32 %v3154, %v4100
        %v4165 = vadd.f32 %v3155, %v4101
        %v4166 = vadd.f32 %v3156, %v4102
        %v4167 = vadd.f32 %v3157, %v4103
        %v4168 = vadd.f32 %v3158, %v4104
        %v4169 = vadd.f32 %v3159, %v4105
        %v4170 = vadd.f32 %v3160, %v4106
        %v4171 = vadd.f32 %v3161, %v4107
        %v4172 = vadd.f32 %v3162, %v4108
        %v4173 = vadd.f32 %v3163, %v4109
        %v4174 = vadd.f32 %v3164, %v4110
        %v4175 = vadd.f32 %v3165, %v4111
        %v4176 = vadd.f32 %v3166, %v4112
        %v4177 = vadd.f32 %v3167, %v4113
        %v4178 = vadd.f32 %v3168, %v4114
        %v4179 = vadd.f32 %v3169, %v4115
        %v4180 = vadd.f32 %v3170, %v4116
        %v4181 = vadd.f32 %v3171, %v4117
        %v4182 = vadd.f32 %v3172, %v4118
        %v4183 = vadd.f32 %v3173, %v4119
        %v4184 = vadd.f32 %v3174, %v4120
        %v4185 = vadd.f32 %v3175, %v4121
        %v4186 = vadd.f32 %v3176, %v4122
        %v4187 = vadd.f32 %v3177, %v4123
        %v4188 = vadd.f32 %v3178, %v4124
        %v4189 = vadd.f32 %v3179, %v4125
        %v4190 = vadd.f32 %v3180, %v4126
        %v4191 = vadd.f32 %v3181, %v4127
        %v4192 = vadd.f32 %v3182, %v4128
        %v4193 = vadd.f32 %v3183, %v4129
        %v4194 = vadd.f32 %v3184, %v4130
        %v4195 = vadd.f32 %v3185, %v4131
        %v4196 = vadd.f32 %v3186, %v4132
        %v4197 = vadd.f32 %v3187, %v4133
        %v4198 = vadd.f32 %v3188, %v4134
        %v4199 = vadd.f32 %v3189, %v4135
        %v4200 = vadd.f32 %v3190, %v4136
        %v4201 = vadd.f32 %v3191, %v4137
        %v4202 = vadd.f32 %v3192, %v4138
        %v4203 = vadd.f32 %v3193, %v4139
        %v4204 = vadd.f32 %v3194, %v4140
        %v4205 = vadd.f32 %v3195, %v4141
        %v4206 = vadd.f32 %v3196, %v4142
        %v4207 = vadd.f32 %v3197, %v4143
        %v4208 = vadd.f32 %v3198, %v4144
        %v4209 = vadd.f32 %v3199, %v4145
        %v4210 = vadd.f32 %v3200, %v4146
        %v4211 = vadd.f32 %v3201, %v4147
        %v4212 = vadd.f32 %v3202, %v4148
        %v4213 = vadd.f32 %v3203, %v4149
        %v4214 = vadd.f32 %v3204, %v4150
        %v4215 = vadd.f32 %v3205, %v4151
        %v4216 = vadd.f32 %v3206, %v4152
        %v4217 = vadd.f32 %v3207, %v4153
        %v4218 = vadd.f32 %v3208, %v4154
        %v4219 = vadd.f32 %v3209, %v4155
        %v4220 = vadd.f32 %v3210, %v4156
        %v4221 = vadd.f32 %v3211, %v4157
        %v4222 = vadd.f32 %v3212, %v4158
        %v4223 = vadd.f32 %v3213, %v4159
        %v4224 = vadd.f32 %v3214, %v4160
        %v4225 = vadd.f32 %v3215, %v4161
        %v4226 = vadd.f32 %v3216, %v4162
        %v4227 = vadd.f32 %v3217, %v4163
        %s4228 = scalar_lea.vmem [#allocation11], 384
        %v4229 = vld [vmem:[%s4228] sm:$0xff]
        %v4230 = vld [vmem:[%s4228 + $0x8] sm:$0xff]
        %v4231 = vld [vmem:[%s4228 + $0x10] sm:$0xff]
        %v4232 = vld [vmem:[%s4228 + $0x18] sm:$0xff]
        %v4233 = vld [vmem:[%s4228 + $0x20] sm:$0xff]
        %v4234 = vld [vmem:[%s4228 + $0x28] sm:$0xff]
        %v4235 = vld [vmem:[%s4228 + $0x30] sm:$0xff]
        %v4236 = vld [vmem:[%s4228 + $0x38] sm:$0xff]
        %v4237 = vld [vmem:[%s4228 + $0x40] sm:$0xff]
        %v4238 = vld [vmem:[%s4228 + $0x48] sm:$0xff]
        %v4239 = vld [vmem:[%s4228 + $0x50] sm:$0xff]
        %v4240 = vld [vmem:[%s4228 + $0x58] sm:$0xff]
        %v4241 = vld [vmem:[%s4228 + $0x60] sm:$0xff]
        %v4242 = vld [vmem:[%s4228 + $0x68] sm:$0xff]
        %v4243 = vld [vmem:[%s4228 + $0x70] sm:$0xff]
        %v4244 = vld [vmem:[%s4228 + $0x78] sm:$0xff]
        %v4246 = vsel %vm723, %v4230, 0
        %v4249 = vsel %vm723, %v4232, 0
        %v4252 = vsel %vm723, %v4234, 0
        %v4255 = vsel %vm723, %v4236, 0
        %v4258 = vsel %vm723, %v4238, 0
        %v4261 = vsel %vm723, %v4240, 0
        %v4264 = vsel %vm723, %v4242, 0
        %v4267 = vsel %vm723, %v4244, 0
        %4269 = vmatprep.subr.mxu0 %v499
        %4270 = vmatpush1.msra.mxu0 %v498
        %4271 = vmatprep.subr.mxu0 %v507
        %4272 = vmatpush1.msra.mxu0 %v506
        %4273 = vmatprep.subr.mxu0 %v515
        %4274 = vmatpush1.msra.mxu0 %v514
        %4275 = vmatprep.subr.mxu0 %v523
        %4276 = vmatpush1.msra.mxu0 %v522
        %4277 = vmatprep.subr.mxu0 %v531
        %4278 = vmatpush1.msra.mxu0 %v530
        %4279 = vmatprep.subr.mxu0 %v539
        %4280 = vmatpush1.msra.mxu0 %v538
        %4281 = vmatprep.subr.mxu0 %v547
        %4282 = vmatpush1.msra.mxu0 %v546
        %4283 = vmatprep.subr.mxu0 %v555
        %4284 = vmatpush1.msra.mxu0 %v554
        %4285 = vmatprep.subr.mxu0 %v563
        %4286 = vmatpush1.msra.mxu0 %v562
        %4287 = vmatprep.subr.mxu0 %v571
        %4288 = vmatpush1.msra.mxu0 %v570
        %4289 = vmatprep.subr.mxu0 %v579
        %4290 = vmatpush1.msra.mxu0 %v578
        %4291 = vmatprep.subr.mxu0 %v587
        %4292 = vmatpush1.msra.mxu0 %v586
        %4293 = vmatprep.subr.mxu0 %v595
        %4294 = vmatpush1.msra.mxu0 %v594
        %4295 = vmatprep.subr.mxu0 %v603
        %4296 = vmatpush1.msra.mxu0 %v602
        %4297 = vmatprep.subr.mxu0 %v611
        %4298 = vmatpush1.msra.mxu0 %v610
        %4299 = vmatprep.subr.mxu0 %v619
        %4300 = vmatpush1.msra.mxu0 %v618
        %4301 = vmatprep.subr.mxu0 %v627
        %4302 = vmatpush1.msra.mxu0 %v626
        %4303 = vmatprep.subr.mxu0 %v635
        %4304 = vmatpush1.msra.mxu0 %v634
        %4305 = vmatprep.subr.mxu0 %v643
        %4306 = vmatpush1.msra.mxu0 %v642
        %4307 = vmatprep.subr.mxu0 %v651
        %4308 = vmatpush1.msra.mxu0 %v650
        %4309 = vmatprep.subr.mxu0 0.0
        %4310 = vmatpush1.msra.mxu0 0.0
        %4311 = vmatprep.subr.mxu0 0.0
        %4312 = vmatpush1.msra.mxu0 0.0
        %4313 = vmatprep.subr.mxu0 0.0
        %4314 = vmatpush1.msra.mxu0 0.0
        %4315 = vmatprep.subr.mxu0 0.0
        %4316 = vmatpush1.msra.mxu0 0.0
        %4317 = vmatprep.subr.mxu0 0.0
        %4318 = vmatpush1.msra.mxu0 0.0
        %4319 = vmatprep.subr.mxu0 0.0
        %4320 = vmatpush1.msra.mxu0 0.0
        %4321 = vmatprep.subr.mxu0 0.0
        %4322 = vmatpush1.msra.mxu0 0.0
        %4323 = vmatprep.subr.mxu0 0.0
        %4324 = vmatpush1.msra.mxu0 0.0
        %4325 = vmatprep.subr.mxu0 0.0
        %4326 = vmatpush1.msra.mxu0 0.0
        %4327 = vmatprep.subr.mxu0 0.0
        %4328 = vmatpush1.msra.mxu0 0.0
        %4329 = vmatprep.subr.mxu0 0.0
        %4330 = vmatpush1.msra.mxu0 0.0
        %4331 = vmatprep.subr.mxu0 0.0
        %4332 = vmatpush1.msra.mxu0 0.0
        %4333 = vmatprep.mubr.f32.mxu0 %v4246
        %4334 = vmatmul.mubr.f32.gmra.mrb[0].mxu0 %v4229
        %v4335 = vpop.f32.mrb[0].mxu0
        %v4336 = vadd.f32 0.0, %v4335
        %v4337 = vpop.f32.mrb[0].mxu0
        %v4338 = vadd.f32 0.0, %v4337
        %4339 = vmatprep.mubr.f32.mxu0 %v4249
        %4340 = vmatmul.mubr.f32.gmra.mrb[0].mxu0 %v4231
        %v4341 = vpop.f32.mrb[0].mxu0
        %v4342 = vadd.f32 0.0, %v4341
        %v4343 = vpop.f32.mrb[0].mxu0
        %v4344 = vadd.f32 0.0, %v4343
        %4345 = vmatprep.mubr.f32.mxu0 %v4252
        %4346 = vmatmul.mubr.f32.gmra.mrb[0].mxu0 %v4233
        %v4347 = vpop.f32.mrb[0].mxu0
        %v4348 = vadd.f32 0.0, %v4347
        %v4349 = vpop.f32.mrb[0].mxu0
        %v4350 = vadd.f32 0.0, %v4349
        %4351 = vmatprep.mubr.f32.mxu0 %v4255
        %4352 = vmatmul.mubr.f32.gmra.mrb[0].mxu0 %v4235
        %v4353 = vpop.f32.mrb[0].mxu0
        %v4354 = vadd.f32 0.0, %v4353
        %v4355 = vpop.f32.mrb[0].mxu0
        %v4356 = vadd.f32 0.0, %v4355
        %4357 = vmatprep.mubr.f32.mxu0 %v4258
        %4358 = vmatmul.mubr.f32.gmra.mrb[0].mxu0 %v4237
        %v4359 = vpop.f32.mrb[0].mxu0
        %v4360 = vadd.f32 0.0, %v4359
        %v4361 = vpop.f32.mrb[0].mxu0
        %v4362 = vadd.f32 0.0, %v4361
        %4363 = vmatprep.mubr.f32.mxu0 %v4261
        %4364 = vmatmul.mubr.f32.gmra.mrb[0].mxu0 %v4239
        %v4365 = vpop.f32.mrb[0].mxu0
        %v4366 = vadd.f32 0.0, %v4365
        %v4367 = vpop.f32.mrb[0].mxu0
        %v4368 = vadd.f32 0.0, %v4367
        %4369 = vmatprep.mubr.f32.mxu0 %v4264
        %4370 = vmatmul.mubr.f32.gmra.mrb[0].mxu0 %v4241
        %v4371 = vpop.f32.mrb[0].mxu0
        %v4372 = vadd.f32 0.0, %v4371
        %v4373 = vpop.f32.mrb[0].mxu0
        %v4374 = vadd.f32 0.0, %v4373
        %4375 = vmatprep.mubr.f32.mxu0 %v4267
        %4376 = vmatmul.mubr.f32.gmra.mrb[0].mxu0 %v4243
        %v4377 = vpop.f32.mrb[0].mxu0
        %v4378 = vadd.f32 0.0, %v4377
        %v4379 = vpop.f32.mrb[0].mxu0
        %v4380 = vadd.f32 0.0, %v4379
        %4381 = vdwg.mxu0
        %4382 = vmatprep.subr.mxu0 %v501
        %4383 = vmatpush1.msra.mxu0 %v500
        %4384 = vmatprep.subr.mxu0 %v509
        %4385 = vmatpush1.msra.mxu0 %v508
        %4386 = vmatprep.subr.mxu0 %v517
        %4387 = vmatpush1.msra.mxu0 %v516
        %4388 = vmatprep.subr.mxu0 %v525
        %4389 = vmatpush1.msra.mxu0 %v524
        %4390 = vmatprep.subr.mxu0 %v533
        %4391 = vmatpush1.msra.mxu0 %v532
        %4392 = vmatprep.subr.mxu0 %v541
        %4393 = vmatpush1.msra.mxu0 %v540
        %4394 = vmatprep.subr.mxu0 %v549
        %4395 = vmatpush1.msra.mxu0 %v548
        %4396 = vmatprep.subr.mxu0 %v557
        %4397 = vmatpush1.msra.mxu0 %v556
        %4398 = vmatprep.subr.mxu0 %v565
        %4399 = vmatpush1.msra.mxu0 %v564
        %4400 = vmatprep.subr.mxu0 %v573
        %4401 = vmatpush1.msra.mxu0 %v572
        %4402 = vmatprep.subr.mxu0 %v581
        %4403 = vmatpush1.msra.mxu0 %v580
        %4404 = vmatprep.subr.mxu0 %v589
        %4405 = vmatpush1.msra.mxu0 %v588
        %4406 = vmatprep.subr.mxu0 %v597
        %4407 = vmatpush1.msra.mxu0 %v596
        %4408 = vmatprep.subr.mxu0 %v605
        %4409 = vmatpush1.msra.mxu0 %v604
        %4410 = vmatprep.subr.mxu0 %v613
        %4411 = vmatpush1.msra.mxu0 %v612
        %4412 = vmatprep.subr.mxu0 %v621
        %4413 = vmatpush1.msra.mxu0 %v620
        %4414 = vmatprep.subr.mxu0 %v629
        %4415 = vmatpush1.msra.mxu0 %v628
        %4416 = vmatprep.subr.mxu0 %v637
        %4417 = vmatpush1.msra.mxu0 %v636
        %4418 = vmatprep.subr.mxu0 %v645
        %4419 = vmatpush1.msra.mxu0 %v644
        %4420 = vmatprep.subr.mxu0 %v653
        %4421 = vmatpush1.msra.mxu0 %v652
        %4422 = vmatprep.subr.mxu0 0.0
        %4423 = vmatpush1.msra.mxu0 0.0
        %4424 = vmatprep.subr.mxu0 0.0
        %4425 = vmatpush1.msra.mxu0 0.0
        %4426 = vmatprep.subr.mxu0 0.0
        %4427 = vmatpush1.msra.mxu0 0.0
        %4428 = vmatprep.subr.mxu0 0.0
        %4429 = vmatpush1.msra.mxu0 0.0
        %4430 = vmatprep.subr.mxu0 0.0
        %4431 = vmatpush1.msra.mxu0 0.0
        %4432 = vmatprep.subr.mxu0 0.0
        %4433 = vmatpush1.msra.mxu0 0.0
        %4434 = vmatprep.subr.mxu0 0.0
        %4435 = vmatpush1.msra.mxu0 0.0
        %4436 = vmatprep.subr.mxu0 0.0
        %4437 = vmatpush1.msra.mxu0 0.0
        %4438 = vmatprep.subr.mxu0 0.0
        %4439 = vmatpush1.msra.mxu0 0.0
        %4440 = vmatprep.subr.mxu0 0.0
        %4441 = vmatpush1.msra.mxu0 0.0
        %4442 = vmatprep.subr.mxu0 0.0
        %4443 = vmatpush1.msra.mxu0 0.0
        %4444 = vmatprep.subr.mxu0 0.0
        %4445 = vmatpush1.msra.mxu0 0.0
        %4446 = vmatprep.mubr.f32.mxu0 %v4246
        %4447 = vmatmul.mubr.f32.gmra.mrb[0].mxu0 %v4229
        %v4448 = vpop.f32.mrb[0].mxu0
        %v4449 = vadd.f32 0.0, %v4448
        %v4450 = vpop.f32.mrb[0].mxu0
        %v4451 = vadd.f32 0.0, %v4450
        %4452 = vmatprep.mubr.f32.mxu0 %v4249
        %4453 = vmatmul.mubr.f32.gmra.mrb[0].mxu0 %v4231
        %v4454 = vpop.f32.mrb[0].mxu0
        %v4455 = vadd.f32 0.0, %v4454
        %v4456 = vpop.f32.mrb[0].mxu0
        %v4457 = vadd.f32 0.0, %v4456
        %4458 = vmatprep.mubr.f32.mxu0 %v4252
        %4459 = vmatmul.mubr.f32.gmra.mrb[0].mxu0 %v4233
        %v4460 = vpop.f32.mrb[0].mxu0
        %v4461 = vadd.f32 0.0, %v4460
        %v4462 = vpop.f32.mrb[0].mxu0
        %v4463 = vadd.f32 0.0, %v4462
        %4464 = vmatprep.mubr.f32.mxu0 %v4255
        %4465 = vmatmul.mubr.f32.gmra.mrb[0].mxu0 %v4235
        %v4466 = vpop.f32.mrb[0].mxu0
        %v4467 = vadd.f32 0.0, %v4466
        %v4468 = vpop.f32.mrb[0].mxu0
        %v4469 = vadd.f32 0.0, %v4468
        %4470 = vmatprep.mubr.f32.mxu0 %v4258
        %4471 = vmatmul.mubr.f32.gmra.mrb[0].mxu0 %v4237
        %v4472 = vpop.f32.mrb[0].mxu0
        %v4473 = vadd.f32 0.0, %v4472
        %v4474 = vpop.f32.mrb[0].mxu0
        %v4475 = vadd.f32 0.0, %v4474
        %4476 = vmatprep.mubr.f32.mxu0 %v4261
        %4477 = vmatmul.mubr.f32.gmra.mrb[0].mxu0 %v4239
        %v4478 = vpop.f32.mrb[0].mxu0
        %v4479 = vadd.f32 0.0, %v4478
        %v4480 = vpop.f32.mrb[0].mxu0
        %v4481 = vadd.f32 0.0, %v4480
        %4482 = vmatprep.mubr.f32.mxu0 %v4264
        %4483 = vmatmul.mubr.f32.gmra.mrb[0].mxu0 %v4241
        %v4484 = vpop.f32.mrb[0].mxu0
        %v4485 = vadd.f32 0.0, %v4484
        %v4486 = vpop.f32.mrb[0].mxu0
        %v4487 = vadd.f32 0.0, %v4486
        %4488 = vmatprep.mubr.f32.mxu0 %v4267
        %4489 = vmatmul.mubr.f32.gmra.mrb[0].mxu0 %v4243
        %v4490 = vpop.f32.mrb[0].mxu0
        %v4491 = vadd.f32 0.0, %v4490
        %v4492 = vpop.f32.mrb[0].mxu0
        %v4493 = vadd.f32 0.0, %v4492
        %4494 = vdwg.mxu0
        %4495 = vmatprep.subr.mxu0 %v503
        %4496 = vmatpush1.msra.mxu0 %v502
        %4497 = vmatprep.subr.mxu0 %v511
        %4498 = vmatpush1.msra.mxu0 %v510
        %4499 = vmatprep.subr.mxu0 %v519
        %4500 = vmatpush1.msra.mxu0 %v518
        %4501 = vmatprep.subr.mxu0 %v527
        %4502 = vmatpush1.msra.mxu0 %v526
        %4503 = vmatprep.subr.mxu0 %v535
        %4504 = vmatpush1.msra.mxu0 %v534
        %4505 = vmatprep.subr.mxu0 %v543
        %4506 = vmatpush1.msra.mxu0 %v542
        %4507 = vmatprep.subr.mxu0 %v551
        %4508 = vmatpush1.msra.mxu0 %v550
        %4509 = vmatprep.subr.mxu0 %v559
        %4510 = vmatpush1.msra.mxu0 %v558
        %4511 = vmatprep.subr.mxu0 %v567
        %4512 = vmatpush1.msra.mxu0 %v566
        %4513 = vmatprep.subr.mxu0 %v575
        %4514 = vmatpush1.msra.mxu0 %v574
        %4515 = vmatprep.subr.mxu0 %v583
        %4516 = vmatpush1.msra.mxu0 %v582
        %4517 = vmatprep.subr.mxu0 %v591
        %4518 = vmatpush1.msra.mxu0 %v590
        %4519 = vmatprep.subr.mxu0 %v599
        %4520 = vmatpush1.msra.mxu0 %v598
        %4521 = vmatprep.subr.mxu0 %v607
        %4522 = vmatpush1.msra.mxu0 %v606
        %4523 = vmatprep.subr.mxu0 %v615
        %4524 = vmatpush1.msra.mxu0 %v614
        %4525 = vmatprep.subr.mxu0 %v623
        %4526 = vmatpush1.msra.mxu0 %v622
        %4527 = vmatprep.subr.mxu0 %v631
        %4528 = vmatpush1.msra.mxu0 %v630
        %4529 = vmatprep.subr.mxu0 %v639
        %4530 = vmatpush1.msra.mxu0 %v638
        %4531 = vmatprep.subr.mxu0 %v647
        %4532 = vmatpush1.msra.mxu0 %v646
        %4533 = vmatprep.subr.mxu0 %v655
        %4534 = vmatpush1.msra.mxu0 %v654
        %4535 = vmatprep.subr.mxu0 0.0
        %4536 = vmatpush1.msra.mxu0 0.0
        %4537 = vmatprep.subr.mxu0 0.0
        %4538 = vmatpush1.msra.mxu0 0.0
        %4539 = vmatprep.subr.mxu0 0.0
        %4540 = vmatpush1.msra.mxu0 0.0
        %4541 = vmatprep.subr.mxu0 0.0
        %4542 = vmatpush1.msra.mxu0 0.0
        %4543 = vmatprep.subr.mxu0 0.0
        %4544 = vmatpush1.msra.mxu0 0.0
        %4545 = vmatprep.subr.mxu0 0.0
        %4546 = vmatpush1.msra.mxu0 0.0
        %4547 = vmatprep.subr.mxu0 0.0
        %4548 = vmatpush1.msra.mxu0 0.0
        %4549 = vmatprep.subr.mxu0 0.0
        %4550 = vmatpush1.msra.mxu0 0.0
        %4551 = vmatprep.subr.mxu0 0.0
        %4552 = vmatpush1.msra.mxu0 0.0
        %4553 = vmatprep.subr.mxu0 0.0
        %4554 = vmatpush1.msra.mxu0 0.0
        %4555 = vmatprep.subr.mxu0 0.0
        %4556 = vmatpush1.msra.mxu0 0.0
        %4557 = vmatprep.subr.mxu0 0.0
        %4558 = vmatpush1.msra.mxu0 0.0
        %4559 = vmatprep.mubr.f32.mxu0 %v4246
        %4560 = vmatmul.mubr.f32.gmra.mrb[0].mxu0 %v4229
        %v4561 = vpop.f32.mrb[0].mxu0
        %v4562 = vadd.f32 0.0, %v4561
        %v4563 = vpop.f32.mrb[0].mxu0
        %v4564 = vadd.f32 0.0, %v4563
        %4565 = vmatprep.mubr.f32.mxu0 %v4249
        %4566 = vmatmul.mubr.f32.gmra.mrb[0].mxu0 %v4231
        %v4567 = vpop.f32.mrb[0].mxu0
        %v4568 = vadd.f32 0.0, %v4567
        %v4569 = vpop.f32.mrb[0].mxu0
        %v4570 = vadd.f32 0.0, %v4569
        %4571 = vmatprep.mubr.f32.mxu0 %v4252
        %4572 = vmatmul.mubr.f32.gmra.mrb[0].mxu0 %v4233
        %v4573 = vpop.f32.mrb[0].mxu0
        %v4574 = vadd.f32 0.0, %v4573
        %v4575 = vpop.f32.mrb[0].mxu0
        %v4576 = vadd.f32 0.0, %v4575
        %4577 = vmatprep.mubr.f32.mxu0 %v4255
        %4578 = vmatmul.mubr.f32.gmra.mrb[0].mxu0 %v4235
        %v4579 = vpop.f32.mrb[0].mxu0
        %v4580 = vadd.f32 0.0, %v4579
        %v4581 = vpop.f32.mrb[0].mxu0
        %v4582 = vadd.f32 0.0, %v4581
        %4583 = vmatprep.mubr.f32.mxu0 %v4258
        %4584 = vmatmul.mubr.f32.gmra.mrb[0].mxu0 %v4237
        %v4585 = vpop.f32.mrb[0].mxu0
        %v4586 = vadd.f32 0.0, %v4585
        %v4587 = vpop.f32.mrb[0].mxu0
        %v4588 = vadd.f32 0.0, %v4587
        %4589 = vmatprep.mubr.f32.mxu0 %v4261
        %4590 = vmatmul.mubr.f32.gmra.mrb[0].mxu0 %v4239
        %v4591 = vpop.f32.mrb[0].mxu0
        %v4592 = vadd.f32 0.0, %v4591
        %v4593 = vpop.f32.mrb[0].mxu0
        %v4594 = vadd.f32 0.0, %v4593
        %4595 = vmatprep.mubr.f32.mxu0 %v4264
        %4596 = vmatmul.mubr.f32.gmra.mrb[0].mxu0 %v4241
        %v4597 = vpop.f32.mrb[0].mxu0
        %v4598 = vadd.f32 0.0, %v4597
        %v4599 = vpop.f32.mrb[0].mxu0
        %v4600 = vadd.f32 0.0, %v4599
        %4601 = vmatprep.mubr.f32.mxu0 %v4267
        %4602 = vmatmul.mubr.f32.gmra.mrb[0].mxu0 %v4243
        %v4603 = vpop.f32.mrb[0].mxu0
        %v4604 = vadd.f32 0.0, %v4603
        %v4605 = vpop.f32.mrb[0].mxu0
        %v4606 = vadd.f32 0.0, %v4605
        %4607 = vdwg.mxu0
        %4608 = vmatprep.subr.mxu0 %v505
        %4609 = vmatpush1.msra.mxu0 %v504
        %4610 = vmatprep.subr.mxu0 %v513
        %4611 = vmatpush1.msra.mxu0 %v512
        %4612 = vmatprep.subr.mxu0 %v521
        %4613 = vmatpush1.msra.mxu0 %v520
        %4614 = vmatprep.subr.mxu0 %v529
        %4615 = vmatpush1.msra.mxu0 %v528
        %4616 = vmatprep.subr.mxu0 %v537
        %4617 = vmatpush1.msra.mxu0 %v536
        %4618 = vmatprep.subr.mxu0 %v545
        %4619 = vmatpush1.msra.mxu0 %v544
        %4620 = vmatprep.subr.mxu0 %v553
        %4621 = vmatpush1.msra.mxu0 %v552
        %4622 = vmatprep.subr.mxu0 %v561
        %4623 = vmatpush1.msra.mxu0 %v560
        %4624 = vmatprep.subr.mxu0 %v569
        %4625 = vmatpush1.msra.mxu0 %v568
        %4626 = vmatprep.subr.mxu0 %v577
        %4627 = vmatpush1.msra.mxu0 %v576
        %4628 = vmatprep.subr.mxu0 %v585
        %4629 = vmatpush1.msra.mxu0 %v584
        %4630 = vmatprep.subr.mxu0 %v593
        %4631 = vmatpush1.msra.mxu0 %v592
        %4632 = vmatprep.subr.mxu0 %v601
        %4633 = vmatpush1.msra.mxu0 %v600
        %4634 = vmatprep.subr.mxu0 %v609
        %4635 = vmatpush1.msra.mxu0 %v608
        %4636 = vmatprep.subr.mxu0 %v617
        %4637 = vmatpush1.msra.mxu0 %v616
        %4638 = vmatprep.subr.mxu0 %v625
        %4639 = vmatpush1.msra.mxu0 %v624
        %4640 = vmatprep.subr.mxu0 %v633
        %4641 = vmatpush1.msra.mxu0 %v632
        %4642 = vmatprep.subr.mxu0 %v641
        %4643 = vmatpush1.msra.mxu0 %v640
        %4644 = vmatprep.subr.mxu0 %v649
        %4645 = vmatpush1.msra.mxu0 %v648
        %4646 = vmatprep.subr.mxu0 %v657
        %4647 = vmatpush1.msra.mxu0 %v656
        %4648 = vmatprep.subr.mxu0 0.0
        %4649 = vmatpush1.msra.mxu0 0.0
        %4650 = vmatprep.subr.mxu0 0.0
        %4651 = vmatpush1.msra.mxu0 0.0
        %4652 = vmatprep.subr.mxu0 0.0
        %4653 = vmatpush1.msra.mxu0 0.0
        %4654 = vmatprep.subr.mxu0 0.0
        %4655 = vmatpush1.msra.mxu0 0.0
        %4656 = vmatprep.subr.mxu0 0.0
        %4657 = vmatpush1.msra.mxu0 0.0
        %4658 = vmatprep.subr.mxu0 0.0
        %4659 = vmatpush1.msra.mxu0 0.0
        %4660 = vmatprep.subr.mxu0 0.0
        %4661 = vmatpush1.msra.mxu0 0.0
        %4662 = vmatprep.subr.mxu0 0.0
        %4663 = vmatpush1.msra.mxu0 0.0
        %4664 = vmatprep.subr.mxu0 0.0
        %4665 = vmatpush1.msra.mxu0 0.0
        %4666 = vmatprep.subr.mxu0 0.0
        %4667 = vmatpush1.msra.mxu0 0.0
        %4668 = vmatprep.subr.mxu0 0.0
        %4669 = vmatpush1.msra.mxu0 0.0
        %4670 = vmatprep.subr.mxu0 0.0
        %4671 = vmatpush1.msra.mxu0 0.0
        %4672 = vmatprep.mubr.f32.mxu0 %v4246
        %4673 = vmatmul.mubr.f32.gmra.mrb[0].mxu0 %v4229
        %v4674 = vpop.f32.mrb[0].mxu0
        %v4675 = vadd.f32 0.0, %v4674
        %v4676 = vpop.f32.mrb[0].mxu0
        %v4677 = vadd.f32 0.0, %v4676
        %4678 = vmatprep.mubr.f32.mxu0 %v4249
        %4679 = vmatmul.mubr.f32.gmra.mrb[0].mxu0 %v4231
        %v4680 = vpop.f32.mrb[0].mxu0
        %v4681 = vadd.f32 0.0, %v4680
        %v4682 = vpop.f32.mrb[0].mxu0
        %v4683 = vadd.f32 0.0, %v4682
        %4684 = vmatprep.mubr.f32.mxu0 %v4252
        %4685 = vmatmul.mubr.f32.gmra.mrb[0].mxu0 %v4233
        %v4686 = vpop.f32.mrb[0].mxu0
        %v4687 = vadd.f32 0.0, %v4686
        %v4688 = vpop.f32.mrb[0].mxu0
        %v4689 = vadd.f32 0.0, %v4688
        %4690 = vmatprep.mubr.f32.mxu0 %v4255
        %4691 = vmatmul.mubr.f32.gmra.mrb[0].mxu0 %v4235
        %v4692 = vpop.f32.mrb[0].mxu0
        %v4693 = vadd.f32 0.0, %v4692
        %v4694 = vpop.f32.mrb[0].mxu0
        %v4695 = vadd.f32 0.0, %v4694
        %4696 = vmatprep.mubr.f32.mxu0 %v4258
        %4697 = vmatmul.mubr.f32.gmra.mrb[0].mxu0 %v4237
        %v4698 = vpop.f32.mrb[0].mxu0
        %v4699 = vadd.f32 0.0, %v4698
        %v4700 = vpop.f32.mrb[0].mxu0
        %v4701 = vadd.f32 0.0, %v4700
        %4702 = vmatprep.mubr.f32.mxu0 %v4261
        %4703 = vmatmul.mubr.f32.gmra.mrb[0].mxu0 %v4239
        %v4704 = vpop.f32.mrb[0].mxu0
        %v4705 = vadd.f32 0.0, %v4704
        %v4706 = vpop.f32.mrb[0].mxu0
        %v4707 = vadd.f32 0.0, %v4706
        %4708 = vmatprep.mubr.f32.mxu0 %v4264
        %4709 = vmatmul.mubr.f32.gmra.mrb[0].mxu0 %v4241
        %v4710 = vpop.f32.mrb[0].mxu0
        %v4711 = vadd.f32 0.0, %v4710
        %v4712 = vpop.f32.mrb[0].mxu0
        %v4713 = vadd.f32 0.0, %v4712
        %4714 = vmatprep.mubr.f32.mxu0 %v4267
        %4715 = vmatmul.mubr.f32.gmra.mrb[0].mxu0 %v4243
        %v4716 = vpop.f32.mrb[0].mxu0
        %v4717 = vadd.f32 0.0, %v4716
        %v4718 = vpop.f32.mrb[0].mxu0
        %v4719 = vadd.f32 0.0, %v4718
        %4720 = vdwg.mxu0
        %4729 = vrot.lane.b32.xlu0 %v4677, 125
        %v4730 = vpop.permute.xlu0 %4729
        %4731 = vrot.lane.b32.xlu0 %v4683, 125
        %v4732 = vpop.permute.xlu0 %4731
        %4733 = vrot.lane.b32.xlu0 %v4689, 125
        %v4734 = vpop.permute.xlu0 %4733
        %4735 = vrot.lane.b32.xlu0 %v4695, 125
        %v4736 = vpop.permute.xlu0 %4735
        %4737 = vrot.lane.b32.xlu0 %v4701, 125
        %v4738 = vpop.permute.xlu0 %4737
        %4739 = vrot.lane.b32.xlu0 %v4707, 125
        %v4740 = vpop.permute.xlu0 %4739
        %4741 = vrot.lane.b32.xlu0 %v4713, 125
        %v4742 = vpop.permute.xlu0 %4741
        %4743 = vrot.lane.b32.xlu0 %v4719, 125
        %v4744 = vpop.permute.xlu0 %4743
        %4809 = vrot.lane.b32.xlu0 %v4336, 1
        %v4810 = vpop.permute.xlu0 %4809
        %4811 = vrot.lane.b32.xlu0 %v4338, 1
        %v4812 = vpop.permute.xlu0 %4811
        %4813 = vrot.lane.b32.xlu0 %v4449, 1
        %v4814 = vpop.permute.xlu0 %4813
        %4815 = vrot.lane.b32.xlu0 %v4451, 1
        %v4816 = vpop.permute.xlu0 %4815
        %4817 = vrot.lane.b32.xlu0 %v4562, 1
        %v4818 = vpop.permute.xlu0 %4817
        %4819 = vrot.lane.b32.xlu0 %v4564, 1
        %v4820 = vpop.permute.xlu0 %4819
        %4821 = vrot.lane.b32.xlu0 %v4675, 1
        %v4822 = vpop.permute.xlu0 %4821
        %4823 = vrot.lane.b32.xlu0 %v4677, 1
        %v4824 = vpop.permute.xlu0 %4823
        %4825 = vrot.lane.b32.xlu0 %v4342, 1
        %v4826 = vpop.permute.xlu0 %4825
        %4827 = vrot.lane.b32.xlu0 %v4344, 1
        %v4828 = vpop.permute.xlu0 %4827
        %4829 = vrot.lane.b32.xlu0 %v4455, 1
        %v4830 = vpop.permute.xlu0 %4829
        %4831 = vrot.lane.b32.xlu0 %v4457, 1
        %v4832 = vpop.permute.xlu0 %4831
        %4833 = vrot.lane.b32.xlu0 %v4568, 1
        %v4834 = vpop.permute.xlu0 %4833
        %4835 = vrot.lane.b32.xlu0 %v4570, 1
        %v4836 = vpop.permute.xlu0 %4835
        %4837 = vrot.lane.b32.xlu0 %v4681, 1
        %v4838 = vpop.permute.xlu0 %4837
        %4839 = vrot.lane.b32.xlu0 %v4683, 1
        %v4840 = vpop.permute.xlu0 %4839
        %4841 = vrot.lane.b32.xlu0 %v4348, 1
        %v4842 = vpop.permute.xlu0 %4841
        %4843 = vrot.lane.b32.xlu0 %v4350, 1
        %v4844 = vpop.permute.xlu0 %4843
        %4845 = vrot.lane.b32.xlu0 %v4461, 1
        %v4846 = vpop.permute.xlu0 %4845
        %4847 = vrot.lane.b32.xlu0 %v4463, 1
        %v4848 = vpop.permute.xlu0 %4847
        %4849 = vrot.lane.b32.xlu0 %v4574, 1
        %v4850 = vpop.permute.xlu0 %4849
        %4851 = vrot.lane.b32.xlu0 %v4576, 1
        %v4852 = vpop.permute.xlu0 %4851
        %4853 = vrot.lane.b32.xlu0 %v4687, 1
        %v4854 = vpop.permute.xlu0 %4853
        %4855 = vrot.lane.b32.xlu0 %v4689, 1
        %v4856 = vpop.permute.xlu0 %4855
        %4857 = vrot.lane.b32.xlu0 %v4354, 1
        %v4858 = vpop.permute.xlu0 %4857
        %4859 = vrot.lane.b32.xlu0 %v4356, 1
        %v4860 = vpop.permute.xlu0 %4859
        %4861 = vrot.lane.b32.xlu0 %v4467, 1
        %v4862 = vpop.permute.xlu0 %4861
        %4863 = vrot.lane.b32.xlu0 %v4469, 1
        %v4864 = vpop.permute.xlu0 %4863
        %4865 = vrot.lane.b32.xlu0 %v4580, 1
        %v4866 = vpop.permute.xlu0 %4865
        %4867 = vrot.lane.b32.xlu0 %v4582, 1
        %v4868 = vpop.permute.xlu0 %4867
        %4869 = vrot.lane.b32.xlu0 %v4693, 1
        %v4870 = vpop.permute.xlu0 %4869
        %4871 = vrot.lane.b32.xlu0 %v4695, 1
        %v4872 = vpop.permute.xlu0 %4871
        %4873 = vrot.lane.b32.xlu0 %v4360, 1
        %v4874 = vpop.permute.xlu0 %4873
        %4875 = vrot.lane.b32.xlu0 %v4362, 1
        %v4876 = vpop.permute.xlu0 %4875
        %4877 = vrot.lane.b32.xlu0 %v4473, 1
        %v4878 = vpop.permute.xlu0 %4877
        %4879 = vrot.lane.b32.xlu0 %v4475, 1
        %v4880 = vpop.permute.xlu0 %4879
        %4881 = vrot.lane.b32.xlu0 %v4586, 1
        %v4882 = vpop.permute.xlu0 %4881
        %4883 = vrot.lane.b32.xlu0 %v4588, 1
        %v4884 = vpop.permute.xlu0 %4883
        %4885 = vrot.lane.b32.xlu0 %v4699, 1
        %v4886 = vpop.permute.xlu0 %4885
        %4887 = vrot.lane.b32.xlu0 %v4701, 1
        %v4888 = vpop.permute.xlu0 %4887
        %4889 = vrot.lane.b32.xlu0 %v4366, 1
        %v4890 = vpop.permute.xlu0 %4889
        %4891 = vrot.lane.b32.xlu0 %v4368, 1
        %v4892 = vpop.permute.xlu0 %4891
        %4893 = vrot.lane.b32.xlu0 %v4479, 1
        %v4894 = vpop.permute.xlu0 %4893
        %4895 = vrot.lane.b32.xlu0 %v4481, 1
        %v4896 = vpop.permute.xlu0 %4895
        %4897 = vrot.lane.b32.xlu0 %v4592, 1
        %v4898 = vpop.permute.xlu0 %4897
        %4899 = vrot.lane.b32.xlu0 %v4594, 1
        %v4900 = vpop.permute.xlu0 %4899
        %4901 = vrot.lane.b32.xlu0 %v4705, 1
        %v4902 = vpop.permute.xlu0 %4901
        %4903 = vrot.lane.b32.xlu0 %v4707, 1
        %v4904 = vpop.permute.xlu0 %4903
        %4905 = vrot.lane.b32.xlu0 %v4372, 1
        %v4906 = vpop.permute.xlu0 %4905
        %4907 = vrot.lane.b32.xlu0 %v4374, 1
        %v4908 = vpop.permute.xlu0 %4907
        %4909 = vrot.lane.b32.xlu0 %v4485, 1
        %v4910 = vpop.permute.xlu0 %4909
        %4911 = vrot.lane.b32.xlu0 %v4487, 1
        %v4912 = vpop.permute.xlu0 %4911
        %4913 = vrot.lane.b32.xlu0 %v4598, 1
        %v4914 = vpop.permute.xlu0 %4913
        %4915 = vrot.lane.b32.xlu0 %v4600, 1
        %v4916 = vpop.permute.xlu0 %4915
        %4917 = vrot.lane.b32.xlu0 %v4711, 1
        %v4918 = vpop.permute.xlu0 %4917
        %4919 = vrot.lane.b32.xlu0 %v4713, 1
        %v4920 = vpop.permute.xlu0 %4919
        %4921 = vrot.lane.b32.xlu0 %v4378, 1
        %v4922 = vpop.permute.xlu0 %4921
        %4923 = vrot.lane.b32.xlu0 %v4380, 1
        %v4924 = vpop.permute.xlu0 %4923
        %4925 = vrot.lane.b32.xlu0 %v4491, 1
        %v4926 = vpop.permute.xlu0 %4925
        %4927 = vrot.lane.b32.xlu0 %v4493, 1
        %v4928 = vpop.permute.xlu0 %4927
        %4929 = vrot.lane.b32.xlu0 %v4604, 1
        %v4930 = vpop.permute.xlu0 %4929
        %4931 = vrot.lane.b32.xlu0 %v4606, 1
        %v4932 = vpop.permute.xlu0 %4931
        %4933 = vrot.lane.b32.xlu0 %v4717, 1
        %v4934 = vpop.permute.xlu0 %4933
        %4935 = vrot.lane.b32.xlu0 %v4719, 1
        %v4936 = vpop.permute.xlu0 %4935
        %vm4937 = vcmask 7168
        %v4938 = vsel %vm4937, %v4810, %v4812
        %v4939 = vsel %vm4937, %v4812, %v4814
        %v4940 = vsel %vm4937, %v4814, %v4816
        %v4941 = vsel %vm4937, %v4816, %v4818
        %v4942 = vsel %vm4937, %v4818, %v4820
        %v4943 = vsel %vm4937, %v4820, %v4822
        %v4944 = vsel %vm4937, %v4822, %v4824
        %v4945 = vsel %vm4937, %v4826, %v4828
        %v4946 = vsel %vm4937, %v4828, %v4830
        %v4947 = vsel %vm4937, %v4830, %v4832
        %v4948 = vsel %vm4937, %v4832, %v4834
        %v4949 = vsel %vm4937, %v4834, %v4836
        %v4950 = vsel %vm4937, %v4836, %v4838
        %v4951 = vsel %vm4937, %v4838, %v4840
        %v4952 = vsel %vm4937, %v4842, %v4844
        %v4953 = vsel %vm4937, %v4844, %v4846
        %v4954 = vsel %vm4937, %v4846, %v4848
        %v4955 = vsel %vm4937, %v4848, %v4850
        %v4956 = vsel %vm4937, %v4850, %v4852
        %v4957 = vsel %vm4937, %v4852, %v4854
        %v4958 = vsel %vm4937, %v4854, %v4856
        %v4959 = vsel %vm4937, %v4858, %v4860
        %v4960 = vsel %vm4937, %v4860, %v4862
        %v4961 = vsel %vm4937, %v4862, %v4864
        %v4962 = vsel %vm4937, %v4864, %v4866
        %v4963 = vsel %vm4937, %v4866, %v4868
        %v4964 = vsel %vm4937, %v4868, %v4870
        %v4965 = vsel %vm4937, %v4870, %v4872
        %v4966 = vsel %vm4937, %v4874, %v4876
        %v4967 = vsel %vm4937, %v4876, %v4878
        %v4968 = vsel %vm4937, %v4878, %v4880
        %v4969 = vsel %vm4937, %v4880, %v4882
        %v4970 = vsel %vm4937, %v4882, %v4884
        %v4971 = vsel %vm4937, %v4884, %v4886
        %v4972 = vsel %vm4937, %v4886, %v4888
        %v4973 = vsel %vm4937, %v4890, %v4892
        %v4974 = vsel %vm4937, %v4892, %v4894
        %v4975 = vsel %vm4937, %v4894, %v4896
        %v4976 = vsel %vm4937, %v4896, %v4898
        %v4977 = vsel %vm4937, %v4898, %v4900
        %v4978 = vsel %vm4937, %v4900, %v4902
        %v4979 = vsel %vm4937, %v4902, %v4904
        %v4980 = vsel %vm4937, %v4906, %v4908
        %v4981 = vsel %vm4937, %v4908, %v4910
        %v4982 = vsel %vm4937, %v4910, %v4912
        %v4983 = vsel %vm4937, %v4912, %v4914
        %v4984 = vsel %vm4937, %v4914, %v4916
        %v4985 = vsel %vm4937, %v4916, %v4918
        %v4986 = vsel %vm4937, %v4918, %v4920
        %v4987 = vsel %vm4937, %v4922, %v4924
        %v4988 = vsel %vm4937, %v4924, %v4926
        %v4989 = vsel %vm4937, %v4926, %v4928
        %v4990 = vsel %vm4937, %v4928, %v4930
        %v4991 = vsel %vm4937, %v4930, %v4932
        %v4992 = vsel %vm4937, %v4932, %v4934
        %v4993 = vsel %vm4937, %v4934, %v4936
        %v5058 = vsel %vm4937, %v4730, %v4810
        %v5059 = vsel %vm4937, %v4732, %v4826
        %v5060 = vsel %vm4937, %v4734, %v4842
        %v5061 = vsel %vm4937, %v4736, %v4858
        %v5062 = vsel %vm4937, %v4738, %v4874
        %v5063 = vsel %vm4937, %v4740, %v4890
        %v5064 = vsel %vm4937, %v4742, %v4906
        %v5065 = vsel %vm4937, %v4744, %v4922
        %s5066 = scalar_lea.vmem %s8, 24
        %v5067 = vld [vmem:[%s5066] sm:$0xff]
        %v5069 = vlaneseq
        %v5070 = vshrl.u32 %v5069, 7
        %v5071 = vsub.s32 0, %v5070
        %v5072 = vrot.slane %v5067, %v5071
        %v5073 = vlaneseq
        %v5074 = vshrl.u32 %v5073, 7
        %v5075 = vsub.s32 1, %v5074
        %v5076 = vrot.slane %v5067, %v5075
        %v5077 = vlaneseq
        %v5078 = vshrl.u32 %v5077, 7
        %v5079 = vsub.s32 2, %v5078
        %v5080 = vrot.slane %v5067, %v5079
        %v5081 = vlaneseq
        %v5082 = vshrl.u32 %v5081, 7
        %v5083 = vsub.s32 3, %v5082
        %v5084 = vrot.slane %v5067, %v5083
        %v5085 = vlaneseq
        %v5086 = vshrl.u32 %v5085, 7
        %v5087 = vsub.s32 4, %v5086
        %v5088 = vrot.slane %v5067, %v5087
        %v5089 = vlaneseq
        %v5090 = vshrl.u32 %v5089, 7
        %v5091 = vsub.s32 5, %v5090
        %v5092 = vrot.slane %v5067, %v5091
        %v5093 = vlaneseq
        %v5094 = vshrl.u32 %v5093, 7
        %v5095 = vsub.s32 6, %v5094
        %v5096 = vrot.slane %v5067, %v5095
        %v5097 = vlaneseq
        %v5098 = vshrl.u32 %v5097, 7
        %v5099 = vsub.s32 7, %v5098
        %v5100 = vrot.slane %v5067, %v5099
        %v5109 = vmul.f32 %v5058, %v5072
        %v5110 = vmul.f32 %v4938, %v5076
        %v5111 = vmul.f32 %v4939, %v5080
        %v5112 = vmul.f32 %v4940, %v5084
        %v5113 = vmul.f32 %v4941, %v5088
        %v5114 = vmul.f32 %v4942, %v5092
        %v5115 = vmul.f32 %v4943, %v5096
        %v5116 = vmul.f32 %v4944, %v5100
        %v5117 = vmul.f32 %v5059, %v5072
        %v5118 = vmul.f32 %v4945, %v5076
        %v5119 = vmul.f32 %v4946, %v5080
        %v5120 = vmul.f32 %v4947, %v5084
        %v5121 = vmul.f32 %v4948, %v5088
        %v5122 = vmul.f32 %v4949, %v5092
        %v5123 = vmul.f32 %v4950, %v5096
        %v5124 = vmul.f32 %v4951, %v5100
        %v5125 = vmul.f32 %v5060, %v5072
        %v5126 = vmul.f32 %v4952, %v5076
        %v5127 = vmul.f32 %v4953, %v5080
        %v5128 = vmul.f32 %v4954, %v5084
        %v5129 = vmul.f32 %v4955, %v5088
        %v5130 = vmul.f32 %v4956, %v5092
        %v5131 = vmul.f32 %v4957, %v5096
        %v5132 = vmul.f32 %v4958, %v5100
        %v5133 = vmul.f32 %v5061, %v5072
        %v5134 = vmul.f32 %v4959, %v5076
        %v5135 = vmul.f32 %v4960, %v5080
        %v5136 = vmul.f32 %v4961, %v5084
        %v5137 = vmul.f32 %v4962, %v5088
        %v5138 = vmul.f32 %v4963, %v5092
        %v5139 = vmul.f32 %v4964, %v5096
        %v5140 = vmul.f32 %v4965, %v5100
        %v5141 = vmul.f32 %v5062, %v5072
        %v5142 = vmul.f32 %v4966, %v5076
        %v5143 = vmul.f32 %v4967, %v5080
        %v5144 = vmul.f32 %v4968, %v5084
        %v5145 = vmul.f32 %v4969, %v5088
        %v5146 = vmul.f32 %v4970, %v5092
        %v5147 = vmul.f32 %v4971, %v5096
        %v5148 = vmul.f32 %v4972, %v5100
        %v5149 = vmul.f32 %v5063, %v5072
        %v5150 = vmul.f32 %v4973, %v5076
        %v5151 = vmul.f32 %v4974, %v5080
        %v5152 = vmul.f32 %v4975, %v5084
        %v5153 = vmul.f32 %v4976, %v5088
        %v5154 = vmul.f32 %v4977, %v5092
        %v5155 = vmul.f32 %v4978, %v5096
        %v5156 = vmul.f32 %v4979, %v5100
        %v5157 = vmul.f32 %v5064, %v5072
        %v5158 = vmul.f32 %v4980, %v5076
        %v5159 = vmul.f32 %v4981, %v5080
        %v5160 = vmul.f32 %v4982, %v5084
        %v5161 = vmul.f32 %v4983, %v5088
        %v5162 = vmul.f32 %v4984, %v5092
        %v5163 = vmul.f32 %v4985, %v5096
        %v5164 = vmul.f32 %v4986, %v5100
        %v5165 = vmul.f32 %v5065, %v5072
        %v5166 = vmul.f32 %v4987, %v5076
        %v5167 = vmul.f32 %v4988, %v5080
        %v5168 = vmul.f32 %v4989, %v5084
        %v5169 = vmul.f32 %v4990, %v5088
        %v5170 = vmul.f32 %v4991, %v5092
        %v5171 = vmul.f32 %v4992, %v5096
        %v5172 = vmul.f32 %v4993, %v5100
        %v5173 = vadd.f32 %v4164, %v5109
        %v5174 = vadd.f32 %v4165, %v5110
        %v5175 = vadd.f32 %v4166, %v5111
        %v5176 = vadd.f32 %v4167, %v5112
        %v5177 = vadd.f32 %v4168, %v5113
        %v5178 = vadd.f32 %v4169, %v5114
        %v5179 = vadd.f32 %v4170, %v5115
        %v5180 = vadd.f32 %v4171, %v5116
        %v5181 = vadd.f32 %v4172, %v5117
        %v5182 = vadd.f32 %v4173, %v5118
        %v5183 = vadd.f32 %v4174, %v5119
        %v5184 = vadd.f32 %v4175, %v5120
        %v5185 = vadd.f32 %v4176, %v5121
        %v5186 = vadd.f32 %v4177, %v5122
        %v5187 = vadd.f32 %v4178, %v5123
        %v5188 = vadd.f32 %v4179, %v5124
        %v5189 = vadd.f32 %v4180, %v5125
        %v5190 = vadd.f32 %v4181, %v5126
        %v5191 = vadd.f32 %v4182, %v5127
        %v5192 = vadd.f32 %v4183, %v5128
        %v5193 = vadd.f32 %v4184, %v5129
        %v5194 = vadd.f32 %v4185, %v5130
        %v5195 = vadd.f32 %v4186, %v5131
        %v5196 = vadd.f32 %v4187, %v5132
        %v5197 = vadd.f32 %v4188, %v5133
        %v5198 = vadd.f32 %v4189, %v5134
        %v5199 = vadd.f32 %v4190, %v5135
        %v5200 = vadd.f32 %v4191, %v5136
        %v5201 = vadd.f32 %v4192, %v5137
        %v5202 = vadd.f32 %v4193, %v5138
        %v5203 = vadd.f32 %v4194, %v5139
        %v5204 = vadd.f32 %v4195, %v5140
        %v5205 = vadd.f32 %v4196, %v5141
        %v5206 = vadd.f32 %v4197, %v5142
        %v5207 = vadd.f32 %v4198, %v5143
        %v5208 = vadd.f32 %v4199, %v5144
        %v5209 = vadd.f32 %v4200, %v5145
        %v5210 = vadd.f32 %v4201, %v5146
        %v5211 = vadd.f32 %v4202, %v5147
        %v5212 = vadd.f32 %v4203, %v5148
        %v5213 = vadd.f32 %v4204, %v5149
        %v5214 = vadd.f32 %v4205, %v5150
        %v5215 = vadd.f32 %v4206, %v5151
        %v5216 = vadd.f32 %v4207, %v5152
        %v5217 = vadd.f32 %v4208, %v5153
        %v5218 = vadd.f32 %v4209, %v5154
        %v5219 = vadd.f32 %v4210, %v5155
        %v5220 = vadd.f32 %v4211, %v5156
        %v5221 = vadd.f32 %v4212, %v5157
        %v5222 = vadd.f32 %v4213, %v5158
        %v5223 = vadd.f32 %v4214, %v5159
        %v5224 = vadd.f32 %v4215, %v5160
        %v5225 = vadd.f32 %v4216, %v5161
        %v5226 = vadd.f32 %v4217, %v5162
        %v5227 = vadd.f32 %v4218, %v5163
        %v5228 = vadd.f32 %v4219, %v5164
        %v5229 = vadd.f32 %v4220, %v5165
        %v5230 = vadd.f32 %v4221, %v5166
        %v5231 = vadd.f32 %v4222, %v5167
        %v5232 = vadd.f32 %v4223, %v5168
        %v5233 = vadd.f32 %v4224, %v5169
        %v5234 = vadd.f32 %v4225, %v5170
        %v5235 = vadd.f32 %v4226, %v5171
        %v5236 = vadd.f32 %v4227, %v5172
        %s5237 = scalar_lea.vmem [#allocation11], 640
        %v5238 = vld [vmem:[%s5237] sm:$0xff]
        %v5239 = vld [vmem:[%s5237 + $0x8] sm:$0xff]
        %v5240 = vld [vmem:[%s5237 + $0x10] sm:$0xff]
        %v5241 = vld [vmem:[%s5237 + $0x18] sm:$0xff]
        %v5242 = vld [vmem:[%s5237 + $0x20] sm:$0xff]
        %v5243 = vld [vmem:[%s5237 + $0x28] sm:$0xff]
        %v5244 = vld [vmem:[%s5237 + $0x30] sm:$0xff]
        %v5245 = vld [vmem:[%s5237 + $0x38] sm:$0xff]
        %v5246 = vld [vmem:[%s5237 + $0x40] sm:$0xff]
        %v5247 = vld [vmem:[%s5237 + $0x48] sm:$0xff]
        %v5248 = vld [vmem:[%s5237 + $0x50] sm:$0xff]
        %v5249 = vld [vmem:[%s5237 + $0x58] sm:$0xff]
        %v5250 = vld [vmem:[%s5237 + $0x60] sm:$0xff]
        %v5251 = vld [vmem:[%s5237 + $0x68] sm:$0xff]
        %v5252 = vld [vmem:[%s5237 + $0x70] sm:$0xff]
        %v5253 = vld [vmem:[%s5237 + $0x78] sm:$0xff]
        %v5255 = vsel %vm723, %v5239, 0
        %v5258 = vsel %vm723, %v5241, 0
        %v5261 = vsel %vm723, %v5243, 0
        %v5264 = vsel %vm723, %v5245, 0
        %v5267 = vsel %vm723, %v5247, 0
        %v5270 = vsel %vm723, %v5249, 0
        %v5273 = vsel %vm723, %v5251, 0
        %v5276 = vsel %vm723, %v5253, 0
        %5278 = vmatprep.subr.mxu0 %v499
        %5279 = vmatpush1.msra.mxu0 %v498
        %5280 = vmatprep.subr.mxu0 %v507
        %5281 = vmatpush1.msra.mxu0 %v506
        %5282 = vmatprep.subr.mxu0 %v515
        %5283 = vmatpush1.msra.mxu0 %v514
        %5284 = vmatprep.subr.mxu0 %v523
        %5285 = vmatpush1.msra.mxu0 %v522
        %5286 = vmatprep.subr.mxu0 %v531
        %5287 = vmatpush1.msra.mxu0 %v530
        %5288 = vmatprep.subr.mxu0 %v539
        %5289 = vmatpush1.msra.mxu0 %v538
        %5290 = vmatprep.subr.mxu0 %v547
        %5291 = vmatpush1.msra.mxu0 %v546
        %5292 = vmatprep.subr.mxu0 %v555
        %5293 = vmatpush1.msra.mxu0 %v554
        %5294 = vmatprep.subr.mxu0 %v563
        %5295 = vmatpush1.msra.mxu0 %v562
        %5296 = vmatprep.subr.mxu0 %v571
        %5297 = vmatpush1.msra.mxu0 %v570
        %5298 = vmatprep.subr.mxu0 %v579
        %5299 = vmatpush1.msra.mxu0 %v578
        %5300 = vmatprep.subr.mxu0 %v587
        %5301 = vmatpush1.msra.mxu0 %v586
        %5302 = vmatprep.subr.mxu0 %v595
        %5303 = vmatpush1.msra.mxu0 %v594
        %5304 = vmatprep.subr.mxu0 %v603
        %5305 = vmatpush1.msra.mxu0 %v602
        %5306 = vmatprep.subr.mxu0 %v611
        %5307 = vmatpush1.msra.mxu0 %v610
        %5308 = vmatprep.subr.mxu0 %v619
        %5309 = vmatpush1.msra.mxu0 %v618
        %5310 = vmatprep.subr.mxu0 %v627
        %5311 = vmatpush1.msra.mxu0 %v626
        %5312 = vmatprep.subr.mxu0 %v635
        %5313 = vmatpush1.msra.mxu0 %v634
        %5314 = vmatprep.subr.mxu0 %v643
        %5315 = vmatpush1.msra.mxu0 %v642
        %5316 = vmatprep.subr.mxu0 %v651
        %5317 = vmatpush1.msra.mxu0 %v650
        %5318 = vmatprep.subr.mxu0 0.0
        %5319 = vmatpush1.msra.mxu0 0.0
        %5320 = vmatprep.subr.mxu0 0.0
        %5321 = vmatpush1.msra.mxu0 0.0
        %5322 = vmatprep.subr.mxu0 0.0
        %5323 = vmatpush1.msra.mxu0 0.0
        %5324 = vmatprep.subr.mxu0 0.0
        %5325 = vmatpush1.msra.mxu0 0.0
        %5326 = vmatprep.subr.mxu0 0.0
        %5327 = vmatpush1.msra.mxu0 0.0
        %5328 = vmatprep.subr.mxu0 0.0
        %5329 = vmatpush1.msra.mxu0 0.0
        %5330 = vmatprep.subr.mxu0 0.0
        %5331 = vmatpush1.msra.mxu0 0.0
        %5332 = vmatprep.subr.mxu0 0.0
        %5333 = vmatpush1.msra.mxu0 0.0
        %5334 = vmatprep.subr.mxu0 0.0
        %5335 = vmatpush1.msra.mxu0 0.0
        %5336 = vmatprep.subr.mxu0 0.0
        %5337 = vmatpush1.msra.mxu0 0.0
        %5338 = vmatprep.subr.mxu0 0.0
        %5339 = vmatpush1.msra.mxu0 0.0
        %5340 = vmatprep.subr.mxu0 0.0
        %5341 = vmatpush1.msra.mxu0 0.0
        %5342 = vmatprep.mubr.f32.mxu0 %v5255
        %5343 = vmatmul.mubr.f32.gmra.mrb[0].mxu0 %v5238
        %v5344 = vpop.f32.mrb[0].mxu0
        %v5345 = vadd.f32 0.0, %v5344
        %v5346 = vpop.f32.mrb[0].mxu0
        %v5347 = vadd.f32 0.0, %v5346
        %5348 = vmatprep.mubr.f32.mxu0 %v5258
        %5349 = vmatmul.mubr.f32.gmra.mrb[0].mxu0 %v5240
        %v5350 = vpop.f32.mrb[0].mxu0
        %v5351 = vadd.f32 0.0, %v5350
        %v5352 = vpop.f32.mrb[0].mxu0
        %v5353 = vadd.f32 0.0, %v5352
        %5354 = vmatprep.mubr.f32.mxu0 %v5261
        %5355 = vmatmul.mubr.f32.gmra.mrb[0].mxu0 %v5242
        %v5356 = vpop.f32.mrb[0].mxu0
        %v5357 = vadd.f32 0.0, %v5356
        %v5358 = vpop.f32.mrb[0].mxu0
        %v5359 = vadd.f32 0.0, %v5358
        %5360 = vmatprep.mubr.f32.mxu0 %v5264
        %5361 = vmatmul.mubr.f32.gmra.mrb[0].mxu0 %v5244
        %v5362 = vpop.f32.mrb[0].mxu0
        %v5363 = vadd.f32 0.0, %v5362
        %v5364 = vpop.f32.mrb[0].mxu0
        %v5365 = vadd.f32 0.0, %v5364
        %5366 = vmatprep.mubr.f32.mxu0 %v5267
        %5367 = vmatmul.mubr.f32.gmra.mrb[0].mxu0 %v5246
        %v5368 = vpop.f32.mrb[0].mxu0
        %v5369 = vadd.f32 0.0, %v5368
        %v5370 = vpop.f32.mrb[0].mxu0
        %v5371 = vadd.f32 0.0, %v5370
        %5372 = vmatprep.mubr.f32.mxu0 %v5270
        %5373 = vmatmul.mubr.f32.gmra.mrb[0].mxu0 %v5248
        %v5374 = vpop.f32.mrb[0].mxu0
        %v5375 = vadd.f32 0.0, %v5374
        %v5376 = vpop.f32.mrb[0].mxu0
        %v5377 = vadd.f32 0.0, %v5376
        %5378 = vmatprep.mubr.f32.mxu0 %v5273
        %5379 = vmatmul.mubr.f32.gmra.mrb[0].mxu0 %v5250
        %v5380 = vpop.f32.mrb[0].mxu0
        %v5381 = vadd.f32 0.0, %v5380
        %v5382 = vpop.f32.mrb[0].mxu0
        %v5383 = vadd.f32 0.0, %v5382
        %5384 = vmatprep.mubr.f32.mxu0 %v5276
        %5385 = vmatmul.mubr.f32.gmra.mrb[0].mxu0 %v5252
        %v5386 = vpop.f32.mrb[0].mxu0
        %v5387 = vadd.f32 0.0, %v5386
        %v5388 = vpop.f32.mrb[0].mxu0
        %v5389 = vadd.f32 0.0, %v5388
        %5390 = vdwg.mxu0
        %5391 = vmatprep.subr.mxu0 %v501
        %5392 = vmatpush1.msra.mxu0 %v500
        %5393 = vmatprep.subr.mxu0 %v509
        %5394 = vmatpush1.msra.mxu0 %v508
        %5395 = vmatprep.subr.mxu0 %v517
        %5396 = vmatpush1.msra.mxu0 %v516
        %5397 = vmatprep.subr.mxu0 %v525
        %5398 = vmatpush1.msra.mxu0 %v524
        %5399 = vmatprep.subr.mxu0 %v533
        %5400 = vmatpush1.msra.mxu0 %v532
        %5401 = vmatprep.subr.mxu0 %v541
        %5402 = vmatpush1.msra.mxu0 %v540
        %5403 = vmatprep.subr.mxu0 %v549
        %5404 = vmatpush1.msra.mxu0 %v548
        %5405 = vmatprep.subr.mxu0 %v557
        %5406 = vmatpush1.msra.mxu0 %v556
        %5407 = vmatprep.subr.mxu0 %v565
        %5408 = vmatpush1.msra.mxu0 %v564
        %5409 = vmatprep.subr.mxu0 %v573
        %5410 = vmatpush1.msra.mxu0 %v572
        %5411 = vmatprep.subr.mxu0 %v581
        %5412 = vmatpush1.msra.mxu0 %v580
        %5413 = vmatprep.subr.mxu0 %v589
        %5414 = vmatpush1.msra.mxu0 %v588
        %5415 = vmatprep.subr.mxu0 %v597
        %5416 = vmatpush1.msra.mxu0 %v596
        %5417 = vmatprep.subr.mxu0 %v605
        %5418 = vmatpush1.msra.mxu0 %v604
        %5419 = vmatprep.subr.mxu0 %v613
        %5420 = vmatpush1.msra.mxu0 %v612
        %5421 = vmatprep.subr.mxu0 %v621
        %5422 = vmatpush1.msra.mxu0 %v620
        %5423 = vmatprep.subr.mxu0 %v629
        %5424 = vmatpush1.msra.mxu0 %v628
        %5425 = vmatprep.subr.mxu0 %v637
        %5426 = vmatpush1.msra.mxu0 %v636
        %5427 = vmatprep.subr.mxu0 %v645
        %5428 = vmatpush1.msra.mxu0 %v644
        %5429 = vmatprep.subr.mxu0 %v653
        %5430 = vmatpush1.msra.mxu0 %v652
        %5431 = vmatprep.subr.mxu0 0.0
        %5432 = vmatpush1.msra.mxu0 0.0
        %5433 = vmatprep.subr.mxu0 0.0
        %5434 = vmatpush1.msra.mxu0 0.0
        %5435 = vmatprep.subr.mxu0 0.0
        %5436 = vmatpush1.msra.mxu0 0.0
        %5437 = vmatprep.subr.mxu0 0.0
        %5438 = vmatpush1.msra.mxu0 0.0
        %5439 = vmatprep.subr.mxu0 0.0
        %5440 = vmatpush1.msra.mxu0 0.0
        %5441 = vmatprep.subr.mxu0 0.0
        %5442 = vmatpush1.msra.mxu0 0.0
        %5443 = vmatprep.subr.mxu0 0.0
        %5444 = vmatpush1.msra.mxu0 0.0
        %5445 = vmatprep.subr.mxu0 0.0
        %5446 = vmatpush1.msra.mxu0 0.0
        %5447 = vmatprep.subr.mxu0 0.0
        %5448 = vmatpush1.msra.mxu0 0.0
        %5449 = vmatprep.subr.mxu0 0.0
        %5450 = vmatpush1.msra.mxu0 0.0
        %5451 = vmatprep.subr.mxu0 0.0
        %5452 = vmatpush1.msra.mxu0 0.0
        %5453 = vmatprep.subr.mxu0 0.0
        %5454 = vmatpush1.msra.mxu0 0.0
        %5455 = vmatprep.mubr.f32.mxu0 %v5255
        %5456 = vmatmul.mubr.f32.gmra.mrb[0].mxu0 %v5238
        %v5457 = vpop.f32.mrb[0].mxu0
        %v5458 = vadd.f32 0.0, %v5457
        %v5459 = vpop.f32.mrb[0].mxu0
        %v5460 = vadd.f32 0.0, %v5459
        %5461 = vmatprep.mubr.f32.mxu0 %v5258
        %5462 = vmatmul.mubr.f32.gmra.mrb[0].mxu0 %v5240
        %v5463 = vpop.f32.mrb[0].mxu0
        %v5464 = vadd.f32 0.0, %v5463
        %v5465 = vpop.f32.mrb[0].mxu0
        %v5466 = vadd.f32 0.0, %v5465
        %5467 = vmatprep.mubr.f32.mxu0 %v5261
        %5468 = vmatmul.mubr.f32.gmra.mrb[0].mxu0 %v5242
        %v5469 = vpop.f32.mrb[0].mxu0
        %v5470 = vadd.f32 0.0, %v5469
        %v5471 = vpop.f32.mrb[0].mxu0
        %v5472 = vadd.f32 0.0, %v5471
        %5473 = vmatprep.mubr.f32.mxu0 %v5264
        %5474 = vmatmul.mubr.f32.gmra.mrb[0].mxu0 %v5244
        %v5475 = vpop.f32.mrb[0].mxu0
        %v5476 = vadd.f32 0.0, %v5475
        %v5477 = vpop.f32.mrb[0].mxu0
        %v5478 = vadd.f32 0.0, %v5477
        %5479 = vmatprep.mubr.f32.mxu0 %v5267
        %5480 = vmatmul.mubr.f32.gmra.mrb[0].mxu0 %v5246
        %v5481 = vpop.f32.mrb[0].mxu0
        %v5482 = vadd.f32 0.0, %v5481
        %v5483 = vpop.f32.mrb[0].mxu0
        %v5484 = vadd.f32 0.0, %v5483
        %5485 = vmatprep.mubr.f32.mxu0 %v5270
        %5486 = vmatmul.mubr.f32.gmra.mrb[0].mxu0 %v5248
        %v5487 = vpop.f32.mrb[0].mxu0
        %v5488 = vadd.f32 0.0, %v5487
        %v5489 = vpop.f32.mrb[0].mxu0
        %v5490 = vadd.f32 0.0, %v5489
        %5491 = vmatprep.mubr.f32.mxu0 %v5273
        %5492 = vmatmul.mubr.f32.gmra.mrb[0].mxu0 %v5250
        %v5493 = vpop.f32.mrb[0].mxu0
        %v5494 = vadd.f32 0.0, %v5493
        %v5495 = vpop.f32.mrb[0].mxu0
        %v5496 = vadd.f32 0.0, %v5495
        %5497 = vmatprep.mubr.f32.mxu0 %v5276
        %5498 = vmatmul.mubr.f32.gmra.mrb[0].mxu0 %v5252
        %v5499 = vpop.f32.mrb[0].mxu0
        %v5500 = vadd.f32 0.0, %v5499
        %v5501 = vpop.f32.mrb[0].mxu0
        %v5502 = vadd.f32 0.0, %v5501
        %5503 = vdwg.mxu0
        %5504 = vmatprep.subr.mxu0 %v503
        %5505 = vmatpush1.msra.mxu0 %v502
        %5506 = vmatprep.subr.mxu0 %v511
        %5507 = vmatpush1.msra.mxu0 %v510
        %5508 = vmatprep.subr.mxu0 %v519
        %5509 = vmatpush1.msra.mxu0 %v518
        %5510 = vmatprep.subr.mxu0 %v527
        %5511 = vmatpush1.msra.mxu0 %v526
        %5512 = vmatprep.subr.mxu0 %v535
        %5513 = vmatpush1.msra.mxu0 %v534
        %5514 = vmatprep.subr.mxu0 %v543
        %5515 = vmatpush1.msra.mxu0 %v542
        %5516 = vmatprep.subr.mxu0 %v551
        %5517 = vmatpush1.msra.mxu0 %v550
        %5518 = vmatprep.subr.mxu0 %v559
        %5519 = vmatpush1.msra.mxu0 %v558
        %5520 = vmatprep.subr.mxu0 %v567
        %5521 = vmatpush1.msra.mxu0 %v566
        %5522 = vmatprep.subr.mxu0 %v575
        %5523 = vmatpush1.msra.mxu0 %v574
        %5524 = vmatprep.subr.mxu0 %v583
        %5525 = vmatpush1.msra.mxu0 %v582
        %5526 = vmatprep.subr.mxu0 %v591
        %5527 = vmatpush1.msra.mxu0 %v590
        %5528 = vmatprep.subr.mxu0 %v599
        %5529 = vmatpush1.msra.mxu0 %v598
        %5530 = vmatprep.subr.mxu0 %v607
        %5531 = vmatpush1.msra.mxu0 %v606
        %5532 = vmatprep.subr.mxu0 %v615
        %5533 = vmatpush1.msra.mxu0 %v614
        %5534 = vmatprep.subr.mxu0 %v623
        %5535 = vmatpush1.msra.mxu0 %v622
        %5536 = vmatprep.subr.mxu0 %v631
        %5537 = vmatpush1.msra.mxu0 %v630
        %5538 = vmatprep.subr.mxu0 %v639
        %5539 = vmatpush1.msra.mxu0 %v638
        %5540 = vmatprep.subr.mxu0 %v647
        %5541 = vmatpush1.msra.mxu0 %v646
        %5542 = vmatprep.subr.mxu0 %v655
        %5543 = vmatpush1.msra.mxu0 %v654
        %5544 = vmatprep.subr.mxu0 0.0
        %5545 = vmatpush1.msra.mxu0 0.0
        %5546 = vmatprep.subr.mxu0 0.0
        %5547 = vmatpush1.msra.mxu0 0.0
        %5548 = vmatprep.subr.mxu0 0.0
        %5549 = vmatpush1.msra.mxu0 0.0
        %5550 = vmatprep.subr.mxu0 0.0
        %5551 = vmatpush1.msra.mxu0 0.0
        %5552 = vmatprep.subr.mxu0 0.0
        %5553 = vmatpush1.msra.mxu0 0.0
        %5554 = vmatprep.subr.mxu0 0.0
        %5555 = vmatpush1.msra.mxu0 0.0
        %5556 = vmatprep.subr.mxu0 0.0
        %5557 = vmatpush1.msra.mxu0 0.0
        %5558 = vmatprep.subr.mxu0 0.0
        %5559 = vmatpush1.msra.mxu0 0.0
        %5560 = vmatprep.subr.mxu0 0.0
        %5561 = vmatpush1.msra.mxu0 0.0
        %5562 = vmatprep.subr.mxu0 0.0
        %5563 = vmatpush1.msra.mxu0 0.0
        %5564 = vmatprep.subr.mxu0 0.0
        %5565 = vmatpush1.msra.mxu0 0.0
        %5566 = vmatprep.subr.mxu0 0.0
        %5567 = vmatpush1.msra.mxu0 0.0
        %5568 = vmatprep.mubr.f32.mxu0 %v5255
        %5569 = vmatmul.mubr.f32.gmra.mrb[0].mxu0 %v5238
        %v5570 = vpop.f32.mrb[0].mxu0
        %v5571 = vadd.f32 0.0, %v5570
        %v5572 = vpop.f32.mrb[0].mxu0
        %v5573 = vadd.f32 0.0, %v5572
        %5574 = vmatprep.mubr.f32.mxu0 %v5258
        %5575 = vmatmul.mubr.f32.gmra.mrb[0].mxu0 %v5240
        %v5576 = vpop.f32.mrb[0].mxu0
        %v5577 = vadd.f32 0.0, %v5576
        %v5578 = vpop.f32.mrb[0].mxu0
        %v5579 = vadd.f32 0.0, %v5578
        %5580 = vmatprep.mubr.f32.mxu0 %v5261
        %5581 = vmatmul.mubr.f32.gmra.mrb[0].mxu0 %v5242
        %v5582 = vpop.f32.mrb[0].mxu0
        %v5583 = vadd.f32 0.0, %v5582
        %v5584 = vpop.f32.mrb[0].mxu0
        %v5585 = vadd.f32 0.0, %v5584
        %5586 = vmatprep.mubr.f32.mxu0 %v5264
        %5587 = vmatmul.mubr.f32.gmra.mrb[0].mxu0 %v5244
        %v5588 = vpop.f32.mrb[0].mxu0
        %v5589 = vadd.f32 0.0, %v5588
        %v5590 = vpop.f32.mrb[0].mxu0
        %v5591 = vadd.f32 0.0, %v5590
        %5592 = vmatprep.mubr.f32.mxu0 %v5267
        %5593 = vmatmul.mubr.f32.gmra.mrb[0].mxu0 %v5246
        %v5594 = vpop.f32.mrb[0].mxu0
        %v5595 = vadd.f32 0.0, %v5594
        %v5596 = vpop.f32.mrb[0].mxu0
        %v5597 = vadd.f32 0.0, %v5596
        %5598 = vmatprep.mubr.f32.mxu0 %v5270
        %5599 = vmatmul.mubr.f32.gmra.mrb[0].mxu0 %v5248
        %v5600 = vpop.f32.mrb[0].mxu0
        %v5601 = vadd.f32 0.0, %v5600
        %v5602 = vpop.f32.mrb[0].mxu0
        %v5603 = vadd.f32 0.0, %v5602
        %5604 = vmatprep.mubr.f32.mxu0 %v5273
        %5605 = vmatmul.mubr.f32.gmra.mrb[0].mxu0 %v5250
        %v5606 = vpop.f32.mrb[0].mxu0
        %v5607 = vadd.f32 0.0, %v5606
        %v5608 = vpop.f32.mrb[0].mxu0
        %v5609 = vadd.f32 0.0, %v5608
        %5610 = vmatprep.mubr.f32.mxu0 %v5276
        %5611 = vmatmul.mubr.f32.gmra.mrb[0].mxu0 %v5252
        %v5612 = vpop.f32.mrb[0].mxu0
        %v5613 = vadd.f32 0.0, %v5612
        %v5614 = vpop.f32.mrb[0].mxu0
        %v5615 = vadd.f32 0.0, %v5614
        %5616 = vdwg.mxu0
        %5617 = vmatprep.subr.mxu0 %v505
        %5618 = vmatpush1.msra.mxu0 %v504
        %5619 = vmatprep.subr.mxu0 %v513
        %5620 = vmatpush1.msra.mxu0 %v512
        %5621 = vmatprep.subr.mxu0 %v521
        %5622 = vmatpush1.msra.mxu0 %v520
        %5623 = vmatprep.subr.mxu0 %v529
        %5624 = vmatpush1.msra.mxu0 %v528
        %5625 = vmatprep.subr.mxu0 %v537
        %5626 = vmatpush1.msra.mxu0 %v536
        %5627 = vmatprep.subr.mxu0 %v545
        %5628 = vmatpush1.msra.mxu0 %v544
        %5629 = vmatprep.subr.mxu0 %v553
        %5630 = vmatpush1.msra.mxu0 %v552
        %5631 = vmatprep.subr.mxu0 %v561
        %5632 = vmatpush1.msra.mxu0 %v560
        %5633 = vmatprep.subr.mxu0 %v569
        %5634 = vmatpush1.msra.mxu0 %v568
        %5635 = vmatprep.subr.mxu0 %v577
        %5636 = vmatpush1.msra.mxu0 %v576
        %5637 = vmatprep.subr.mxu0 %v585
        %5638 = vmatpush1.msra.mxu0 %v584
        %5639 = vmatprep.subr.mxu0 %v593
        %5640 = vmatpush1.msra.mxu0 %v592
        %5641 = vmatprep.subr.mxu0 %v601
        %5642 = vmatpush1.msra.mxu0 %v600
        %5643 = vmatprep.subr.mxu0 %v609
        %5644 = vmatpush1.msra.mxu0 %v608
        %5645 = vmatprep.subr.mxu0 %v617
        %5646 = vmatpush1.msra.mxu0 %v616
        %5647 = vmatprep.subr.mxu0 %v625
        %5648 = vmatpush1.msra.mxu0 %v624
        %5649 = vmatprep.subr.mxu0 %v633
        %5650 = vmatpush1.msra.mxu0 %v632
        %5651 = vmatprep.subr.mxu0 %v641
        %5652 = vmatpush1.msra.mxu0 %v640
        %5653 = vmatprep.subr.mxu0 %v649
        %5654 = vmatpush1.msra.mxu0 %v648
        %5655 = vmatprep.subr.mxu0 %v657
        %5656 = vmatpush1.msra.mxu0 %v656
        %5657 = vmatprep.subr.mxu0 0.0
        %5658 = vmatpush1.msra.mxu0 0.0
        %5659 = vmatprep.subr.mxu0 0.0
        %5660 = vmatpush1.msra.mxu0 0.0
        %5661 = vmatprep.subr.mxu0 0.0
        %5662 = vmatpush1.msra.mxu0 0.0
        %5663 = vmatprep.subr.mxu0 0.0
        %5664 = vmatpush1.msra.mxu0 0.0
        %5665 = vmatprep.subr.mxu0 0.0
        %5666 = vmatpush1.msra.mxu0 0.0
        %5667 = vmatprep.subr.mxu0 0.0
        %5668 = vmatpush1.msra.mxu0 0.0
        %5669 = vmatprep.subr.mxu0 0.0
        %5670 = vmatpush1.msra.mxu0 0.0
        %5671 = vmatprep.subr.mxu0 0.0
        %5672 = vmatpush1.msra.mxu0 0.0
        %5673 = vmatprep.subr.mxu0 0.0
        %5674 = vmatpush1.msra.mxu0 0.0
        %5675 = vmatprep.subr.mxu0 0.0
        %5676 = vmatpush1.msra.mxu0 0.0
        %5677 = vmatprep.subr.mxu0 0.0
        %5678 = vmatpush1.msra.mxu0 0.0
        %5679 = vmatprep.subr.mxu0 0.0
        %5680 = vmatpush1.msra.mxu0 0.0
        %5681 = vmatprep.mubr.f32.mxu0 %v5255
        %5682 = vmatmul.mubr.f32.gmra.mrb[0].mxu0 %v5238
        %v5683 = vpop.f32.mrb[0].mxu0
        %v5684 = vadd.f32 0.0, %v5683
        %v5685 = vpop.f32.mrb[0].mxu0
        %v5686 = vadd.f32 0.0, %v5685
        %5687 = vmatprep.mubr.f32.mxu0 %v5258
        %5688 = vmatmul.mubr.f32.gmra.mrb[0].mxu0 %v5240
        %v5689 = vpop.f32.mrb[0].mxu0
        %v5690 = vadd.f32 0.0, %v5689
        %v5691 = vpop.f32.mrb[0].mxu0
        %v5692 = vadd.f32 0.0, %v5691
        %5693 = vmatprep.mubr.f32.mxu0 %v5261
        %5694 = vmatmul.mubr.f32.gmra.mrb[0].mxu0 %v5242
        %v5695 = vpop.f32.mrb[0].mxu0
        %v5696 = vadd.f32 0.0, %v5695
        %v5697 = vpop.f32.mrb[0].mxu0
        %v5698 = vadd.f32 0.0, %v5697
        %5699 = vmatprep.mubr.f32.mxu0 %v5264
        %5700 = vmatmul.mubr.f32.gmra.mrb[0].mxu0 %v5244
        %v5701 = vpop.f32.mrb[0].mxu0
        %v5702 = vadd.f32 0.0, %v5701
        %v5703 = vpop.f32.mrb[0].mxu0
        %v5704 = vadd.f32 0.0, %v5703
        %5705 = vmatprep.mubr.f32.mxu0 %v5267
        %5706 = vmatmul.mubr.f32.gmra.mrb[0].mxu0 %v5246
        %v5707 = vpop.f32.mrb[0].mxu0
        %v5708 = vadd.f32 0.0, %v5707
        %v5709 = vpop.f32.mrb[0].mxu0
        %v5710 = vadd.f32 0.0, %v5709
        %5711 = vmatprep.mubr.f32.mxu0 %v5270
        %5712 = vmatmul.mubr.f32.gmra.mrb[0].mxu0 %v5248
        %v5713 = vpop.f32.mrb[0].mxu0
        %v5714 = vadd.f32 0.0, %v5713
        %v5715 = vpop.f32.mrb[0].mxu0
        %v5716 = vadd.f32 0.0, %v5715
        %5717 = vmatprep.mubr.f32.mxu0 %v5273
        %5718 = vmatmul.mubr.f32.gmra.mrb[0].mxu0 %v5250
        %v5719 = vpop.f32.mrb[0].mxu0
        %v5720 = vadd.f32 0.0, %v5719
        %v5721 = vpop.f32.mrb[0].mxu0
        %v5722 = vadd.f32 0.0, %v5721
        %5723 = vmatprep.mubr.f32.mxu0 %v5276
        %5724 = vmatmul.mubr.f32.gmra.mrb[0].mxu0 %v5252
        %v5725 = vpop.f32.mrb[0].mxu0
        %v5726 = vadd.f32 0.0, %v5725
        %v5727 = vpop.f32.mrb[0].mxu0
        %v5728 = vadd.f32 0.0, %v5727
        %5729 = vdwg.mxu0
        %5794 = vrot.lane.b32.xlu0 %v5345, 127
        %v5795 = vpop.permute.xlu0 %5794
        %5796 = vrot.lane.b32.xlu0 %v5347, 127
        %v5797 = vpop.permute.xlu0 %5796
        %5798 = vrot.lane.b32.xlu0 %v5458, 127
        %v5799 = vpop.permute.xlu0 %5798
        %5800 = vrot.lane.b32.xlu0 %v5460, 127
        %v5801 = vpop.permute.xlu0 %5800
        %5802 = vrot.lane.b32.xlu0 %v5571, 127
        %v5803 = vpop.permute.xlu0 %5802
        %5804 = vrot.lane.b32.xlu0 %v5573, 127
        %v5805 = vpop.permute.xlu0 %5804
        %5806 = vrot.lane.b32.xlu0 %v5684, 127
        %v5807 = vpop.permute.xlu0 %5806
        %5808 = vrot.lane.b32.xlu0 %v5686, 127
        %v5809 = vpop.permute.xlu0 %5808
        %5810 = vrot.lane.b32.xlu0 %v5351, 127
        %v5811 = vpop.permute.xlu0 %5810
        %5812 = vrot.lane.b32.xlu0 %v5353, 127
        %v5813 = vpop.permute.xlu0 %5812
        %5814 = vrot.lane.b32.xlu0 %v5464, 127
        %v5815 = vpop.permute.xlu0 %5814
        %5816 = vrot.lane.b32.xlu0 %v5466, 127
        %v5817 = vpop.permute.xlu0 %5816
        %5818 = vrot.lane.b32.xlu0 %v5577, 127
        %v5819 = vpop.permute.xlu0 %5818
        %5820 = vrot.lane.b32.xlu0 %v5579, 127
        %v5821 = vpop.permute.xlu0 %5820
        %5822 = vrot.lane.b32.xlu0 %v5690, 127
        %v5823 = vpop.permute.xlu0 %5822
        %5824 = vrot.lane.b32.xlu0 %v5692, 127
        %v5825 = vpop.permute.xlu0 %5824
        %5826 = vrot.lane.b32.xlu0 %v5357, 127
        %v5827 = vpop.permute.xlu0 %5826
        %5828 = vrot.lane.b32.xlu0 %v5359, 127
        %v5829 = vpop.permute.xlu0 %5828
        %5830 = vrot.lane.b32.xlu0 %v5470, 127
        %v5831 = vpop.permute.xlu0 %5830
        %5832 = vrot.lane.b32.xlu0 %v5472, 127
        %v5833 = vpop.permute.xlu0 %5832
        %5834 = vrot.lane.b32.xlu0 %v5583, 127
        %v5835 = vpop.permute.xlu0 %5834
        %5836 = vrot.lane.b32.xlu0 %v5585, 127
        %v5837 = vpop.permute.xlu0 %5836
        %5838 = vrot.lane.b32.xlu0 %v5696, 127
        %v5839 = vpop.permute.xlu0 %5838
        %5840 = vrot.lane.b32.xlu0 %v5698, 127
        %v5841 = vpop.permute.xlu0 %5840
        %5842 = vrot.lane.b32.xlu0 %v5363, 127
        %v5843 = vpop.permute.xlu0 %5842
        %5844 = vrot.lane.b32.xlu0 %v5365, 127
        %v5845 = vpop.permute.xlu0 %5844
        %5846 = vrot.lane.b32.xlu0 %v5476, 127
        %v5847 = vpop.permute.xlu0 %5846
        %5848 = vrot.lane.b32.xlu0 %v5478, 127
        %v5849 = vpop.permute.xlu0 %5848
        %5850 = vrot.lane.b32.xlu0 %v5589, 127
        %v5851 = vpop.permute.xlu0 %5850
        %5852 = vrot.lane.b32.xlu0 %v5591, 127
        %v5853 = vpop.permute.xlu0 %5852
        %5854 = vrot.lane.b32.xlu0 %v5702, 127
        %v5855 = vpop.permute.xlu0 %5854
        %5856 = vrot.lane.b32.xlu0 %v5704, 127
        %v5857 = vpop.permute.xlu0 %5856
        %5858 = vrot.lane.b32.xlu0 %v5369, 127
        %v5859 = vpop.permute.xlu0 %5858
        %5860 = vrot.lane.b32.xlu0 %v5371, 127
        %v5861 = vpop.permute.xlu0 %5860
        %5862 = vrot.lane.b32.xlu0 %v5482, 127
        %v5863 = vpop.permute.xlu0 %5862
        %5864 = vrot.lane.b32.xlu0 %v5484, 127
        %v5865 = vpop.permute.xlu0 %5864
        %5866 = vrot.lane.b32.xlu0 %v5595, 127
        %v5867 = vpop.permute.xlu0 %5866
        %5868 = vrot.lane.b32.xlu0 %v5597, 127
        %v5869 = vpop.permute.xlu0 %5868
        %5870 = vrot.lane.b32.xlu0 %v5708, 127
        %v5871 = vpop.permute.xlu0 %5870
        %5872 = vrot.lane.b32.xlu0 %v5710, 127
        %v5873 = vpop.permute.xlu0 %5872
        %5874 = vrot.lane.b32.xlu0 %v5375, 127
        %v5875 = vpop.permute.xlu0 %5874
        %5876 = vrot.lane.b32.xlu0 %v5377, 127
        %v5877 = vpop.permute.xlu0 %5876
        %5878 = vrot.lane.b32.xlu0 %v5488, 127
        %v5879 = vpop.permute.xlu0 %5878
        %5880 = vrot.lane.b32.xlu0 %v5490, 127
        %v5881 = vpop.permute.xlu0 %5880
        %5882 = vrot.lane.b32.xlu0 %v5601, 127
        %v5883 = vpop.permute.xlu0 %5882
        %5884 = vrot.lane.b32.xlu0 %v5603, 127
        %v5885 = vpop.permute.xlu0 %5884
        %5886 = vrot.lane.b32.xlu0 %v5714, 127
        %v5887 = vpop.permute.xlu0 %5886
        %5888 = vrot.lane.b32.xlu0 %v5716, 127
        %v5889 = vpop.permute.xlu0 %5888
        %5890 = vrot.lane.b32.xlu0 %v5381, 127
        %v5891 = vpop.permute.xlu0 %5890
        %5892 = vrot.lane.b32.xlu0 %v5383, 127
        %v5893 = vpop.permute.xlu0 %5892
        %5894 = vrot.lane.b32.xlu0 %v5494, 127
        %v5895 = vpop.permute.xlu0 %5894
        %5896 = vrot.lane.b32.xlu0 %v5496, 127
        %v5897 = vpop.permute.xlu0 %5896
        %5898 = vrot.lane.b32.xlu0 %v5607, 127
        %v5899 = vpop.permute.xlu0 %5898
        %5900 = vrot.lane.b32.xlu0 %v5609, 127
        %v5901 = vpop.permute.xlu0 %5900
        %5902 = vrot.lane.b32.xlu0 %v5720, 127
        %v5903 = vpop.permute.xlu0 %5902
        %5904 = vrot.lane.b32.xlu0 %v5722, 127
        %v5905 = vpop.permute.xlu0 %5904
        %5906 = vrot.lane.b32.xlu0 %v5387, 127
        %v5907 = vpop.permute.xlu0 %5906
        %5908 = vrot.lane.b32.xlu0 %v5389, 127
        %v5909 = vpop.permute.xlu0 %5908
        %5910 = vrot.lane.b32.xlu0 %v5500, 127
        %v5911 = vpop.permute.xlu0 %5910
        %5912 = vrot.lane.b32.xlu0 %v5502, 127
        %v5913 = vpop.permute.xlu0 %5912
        %5914 = vrot.lane.b32.xlu0 %v5613, 127
        %v5915 = vpop.permute.xlu0 %5914
        %5916 = vrot.lane.b32.xlu0 %v5615, 127
        %v5917 = vpop.permute.xlu0 %5916
        %5918 = vrot.lane.b32.xlu0 %v5726, 127
        %v5919 = vpop.permute.xlu0 %5918
        %5920 = vrot.lane.b32.xlu0 %v5728, 127
        %v5921 = vpop.permute.xlu0 %5920
        %vm5922 = vcmask 1039360
        %v5923 = vsel %vm5922, %v5795, %v5797
        %v5924 = vsel %vm5922, %v5797, %v5799
        %v5925 = vsel %vm5922, %v5799, %v5801
        %v5926 = vsel %vm5922, %v5801, %v5803
        %v5927 = vsel %vm5922, %v5803, %v5805
        %v5928 = vsel %vm5922, %v5805, %v5807
        %v5929 = vsel %vm5922, %v5807, %v5809
        %v5930 = vsel %vm5922, %v5811, %v5813
        %v5931 = vsel %vm5922, %v5813, %v5815
        %v5932 = vsel %vm5922, %v5815, %v5817
        %v5933 = vsel %vm5922, %v5817, %v5819
        %v5934 = vsel %vm5922, %v5819, %v5821
        %v5935 = vsel %vm5922, %v5821, %v5823
        %v5936 = vsel %vm5922, %v5823, %v5825
        %v5937 = vsel %vm5922, %v5827, %v5829
        %v5938 = vsel %vm5922, %v5829, %v5831
        %v5939 = vsel %vm5922, %v5831, %v5833
        %v5940 = vsel %vm5922, %v5833, %v5835
        %v5941 = vsel %vm5922, %v5835, %v5837
        %v5942 = vsel %vm5922, %v5837, %v5839
        %v5943 = vsel %vm5922, %v5839, %v5841
        %v5944 = vsel %vm5922, %v5843, %v5845
        %v5945 = vsel %vm5922, %v5845, %v5847
        %v5946 = vsel %vm5922, %v5847, %v5849
        %v5947 = vsel %vm5922, %v5849, %v5851
        %v5948 = vsel %vm5922, %v5851, %v5853
        %v5949 = vsel %vm5922, %v5853, %v5855
        %v5950 = vsel %vm5922, %v5855, %v5857
        %v5951 = vsel %vm5922, %v5859, %v5861
        %v5952 = vsel %vm5922, %v5861, %v5863
        %v5953 = vsel %vm5922, %v5863, %v5865
        %v5954 = vsel %vm5922, %v5865, %v5867
        %v5955 = vsel %vm5922, %v5867, %v5869
        %v5956 = vsel %vm5922, %v5869, %v5871
        %v5957 = vsel %vm5922, %v5871, %v5873
        %v5958 = vsel %vm5922, %v5875, %v5877
        %v5959 = vsel %vm5922, %v5877, %v5879
        %v5960 = vsel %vm5922, %v5879, %v5881
        %v5961 = vsel %vm5922, %v5881, %v5883
        %v5962 = vsel %vm5922, %v5883, %v5885
        %v5963 = vsel %vm5922, %v5885, %v5887
        %v5964 = vsel %vm5922, %v5887, %v5889
        %v5965 = vsel %vm5922, %v5891, %v5893
        %v5966 = vsel %vm5922, %v5893, %v5895
        %v5967 = vsel %vm5922, %v5895, %v5897
        %v5968 = vsel %vm5922, %v5897, %v5899
        %v5969 = vsel %vm5922, %v5899, %v5901
        %v5970 = vsel %vm5922, %v5901, %v5903
        %v5971 = vsel %vm5922, %v5903, %v5905
        %v5972 = vsel %vm5922, %v5907, %v5909
        %v5973 = vsel %vm5922, %v5909, %v5911
        %v5974 = vsel %vm5922, %v5911, %v5913
        %v5975 = vsel %vm5922, %v5913, %v5915
        %v5976 = vsel %vm5922, %v5915, %v5917
        %v5977 = vsel %vm5922, %v5917, %v5919
        %v5978 = vsel %vm5922, %v5919, %v5921
        %6043 = vrot.lane.b32.xlu0 %v5345, 3
        %v6044 = vpop.permute.xlu0 %6043
        %6045 = vrot.lane.b32.xlu0 %v5351, 3
        %v6046 = vpop.permute.xlu0 %6045
        %6047 = vrot.lane.b32.xlu0 %v5357, 3
        %v6048 = vpop.permute.xlu0 %6047
        %6049 = vrot.lane.b32.xlu0 %v5363, 3
        %v6050 = vpop.permute.xlu0 %6049
        %6051 = vrot.lane.b32.xlu0 %v5369, 3
        %v6052 = vpop.permute.xlu0 %6051
        %6053 = vrot.lane.b32.xlu0 %v5375, 3
        %v6054 = vpop.permute.xlu0 %6053
        %6055 = vrot.lane.b32.xlu0 %v5381, 3
        %v6056 = vpop.permute.xlu0 %6055
        %6057 = vrot.lane.b32.xlu0 %v5387, 3
        %v6058 = vpop.permute.xlu0 %6057
        %vm6067 = vcmask 23552
        %v6068 = vsel %vm6067, %v5809, %v6044
        %v6069 = vsel %vm6067, %v5825, %v6046
        %v6070 = vsel %vm6067, %v5841, %v6048
        %v6071 = vsel %vm6067, %v5857, %v6050
        %v6072 = vsel %vm6067, %v5873, %v6052
        %v6073 = vsel %vm6067, %v5889, %v6054
        %v6074 = vsel %vm6067, %v5905, %v6056
        %v6075 = vsel %vm6067, %v5921, %v6058
        %s6076 = scalar_lea.vmem %s8, 40
        %v6077 = vld [vmem:[%s6076] sm:$0xff]
        %v6079 = vlaneseq
        %v6080 = vshrl.u32 %v6079, 7
        %v6081 = vsub.s32 0, %v6080
        %v6082 = vrot.slane %v6077, %v6081
        %v6083 = vlaneseq
        %v6084 = vshrl.u32 %v6083, 7
        %v6085 = vsub.s32 1, %v6084
        %v6086 = vrot.slane %v6077, %v6085
        %v6087 = vlaneseq
        %v6088 = vshrl.u32 %v6087, 7
        %v6089 = vsub.s32 2, %v6088
        %v6090 = vrot.slane %v6077, %v6089
        %v6091 = vlaneseq
        %v6092 = vshrl.u32 %v6091, 7
        %v6093 = vsub.s32 3, %v6092
        %v6094 = vrot.slane %v6077, %v6093
        %v6095 = vlaneseq
        %v6096 = vshrl.u32 %v6095, 7
        %v6097 = vsub.s32 4, %v6096
        %v6098 = vrot.slane %v6077, %v6097
        %v6099 = vlaneseq
        %v6100 = vshrl.u32 %v6099, 7
        %v6101 = vsub.s32 5, %v6100
        %v6102 = vrot.slane %v6077, %v6101
        %v6103 = vlaneseq
        %v6104 = vshrl.u32 %v6103, 7
        %v6105 = vsub.s32 6, %v6104
        %v6106 = vrot.slane %v6077, %v6105
        %v6107 = vlaneseq
        %v6108 = vshrl.u32 %v6107, 7
        %v6109 = vsub.s32 7, %v6108
        %v6110 = vrot.slane %v6077, %v6109
        %v6119 = vmul.f32 %v5923, %v6082
        %v6120 = vmul.f32 %v5924, %v6086
        %v6121 = vmul.f32 %v5925, %v6090
        %v6122 = vmul.f32 %v5926, %v6094
        %v6123 = vmul.f32 %v5927, %v6098
        %v6124 = vmul.f32 %v5928, %v6102
        %v6125 = vmul.f32 %v5929, %v6106
        %v6126 = vmul.f32 %v6068, %v6110
        %v6127 = vmul.f32 %v5930, %v6082
        %v6128 = vmul.f32 %v5931, %v6086
        %v6129 = vmul.f32 %v5932, %v6090
        %v6130 = vmul.f32 %v5933, %v6094
        %v6131 = vmul.f32 %v5934, %v6098
        %v6132 = vmul.f32 %v5935, %v6102
        %v6133 = vmul.f32 %v5936, %v6106
        %v6134 = vmul.f32 %v6069, %v6110
        %v6135 = vmul.f32 %v5937, %v6082
        %v6136 = vmul.f32 %v5938, %v6086
        %v6137 = vmul.f32 %v5939, %v6090
        %v6138 = vmul.f32 %v5940, %v6094
        %v6139 = vmul.f32 %v5941, %v6098
        %v6140 = vmul.f32 %v5942, %v6102
        %v6141 = vmul.f32 %v5943, %v6106
        %v6142 = vmul.f32 %v6070, %v6110
        %v6143 = vmul.f32 %v5944, %v6082
        %v6144 = vmul.f32 %v5945, %v6086
        %v6145 = vmul.f32 %v5946, %v6090
        %v6146 = vmul.f32 %v5947, %v6094
        %v6147 = vmul.f32 %v5948, %v6098
        %v6148 = vmul.f32 %v5949, %v6102
        %v6149 = vmul.f32 %v5950, %v6106
        %v6150 = vmul.f32 %v6071, %v6110
        %v6151 = vmul.f32 %v5951, %v6082
        %v6152 = vmul.f32 %v5952, %v6086
        %v6153 = vmul.f32 %v5953, %v6090
        %v6154 = vmul.f32 %v5954, %v6094
        %v6155 = vmul.f32 %v5955, %v6098
        %v6156 = vmul.f32 %v5956, %v6102
        %v6157 = vmul.f32 %v5957, %v6106
        %v6158 = vmul.f32 %v6072, %v6110
        %v6159 = vmul.f32 %v5958, %v6082
        %v6160 = vmul.f32 %v5959, %v6086
        %v6161 = vmul.f32 %v5960, %v6090
        %v6162 = vmul.f32 %v5961, %v6094
        %v6163 = vmul.f32 %v5962, %v6098
        %v6164 = vmul.f32 %v5963, %v6102
        %v6165 = vmul.f32 %v5964, %v6106
        %v6166 = vmul.f32 %v6073, %v6110
        %v6167 = vmul.f32 %v5965, %v6082
        %v6168 = vmul.f32 %v5966, %v6086
        %v6169 = vmul.f32 %v5967, %v6090
        %v6170 = vmul.f32 %v5968, %v6094
        %v6171 = vmul.f32 %v5969, %v6098
        %v6172 = vmul.f32 %v5970, %v6102
        %v6173 = vmul.f32 %v5971, %v6106
        %v6174 = vmul.f32 %v6074, %v6110
        %v6175 = vmul.f32 %v5972, %v6082
        %v6176 = vmul.f32 %v5973, %v6086
        %v6177 = vmul.f32 %v5974, %v6090
        %v6178 = vmul.f32 %v5975, %v6094
        %v6179 = vmul.f32 %v5976, %v6098
        %v6180 = vmul.f32 %v5977, %v6102
        %v6181 = vmul.f32 %v5978, %v6106
        %v6182 = vmul.f32 %v6075, %v6110
        %v6183 = vadd.f32 %v5173, %v6119
        %v6184 = vadd.f32 %v5174, %v6120
        %v6185 = vadd.f32 %v5175, %v6121
        %v6186 = vadd.f32 %v5176, %v6122
        %v6187 = vadd.f32 %v5177, %v6123
        %v6188 = vadd.f32 %v5178, %v6124
        %v6189 = vadd.f32 %v5179, %v6125
        %v6190 = vadd.f32 %v5180, %v6126
        %v6191 = vadd.f32 %v5181, %v6127
        %v6192 = vadd.f32 %v5182, %v6128
        %v6193 = vadd.f32 %v5183, %v6129
        %v6194 = vadd.f32 %v5184, %v6130
        %v6195 = vadd.f32 %v5185, %v6131
        %v6196 = vadd.f32 %v5186, %v6132
        %v6197 = vadd.f32 %v5187, %v6133
        %v6198 = vadd.f32 %v5188, %v6134
        %v6199 = vadd.f32 %v5189, %v6135
        %v6200 = vadd.f32 %v5190, %v6136
        %v6201 = vadd.f32 %v5191, %v6137
        %v6202 = vadd.f32 %v5192, %v6138
        %v6203 = vadd.f32 %v5193, %v6139
        %v6204 = vadd.f32 %v5194, %v6140
        %v6205 = vadd.f32 %v5195, %v6141
        %v6206 = vadd.f32 %v5196, %v6142
        %v6207 = vadd.f32 %v5197, %v6143
        %v6208 = vadd.f32 %v5198, %v6144
        %v6209 = vadd.f32 %v5199, %v6145
        %v6210 = vadd.f32 %v5200, %v6146
        %v6211 = vadd.f32 %v5201, %v6147
        %v6212 = vadd.f32 %v5202, %v6148
        %v6213 = vadd.f32 %v5203, %v6149
        %v6214 = vadd.f32 %v5204, %v6150
        %v6215 = vadd.f32 %v5205, %v6151
        %v6216 = vadd.f32 %v5206, %v6152
        %v6217 = vadd.f32 %v5207, %v6153
        %v6218 = vadd.f32 %v5208, %v6154
        %v6219 = vadd.f32 %v5209, %v6155
        %v6220 = vadd.f32 %v5210, %v6156
        %v6221 = vadd.f32 %v5211, %v6157
        %v6222 = vadd.f32 %v5212, %v6158
        %v6223 = vadd.f32 %v5213, %v6159
        %v6224 = vadd.f32 %v5214, %v6160
        %v6225 = vadd.f32 %v5215, %v6161
        %v6226 = vadd.f32 %v5216, %v6162
        %v6227 = vadd.f32 %v5217, %v6163
        %v6228 = vadd.f32 %v5218, %v6164
        %v6229 = vadd.f32 %v5219, %v6165
        %v6230 = vadd.f32 %v5220, %v6166
        %v6231 = vadd.f32 %v5221, %v6167
        %v6232 = vadd.f32 %v5222, %v6168
        %v6233 = vadd.f32 %v5223, %v6169
        %v6234 = vadd.f32 %v5224, %v6170
        %v6235 = vadd.f32 %v5225, %v6171
        %v6236 = vadd.f32 %v5226, %v6172
        %v6237 = vadd.f32 %v5227, %v6173
        %v6238 = vadd.f32 %v5228, %v6174
        %v6239 = vadd.f32 %v5229, %v6175
        %v6240 = vadd.f32 %v5230, %v6176
        %v6241 = vadd.f32 %v5231, %v6177
        %v6242 = vadd.f32 %v5232, %v6178
        %v6243 = vadd.f32 %v5233, %v6179
        %v6244 = vadd.f32 %v5234, %v6180
        %v6245 = vadd.f32 %v5235, %v6181
        %v6246 = vadd.f32 %v5236, %v6182
        %s6247 = scalar_lea.vmem [#allocation11], 768
        %v6248 = vld [vmem:[%s6247] sm:$0xff]
        %v6249 = vld [vmem:[%s6247 + $0x8] sm:$0xff]
        %v6250 = vld [vmem:[%s6247 + $0x10] sm:$0xff]
        %v6251 = vld [vmem:[%s6247 + $0x18] sm:$0xff]
        %v6252 = vld [vmem:[%s6247 + $0x20] sm:$0xff]
        %v6253 = vld [vmem:[%s6247 + $0x28] sm:$0xff]
        %v6254 = vld [vmem:[%s6247 + $0x30] sm:$0xff]
        %v6255 = vld [vmem:[%s6247 + $0x38] sm:$0xff]
        %v6256 = vld [vmem:[%s6247 + $0x40] sm:$0xff]
        %v6257 = vld [vmem:[%s6247 + $0x48] sm:$0xff]
        %v6258 = vld [vmem:[%s6247 + $0x50] sm:$0xff]
        %v6259 = vld [vmem:[%s6247 + $0x58] sm:$0xff]
        %v6260 = vld [vmem:[%s6247 + $0x60] sm:$0xff]
        %v6261 = vld [vmem:[%s6247 + $0x68] sm:$0xff]
        %v6262 = vld [vmem:[%s6247 + $0x70] sm:$0xff]
        %v6263 = vld [vmem:[%s6247 + $0x78] sm:$0xff]
        %v6265 = vsel %vm723, %v6249, 0
        %v6268 = vsel %vm723, %v6251, 0
        %v6271 = vsel %vm723, %v6253, 0
        %v6274 = vsel %vm723, %v6255, 0
        %v6277 = vsel %vm723, %v6257, 0
        %v6280 = vsel %vm723, %v6259, 0
        %v6283 = vsel %vm723, %v6261, 0
        %v6286 = vsel %vm723, %v6263, 0
        %6288 = vmatprep.subr.mxu0 %v499
        %6289 = vmatpush1.msra.mxu0 %v498
        %6290 = vmatprep.subr.mxu0 %v507
        %6291 = vmatpush1.msra.mxu0 %v506
        %6292 = vmatprep.subr.mxu0 %v515
        %6293 = vmatpush1.msra.mxu0 %v514
        %6294 = vmatprep.subr.mxu0 %v523
        %6295 = vmatpush1.msra.mxu0 %v522
        %6296 = vmatprep.subr.mxu0 %v531
        %6297 = vmatpush1.msra.mxu0 %v530
        %6298 = vmatprep.subr.mxu0 %v539
        %6299 = vmatpush1.msra.mxu0 %v538
        %6300 = vmatprep.subr.mxu0 %v547
        %6301 = vmatpush1.msra.mxu0 %v546
        %6302 = vmatprep.subr.mxu0 %v555
        %6303 = vmatpush1.msra.mxu0 %v554
        %6304 = vmatprep.subr.mxu0 %v563
        %6305 = vmatpush1.msra.mxu0 %v562
        %6306 = vmatprep.subr.mxu0 %v571
        %6307 = vmatpush1.msra.mxu0 %v570
        %6308 = vmatprep.subr.mxu0 %v579
        %6309 = vmatpush1.msra.mxu0 %v578
        %6310 = vmatprep.subr.mxu0 %v587
        %6311 = vmatpush1.msra.mxu0 %v586
        %6312 = vmatprep.subr.mxu0 %v595
        %6313 = vmatpush1.msra.mxu0 %v594
        %6314 = vmatprep.subr.mxu0 %v603
        %6315 = vmatpush1.msra.mxu0 %v602
        %6316 = vmatprep.subr.mxu0 %v611
        %6317 = vmatpush1.msra.mxu0 %v610
        %6318 = vmatprep.subr.mxu0 %v619
        %6319 = vmatpush1.msra.mxu0 %v618
        %6320 = vmatprep.subr.mxu0 %v627
        %6321 = vmatpush1.msra.mxu0 %v626
        %6322 = vmatprep.subr.mxu0 %v635
        %6323 = vmatpush1.msra.mxu0 %v634
        %6324 = vmatprep.subr.mxu0 %v643
        %6325 = vmatpush1.msra.mxu0 %v642
        %6326 = vmatprep.subr.mxu0 %v651
        %6327 = vmatpush1.msra.mxu0 %v650
        %6328 = vmatprep.subr.mxu0 0.0
        %6329 = vmatpush1.msra.mxu0 0.0
        %6330 = vmatprep.subr.mxu0 0.0
        %6331 = vmatpush1.msra.mxu0 0.0
        %6332 = vmatprep.subr.mxu0 0.0
        %6333 = vmatpush1.msra.mxu0 0.0
        %6334 = vmatprep.subr.mxu0 0.0
        %6335 = vmatpush1.msra.mxu0 0.0
        %6336 = vmatprep.subr.mxu0 0.0
        %6337 = vmatpush1.msra.mxu0 0.0
        %6338 = vmatprep.subr.mxu0 0.0
        %6339 = vmatpush1.msra.mxu0 0.0
        %6340 = vmatprep.subr.mxu0 0.0
        %6341 = vmatpush1.msra.mxu0 0.0
        %6342 = vmatprep.subr.mxu0 0.0
        %6343 = vmatpush1.msra.mxu0 0.0
        %6344 = vmatprep.subr.mxu0 0.0
        %6345 = vmatpush1.msra.mxu0 0.0
        %6346 = vmatprep.subr.mxu0 0.0
        %6347 = vmatpush1.msra.mxu0 0.0
        %6348 = vmatprep.subr.mxu0 0.0
        %6349 = vmatpush1.msra.mxu0 0.0
        %6350 = vmatprep.subr.mxu0 0.0
        %6351 = vmatpush1.msra.mxu0 0.0
        %6352 = vmatprep.mubr.f32.mxu0 %v6265
        %6353 = vmatmul.mubr.f32.gmra.mrb[0].mxu0 %v6248
        %v6354 = vpop.f32.mrb[0].mxu0
        %v6355 = vadd.f32 0.0, %v6354
        %v6356 = vpop.f32.mrb[0].mxu0
        %v6357 = vadd.f32 0.0, %v6356
        %6358 = vmatprep.mubr.f32.mxu0 %v6268
        %6359 = vmatmul.mubr.f32.gmra.mrb[0].mxu0 %v6250
        %v6360 = vpop.f32.mrb[0].mxu0
        %v6361 = vadd.f32 0.0, %v6360
        %v6362 = vpop.f32.mrb[0].mxu0
        %v6363 = vadd.f32 0.0, %v6362
        %6364 = vmatprep.mubr.f32.mxu0 %v6271
        %6365 = vmatmul.mubr.f32.gmra.mrb[0].mxu0 %v6252
        %v6366 = vpop.f32.mrb[0].mxu0
        %v6367 = vadd.f32 0.0, %v6366
        %v6368 = vpop.f32.mrb[0].mxu0
        %v6369 = vadd.f32 0.0, %v6368
        %6370 = vmatprep.mubr.f32.mxu0 %v6274
        %6371 = vmatmul.mubr.f32.gmra.mrb[0].mxu0 %v6254
        %v6372 = vpop.f32.mrb[0].mxu0
        %v6373 = vadd.f32 0.0, %v6372
        %v6374 = vpop.f32.mrb[0].mxu0
        %v6375 = vadd.f32 0.0, %v6374
        %6376 = vmatprep.mubr.f32.mxu0 %v6277
        %6377 = vmatmul.mubr.f32.gmra.mrb[0].mxu0 %v6256
        %v6378 = vpop.f32.mrb[0].mxu0
        %v6379 = vadd.f32 0.0, %v6378
        %v6380 = vpop.f32.mrb[0].mxu0
        %v6381 = vadd.f32 0.0, %v6380
        %6382 = vmatprep.mubr.f32.mxu0 %v6280
        %6383 = vmatmul.mubr.f32.gmra.mrb[0].mxu0 %v6258
        %v6384 = vpop.f32.mrb[0].mxu0
        %v6385 = vadd.f32 0.0, %v6384
        %v6386 = vpop.f32.mrb[0].mxu0
        %v6387 = vadd.f32 0.0, %v6386
        %6388 = vmatprep.mubr.f32.mxu0 %v6283
        %6389 = vmatmul.mubr.f32.gmra.mrb[0].mxu0 %v6260
        %v6390 = vpop.f32.mrb[0].mxu0
        %v6391 = vadd.f32 0.0, %v6390
        %v6392 = vpop.f32.mrb[0].mxu0
        %v6393 = vadd.f32 0.0, %v6392
        %6394 = vmatprep.mubr.f32.mxu0 %v6286
        %6395 = vmatmul.mubr.f32.gmra.mrb[0].mxu0 %v6262
        %v6396 = vpop.f32.mrb[0].mxu0
        %v6397 = vadd.f32 0.0, %v6396
        %v6398 = vpop.f32.mrb[0].mxu0
        %v6399 = vadd.f32 0.0, %v6398
        %6400 = vdwg.mxu0
        %6401 = vmatprep.subr.mxu0 %v501
        %6402 = vmatpush1.msra.mxu0 %v500
        %6403 = vmatprep.subr.mxu0 %v509
        %6404 = vmatpush1.msra.mxu0 %v508
        %6405 = vmatprep.subr.mxu0 %v517
        %6406 = vmatpush1.msra.mxu0 %v516
        %6407 = vmatprep.subr.mxu0 %v525
        %6408 = vmatpush1.msra.mxu0 %v524
        %6409 = vmatprep.subr.mxu0 %v533
        %6410 = vmatpush1.msra.mxu0 %v532
        %6411 = vmatprep.subr.mxu0 %v541
        %6412 = vmatpush1.msra.mxu0 %v540
        %6413 = vmatprep.subr.mxu0 %v549
        %6414 = vmatpush1.msra.mxu0 %v548
        %6415 = vmatprep.subr.mxu0 %v557
        %6416 = vmatpush1.msra.mxu0 %v556
        %6417 = vmatprep.subr.mxu0 %v565
        %6418 = vmatpush1.msra.mxu0 %v564
        %6419 = vmatprep.subr.mxu0 %v573
        %6420 = vmatpush1.msra.mxu0 %v572
        %6421 = vmatprep.subr.mxu0 %v581
        %6422 = vmatpush1.msra.mxu0 %v580
        %6423 = vmatprep.subr.mxu0 %v589
        %6424 = vmatpush1.msra.mxu0 %v588
        %6425 = vmatprep.subr.mxu0 %v597
        %6426 = vmatpush1.msra.mxu0 %v596
        %6427 = vmatprep.subr.mxu0 %v605
        %6428 = vmatpush1.msra.mxu0 %v604
        %6429 = vmatprep.subr.mxu0 %v613
        %6430 = vmatpush1.msra.mxu0 %v612
        %6431 = vmatprep.subr.mxu0 %v621
        %6432 = vmatpush1.msra.mxu0 %v620
        %6433 = vmatprep.subr.mxu0 %v629
        %6434 = vmatpush1.msra.mxu0 %v628
        %6435 = vmatprep.subr.mxu0 %v637
        %6436 = vmatpush1.msra.mxu0 %v636
        %6437 = vmatprep.subr.mxu0 %v645
        %6438 = vmatpush1.msra.mxu0 %v644
        %6439 = vmatprep.subr.mxu0 %v653
        %6440 = vmatpush1.msra.mxu0 %v652
        %6441 = vmatprep.subr.mxu0 0.0
        %6442 = vmatpush1.msra.mxu0 0.0
        %6443 = vmatprep.subr.mxu0 0.0
        %6444 = vmatpush1.msra.mxu0 0.0
        %6445 = vmatprep.subr.mxu0 0.0
        %6446 = vmatpush1.msra.mxu0 0.0
        %6447 = vmatprep.subr.mxu0 0.0
        %6448 = vmatpush1.msra.mxu0 0.0
        %6449 = vmatprep.subr.mxu0 0.0
        %6450 = vmatpush1.msra.mxu0 0.0
        %6451 = vmatprep.subr.mxu0 0.0
        %6452 = vmatpush1.msra.mxu0 0.0
        %6453 = vmatprep.subr.mxu0 0.0
        %6454 = vmatpush1.msra.mxu0 0.0
        %6455 = vmatprep.subr.mxu0 0.0
        %6456 = vmatpush1.msra.mxu0 0.0
        %6457 = vmatprep.subr.mxu0 0.0
        %6458 = vmatpush1.msra.mxu0 0.0
        %6459 = vmatprep.subr.mxu0 0.0
        %6460 = vmatpush1.msra.mxu0 0.0
        %6461 = vmatprep.subr.mxu0 0.0
        %6462 = vmatpush1.msra.mxu0 0.0
        %6463 = vmatprep.subr.mxu0 0.0
        %6464 = vmatpush1.msra.mxu0 0.0
        %6465 = vmatprep.mubr.f32.mxu0 %v6265
        %6466 = vmatmul.mubr.f32.gmra.mrb[0].mxu0 %v6248
        %v6467 = vpop.f32.mrb[0].mxu0
        %v6468 = vadd.f32 0.0, %v6467
        %v6469 = vpop.f32.mrb[0].mxu0
        %v6470 = vadd.f32 0.0, %v6469
        %6471 = vmatprep.mubr.f32.mxu0 %v6268
        %6472 = vmatmul.mubr.f32.gmra.mrb[0].mxu0 %v6250
        %v6473 = vpop.f32.mrb[0].mxu0
        %v6474 = vadd.f32 0.0, %v6473
        %v6475 = vpop.f32.mrb[0].mxu0
        %v6476 = vadd.f32 0.0, %v6475
        %6477 = vmatprep.mubr.f32.mxu0 %v6271
        %6478 = vmatmul.mubr.f32.gmra.mrb[0].mxu0 %v6252
        %v6479 = vpop.f32.mrb[0].mxu0
        %v6480 = vadd.f32 0.0, %v6479
        %v6481 = vpop.f32.mrb[0].mxu0
        %v6482 = vadd.f32 0.0, %v6481
        %6483 = vmatprep.mubr.f32.mxu0 %v6274
        %6484 = vmatmul.mubr.f32.gmra.mrb[0].mxu0 %v6254
        %v6485 = vpop.f32.mrb[0].mxu0
        %v6486 = vadd.f32 0.0, %v6485
        %v6487 = vpop.f32.mrb[0].mxu0
        %v6488 = vadd.f32 0.0, %v6487
        %6489 = vmatprep.mubr.f32.mxu0 %v6277
        %6490 = vmatmul.mubr.f32.gmra.mrb[0].mxu0 %v6256
        %v6491 = vpop.f32.mrb[0].mxu0
        %v6492 = vadd.f32 0.0, %v6491
        %v6493 = vpop.f32.mrb[0].mxu0
        %v6494 = vadd.f32 0.0, %v6493
        %6495 = vmatprep.mubr.f32.mxu0 %v6280
        %6496 = vmatmul.mubr.f32.gmra.mrb[0].mxu0 %v6258
        %v6497 = vpop.f32.mrb[0].mxu0
        %v6498 = vadd.f32 0.0, %v6497
        %v6499 = vpop.f32.mrb[0].mxu0
        %v6500 = vadd.f32 0.0, %v6499
        %6501 = vmatprep.mubr.f32.mxu0 %v6283
        %6502 = vmatmul.mubr.f32.gmra.mrb[0].mxu0 %v6260
        %v6503 = vpop.f32.mrb[0].mxu0
        %v6504 = vadd.f32 0.0, %v6503
        %v6505 = vpop.f32.mrb[0].mxu0
        %v6506 = vadd.f32 0.0, %v6505
        %6507 = vmatprep.mubr.f32.mxu0 %v6286
        %6508 = vmatmul.mubr.f32.gmra.mrb[0].mxu0 %v6262
        %v6509 = vpop.f32.mrb[0].mxu0
        %v6510 = vadd.f32 0.0, %v6509
        %v6511 = vpop.f32.mrb[0].mxu0
        %v6512 = vadd.f32 0.0, %v6511
        %6513 = vdwg.mxu0
        %6514 = vmatprep.subr.mxu0 %v503
        %6515 = vmatpush1.msra.mxu0 %v502
        %6516 = vmatprep.subr.mxu0 %v511
        %6517 = vmatpush1.msra.mxu0 %v510
        %6518 = vmatprep.subr.mxu0 %v519
        %6519 = vmatpush1.msra.mxu0 %v518
        %6520 = vmatprep.subr.mxu0 %v527
        %6521 = vmatpush1.msra.mxu0 %v526
        %6522 = vmatprep.subr.mxu0 %v535
        %6523 = vmatpush1.msra.mxu0 %v534
        %6524 = vmatprep.subr.mxu0 %v543
        %6525 = vmatpush1.msra.mxu0 %v542
        %6526 = vmatprep.subr.mxu0 %v551
        %6527 = vmatpush1.msra.mxu0 %v550
        %6528 = vmatprep.subr.mxu0 %v559
        %6529 = vmatpush1.msra.mxu0 %v558
        %6530 = vmatprep.subr.mxu0 %v567
        %6531 = vmatpush1.msra.mxu0 %v566
        %6532 = vmatprep.subr.mxu0 %v575
        %6533 = vmatpush1.msra.mxu0 %v574
        %6534 = vmatprep.subr.mxu0 %v583
        %6535 = vmatpush1.msra.mxu0 %v582
        %6536 = vmatprep.subr.mxu0 %v591
        %6537 = vmatpush1.msra.mxu0 %v590
        %6538 = vmatprep.subr.mxu0 %v599
        %6539 = vmatpush1.msra.mxu0 %v598
        %6540 = vmatprep.subr.mxu0 %v607
        %6541 = vmatpush1.msra.mxu0 %v606
        %6542 = vmatprep.subr.mxu0 %v615
        %6543 = vmatpush1.msra.mxu0 %v614
        %6544 = vmatprep.subr.mxu0 %v623
        %6545 = vmatpush1.msra.mxu0 %v622
        %6546 = vmatprep.subr.mxu0 %v631
        %6547 = vmatpush1.msra.mxu0 %v630
        %6548 = vmatprep.subr.mxu0 %v639
        %6549 = vmatpush1.msra.mxu0 %v638
        %6550 = vmatprep.subr.mxu0 %v647
        %6551 = vmatpush1.msra.mxu0 %v646
        %6552 = vmatprep.subr.mxu0 %v655
        %6553 = vmatpush1.msra.mxu0 %v654
        %6554 = vmatprep.subr.mxu0 0.0
        %6555 = vmatpush1.msra.mxu0 0.0
        %6556 = vmatprep.subr.mxu0 0.0
        %6557 = vmatpush1.msra.mxu0 0.0
        %6558 = vmatprep.subr.mxu0 0.0
        %6559 = vmatpush1.msra.mxu0 0.0
        %6560 = vmatprep.subr.mxu0 0.0
        %6561 = vmatpush1.msra.mxu0 0.0
        %6562 = vmatprep.subr.mxu0 0.0
        %6563 = vmatpush1.msra.mxu0 0.0
        %6564 = vmatprep.subr.mxu0 0.0
        %6565 = vmatpush1.msra.mxu0 0.0
        %6566 = vmatprep.subr.mxu0 0.0
        %6567 = vmatpush1.msra.mxu0 0.0
        %6568 = vmatprep.subr.mxu0 0.0
        %6569 = vmatpush1.msra.mxu0 0.0
        %6570 = vmatprep.subr.mxu0 0.0
        %6571 = vmatpush1.msra.mxu0 0.0
        %6572 = vmatprep.subr.mxu0 0.0
        %6573 = vmatpush1.msra.mxu0 0.0
        %6574 = vmatprep.subr.mxu0 0.0
        %6575 = vmatpush1.msra.mxu0 0.0
        %6576 = vmatprep.subr.mxu0 0.0
        %6577 = vmatpush1.msra.mxu0 0.0
        %6578 = vmatprep.mubr.f32.mxu0 %v6265
        %6579 = vmatmul.mubr.f32.gmra.mrb[0].mxu0 %v6248
        %v6580 = vpop.f32.mrb[0].mxu0
        %v6581 = vadd.f32 0.0, %v6580
        %v6582 = vpop.f32.mrb[0].mxu0
        %v6583 = vadd.f32 0.0, %v6582
        %6584 = vmatprep.mubr.f32.mxu0 %v6268
        %6585 = vmatmul.mubr.f32.gmra.mrb[0].mxu0 %v6250
        %v6586 = vpop.f32.mrb[0].mxu0
        %v6587 = vadd.f32 0.0, %v6586
        %v6588 = vpop.f32.mrb[0].mxu0
        %v6589 = vadd.f32 0.0, %v6588
        %6590 = vmatprep.mubr.f32.mxu0 %v6271
        %6591 = vmatmul.mubr.f32.gmra.mrb[0].mxu0 %v6252
        %v6592 = vpop.f32.mrb[0].mxu0
        %v6593 = vadd.f32 0.0, %v6592
        %v6594 = vpop.f32.mrb[0].mxu0
        %v6595 = vadd.f32 0.0, %v6594
        %6596 = vmatprep.mubr.f32.mxu0 %v6274
        %6597 = vmatmul.mubr.f32.gmra.mrb[0].mxu0 %v6254
        %v6598 = vpop.f32.mrb[0].mxu0
        %v6599 = vadd.f32 0.0, %v6598
        %v6600 = vpop.f32.mrb[0].mxu0
        %v6601 = vadd.f32 0.0, %v6600
        %6602 = vmatprep.mubr.f32.mxu0 %v6277
        %6603 = vmatmul.mubr.f32.gmra.mrb[0].mxu0 %v6256
        %v6604 = vpop.f32.mrb[0].mxu0
        %v6605 = vadd.f32 0.0, %v6604
        %v6606 = vpop.f32.mrb[0].mxu0
        %v6607 = vadd.f32 0.0, %v6606
        %6608 = vmatprep.mubr.f32.mxu0 %v6280
        %6609 = vmatmul.mubr.f32.gmra.mrb[0].mxu0 %v6258
        %v6610 = vpop.f32.mrb[0].mxu0
        %v6611 = vadd.f32 0.0, %v6610
        %v6612 = vpop.f32.mrb[0].mxu0
        %v6613 = vadd.f32 0.0, %v6612
        %6614 = vmatprep.mubr.f32.mxu0 %v6283
        %6615 = vmatmul.mubr.f32.gmra.mrb[0].mxu0 %v6260
        %v6616 = vpop.f32.mrb[0].mxu0
        %v6617 = vadd.f32 0.0, %v6616
        %v6618 = vpop.f32.mrb[0].mxu0
        %v6619 = vadd.f32 0.0, %v6618
        %6620 = vmatprep.mubr.f32.mxu0 %v6286
        %6621 = vmatmul.mubr.f32.gmra.mrb[0].mxu0 %v6262
        %v6622 = vpop.f32.mrb[0].mxu0
        %v6623 = vadd.f32 0.0, %v6622
        %v6624 = vpop.f32.mrb[0].mxu0
        %v6625 = vadd.f32 0.0, %v6624
        %6626 = vdwg.mxu0
        %6627 = vmatprep.subr.mxu0 %v505
        %6628 = vmatpush1.msra.mxu0 %v504
        %6629 = vmatprep.subr.mxu0 %v513
        %6630 = vmatpush1.msra.mxu0 %v512
        %6631 = vmatprep.subr.mxu0 %v521
        %6632 = vmatpush1.msra.mxu0 %v520
        %6633 = vmatprep.subr.mxu0 %v529
        %6634 = vmatpush1.msra.mxu0 %v528
        %6635 = vmatprep.subr.mxu0 %v537
        %6636 = vmatpush1.msra.mxu0 %v536
        %6637 = vmatprep.subr.mxu0 %v545
        %6638 = vmatpush1.msra.mxu0 %v544
        %6639 = vmatprep.subr.mxu0 %v553
        %6640 = vmatpush1.msra.mxu0 %v552
        %6641 = vmatprep.subr.mxu0 %v561
        %6642 = vmatpush1.msra.mxu0 %v560
        %6643 = vmatprep.subr.mxu0 %v569
        %6644 = vmatpush1.msra.mxu0 %v568
        %6645 = vmatprep.subr.mxu0 %v577
        %6646 = vmatpush1.msra.mxu0 %v576
        %6647 = vmatprep.subr.mxu0 %v585
        %6648 = vmatpush1.msra.mxu0 %v584
        %6649 = vmatprep.subr.mxu0 %v593
        %6650 = vmatpush1.msra.mxu0 %v592
        %6651 = vmatprep.subr.mxu0 %v601
        %6652 = vmatpush1.msra.mxu0 %v600
        %6653 = vmatprep.subr.mxu0 %v609
        %6654 = vmatpush1.msra.mxu0 %v608
        %6655 = vmatprep.subr.mxu0 %v617
        %6656 = vmatpush1.msra.mxu0 %v616
        %6657 = vmatprep.subr.mxu0 %v625
        %6658 = vmatpush1.msra.mxu0 %v624
        %6659 = vmatprep.subr.mxu0 %v633
        %6660 = vmatpush1.msra.mxu0 %v632
        %6661 = vmatprep.subr.mxu0 %v641
        %6662 = vmatpush1.msra.mxu0 %v640
        %6663 = vmatprep.subr.mxu0 %v649
        %6664 = vmatpush1.msra.mxu0 %v648
        %6665 = vmatprep.subr.mxu0 %v657
        %6666 = vmatpush1.msra.mxu0 %v656
        %6667 = vmatprep.subr.mxu0 0.0
        %6668 = vmatpush1.msra.mxu0 0.0
        %6669 = vmatprep.subr.mxu0 0.0
        %6670 = vmatpush1.msra.mxu0 0.0
        %6671 = vmatprep.subr.mxu0 0.0
        %6672 = vmatpush1.msra.mxu0 0.0
        %6673 = vmatprep.subr.mxu0 0.0
        %6674 = vmatpush1.msra.mxu0 0.0
        %6675 = vmatprep.subr.mxu0 0.0
        %6676 = vmatpush1.msra.mxu0 0.0
        %6677 = vmatprep.subr.mxu0 0.0
        %6678 = vmatpush1.msra.mxu0 0.0
        %6679 = vmatprep.subr.mxu0 0.0
        %6680 = vmatpush1.msra.mxu0 0.0
        %6681 = vmatprep.subr.mxu0 0.0
        %6682 = vmatpush1.msra.mxu0 0.0
        %6683 = vmatprep.subr.mxu0 0.0
        %6684 = vmatpush1.msra.mxu0 0.0
        %6685 = vmatprep.subr.mxu0 0.0
        %6686 = vmatpush1.msra.mxu0 0.0
        %6687 = vmatprep.subr.mxu0 0.0
        %6688 = vmatpush1.msra.mxu0 0.0
        %6689 = vmatprep.subr.mxu0 0.0
        %6690 = vmatpush1.msra.mxu0 0.0
        %6691 = vmatprep.mubr.f32.mxu0 %v6265
        %6692 = vmatmul.mubr.f32.gmra.mrb[0].mxu0 %v6248
        %v6693 = vpop.f32.mrb[0].mxu0
        %v6694 = vadd.f32 0.0, %v6693
        %v6695 = vpop.f32.mrb[0].mxu0
        %v6696 = vadd.f32 0.0, %v6695
        %6697 = vmatprep.mubr.f32.mxu0 %v6268
        %6698 = vmatmul.mubr.f32.gmra.mrb[0].mxu0 %v6250
        %v6699 = vpop.f32.mrb[0].mxu0
        %v6700 = vadd.f32 0.0, %v6699
        %v6701 = vpop.f32.mrb[0].mxu0
        %v6702 = vadd.f32 0.0, %v6701
        %6703 = vmatprep.mubr.f32.mxu0 %v6271
        %6704 = vmatmul.mubr.f32.gmra.mrb[0].mxu0 %v6252
        %v6705 = vpop.f32.mrb[0].mxu0
        %v6706 = vadd.f32 0.0, %v6705
        %v6707 = vpop.f32.mrb[0].mxu0
        %v6708 = vadd.f32 0.0, %v6707
        %6709 = vmatprep.mubr.f32.mxu0 %v6274
        %6710 = vmatmul.mubr.f32.gmra.mrb[0].mxu0 %v6254
        %v6711 = vpop.f32.mrb[0].mxu0
        %v6712 = vadd.f32 0.0, %v6711
        %v6713 = vpop.f32.mrb[0].mxu0
        %v6714 = vadd.f32 0.0, %v6713
        %6715 = vmatprep.mubr.f32.mxu0 %v6277
        %6716 = vmatmul.mubr.f32.gmra.mrb[0].mxu0 %v6256
        %v6717 = vpop.f32.mrb[0].mxu0
        %v6718 = vadd.f32 0.0, %v6717
        %v6719 = vpop.f32.mrb[0].mxu0
        %v6720 = vadd.f32 0.0, %v6719
        %6721 = vmatprep.mubr.f32.mxu0 %v6280
        %6722 = vmatmul.mubr.f32.gmra.mrb[0].mxu0 %v6258
        %v6723 = vpop.f32.mrb[0].mxu0
        %v6724 = vadd.f32 0.0, %v6723
        %v6725 = vpop.f32.mrb[0].mxu0
        %v6726 = vadd.f32 0.0, %v6725
        %6727 = vmatprep.mubr.f32.mxu0 %v6283
        %6728 = vmatmul.mubr.f32.gmra.mrb[0].mxu0 %v6260
        %v6729 = vpop.f32.mrb[0].mxu0
        %v6730 = vadd.f32 0.0, %v6729
        %v6731 = vpop.f32.mrb[0].mxu0
        %v6732 = vadd.f32 0.0, %v6731
        %6733 = vmatprep.mubr.f32.mxu0 %v6286
        %6734 = vmatmul.mubr.f32.gmra.mrb[0].mxu0 %v6262
        %v6735 = vpop.f32.mrb[0].mxu0
        %v6736 = vadd.f32 0.0, %v6735
        %v6737 = vpop.f32.mrb[0].mxu0
        %v6738 = vadd.f32 0.0, %v6737
        %6739 = vdwg.mxu0
        %6804 = vrot.lane.b32.xlu0 %v6355, 99
        %v6805 = vpop.permute.xlu0 %6804
        %6806 = vrot.lane.b32.xlu0 %v6357, 99
        %v6807 = vpop.permute.xlu0 %6806
        %6808 = vrot.lane.b32.xlu0 %v6468, 99
        %v6809 = vpop.permute.xlu0 %6808
        %6810 = vrot.lane.b32.xlu0 %v6470, 99
        %v6811 = vpop.permute.xlu0 %6810
        %6812 = vrot.lane.b32.xlu0 %v6581, 99
        %v6813 = vpop.permute.xlu0 %6812
        %6814 = vrot.lane.b32.xlu0 %v6583, 99
        %v6815 = vpop.permute.xlu0 %6814
        %6816 = vrot.lane.b32.xlu0 %v6694, 99
        %v6817 = vpop.permute.xlu0 %6816
        %6818 = vrot.lane.b32.xlu0 %v6696, 99
        %v6819 = vpop.permute.xlu0 %6818
        %6820 = vrot.lane.b32.xlu0 %v6361, 99
        %v6821 = vpop.permute.xlu0 %6820
        %6822 = vrot.lane.b32.xlu0 %v6363, 99
        %v6823 = vpop.permute.xlu0 %6822
        %6824 = vrot.lane.b32.xlu0 %v6474, 99
        %v6825 = vpop.permute.xlu0 %6824
        %6826 = vrot.lane.b32.xlu0 %v6476, 99
        %v6827 = vpop.permute.xlu0 %6826
        %6828 = vrot.lane.b32.xlu0 %v6587, 99
        %v6829 = vpop.permute.xlu0 %6828
        %6830 = vrot.lane.b32.xlu0 %v6589, 99
        %v6831 = vpop.permute.xlu0 %6830
        %6832 = vrot.lane.b32.xlu0 %v6700, 99
        %v6833 = vpop.permute.xlu0 %6832
        %6834 = vrot.lane.b32.xlu0 %v6702, 99
        %v6835 = vpop.permute.xlu0 %6834
        %6836 = vrot.lane.b32.xlu0 %v6367, 99
        %v6837 = vpop.permute.xlu0 %6836
        %6838 = vrot.lane.b32.xlu0 %v6369, 99
        %v6839 = vpop.permute.xlu0 %6838
        %6840 = vrot.lane.b32.xlu0 %v6480, 99
        %v6841 = vpop.permute.xlu0 %6840
        %6842 = vrot.lane.b32.xlu0 %v6482, 99
        %v6843 = vpop.permute.xlu0 %6842
        %6844 = vrot.lane.b32.xlu0 %v6593, 99
        %v6845 = vpop.permute.xlu0 %6844
        %6846 = vrot.lane.b32.xlu0 %v6595, 99
        %v6847 = vpop.permute.xlu0 %6846
        %6848 = vrot.lane.b32.xlu0 %v6706, 99
        %v6849 = vpop.permute.xlu0 %6848
        %6850 = vrot.lane.b32.xlu0 %v6708, 99
        %v6851 = vpop.permute.xlu0 %6850
        %6852 = vrot.lane.b32.xlu0 %v6373, 99
        %v6853 = vpop.permute.xlu0 %6852
        %6854 = vrot.lane.b32.xlu0 %v6375, 99
        %v6855 = vpop.permute.xlu0 %6854
        %6856 = vrot.lane.b32.xlu0 %v6486, 99
        %v6857 = vpop.permute.xlu0 %6856
        %6858 = vrot.lane.b32.xlu0 %v6488, 99
        %v6859 = vpop.permute.xlu0 %6858
        %6860 = vrot.lane.b32.xlu0 %v6599, 99
        %v6861 = vpop.permute.xlu0 %6860
        %6862 = vrot.lane.b32.xlu0 %v6601, 99
        %v6863 = vpop.permute.xlu0 %6862
        %6864 = vrot.lane.b32.xlu0 %v6712, 99
        %v6865 = vpop.permute.xlu0 %6864
        %6866 = vrot.lane.b32.xlu0 %v6714, 99
        %v6867 = vpop.permute.xlu0 %6866
        %6868 = vrot.lane.b32.xlu0 %v6379, 99
        %v6869 = vpop.permute.xlu0 %6868
        %6870 = vrot.lane.b32.xlu0 %v6381, 99
        %v6871 = vpop.permute.xlu0 %6870
        %6872 = vrot.lane.b32.xlu0 %v6492, 99
        %v6873 = vpop.permute.xlu0 %6872
        %6874 = vrot.lane.b32.xlu0 %v6494, 99
        %v6875 = vpop.permute.xlu0 %6874
        %6876 = vrot.lane.b32.xlu0 %v6605, 99
        %v6877 = vpop.permute.xlu0 %6876
        %6878 = vrot.lane.b32.xlu0 %v6607, 99
        %v6879 = vpop.permute.xlu0 %6878
        %6880 = vrot.lane.b32.xlu0 %v6718, 99
        %v6881 = vpop.permute.xlu0 %6880
        %6882 = vrot.lane.b32.xlu0 %v6720, 99
        %v6883 = vpop.permute.xlu0 %6882
        %6884 = vrot.lane.b32.xlu0 %v6385, 99
        %v6885 = vpop.permute.xlu0 %6884
        %6886 = vrot.lane.b32.xlu0 %v6387, 99
        %v6887 = vpop.permute.xlu0 %6886
        %6888 = vrot.lane.b32.xlu0 %v6498, 99
        %v6889 = vpop.permute.xlu0 %6888
        %6890 = vrot.lane.b32.xlu0 %v6500, 99
        %v6891 = vpop.permute.xlu0 %6890
        %6892 = vrot.lane.b32.xlu0 %v6611, 99
        %v6893 = vpop.permute.xlu0 %6892
        %6894 = vrot.lane.b32.xlu0 %v6613, 99
        %v6895 = vpop.permute.xlu0 %6894
        %6896 = vrot.lane.b32.xlu0 %v6724, 99
        %v6897 = vpop.permute.xlu0 %6896
        %6898 = vrot.lane.b32.xlu0 %v6726, 99
        %v6899 = vpop.permute.xlu0 %6898
        %6900 = vrot.lane.b32.xlu0 %v6391, 99
        %v6901 = vpop.permute.xlu0 %6900
        %6902 = vrot.lane.b32.xlu0 %v6393, 99
        %v6903 = vpop.permute.xlu0 %6902
        %6904 = vrot.lane.b32.xlu0 %v6504, 99
        %v6905 = vpop.permute.xlu0 %6904
        %6906 = vrot.lane.b32.xlu0 %v6506, 99
        %v6907 = vpop.permute.xlu0 %6906
        %6908 = vrot.lane.b32.xlu0 %v6617, 99
        %v6909 = vpop.permute.xlu0 %6908
        %6910 = vrot.lane.b32.xlu0 %v6619, 99
        %v6911 = vpop.permute.xlu0 %6910
        %6912 = vrot.lane.b32.xlu0 %v6730, 99
        %v6913 = vpop.permute.xlu0 %6912
        %6914 = vrot.lane.b32.xlu0 %v6732, 99
        %v6915 = vpop.permute.xlu0 %6914
        %6916 = vrot.lane.b32.xlu0 %v6397, 99
        %v6917 = vpop.permute.xlu0 %6916
        %6918 = vrot.lane.b32.xlu0 %v6399, 99
        %v6919 = vpop.permute.xlu0 %6918
        %6920 = vrot.lane.b32.xlu0 %v6510, 99
        %v6921 = vpop.permute.xlu0 %6920
        %6922 = vrot.lane.b32.xlu0 %v6512, 99
        %v6923 = vpop.permute.xlu0 %6922
        %6924 = vrot.lane.b32.xlu0 %v6623, 99
        %v6925 = vpop.permute.xlu0 %6924
        %6926 = vrot.lane.b32.xlu0 %v6625, 99
        %v6927 = vpop.permute.xlu0 %6926
        %6928 = vrot.lane.b32.xlu0 %v6736, 99
        %v6929 = vpop.permute.xlu0 %6928
        %6930 = vrot.lane.b32.xlu0 %v6738, 99
        %v6931 = vpop.permute.xlu0 %6930
        %vm6932 = vcmask 809984
        %v6933 = vsel %vm6932, %v6805, %v6807
        %v6934 = vsel %vm6932, %v6807, %v6809
        %v6935 = vsel %vm6932, %v6809, %v6811
        %v6936 = vsel %vm6932, %v6811, %v6813
        %v6937 = vsel %vm6932, %v6813, %v6815
        %v6938 = vsel %vm6932, %v6815, %v6817
        %v6939 = vsel %vm6932, %v6817, %v6819
        %v6940 = vsel %vm6932, %v6821, %v6823
        %v6941 = vsel %vm6932, %v6823, %v6825
        %v6942 = vsel %vm6932, %v6825, %v6827
        %v6943 = vsel %vm6932, %v6827, %v6829
        %v6944 = vsel %vm6932, %v6829, %v6831
        %v6945 = vsel %vm6932, %v6831, %v6833
        %v6946 = vsel %vm6932, %v6833, %v6835
        %v6947 = vsel %vm6932, %v6837, %v6839
        %v6948 = vsel %vm6932, %v6839, %v6841
        %v6949 = vsel %vm6932, %v6841, %v6843
        %v6950 = vsel %vm6932, %v6843, %v6845
        %v6951 = vsel %vm6932, %v6845, %v6847
        %v6952 = vsel %vm6932, %v6847, %v6849
        %v6953 = vsel %vm6932, %v6849, %v6851
        %v6954 = vsel %vm6932, %v6853, %v6855
        %v6955 = vsel %vm6932, %v6855, %v6857
        %v6956 = vsel %vm6932, %v6857, %v6859
        %v6957 = vsel %vm6932, %v6859, %v6861
        %v6958 = vsel %vm6932, %v6861, %v6863
        %v6959 = vsel %vm6932, %v6863, %v6865
        %v6960 = vsel %vm6932, %v6865, %v6867
        %v6961 = vsel %vm6932, %v6869, %v6871
        %v6962 = vsel %vm6932, %v6871, %v6873
        %v6963 = vsel %vm6932, %v6873, %v6875
        %v6964 = vsel %vm6932, %v6875, %v6877
        %v6965 = vsel %vm6932, %v6877, %v6879
        %v6966 = vsel %vm6932, %v6879, %v6881
        %v6967 = vsel %vm6932, %v6881, %v6883
        %v6968 = vsel %vm6932, %v6885, %v6887
        %v6969 = vsel %vm6932, %v6887, %v6889
        %v6970 = vsel %vm6932, %v6889, %v6891
        %v6971 = vsel %vm6932, %v6891, %v6893
        %v6972 = vsel %vm6932, %v6893, %v6895
        %v6973 = vsel %vm6932, %v6895, %v6897
        %v6974 = vsel %vm6932, %v6897, %v6899
        %v6975 = vsel %vm6932, %v6901, %v6903
        %v6976 = vsel %vm6932, %v6903, %v6905
        %v6977 = vsel %vm6932, %v6905, %v6907
        %v6978 = vsel %vm6932, %v6907, %v6909
        %v6979 = vsel %vm6932, %v6909, %v6911
        %v6980 = vsel %vm6932, %v6911, %v6913
        %v6981 = vsel %vm6932, %v6913, %v6915
        %v6982 = vsel %vm6932, %v6917, %v6919
        %v6983 = vsel %vm6932, %v6919, %v6921
        %v6984 = vsel %vm6932, %v6921, %v6923
        %v6985 = vsel %vm6932, %v6923, %v6925
        %v6986 = vsel %vm6932, %v6925, %v6927
        %v6987 = vsel %vm6932, %v6927, %v6929
        %v6988 = vsel %vm6932, %v6929, %v6931
        %7045 = vrot.lane.b32.xlu0 %v6355, 103
        %v7046 = vpop.permute.xlu0 %7045
        %7047 = vrot.lane.b32.xlu0 %v6361, 103
        %v7048 = vpop.permute.xlu0 %7047
        %7049 = vrot.lane.b32.xlu0 %v6367, 103
        %v7050 = vpop.permute.xlu0 %7049
        %7051 = vrot.lane.b32.xlu0 %v6373, 103
        %v7052 = vpop.permute.xlu0 %7051
        %7053 = vrot.lane.b32.xlu0 %v6379, 103
        %v7054 = vpop.permute.xlu0 %7053
        %7055 = vrot.lane.b32.xlu0 %v6385, 103
        %v7056 = vpop.permute.xlu0 %7055
        %7057 = vrot.lane.b32.xlu0 %v6391, 103
        %v7058 = vpop.permute.xlu0 %7057
        %7059 = vrot.lane.b32.xlu0 %v6397, 103
        %v7060 = vpop.permute.xlu0 %7059
        %vm7069 = vcmask 842752
        %v7070 = vsel %vm7069, %v6939, %v7046
        %v7071 = vsel %vm7069, %v6946, %v7048
        %v7072 = vsel %vm7069, %v6953, %v7050
        %v7073 = vsel %vm7069, %v6960, %v7052
        %v7074 = vsel %vm7069, %v6967, %v7054
        %v7075 = vsel %vm7069, %v6974, %v7056
        %v7076 = vsel %vm7069, %v6981, %v7058
        %v7077 = vsel %vm7069, %v6988, %v7060
        %s7078 = scalar_lea.vmem %s8, 48
        %v7079 = vld [vmem:[%s7078] sm:$0xff]
        %v7081 = vlaneseq
        %v7082 = vshrl.u32 %v7081, 7
        %v7083 = vsub.s32 0, %v7082
        %v7084 = vrot.slane %v7079, %v7083
        %v7085 = vlaneseq
        %v7086 = vshrl.u32 %v7085, 7
        %v7087 = vsub.s32 1, %v7086
        %v7088 = vrot.slane %v7079, %v7087
        %v7089 = vlaneseq
        %v7090 = vshrl.u32 %v7089, 7
        %v7091 = vsub.s32 2, %v7090
        %v7092 = vrot.slane %v7079, %v7091
        %v7093 = vlaneseq
        %v7094 = vshrl.u32 %v7093, 7
        %v7095 = vsub.s32 3, %v7094
        %v7096 = vrot.slane %v7079, %v7095
        %v7097 = vlaneseq
        %v7098 = vshrl.u32 %v7097, 7
        %v7099 = vsub.s32 4, %v7098
        %v7100 = vrot.slane %v7079, %v7099
        %v7101 = vlaneseq
        %v7102 = vshrl.u32 %v7101, 7
        %v7103 = vsub.s32 5, %v7102
        %v7104 = vrot.slane %v7079, %v7103
        %v7105 = vlaneseq
        %v7106 = vshrl.u32 %v7105, 7
        %v7107 = vsub.s32 6, %v7106
        %v7108 = vrot.slane %v7079, %v7107
        %v7109 = vlaneseq
        %v7110 = vshrl.u32 %v7109, 7
        %v7111 = vsub.s32 7, %v7110
        %v7112 = vrot.slane %v7079, %v7111
        %v7121 = vmul.f32 %v6933, %v7084
        %v7122 = vmul.f32 %v6934, %v7088
        %v7123 = vmul.f32 %v6935, %v7092
        %v7124 = vmul.f32 %v6936, %v7096
        %v7125 = vmul.f32 %v6937, %v7100
        %v7126 = vmul.f32 %v6938, %v7104
        %v7127 = vmul.f32 %v7070, %v7108
        %v7128 = vmul.f32 %v7046, %v7112
        %v7129 = vmul.f32 %v6940, %v7084
        %v7130 = vmul.f32 %v6941, %v7088
        %v7131 = vmul.f32 %v6942, %v7092
        %v7132 = vmul.f32 %v6943, %v7096
        %v7133 = vmul.f32 %v6944, %v7100
        %v7134 = vmul.f32 %v6945, %v7104
        %v7135 = vmul.f32 %v7071, %v7108
        %v7136 = vmul.f32 %v7048, %v7112
        %v7137 = vmul.f32 %v6947, %v7084
        %v7138 = vmul.f32 %v6948, %v7088
        %v7139 = vmul.f32 %v6949, %v7092
        %v7140 = vmul.f32 %v6950, %v7096
        %v7141 = vmul.f32 %v6951, %v7100
        %v7142 = vmul.f32 %v6952, %v7104
        %v7143 = vmul.f32 %v7072, %v7108
        %v7144 = vmul.f32 %v7050, %v7112
        %v7145 = vmul.f32 %v6954, %v7084
        %v7146 = vmul.f32 %v6955, %v7088
        %v7147 = vmul.f32 %v6956, %v7092
        %v7148 = vmul.f32 %v6957, %v7096
        %v7149 = vmul.f32 %v6958, %v7100
        %v7150 = vmul.f32 %v6959, %v7104
        %v7151 = vmul.f32 %v7073, %v7108
        %v7152 = vmul.f32 %v7052, %v7112
        %v7153 = vmul.f32 %v6961, %v7084
        %v7154 = vmul.f32 %v6962, %v7088
        %v7155 = vmul.f32 %v6963, %v7092
        %v7156 = vmul.f32 %v6964, %v7096
        %v7157 = vmul.f32 %v6965, %v7100
        %v7158 = vmul.f32 %v6966, %v7104
        %v7159 = vmul.f32 %v7074, %v7108
        %v7160 = vmul.f32 %v7054, %v7112
        %v7161 = vmul.f32 %v6968, %v7084
        %v7162 = vmul.f32 %v6969, %v7088
        %v7163 = vmul.f32 %v6970, %v7092
        %v7164 = vmul.f32 %v6971, %v7096
        %v7165 = vmul.f32 %v6972, %v7100
        %v7166 = vmul.f32 %v6973, %v7104
        %v7167 = vmul.f32 %v7075, %v7108
        %v7168 = vmul.f32 %v7056, %v7112
        %v7169 = vmul.f32 %v6975, %v7084
        %v7170 = vmul.f32 %v6976, %v7088
        %v7171 = vmul.f32 %v6977, %v7092
        %v7172 = vmul.f32 %v6978, %v7096
        %v7173 = vmul.f32 %v6979, %v7100
        %v7174 = vmul.f32 %v6980, %v7104
        %v7175 = vmul.f32 %v7076, %v7108
        %v7176 = vmul.f32 %v7058, %v7112
        %v7177 = vmul.f32 %v6982, %v7084
        %v7178 = vmul.f32 %v6983, %v7088
        %v7179 = vmul.f32 %v6984, %v7092
        %v7180 = vmul.f32 %v6985, %v7096
        %v7181 = vmul.f32 %v6986, %v7100
        %v7182 = vmul.f32 %v6987, %v7104
        %v7183 = vmul.f32 %v7077, %v7108
        %v7184 = vmul.f32 %v7060, %v7112
        %v7185 = vadd.f32 %v6183, %v7121
        %v7186 = vadd.f32 %v6184, %v7122
        %v7187 = vadd.f32 %v6185, %v7123
        %v7188 = vadd.f32 %v6186, %v7124
        %v7189 = vadd.f32 %v6187, %v7125
        %v7190 = vadd.f32 %v6188, %v7126
        %v7191 = vadd.f32 %v6189, %v7127
        %v7192 = vadd.f32 %v6190, %v7128
        %v7193 = vadd.f32 %v6191, %v7129
        %v7194 = vadd.f32 %v6192, %v7130
        %v7195 = vadd.f32 %v6193, %v7131
        %v7196 = vadd.f32 %v6194, %v7132
        %v7197 = vadd.f32 %v6195, %v7133
        %v7198 = vadd.f32 %v6196, %v7134
        %v7199 = vadd.f32 %v6197, %v7135
        %v7200 = vadd.f32 %v6198, %v7136
        %v7201 = vadd.f32 %v6199, %v7137
        %v7202 = vadd.f32 %v6200, %v7138
        %v7203 = vadd.f32 %v6201, %v7139
        %v7204 = vadd.f32 %v6202, %v7140
        %v7205 = vadd.f32 %v6203, %v7141
        %v7206 = vadd.f32 %v6204, %v7142
        %v7207 = vadd.f32 %v6205, %v7143
        %v7208 = vadd.f32 %v6206, %v7144
        %v7209 = vadd.f32 %v6207, %v7145
        %v7210 = vadd.f32 %v6208, %v7146
        %v7211 = vadd.f32 %v6209, %v7147
        %v7212 = vadd.f32 %v6210, %v7148
        %v7213 = vadd.f32 %v6211, %v7149
        %v7214 = vadd.f32 %v6212, %v7150
        %v7215 = vadd.f32 %v6213, %v7151
        %v7216 = vadd.f32 %v6214, %v7152
        %v7217 = vadd.f32 %v6215, %v7153
        %v7218 = vadd.f32 %v6216, %v7154
        %v7219 = vadd.f32 %v6217, %v7155
        %v7220 = vadd.f32 %v6218, %v7156
        %v7221 = vadd.f32 %v6219, %v7157
        %v7222 = vadd.f32 %v6220, %v7158
        %v7223 = vadd.f32 %v6221, %v7159
        %v7224 = vadd.f32 %v6222, %v7160
        %v7225 = vadd.f32 %v6223, %v7161
        %v7226 = vadd.f32 %v6224, %v7162
        %v7227 = vadd.f32 %v6225, %v7163
        %v7228 = vadd.f32 %v6226, %v7164
        %v7229 = vadd.f32 %v6227, %v7165
        %v7230 = vadd.f32 %v6228, %v7166
        %v7231 = vadd.f32 %v6229, %v7167
        %v7232 = vadd.f32 %v6230, %v7168
        %v7233 = vadd.f32 %v6231, %v7169
        %v7234 = vadd.f32 %v6232, %v7170
        %v7235 = vadd.f32 %v6233, %v7171
        %v7236 = vadd.f32 %v6234, %v7172
        %v7237 = vadd.f32 %v6235, %v7173
        %v7238 = vadd.f32 %v6236, %v7174
        %v7239 = vadd.f32 %v6237, %v7175
        %v7240 = vadd.f32 %v6238, %v7176
        %v7241 = vadd.f32 %v6239, %v7177
        %v7242 = vadd.f32 %v6240, %v7178
        %v7243 = vadd.f32 %v6241, %v7179
        %v7244 = vadd.f32 %v6242, %v7180
        %v7245 = vadd.f32 %v6243, %v7181
        %v7246 = vadd.f32 %v6244, %v7182
        %v7247 = vadd.f32 %v6245, %v7183
        %v7248 = vadd.f32 %v6246, %v7184
        %s7249 = scalar_lea.vmem [#allocation11], 896
        %v7250 = vld [vmem:[%s7249] sm:$0xff]
        %v7251 = vld [vmem:[%s7249 + $0x8] sm:$0xff]
        %v7252 = vld [vmem:[%s7249 + $0x10] sm:$0xff]
        %v7253 = vld [vmem:[%s7249 + $0x18] sm:$0xff]
        %v7254 = vld [vmem:[%s7249 + $0x20] sm:$0xff]
        %v7255 = vld [vmem:[%s7249 + $0x28] sm:$0xff]
        %v7256 = vld [vmem:[%s7249 + $0x30] sm:$0xff]
        %v7257 = vld [vmem:[%s7249 + $0x38] sm:$0xff]
        %v7258 = vld [vmem:[%s7249 + $0x40] sm:$0xff]
        %v7259 = vld [vmem:[%s7249 + $0x48] sm:$0xff]
        %v7260 = vld [vmem:[%s7249 + $0x50] sm:$0xff]
        %v7261 = vld [vmem:[%s7249 + $0x58] sm:$0xff]
        %v7262 = vld [vmem:[%s7249 + $0x60] sm:$0xff]
        %v7263 = vld [vmem:[%s7249 + $0x68] sm:$0xff]
        %v7264 = vld [vmem:[%s7249 + $0x70] sm:$0xff]
        %v7265 = vld [vmem:[%s7249 + $0x78] sm:$0xff]
        %v7267 = vsel %vm723, %v7251, 0
        %v7270 = vsel %vm723, %v7253, 0
        %v7273 = vsel %vm723, %v7255, 0
        %v7276 = vsel %vm723, %v7257, 0
        %v7279 = vsel %vm723, %v7259, 0
        %v7282 = vsel %vm723, %v7261, 0
        %v7285 = vsel %vm723, %v7263, 0
        %v7288 = vsel %vm723, %v7265, 0
        %7290 = vmatprep.subr.mxu0 %v499
        %7291 = vmatpush1.msra.mxu0 %v498
        %7292 = vmatprep.subr.mxu0 %v507
        %7293 = vmatpush1.msra.mxu0 %v506
        %7294 = vmatprep.subr.mxu0 %v515
        %7295 = vmatpush1.msra.mxu0 %v514
        %7296 = vmatprep.subr.mxu0 %v523
        %7297 = vmatpush1.msra.mxu0 %v522
        %7298 = vmatprep.subr.mxu0 %v531
        %7299 = vmatpush1.msra.mxu0 %v530
        %7300 = vmatprep.subr.mxu0 %v539
        %7301 = vmatpush1.msra.mxu0 %v538
        %7302 = vmatprep.subr.mxu0 %v547
        %7303 = vmatpush1.msra.mxu0 %v546
        %7304 = vmatprep.subr.mxu0 %v555
        %7305 = vmatpush1.msra.mxu0 %v554
        %7306 = vmatprep.subr.mxu0 %v563
        %7307 = vmatpush1.msra.mxu0 %v562
        %7308 = vmatprep.subr.mxu0 %v571
        %7309 = vmatpush1.msra.mxu0 %v570
        %7310 = vmatprep.subr.mxu0 %v579
        %7311 = vmatpush1.msra.mxu0 %v578
        %7312 = vmatprep.subr.mxu0 %v587
        %7313 = vmatpush1.msra.mxu0 %v586
        %7314 = vmatprep.subr.mxu0 %v595
        %7315 = vmatpush1.msra.mxu0 %v594
        %7316 = vmatprep.subr.mxu0 %v603
        %7317 = vmatpush1.msra.mxu0 %v602
        %7318 = vmatprep.subr.mxu0 %v611
        %7319 = vmatpush1.msra.mxu0 %v610
        %7320 = vmatprep.subr.mxu0 %v619
        %7321 = vmatpush1.msra.mxu0 %v618
        %7322 = vmatprep.subr.mxu0 %v627
        %7323 = vmatpush1.msra.mxu0 %v626
        %7324 = vmatprep.subr.mxu0 %v635
        %7325 = vmatpush1.msra.mxu0 %v634
        %7326 = vmatprep.subr.mxu0 %v643
        %7327 = vmatpush1.msra.mxu0 %v642
        %7328 = vmatprep.subr.mxu0 %v651
        %7329 = vmatpush1.msra.mxu0 %v650
        %7330 = vmatprep.subr.mxu0 0.0
        %7331 = vmatpush1.msra.mxu0 0.0
        %7332 = vmatprep.subr.mxu0 0.0
        %7333 = vmatpush1.msra.mxu0 0.0
        %7334 = vmatprep.subr.mxu0 0.0
        %7335 = vmatpush1.msra.mxu0 0.0
        %7336 = vmatprep.subr.mxu0 0.0
        %7337 = vmatpush1.msra.mxu0 0.0
        %7338 = vmatprep.subr.mxu0 0.0
        %7339 = vmatpush1.msra.mxu0 0.0
        %7340 = vmatprep.subr.mxu0 0.0
        %7341 = vmatpush1.msra.mxu0 0.0
        %7342 = vmatprep.subr.mxu0 0.0
        %7343 = vmatpush1.msra.mxu0 0.0
        %7344 = vmatprep.subr.mxu0 0.0
        %7345 = vmatpush1.msra.mxu0 0.0
        %7346 = vmatprep.subr.mxu0 0.0
        %7347 = vmatpush1.msra.mxu0 0.0
        %7348 = vmatprep.subr.mxu0 0.0
        %7349 = vmatpush1.msra.mxu0 0.0
        %7350 = vmatprep.subr.mxu0 0.0
        %7351 = vmatpush1.msra.mxu0 0.0
        %7352 = vmatprep.subr.mxu0 0.0
        %7353 = vmatpush1.msra.mxu0 0.0
        %7354 = vmatprep.mubr.f32.mxu0 %v7267
        %7355 = vmatmul.mubr.f32.gmra.mrb[0].mxu0 %v7250
        %v7356 = vpop.f32.mrb[0].mxu0
        %v7357 = vadd.f32 0.0, %v7356
        %v7358 = vpop.f32.mrb[0].mxu0
        %v7359 = vadd.f32 0.0, %v7358
        %7360 = vmatprep.mubr.f32.mxu0 %v7270
        %7361 = vmatmul.mubr.f32.gmra.mrb[0].mxu0 %v7252
        %v7362 = vpop.f32.mrb[0].mxu0
        %v7363 = vadd.f32 0.0, %v7362
        %v7364 = vpop.f32.mrb[0].mxu0
        %v7365 = vadd.f32 0.0, %v7364
        %7366 = vmatprep.mubr.f32.mxu0 %v7273
        %7367 = vmatmul.mubr.f32.gmra.mrb[0].mxu0 %v7254
        %v7368 = vpop.f32.mrb[0].mxu0
        %v7369 = vadd.f32 0.0, %v7368
        %v7370 = vpop.f32.mrb[0].mxu0
        %v7371 = vadd.f32 0.0, %v7370
        %7372 = vmatprep.mubr.f32.mxu0 %v7276
        %7373 = vmatmul.mubr.f32.gmra.mrb[0].mxu0 %v7256
        %v7374 = vpop.f32.mrb[0].mxu0
        %v7375 = vadd.f32 0.0, %v7374
        %v7376 = vpop.f32.mrb[0].mxu0
        %v7377 = vadd.f32 0.0, %v7376
        %7378 = vmatprep.mubr.f32.mxu0 %v7279
        %7379 = vmatmul.mubr.f32.gmra.mrb[0].mxu0 %v7258
        %v7380 = vpop.f32.mrb[0].mxu0
        %v7381 = vadd.f32 0.0, %v7380
        %v7382 = vpop.f32.mrb[0].mxu0
        %v7383 = vadd.f32 0.0, %v7382
        %7384 = vmatprep.mubr.f32.mxu0 %v7282
        %7385 = vmatmul.mubr.f32.gmra.mrb[0].mxu0 %v7260
        %v7386 = vpop.f32.mrb[0].mxu0
        %v7387 = vadd.f32 0.0, %v7386
        %v7388 = vpop.f32.mrb[0].mxu0
        %v7389 = vadd.f32 0.0, %v7388
        %7390 = vmatprep.mubr.f32.mxu0 %v7285
        %7391 = vmatmul.mubr.f32.gmra.mrb[0].mxu0 %v7262
        %v7392 = vpop.f32.mrb[0].mxu0
        %v7393 = vadd.f32 0.0, %v7392
        %v7394 = vpop.f32.mrb[0].mxu0
        %v7395 = vadd.f32 0.0, %v7394
        %7396 = vmatprep.mubr.f32.mxu0 %v7288
        %7397 = vmatmul.mubr.f32.gmra.mrb[0].mxu0 %v7264
        %v7398 = vpop.f32.mrb[0].mxu0
        %v7399 = vadd.f32 0.0, %v7398
        %v7400 = vpop.f32.mrb[0].mxu0
        %v7401 = vadd.f32 0.0, %v7400
        %7402 = vdwg.mxu0
        %7403 = vmatprep.subr.mxu0 %v501
        %7404 = vmatpush1.msra.mxu0 %v500
        %7405 = vmatprep.subr.mxu0 %v509
        %7406 = vmatpush1.msra.mxu0 %v508
        %7407 = vmatprep.subr.mxu0 %v517
        %7408 = vmatpush1.msra.mxu0 %v516
        %7409 = vmatprep.subr.mxu0 %v525
        %7410 = vmatpush1.msra.mxu0 %v524
        %7411 = vmatprep.subr.mxu0 %v533
        %7412 = vmatpush1.msra.mxu0 %v532
        %7413 = vmatprep.subr.mxu0 %v541
        %7414 = vmatpush1.msra.mxu0 %v540
        %7415 = vmatprep.subr.mxu0 %v549
        %7416 = vmatpush1.msra.mxu0 %v548
        %7417 = vmatprep.subr.mxu0 %v557
        %7418 = vmatpush1.msra.mxu0 %v556
        %7419 = vmatprep.subr.mxu0 %v565
        %7420 = vmatpush1.msra.mxu0 %v564
        %7421 = vmatprep.subr.mxu0 %v573
        %7422 = vmatpush1.msra.mxu0 %v572
        %7423 = vmatprep.subr.mxu0 %v581
        %7424 = vmatpush1.msra.mxu0 %v580
        %7425 = vmatprep.subr.mxu0 %v589
        %7426 = vmatpush1.msra.mxu0 %v588
        %7427 = vmatprep.subr.mxu0 %v597
        %7428 = vmatpush1.msra.mxu0 %v596
        %7429 = vmatprep.subr.mxu0 %v605
        %7430 = vmatpush1.msra.mxu0 %v604
        %7431 = vmatprep.subr.mxu0 %v613
        %7432 = vmatpush1.msra.mxu0 %v612
        %7433 = vmatprep.subr.mxu0 %v621
        %7434 = vmatpush1.msra.mxu0 %v620
        %7435 = vmatprep.subr.mxu0 %v629
        %7436 = vmatpush1.msra.mxu0 %v628
        %7437 = vmatprep.subr.mxu0 %v637
        %7438 = vmatpush1.msra.mxu0 %v636
        %7439 = vmatprep.subr.mxu0 %v645
        %7440 = vmatpush1.msra.mxu0 %v644
        %7441 = vmatprep.subr.mxu0 %v653
        %7442 = vmatpush1.msra.mxu0 %v652
        %7443 = vmatprep.subr.mxu0 0.0
        %7444 = vmatpush1.msra.mxu0 0.0
        %7445 = vmatprep.subr.mxu0 0.0
        %7446 = vmatpush1.msra.mxu0 0.0
        %7447 = vmatprep.subr.mxu0 0.0
        %7448 = vmatpush1.msra.mxu0 0.0
        %7449 = vmatprep.subr.mxu0 0.0
        %7450 = vmatpush1.msra.mxu0 0.0
        %7451 = vmatprep.subr.mxu0 0.0
        %7452 = vmatpush1.msra.mxu0 0.0
        %7453 = vmatprep.subr.mxu0 0.0
        %7454 = vmatpush1.msra.mxu0 0.0
        %7455 = vmatprep.subr.mxu0 0.0
        %7456 = vmatpush1.msra.mxu0 0.0
        %7457 = vmatprep.subr.mxu0 0.0
        %7458 = vmatpush1.msra.mxu0 0.0
        %7459 = vmatprep.subr.mxu0 0.0
        %7460 = vmatpush1.msra.mxu0 0.0
        %7461 = vmatprep.subr.mxu0 0.0
        %7462 = vmatpush1.msra.mxu0 0.0
        %7463 = vmatprep.subr.mxu0 0.0
        %7464 = vmatpush1.msra.mxu0 0.0
        %7465 = vmatprep.subr.mxu0 0.0
        %7466 = vmatpush1.msra.mxu0 0.0
        %7467 = vmatprep.mubr.f32.mxu0 %v7267
        %7468 = vmatmul.mubr.f32.gmra.mrb[0].mxu0 %v7250
        %v7469 = vpop.f32.mrb[0].mxu0
        %v7470 = vadd.f32 0.0, %v7469
        %v7471 = vpop.f32.mrb[0].mxu0
        %v7472 = vadd.f32 0.0, %v7471
        %7473 = vmatprep.mubr.f32.mxu0 %v7270
        %7474 = vmatmul.mubr.f32.gmra.mrb[0].mxu0 %v7252
        %v7475 = vpop.f32.mrb[0].mxu0
        %v7476 = vadd.f32 0.0, %v7475
        %v7477 = vpop.f32.mrb[0].mxu0
        %v7478 = vadd.f32 0.0, %v7477
        %7479 = vmatprep.mubr.f32.mxu0 %v7273
        %7480 = vmatmul.mubr.f32.gmra.mrb[0].mxu0 %v7254
        %v7481 = vpop.f32.mrb[0].mxu0
        %v7482 = vadd.f32 0.0, %v7481
        %v7483 = vpop.f32.mrb[0].mxu0
        %v7484 = vadd.f32 0.0, %v7483
        %7485 = vmatprep.mubr.f32.mxu0 %v7276
        %7486 = vmatmul.mubr.f32.gmra.mrb[0].mxu0 %v7256
        %v7487 = vpop.f32.mrb[0].mxu0
        %v7488 = vadd.f32 0.0, %v7487
        %v7489 = vpop.f32.mrb[0].mxu0
        %v7490 = vadd.f32 0.0, %v7489
        %7491 = vmatprep.mubr.f32.mxu0 %v7279
        %7492 = vmatmul.mubr.f32.gmra.mrb[0].mxu0 %v7258
        %v7493 = vpop.f32.mrb[0].mxu0
        %v7494 = vadd.f32 0.0, %v7493
        %v7495 = vpop.f32.mrb[0].mxu0
        %v7496 = vadd.f32 0.0, %v7495
        %7497 = vmatprep.mubr.f32.mxu0 %v7282
        %7498 = vmatmul.mubr.f32.gmra.mrb[0].mxu0 %v7260
        %v7499 = vpop.f32.mrb[0].mxu0
        %v7500 = vadd.f32 0.0, %v7499
        %v7501 = vpop.f32.mrb[0].mxu0
        %v7502 = vadd.f32 0.0, %v7501
        %7503 = vmatprep.mubr.f32.mxu0 %v7285
        %7504 = vmatmul.mubr.f32.gmra.mrb[0].mxu0 %v7262
        %v7505 = vpop.f32.mrb[0].mxu0
        %v7506 = vadd.f32 0.0, %v7505
        %v7507 = vpop.f32.mrb[0].mxu0
        %v7508 = vadd.f32 0.0, %v7507
        %7509 = vmatprep.mubr.f32.mxu0 %v7288
        %7510 = vmatmul.mubr.f32.gmra.mrb[0].mxu0 %v7264
        %v7511 = vpop.f32.mrb[0].mxu0
        %v7512 = vadd.f32 0.0, %v7511
        %v7513 = vpop.f32.mrb[0].mxu0
        %v7514 = vadd.f32 0.0, %v7513
        %7515 = vdwg.mxu0
        %7516 = vmatprep.subr.mxu0 %v503
        %7517 = vmatpush1.msra.mxu0 %v502
        %7518 = vmatprep.subr.mxu0 %v511
        %7519 = vmatpush1.msra.mxu0 %v510
        %7520 = vmatprep.subr.mxu0 %v519
        %7521 = vmatpush1.msra.mxu0 %v518
        %7522 = vmatprep.subr.mxu0 %v527
        %7523 = vmatpush1.msra.mxu0 %v526
        %7524 = vmatprep.subr.mxu0 %v535
        %7525 = vmatpush1.msra.mxu0 %v534
        %7526 = vmatprep.subr.mxu0 %v543
        %7527 = vmatpush1.msra.mxu0 %v542
        %7528 = vmatprep.subr.mxu0 %v551
        %7529 = vmatpush1.msra.mxu0 %v550
        %7530 = vmatprep.subr.mxu0 %v559
        %7531 = vmatpush1.msra.mxu0 %v558
        %7532 = vmatprep.subr.mxu0 %v567
        %7533 = vmatpush1.msra.mxu0 %v566
        %7534 = vmatprep.subr.mxu0 %v575
        %7535 = vmatpush1.msra.mxu0 %v574
        %7536 = vmatprep.subr.mxu0 %v583
        %7537 = vmatpush1.msra.mxu0 %v582
        %7538 = vmatprep.subr.mxu0 %v591
        %7539 = vmatpush1.msra.mxu0 %v590
        %7540 = vmatprep.subr.mxu0 %v599
        %7541 = vmatpush1.msra.mxu0 %v598
        %7542 = vmatprep.subr.mxu0 %v607
        %7543 = vmatpush1.msra.mxu0 %v606
        %7544 = vmatprep.subr.mxu0 %v615
        %7545 = vmatpush1.msra.mxu0 %v614
        %7546 = vmatprep.subr.mxu0 %v623
        %7547 = vmatpush1.msra.mxu0 %v622
        %7548 = vmatprep.subr.mxu0 %v631
        %7549 = vmatpush1.msra.mxu0 %v630
        %7550 = vmatprep.subr.mxu0 %v639
        %7551 = vmatpush1.msra.mxu0 %v638
        %7552 = vmatprep.subr.mxu0 %v647
        %7553 = vmatpush1.msra.mxu0 %v646
        %7554 = vmatprep.subr.mxu0 %v655
        %7555 = vmatpush1.msra.mxu0 %v654
        %7556 = vmatprep.subr.mxu0 0.0
        %7557 = vmatpush1.msra.mxu0 0.0
        %7558 = vmatprep.subr.mxu0 0.0
        %7559 = vmatpush1.msra.mxu0 0.0
        %7560 = vmatprep.subr.mxu0 0.0
        %7561 = vmatpush1.msra.mxu0 0.0
        %7562 = vmatprep.subr.mxu0 0.0
        %7563 = vmatpush1.msra.mxu0 0.0
        %7564 = vmatprep.subr.mxu0 0.0
        %7565 = vmatpush1.msra.mxu0 0.0
        %7566 = vmatprep.subr.mxu0 0.0
        %7567 = vmatpush1.msra.mxu0 0.0
        %7568 = vmatprep.subr.mxu0 0.0
        %7569 = vmatpush1.msra.mxu0 0.0
        %7570 = vmatprep.subr.mxu0 0.0
        %7571 = vmatpush1.msra.mxu0 0.0
        %7572 = vmatprep.subr.mxu0 0.0
        %7573 = vmatpush1.msra.mxu0 0.0
        %7574 = vmatprep.subr.mxu0 0.0
        %7575 = vmatpush1.msra.mxu0 0.0
        %7576 = vmatprep.subr.mxu0 0.0
        %7577 = vmatpush1.msra.mxu0 0.0
        %7578 = vmatprep.subr.mxu0 0.0
        %7579 = vmatpush1.msra.mxu0 0.0
        %7580 = vmatprep.mubr.f32.mxu0 %v7267
        %7581 = vmatmul.mubr.f32.gmra.mrb[0].mxu0 %v7250
        %v7582 = vpop.f32.mrb[0].mxu0
        %v7583 = vadd.f32 0.0, %v7582
        %v7584 = vpop.f32.mrb[0].mxu0
        %v7585 = vadd.f32 0.0, %v7584
        %7586 = vmatprep.mubr.f32.mxu0 %v7270
        %7587 = vmatmul.mubr.f32.gmra.mrb[0].mxu0 %v7252
        %v7588 = vpop.f32.mrb[0].mxu0
        %v7589 = vadd.f32 0.0, %v7588
        %v7590 = vpop.f32.mrb[0].mxu0
        %v7591 = vadd.f32 0.0, %v7590
        %7592 = vmatprep.mubr.f32.mxu0 %v7273
        %7593 = vmatmul.mubr.f32.gmra.mrb[0].mxu0 %v7254
        %v7594 = vpop.f32.mrb[0].mxu0
        %v7595 = vadd.f32 0.0, %v7594
        %v7596 = vpop.f32.mrb[0].mxu0
        %v7597 = vadd.f32 0.0, %v7596
        %7598 = vmatprep.mubr.f32.mxu0 %v7276
        %7599 = vmatmul.mubr.f32.gmra.mrb[0].mxu0 %v7256
        %v7600 = vpop.f32.mrb[0].mxu0
        %v7601 = vadd.f32 0.0, %v7600
        %v7602 = vpop.f32.mrb[0].mxu0
        %v7603 = vadd.f32 0.0, %v7602
        %7604 = vmatprep.mubr.f32.mxu0 %v7279
        %7605 = vmatmul.mubr.f32.gmra.mrb[0].mxu0 %v7258
        %v7606 = vpop.f32.mrb[0].mxu0
        %v7607 = vadd.f32 0.0, %v7606
        %v7608 = vpop.f32.mrb[0].mxu0
        %v7609 = vadd.f32 0.0, %v7608
        %7610 = vmatprep.mubr.f32.mxu0 %v7282
        %7611 = vmatmul.mubr.f32.gmra.mrb[0].mxu0 %v7260
        %v7612 = vpop.f32.mrb[0].mxu0
        %v7613 = vadd.f32 0.0, %v7612
        %v7614 = vpop.f32.mrb[0].mxu0
        %v7615 = vadd.f32 0.0, %v7614
        %7616 = vmatprep.mubr.f32.mxu0 %v7285
        %7617 = vmatmul.mubr.f32.gmra.mrb[0].mxu0 %v7262
        %v7618 = vpop.f32.mrb[0].mxu0
        %v7619 = vadd.f32 0.0, %v7618
        %v7620 = vpop.f32.mrb[0].mxu0
        %v7621 = vadd.f32 0.0, %v7620
        %7622 = vmatprep.mubr.f32.mxu0 %v7288
        %7623 = vmatmul.mubr.f32.gmra.mrb[0].mxu0 %v7264
        %v7624 = vpop.f32.mrb[0].mxu0
        %v7625 = vadd.f32 0.0, %v7624
        %v7626 = vpop.f32.mrb[0].mxu0
        %v7627 = vadd.f32 0.0, %v7626
        %7628 = vdwg.mxu0
        %7629 = vmatprep.subr.mxu0 %v505
        %7630 = vmatpush1.msra.mxu0 %v504
        %7631 = vmatprep.subr.mxu0 %v513
        %7632 = vmatpush1.msra.mxu0 %v512
        %7633 = vmatprep.subr.mxu0 %v521
        %7634 = vmatpush1.msra.mxu0 %v520
        %7635 = vmatprep.subr.mxu0 %v529
        %7636 = vmatpush1.msra.mxu0 %v528
        %7637 = vmatprep.subr.mxu0 %v537
        %7638 = vmatpush1.msra.mxu0 %v536
        %7639 = vmatprep.subr.mxu0 %v545
        %7640 = vmatpush1.msra.mxu0 %v544
        %7641 = vmatprep.subr.mxu0 %v553
        %7642 = vmatpush1.msra.mxu0 %v552
        %7643 = vmatprep.subr.mxu0 %v561
        %7644 = vmatpush1.msra.mxu0 %v560
        %7645 = vmatprep.subr.mxu0 %v569
        %7646 = vmatpush1.msra.mxu0 %v568
        %7647 = vmatprep.subr.mxu0 %v577
        %7648 = vmatpush1.msra.mxu0 %v576
        %7649 = vmatprep.subr.mxu0 %v585
        %7650 = vmatpush1.msra.mxu0 %v584
        %7651 = vmatprep.subr.mxu0 %v593
        %7652 = vmatpush1.msra.mxu0 %v592
        %7653 = vmatprep.subr.mxu0 %v601
        %7654 = vmatpush1.msra.mxu0 %v600
        %7655 = vmatprep.subr.mxu0 %v609
        %7656 = vmatpush1.msra.mxu0 %v608
        %7657 = vmatprep.subr.mxu0 %v617
        %7658 = vmatpush1.msra.mxu0 %v616
        %7659 = vmatprep.subr.mxu0 %v625
        %7660 = vmatpush1.msra.mxu0 %v624
        %7661 = vmatprep.subr.mxu0 %v633
        %7662 = vmatpush1.msra.mxu0 %v632
        %7663 = vmatprep.subr.mxu0 %v641
        %7664 = vmatpush1.msra.mxu0 %v640
        %7665 = vmatprep.subr.mxu0 %v649
        %7666 = vmatpush1.msra.mxu0 %v648
        %7667 = vmatprep.subr.mxu0 %v657
        %7668 = vmatpush1.msra.mxu0 %v656
        %7669 = vmatprep.subr.mxu0 0.0
        %7670 = vmatpush1.msra.mxu0 0.0
        %7671 = vmatprep.subr.mxu0 0.0
        %7672 = vmatpush1.msra.mxu0 0.0
        %7673 = vmatprep.subr.mxu0 0.0
        %7674 = vmatpush1.msra.mxu0 0.0
        %7675 = vmatprep.subr.mxu0 0.0
        %7676 = vmatpush1.msra.mxu0 0.0
        %7677 = vmatprep.subr.mxu0 0.0
        %7678 = vmatpush1.msra.mxu0 0.0
        %7679 = vmatprep.subr.mxu0 0.0
        %7680 = vmatpush1.msra.mxu0 0.0
        %7681 = vmatprep.subr.mxu0 0.0
        %7682 = vmatpush1.msra.mxu0 0.0
        %7683 = vmatprep.subr.mxu0 0.0
        %7684 = vmatpush1.msra.mxu0 0.0
        %7685 = vmatprep.subr.mxu0 0.0
        %7686 = vmatpush1.msra.mxu0 0.0
        %7687 = vmatprep.subr.mxu0 0.0
        %7688 = vmatpush1.msra.mxu0 0.0
        %7689 = vmatprep.subr.mxu0 0.0
        %7690 = vmatpush1.msra.mxu0 0.0
        %7691 = vmatprep.subr.mxu0 0.0
        %7692 = vmatpush1.msra.mxu0 0.0
        %7693 = vmatprep.mubr.f32.mxu0 %v7267
        %7694 = vmatmul.mubr.f32.gmra.mrb[0].mxu0 %v7250
        %v7695 = vpop.f32.mrb[0].mxu0
        %v7696 = vadd.f32 0.0, %v7695
        %v7697 = vpop.f32.mrb[0].mxu0
        %v7698 = vadd.f32 0.0, %v7697
        %7699 = vmatprep.mubr.f32.mxu0 %v7270
        %7700 = vmatmul.mubr.f32.gmra.mrb[0].mxu0 %v7252
        %v7701 = vpop.f32.mrb[0].mxu0
        %v7702 = vadd.f32 0.0, %v7701
        %v7703 = vpop.f32.mrb[0].mxu0
        %v7704 = vadd.f32 0.0, %v7703
        %7705 = vmatprep.mubr.f32.mxu0 %v7273
        %7706 = vmatmul.mubr.f32.gmra.mrb[0].mxu0 %v7254
        %v7707 = vpop.f32.mrb[0].mxu0
        %v7708 = vadd.f32 0.0, %v7707
        %v7709 = vpop.f32.mrb[0].mxu0
        %v7710 = vadd.f32 0.0, %v7709
        %7711 = vmatprep.mubr.f32.mxu0 %v7276
        %7712 = vmatmul.mubr.f32.gmra.mrb[0].mxu0 %v7256
        %v7713 = vpop.f32.mrb[0].mxu0
        %v7714 = vadd.f32 0.0, %v7713
        %v7715 = vpop.f32.mrb[0].mxu0
        %v7716 = vadd.f32 0.0, %v7715
        %7717 = vmatprep.mubr.f32.mxu0 %v7279
        %7718 = vmatmul.mubr.f32.gmra.mrb[0].mxu0 %v7258
        %v7719 = vpop.f32.mrb[0].mxu0
        %v7720 = vadd.f32 0.0, %v7719
        %v7721 = vpop.f32.mrb[0].mxu0
        %v7722 = vadd.f32 0.0, %v7721
        %7723 = vmatprep.mubr.f32.mxu0 %v7282
        %7724 = vmatmul.mubr.f32.gmra.mrb[0].mxu0 %v7260
        %v7725 = vpop.f32.mrb[0].mxu0
        %v7726 = vadd.f32 0.0, %v7725
        %v7727 = vpop.f32.mrb[0].mxu0
        %v7728 = vadd.f32 0.0, %v7727
        %7729 = vmatprep.mubr.f32.mxu0 %v7285
        %7730 = vmatmul.mubr.f32.gmra.mrb[0].mxu0 %v7262
        %v7731 = vpop.f32.mrb[0].mxu0
        %v7732 = vadd.f32 0.0, %v7731
        %v7733 = vpop.f32.mrb[0].mxu0
        %v7734 = vadd.f32 0.0, %v7733
        %7735 = vmatprep.mubr.f32.mxu0 %v7288
        %7736 = vmatmul.mubr.f32.gmra.mrb[0].mxu0 %v7264
        %v7737 = vpop.f32.mrb[0].mxu0
        %v7738 = vadd.f32 0.0, %v7737
        %v7739 = vpop.f32.mrb[0].mxu0
        %v7740 = vadd.f32 0.0, %v7739
        %7741 = vdwg.mxu0
        %7806 = vrot.lane.b32.xlu0 %v7357, 98
        %v7807 = vpop.permute.xlu0 %7806
        %7808 = vrot.lane.b32.xlu0 %v7359, 98
        %v7809 = vpop.permute.xlu0 %7808
        %7810 = vrot.lane.b32.xlu0 %v7470, 98
        %v7811 = vpop.permute.xlu0 %7810
        %7812 = vrot.lane.b32.xlu0 %v7472, 98
        %v7813 = vpop.permute.xlu0 %7812
        %7814 = vrot.lane.b32.xlu0 %v7583, 98
        %v7815 = vpop.permute.xlu0 %7814
        %7816 = vrot.lane.b32.xlu0 %v7585, 98
        %v7817 = vpop.permute.xlu0 %7816
        %7818 = vrot.lane.b32.xlu0 %v7696, 98
        %v7819 = vpop.permute.xlu0 %7818
        %7820 = vrot.lane.b32.xlu0 %v7698, 98
        %v7821 = vpop.permute.xlu0 %7820
        %7822 = vrot.lane.b32.xlu0 %v7363, 98
        %v7823 = vpop.permute.xlu0 %7822
        %7824 = vrot.lane.b32.xlu0 %v7365, 98
        %v7825 = vpop.permute.xlu0 %7824
        %7826 = vrot.lane.b32.xlu0 %v7476, 98
        %v7827 = vpop.permute.xlu0 %7826
        %7828 = vrot.lane.b32.xlu0 %v7478, 98
        %v7829 = vpop.permute.xlu0 %7828
        %7830 = vrot.lane.b32.xlu0 %v7589, 98
        %v7831 = vpop.permute.xlu0 %7830
        %7832 = vrot.lane.b32.xlu0 %v7591, 98
        %v7833 = vpop.permute.xlu0 %7832
        %7834 = vrot.lane.b32.xlu0 %v7702, 98
        %v7835 = vpop.permute.xlu0 %7834
        %7836 = vrot.lane.b32.xlu0 %v7704, 98
        %v7837 = vpop.permute.xlu0 %7836
        %7838 = vrot.lane.b32.xlu0 %v7369, 98
        %v7839 = vpop.permute.xlu0 %7838
        %7840 = vrot.lane.b32.xlu0 %v7371, 98
        %v7841 = vpop.permute.xlu0 %7840
        %7842 = vrot.lane.b32.xlu0 %v7482, 98
        %v7843 = vpop.permute.xlu0 %7842
        %7844 = vrot.lane.b32.xlu0 %v7484, 98
        %v7845 = vpop.permute.xlu0 %7844
        %7846 = vrot.lane.b32.xlu0 %v7595, 98
        %v7847 = vpop.permute.xlu0 %7846
        %7848 = vrot.lane.b32.xlu0 %v7597, 98
        %v7849 = vpop.permute.xlu0 %7848
        %7850 = vrot.lane.b32.xlu0 %v7708, 98
        %v7851 = vpop.permute.xlu0 %7850
        %7852 = vrot.lane.b32.xlu0 %v7710, 98
        %v7853 = vpop.permute.xlu0 %7852
        %7854 = vrot.lane.b32.xlu0 %v7375, 98
        %v7855 = vpop.permute.xlu0 %7854
        %7856 = vrot.lane.b32.xlu0 %v7377, 98
        %v7857 = vpop.permute.xlu0 %7856
        %7858 = vrot.lane.b32.xlu0 %v7488, 98
        %v7859 = vpop.permute.xlu0 %7858
        %7860 = vrot.lane.b32.xlu0 %v7490, 98
        %v7861 = vpop.permute.xlu0 %7860
        %7862 = vrot.lane.b32.xlu0 %v7601, 98
        %v7863 = vpop.permute.xlu0 %7862
        %7864 = vrot.lane.b32.xlu0 %v7603, 98
        %v7865 = vpop.permute.xlu0 %7864
        %7866 = vrot.lane.b32.xlu0 %v7714, 98
        %v7867 = vpop.permute.xlu0 %7866
        %7868 = vrot.lane.b32.xlu0 %v7716, 98
        %v7869 = vpop.permute.xlu0 %7868
        %7870 = vrot.lane.b32.xlu0 %v7381, 98
        %v7871 = vpop.permute.xlu0 %7870
        %7872 = vrot.lane.b32.xlu0 %v7383, 98
        %v7873 = vpop.permute.xlu0 %7872
        %7874 = vrot.lane.b32.xlu0 %v7494, 98
        %v7875 = vpop.permute.xlu0 %7874
        %7876 = vrot.lane.b32.xlu0 %v7496, 98
        %v7877 = vpop.permute.xlu0 %7876
        %7878 = vrot.lane.b32.xlu0 %v7607, 98
        %v7879 = vpop.permute.xlu0 %7878
        %7880 = vrot.lane.b32.xlu0 %v7609, 98
        %v7881 = vpop.permute.xlu0 %7880
        %7882 = vrot.lane.b32.xlu0 %v7720, 98
        %v7883 = vpop.permute.xlu0 %7882
        %7884 = vrot.lane.b32.xlu0 %v7722, 98
        %v7885 = vpop.permute.xlu0 %7884
        %7886 = vrot.lane.b32.xlu0 %v7387, 98
        %v7887 = vpop.permute.xlu0 %7886
        %7888 = vrot.lane.b32.xlu0 %v7389, 98
        %v7889 = vpop.permute.xlu0 %7888
        %7890 = vrot.lane.b32.xlu0 %v7500, 98
        %v7891 = vpop.permute.xlu0 %7890
        %7892 = vrot.lane.b32.xlu0 %v7502, 98
        %v7893 = vpop.permute.xlu0 %7892
        %7894 = vrot.lane.b32.xlu0 %v7613, 98
        %v7895 = vpop.permute.xlu0 %7894
        %7896 = vrot.lane.b32.xlu0 %v7615, 98
        %v7897 = vpop.permute.xlu0 %7896
        %7898 = vrot.lane.b32.xlu0 %v7726, 98
        %v7899 = vpop.permute.xlu0 %7898
        %7900 = vrot.lane.b32.xlu0 %v7728, 98
        %v7901 = vpop.permute.xlu0 %7900
        %7902 = vrot.lane.b32.xlu0 %v7393, 98
        %v7903 = vpop.permute.xlu0 %7902
        %7904 = vrot.lane.b32.xlu0 %v7395, 98
        %v7905 = vpop.permute.xlu0 %7904
        %7906 = vrot.lane.b32.xlu0 %v7506, 98
        %v7907 = vpop.permute.xlu0 %7906
        %7908 = vrot.lane.b32.xlu0 %v7508, 98
        %v7909 = vpop.permute.xlu0 %7908
        %7910 = vrot.lane.b32.xlu0 %v7619, 98
        %v7911 = vpop.permute.xlu0 %7910
        %7912 = vrot.lane.b32.xlu0 %v7621, 98
        %v7913 = vpop.permute.xlu0 %7912
        %7914 = vrot.lane.b32.xlu0 %v7732, 98
        %v7915 = vpop.permute.xlu0 %7914
        %7916 = vrot.lane.b32.xlu0 %v7734, 98
        %v7917 = vpop.permute.xlu0 %7916
        %7918 = vrot.lane.b32.xlu0 %v7399, 98
        %v7919 = vpop.permute.xlu0 %7918
        %7920 = vrot.lane.b32.xlu0 %v7401, 98
        %v7921 = vpop.permute.xlu0 %7920
        %7922 = vrot.lane.b32.xlu0 %v7512, 98
        %v7923 = vpop.permute.xlu0 %7922
        %7924 = vrot.lane.b32.xlu0 %v7514, 98
        %v7925 = vpop.permute.xlu0 %7924
        %7926 = vrot.lane.b32.xlu0 %v7625, 98
        %v7927 = vpop.permute.xlu0 %7926
        %7928 = vrot.lane.b32.xlu0 %v7627, 98
        %v7929 = vpop.permute.xlu0 %7928
        %7930 = vrot.lane.b32.xlu0 %v7738, 98
        %v7931 = vpop.permute.xlu0 %7930
        %7932 = vrot.lane.b32.xlu0 %v7740, 98
        %v7933 = vpop.permute.xlu0 %7932
        %vm7934 = vcmask 801792
        %v7935 = vsel %vm7934, %v7807, %v7809
        %v7936 = vsel %vm7934, %v7809, %v7811
        %v7937 = vsel %vm7934, %v7811, %v7813
        %v7938 = vsel %vm7934, %v7813, %v7815
        %v7939 = vsel %vm7934, %v7815, %v7817
        %v7940 = vsel %vm7934, %v7817, %v7819
        %v7941 = vsel %vm7934, %v7819, %v7821
        %v7942 = vsel %vm7934, %v7823, %v7825
        %v7943 = vsel %vm7934, %v7825, %v7827
        %v7944 = vsel %vm7934, %v7827, %v7829
        %v7945 = vsel %vm7934, %v7829, %v7831
        %v7946 = vsel %vm7934, %v7831, %v7833
        %v7947 = vsel %vm7934, %v7833, %v7835
        %v7948 = vsel %vm7934, %v7835, %v7837
        %v7949 = vsel %vm7934, %v7839, %v7841
        %v7950 = vsel %vm7934, %v7841, %v7843
        %v7951 = vsel %vm7934, %v7843, %v7845
        %v7952 = vsel %vm7934, %v7845, %v7847
        %v7953 = vsel %vm7934, %v7847, %v7849
        %v7954 = vsel %vm7934, %v7849, %v7851
        %v7955 = vsel %vm7934, %v7851, %v7853
        %v7956 = vsel %vm7934, %v7855, %v7857
        %v7957 = vsel %vm7934, %v7857, %v7859
        %v7958 = vsel %vm7934, %v7859, %v7861
        %v7959 = vsel %vm7934, %v7861, %v7863
        %v7960 = vsel %vm7934, %v7863, %v7865
        %v7961 = vsel %vm7934, %v7865, %v7867
        %v7962 = vsel %vm7934, %v7867, %v7869
        %v7963 = vsel %vm7934, %v7871, %v7873
        %v7964 = vsel %vm7934, %v7873, %v7875
        %v7965 = vsel %vm7934, %v7875, %v7877
        %v7966 = vsel %vm7934, %v7877, %v7879
        %v7967 = vsel %vm7934, %v7879, %v7881
        %v7968 = vsel %vm7934, %v7881, %v7883
        %v7969 = vsel %vm7934, %v7883, %v7885
        %v7970 = vsel %vm7934, %v7887, %v7889
        %v7971 = vsel %vm7934, %v7889, %v7891
        %v7972 = vsel %vm7934, %v7891, %v7893
        %v7973 = vsel %vm7934, %v7893, %v7895
        %v7974 = vsel %vm7934, %v7895, %v7897
        %v7975 = vsel %vm7934, %v7897, %v7899
        %v7976 = vsel %vm7934, %v7899, %v7901
        %v7977 = vsel %vm7934, %v7903, %v7905
        %v7978 = vsel %vm7934, %v7905, %v7907
        %v7979 = vsel %vm7934, %v7907, %v7909
        %v7980 = vsel %vm7934, %v7909, %v7911
        %v7981 = vsel %vm7934, %v7911, %v7913
        %v7982 = vsel %vm7934, %v7913, %v7915
        %v7983 = vsel %vm7934, %v7915, %v7917
        %v7984 = vsel %vm7934, %v7919, %v7921
        %v7985 = vsel %vm7934, %v7921, %v7923
        %v7986 = vsel %vm7934, %v7923, %v7925
        %v7987 = vsel %vm7934, %v7925, %v7927
        %v7988 = vsel %vm7934, %v7927, %v7929
        %v7989 = vsel %vm7934, %v7929, %v7931
        %v7990 = vsel %vm7934, %v7931, %v7933
        %8047 = vrot.lane.b32.xlu0 %v7357, 102
        %v8048 = vpop.permute.xlu0 %8047
        %8049 = vrot.lane.b32.xlu0 %v7363, 102
        %v8050 = vpop.permute.xlu0 %8049
        %8051 = vrot.lane.b32.xlu0 %v7369, 102
        %v8052 = vpop.permute.xlu0 %8051
        %8053 = vrot.lane.b32.xlu0 %v7375, 102
        %v8054 = vpop.permute.xlu0 %8053
        %8055 = vrot.lane.b32.xlu0 %v7381, 102
        %v8056 = vpop.permute.xlu0 %8055
        %8057 = vrot.lane.b32.xlu0 %v7387, 102
        %v8058 = vpop.permute.xlu0 %8057
        %8059 = vrot.lane.b32.xlu0 %v7393, 102
        %v8060 = vpop.permute.xlu0 %8059
        %8061 = vrot.lane.b32.xlu0 %v7399, 102
        %v8062 = vpop.permute.xlu0 %8061
        %vm8071 = vcmask 834560
        %v8072 = vsel %vm8071, %v7941, %v8048
        %v8073 = vsel %vm8071, %v7948, %v8050
        %v8074 = vsel %vm8071, %v7955, %v8052
        %v8075 = vsel %vm8071, %v7962, %v8054
        %v8076 = vsel %vm8071, %v7969, %v8056
        %v8077 = vsel %vm8071, %v7976, %v8058
        %v8078 = vsel %vm8071, %v7983, %v8060
        %v8079 = vsel %vm8071, %v7990, %v8062
        %s8080 = scalar_lea.vmem %s8, 56
        %v8081 = vld [vmem:[%s8080] sm:$0xff]
        %v8083 = vlaneseq
        %v8084 = vshrl.u32 %v8083, 7
        %v8085 = vsub.s32 0, %v8084
        %v8086 = vrot.slane %v8081, %v8085
        %v8087 = vlaneseq
        %v8088 = vshrl.u32 %v8087, 7
        %v8089 = vsub.s32 1, %v8088
        %v8090 = vrot.slane %v8081, %v8089
        %v8091 = vlaneseq
        %v8092 = vshrl.u32 %v8091, 7
        %v8093 = vsub.s32 2, %v8092
        %v8094 = vrot.slane %v8081, %v8093
        %v8095 = vlaneseq
        %v8096 = vshrl.u32 %v8095, 7
        %v8097 = vsub.s32 3, %v8096
        %v8098 = vrot.slane %v8081, %v8097
        %v8099 = vlaneseq
        %v8100 = vshrl.u32 %v8099, 7
        %v8101 = vsub.s32 4, %v8100
        %v8102 = vrot.slane %v8081, %v8101
        %v8103 = vlaneseq
        %v8104 = vshrl.u32 %v8103, 7
        %v8105 = vsub.s32 5, %v8104
        %v8106 = vrot.slane %v8081, %v8105
        %v8107 = vlaneseq
        %v8108 = vshrl.u32 %v8107, 7
        %v8109 = vsub.s32 6, %v8108
        %v8110 = vrot.slane %v8081, %v8109
        %v8111 = vlaneseq
        %v8112 = vshrl.u32 %v8111, 7
        %v8113 = vsub.s32 7, %v8112
        %v8114 = vrot.slane %v8081, %v8113
        %v8123 = vmul.f32 %v7935, %v8086
        %v8124 = vmul.f32 %v7936, %v8090
        %v8125 = vmul.f32 %v7937, %v8094
        %v8126 = vmul.f32 %v7938, %v8098
        %v8127 = vmul.f32 %v7939, %v8102
        %v8128 = vmul.f32 %v7940, %v8106
        %v8129 = vmul.f32 %v8072, %v8110
        %v8130 = vmul.f32 %v8048, %v8114
        %v8131 = vmul.f32 %v7942, %v8086
        %v8132 = vmul.f32 %v7943, %v8090
        %v8133 = vmul.f32 %v7944, %v8094
        %v8134 = vmul.f32 %v7945, %v8098
        %v8135 = vmul.f32 %v7946, %v8102
        %v8136 = vmul.f32 %v7947, %v8106
        %v8137 = vmul.f32 %v8073, %v8110
        %v8138 = vmul.f32 %v8050, %v8114
        %v8139 = vmul.f32 %v7949, %v8086
        %v8140 = vmul.f32 %v7950, %v8090
        %v8141 = vmul.f32 %v7951, %v8094
        %v8142 = vmul.f32 %v7952, %v8098
        %v8143 = vmul.f32 %v7953, %v8102
        %v8144 = vmul.f32 %v7954, %v8106
        %v8145 = vmul.f32 %v8074, %v8110
        %v8146 = vmul.f32 %v8052, %v8114
        %v8147 = vmul.f32 %v7956, %v8086
        %v8148 = vmul.f32 %v7957, %v8090
        %v8149 = vmul.f32 %v7958, %v8094
        %v8150 = vmul.f32 %v7959, %v8098
        %v8151 = vmul.f32 %v7960, %v8102
        %v8152 = vmul.f32 %v7961, %v8106
        %v8153 = vmul.f32 %v8075, %v8110
        %v8154 = vmul.f32 %v8054, %v8114
        %v8155 = vmul.f32 %v7963, %v8086
        %v8156 = vmul.f32 %v7964, %v8090
        %v8157 = vmul.f32 %v7965, %v8094
        %v8158 = vmul.f32 %v7966, %v8098
        %v8159 = vmul.f32 %v7967, %v8102
        %v8160 = vmul.f32 %v7968, %v8106
        %v8161 = vmul.f32 %v8076, %v8110
        %v8162 = vmul.f32 %v8056, %v8114
        %v8163 = vmul.f32 %v7970, %v8086
        %v8164 = vmul.f32 %v7971, %v8090
        %v8165 = vmul.f32 %v7972, %v8094
        %v8166 = vmul.f32 %v7973, %v8098
        %v8167 = vmul.f32 %v7974, %v8102
        %v8168 = vmul.f32 %v7975, %v8106
        %v8169 = vmul.f32 %v8077, %v8110
        %v8170 = vmul.f32 %v8058, %v8114
        %v8171 = vmul.f32 %v7977, %v8086
        %v8172 = vmul.f32 %v7978, %v8090
        %v8173 = vmul.f32 %v7979, %v8094
        %v8174 = vmul.f32 %v7980, %v8098
        %v8175 = vmul.f32 %v7981, %v8102
        %v8176 = vmul.f32 %v7982, %v8106
        %v8177 = vmul.f32 %v8078, %v8110
        %v8178 = vmul.f32 %v8060, %v8114
        %v8179 = vmul.f32 %v7984, %v8086
        %v8180 = vmul.f32 %v7985, %v8090
        %v8181 = vmul.f32 %v7986, %v8094
        %v8182 = vmul.f32 %v7987, %v8098
        %v8183 = vmul.f32 %v7988, %v8102
        %v8184 = vmul.f32 %v7989, %v8106
        %v8185 = vmul.f32 %v8079, %v8110
        %v8186 = vmul.f32 %v8062, %v8114
        %v8187 = vadd.f32 %v7185, %v8123
        %v8188 = vadd.f32 %v7186, %v8124
        %v8189 = vadd.f32 %v7187, %v8125
        %v8190 = vadd.f32 %v7188, %v8126
        %v8191 = vadd.f32 %v7189, %v8127
        %v8192 = vadd.f32 %v7190, %v8128
        %v8193 = vadd.f32 %v7191, %v8129
        %v8194 = vadd.f32 %v7192, %v8130
        %v8195 = vadd.f32 %v7193, %v8131
        %v8196 = vadd.f32 %v7194, %v8132
        %v8197 = vadd.f32 %v7195, %v8133
        %v8198 = vadd.f32 %v7196, %v8134
        %v8199 = vadd.f32 %v7197, %v8135
        %v8200 = vadd.f32 %v7198, %v8136
        %v8201 = vadd.f32 %v7199, %v8137
        %v8202 = vadd.f32 %v7200, %v8138
        %v8203 = vadd.f32 %v7201, %v8139
        %v8204 = vadd.f32 %v7202, %v8140
        %v8205 = vadd.f32 %v7203, %v8141
        %v8206 = vadd.f32 %v7204, %v8142
        %v8207 = vadd.f32 %v7205, %v8143
        %v8208 = vadd.f32 %v7206, %v8144
        %v8209 = vadd.f32 %v7207, %v8145
        %v8210 = vadd.f32 %v7208, %v8146
        %v8211 = vadd.f32 %v7209, %v8147
        %v8212 = vadd.f32 %v7210, %v8148
        %v8213 = vadd.f32 %v7211, %v8149
        %v8214 = vadd.f32 %v7212, %v8150
        %v8215 = vadd.f32 %v7213, %v8151
        %v8216 = vadd.f32 %v7214, %v8152
        %v8217 = vadd.f32 %v7215, %v8153
        %v8218 = vadd.f32 %v7216, %v8154
        %v8219 = vadd.f32 %v7217, %v8155
        %v8220 = vadd.f32 %v7218, %v8156
        %v8221 = vadd.f32 %v7219, %v8157
        %v8222 = vadd.f32 %v7220, %v8158
        %v8223 = vadd.f32 %v7221, %v8159
        %v8224 = vadd.f32 %v7222, %v8160
        %v8225 = vadd.f32 %v7223, %v8161
        %v8226 = vadd.f32 %v7224, %v8162
        %v8227 = vadd.f32 %v7225, %v8163
        %v8228 = vadd.f32 %v7226, %v8164
        %v8229 = vadd.f32 %v7227, %v8165
        %v8230 = vadd.f32 %v7228, %v8166
        %v8231 = vadd.f32 %v7229, %v8167
        %v8232 = vadd.f32 %v7230, %v8168
        %v8233 = vadd.f32 %v7231, %v8169
        %v8234 = vadd.f32 %v7232, %v8170
        %v8235 = vadd.f32 %v7233, %v8171
        %v8236 = vadd.f32 %v7234, %v8172
        %v8237 = vadd.f32 %v7235, %v8173
        %v8238 = vadd.f32 %v7236, %v8174
        %v8239 = vadd.f32 %v7237, %v8175
        %v8240 = vadd.f32 %v7238, %v8176
        %v8241 = vadd.f32 %v7239, %v8177
        %v8242 = vadd.f32 %v7240, %v8178
        %v8243 = vadd.f32 %v7241, %v8179
        %v8244 = vadd.f32 %v7242, %v8180
        %v8245 = vadd.f32 %v7243, %v8181
        %v8246 = vadd.f32 %v7244, %v8182
        %v8247 = vadd.f32 %v7245, %v8183
        %v8248 = vadd.f32 %v7246, %v8184
        %v8249 = vadd.f32 %v7247, %v8185
        %v8250 = vadd.f32 %v7248, %v8186
        %s8251 = scalar_lea.vmem [#allocation11], 1024
        %v8252 = vld [vmem:[%s8251] sm:$0xff]
        %v8253 = vld [vmem:[%s8251 + $0x8] sm:$0xff]
        %v8254 = vld [vmem:[%s8251 + $0x10] sm:$0xff]
        %v8255 = vld [vmem:[%s8251 + $0x18] sm:$0xff]
        %v8256 = vld [vmem:[%s8251 + $0x20] sm:$0xff]
        %v8257 = vld [vmem:[%s8251 + $0x28] sm:$0xff]
        %v8258 = vld [vmem:[%s8251 + $0x30] sm:$0xff]
        %v8259 = vld [vmem:[%s8251 + $0x38] sm:$0xff]
        %v8260 = vld [vmem:[%s8251 + $0x40] sm:$0xff]
        %v8261 = vld [vmem:[%s8251 + $0x48] sm:$0xff]
        %v8262 = vld [vmem:[%s8251 + $0x50] sm:$0xff]
        %v8263 = vld [vmem:[%s8251 + $0x58] sm:$0xff]
        %v8264 = vld [vmem:[%s8251 + $0x60] sm:$0xff]
        %v8265 = vld [vmem:[%s8251 + $0x68] sm:$0xff]
        %v8266 = vld [vmem:[%s8251 + $0x70] sm:$0xff]
        %v8267 = vld [vmem:[%s8251 + $0x78] sm:$0xff]
        %v8269 = vsel %vm723, %v8253, 0
        %v8272 = vsel %vm723, %v8255, 0
        %v8275 = vsel %vm723, %v8257, 0
        %v8278 = vsel %vm723, %v8259, 0
        %v8281 = vsel %vm723, %v8261, 0
        %v8284 = vsel %vm723, %v8263, 0
        %v8287 = vsel %vm723, %v8265, 0
        %v8290 = vsel %vm723, %v8267, 0
        %8292 = vmatprep.subr.mxu0 %v499
        %8293 = vmatpush1.msra.mxu0 %v498
        %8294 = vmatprep.subr.mxu0 %v507
        %8295 = vmatpush1.msra.mxu0 %v506
        %8296 = vmatprep.subr.mxu0 %v515
        %8297 = vmatpush1.msra.mxu0 %v514
        %8298 = vmatprep.subr.mxu0 %v523
        %8299 = vmatpush1.msra.mxu0 %v522
        %8300 = vmatprep.subr.mxu0 %v531
        %8301 = vmatpush1.msra.mxu0 %v530
        %8302 = vmatprep.subr.mxu0 %v539
        %8303 = vmatpush1.msra.mxu0 %v538
        %8304 = vmatprep.subr.mxu0 %v547
        %8305 = vmatpush1.msra.mxu0 %v546
        %8306 = vmatprep.subr.mxu0 %v555
        %8307 = vmatpush1.msra.mxu0 %v554
        %8308 = vmatprep.subr.mxu0 %v563
        %8309 = vmatpush1.msra.mxu0 %v562
        %8310 = vmatprep.subr.mxu0 %v571
        %8311 = vmatpush1.msra.mxu0 %v570
        %8312 = vmatprep.subr.mxu0 %v579
        %8313 = vmatpush1.msra.mxu0 %v578
        %8314 = vmatprep.subr.mxu0 %v587
        %8315 = vmatpush1.msra.mxu0 %v586
        %8316 = vmatprep.subr.mxu0 %v595
        %8317 = vmatpush1.msra.mxu0 %v594
        %8318 = vmatprep.subr.mxu0 %v603
        %8319 = vmatpush1.msra.mxu0 %v602
        %8320 = vmatprep.subr.mxu0 %v611
        %8321 = vmatpush1.msra.mxu0 %v610
        %8322 = vmatprep.subr.mxu0 %v619
        %8323 = vmatpush1.msra.mxu0 %v618
        %8324 = vmatprep.subr.mxu0 %v627
        %8325 = vmatpush1.msra.mxu0 %v626
        %8326 = vmatprep.subr.mxu0 %v635
        %8327 = vmatpush1.msra.mxu0 %v634
        %8328 = vmatprep.subr.mxu0 %v643
        %8329 = vmatpush1.msra.mxu0 %v642
        %8330 = vmatprep.subr.mxu0 %v651
        %8331 = vmatpush1.msra.mxu0 %v650
        %8332 = vmatprep.subr.mxu0 0.0
        %8333 = vmatpush1.msra.mxu0 0.0
        %8334 = vmatprep.subr.mxu0 0.0
        %8335 = vmatpush1.msra.mxu0 0.0
        %8336 = vmatprep.subr.mxu0 0.0
        %8337 = vmatpush1.msra.mxu0 0.0
        %8338 = vmatprep.subr.mxu0 0.0
        %8339 = vmatpush1.msra.mxu0 0.0
        %8340 = vmatprep.subr.mxu0 0.0
        %8341 = vmatpush1.msra.mxu0 0.0
        %8342 = vmatprep.subr.mxu0 0.0
        %8343 = vmatpush1.msra.mxu0 0.0
        %8344 = vmatprep.subr.mxu0 0.0
        %8345 = vmatpush1.msra.mxu0 0.0
        %8346 = vmatprep.subr.mxu0 0.0
        %8347 = vmatpush1.msra.mxu0 0.0
        %8348 = vmatprep.subr.mxu0 0.0
        %8349 = vmatpush1.msra.mxu0 0.0
        %8350 = vmatprep.subr.mxu0 0.0
        %8351 = vmatpush1.msra.mxu0 0.0
        %8352 = vmatprep.subr.mxu0 0.0
        %8353 = vmatpush1.msra.mxu0 0.0
        %8354 = vmatprep.subr.mxu0 0.0
        %8355 = vmatpush1.msra.mxu0 0.0
        %8356 = vmatprep.mubr.f32.mxu0 %v8269
        %8357 = vmatmul.mubr.f32.gmra.mrb[0].mxu0 %v8252
        %v8358 = vpop.f32.mrb[0].mxu0
        %v8359 = vadd.f32 0.0, %v8358
        %v8360 = vpop.f32.mrb[0].mxu0
        %v8361 = vadd.f32 0.0, %v8360
        %8362 = vmatprep.mubr.f32.mxu0 %v8272
        %8363 = vmatmul.mubr.f32.gmra.mrb[0].mxu0 %v8254
        %v8364 = vpop.f32.mrb[0].mxu0
        %v8365 = vadd.f32 0.0, %v8364
        %v8366 = vpop.f32.mrb[0].mxu0
        %v8367 = vadd.f32 0.0, %v8366
        %8368 = vmatprep.mubr.f32.mxu0 %v8275
        %8369 = vmatmul.mubr.f32.gmra.mrb[0].mxu0 %v8256
        %v8370 = vpop.f32.mrb[0].mxu0
        %v8371 = vadd.f32 0.0, %v8370
        %v8372 = vpop.f32.mrb[0].mxu0
        %v8373 = vadd.f32 0.0, %v8372
        %8374 = vmatprep.mubr.f32.mxu0 %v8278
        %8375 = vmatmul.mubr.f32.gmra.mrb[0].mxu0 %v8258
        %v8376 = vpop.f32.mrb[0].mxu0
        %v8377 = vadd.f32 0.0, %v8376
        %v8378 = vpop.f32.mrb[0].mxu0
        %v8379 = vadd.f32 0.0, %v8378
        %8380 = vmatprep.mubr.f32.mxu0 %v8281
        %8381 = vmatmul.mubr.f32.gmra.mrb[0].mxu0 %v8260
        %v8382 = vpop.f32.mrb[0].mxu0
        %v8383 = vadd.f32 0.0, %v8382
        %v8384 = vpop.f32.mrb[0].mxu0
        %v8385 = vadd.f32 0.0, %v8384
        %8386 = vmatprep.mubr.f32.mxu0 %v8284
        %8387 = vmatmul.mubr.f32.gmra.mrb[0].mxu0 %v8262
        %v8388 = vpop.f32.mrb[0].mxu0
        %v8389 = vadd.f32 0.0, %v8388
        %v8390 = vpop.f32.mrb[0].mxu0
        %v8391 = vadd.f32 0.0, %v8390
        %8392 = vmatprep.mubr.f32.mxu0 %v8287
        %8393 = vmatmul.mubr.f32.gmra.mrb[0].mxu0 %v8264
        %v8394 = vpop.f32.mrb[0].mxu0
        %v8395 = vadd.f32 0.0, %v8394
        %v8396 = vpop.f32.mrb[0].mxu0
        %v8397 = vadd.f32 0.0, %v8396
        %8398 = vmatprep.mubr.f32.mxu0 %v8290
        %8399 = vmatmul.mubr.f32.gmra.mrb[0].mxu0 %v8266
        %v8400 = vpop.f32.mrb[0].mxu0
        %v8401 = vadd.f32 0.0, %v8400
        %v8402 = vpop.f32.mrb[0].mxu0
        %v8403 = vadd.f32 0.0, %v8402
        %8404 = vdwg.mxu0
        %8405 = vmatprep.subr.mxu0 %v501
        %8406 = vmatpush1.msra.mxu0 %v500
        %8407 = vmatprep.subr.mxu0 %v509
        %8408 = vmatpush1.msra.mxu0 %v508
        %8409 = vmatprep.subr.mxu0 %v517
        %8410 = vmatpush1.msra.mxu0 %v516
        %8411 = vmatprep.subr.mxu0 %v525
        %8412 = vmatpush1.msra.mxu0 %v524
        %8413 = vmatprep.subr.mxu0 %v533
        %8414 = vmatpush1.msra.mxu0 %v532
        %8415 = vmatprep.subr.mxu0 %v541
        %8416 = vmatpush1.msra.mxu0 %v540
        %8417 = vmatprep.subr.mxu0 %v549
        %8418 = vmatpush1.msra.mxu0 %v548
        %8419 = vmatprep.subr.mxu0 %v557
        %8420 = vmatpush1.msra.mxu0 %v556
        %8421 = vmatprep.subr.mxu0 %v565
        %8422 = vmatpush1.msra.mxu0 %v564
        %8423 = vmatprep.subr.mxu0 %v573
        %8424 = vmatpush1.msra.mxu0 %v572
        %8425 = vmatprep.subr.mxu0 %v581
        %8426 = vmatpush1.msra.mxu0 %v580
        %8427 = vmatprep.subr.mxu0 %v589
        %8428 = vmatpush1.msra.mxu0 %v588
        %8429 = vmatprep.subr.mxu0 %v597
        %8430 = vmatpush1.msra.mxu0 %v596
        %8431 = vmatprep.subr.mxu0 %v605
        %8432 = vmatpush1.msra.mxu0 %v604
        %8433 = vmatprep.subr.mxu0 %v613
        %8434 = vmatpush1.msra.mxu0 %v612
        %8435 = vmatprep.subr.mxu0 %v621
        %8436 = vmatpush1.msra.mxu0 %v620
        %8437 = vmatprep.subr.mxu0 %v629
        %8438 = vmatpush1.msra.mxu0 %v628
        %8439 = vmatprep.subr.mxu0 %v637
        %8440 = vmatpush1.msra.mxu0 %v636
        %8441 = vmatprep.subr.mxu0 %v645
        %8442 = vmatpush1.msra.mxu0 %v644
        %8443 = vmatprep.subr.mxu0 %v653
        %8444 = vmatpush1.msra.mxu0 %v652
        %8445 = vmatprep.subr.mxu0 0.0
        %8446 = vmatpush1.msra.mxu0 0.0
        %8447 = vmatprep.subr.mxu0 0.0
        %8448 = vmatpush1.msra.mxu0 0.0
        %8449 = vmatprep.subr.mxu0 0.0
        %8450 = vmatpush1.msra.mxu0 0.0
        %8451 = vmatprep.subr.mxu0 0.0
        %8452 = vmatpush1.msra.mxu0 0.0
        %8453 = vmatprep.subr.mxu0 0.0
        %8454 = vmatpush1.msra.mxu0 0.0
        %8455 = vmatprep.subr.mxu0 0.0
        %8456 = vmatpush1.msra.mxu0 0.0
        %8457 = vmatprep.subr.mxu0 0.0
        %8458 = vmatpush1.msra.mxu0 0.0
        %8459 = vmatprep.subr.mxu0 0.0
        %8460 = vmatpush1.msra.mxu0 0.0
        %8461 = vmatprep.subr.mxu0 0.0
        %8462 = vmatpush1.msra.mxu0 0.0
        %8463 = vmatprep.subr.mxu0 0.0
        %8464 = vmatpush1.msra.mxu0 0.0
        %8465 = vmatprep.subr.mxu0 0.0
        %8466 = vmatpush1.msra.mxu0 0.0
        %8467 = vmatprep.subr.mxu0 0.0
        %8468 = vmatpush1.msra.mxu0 0.0
        %8469 = vmatprep.mubr.f32.mxu0 %v8269
        %8470 = vmatmul.mubr.f32.gmra.mrb[0].mxu0 %v8252
        %v8471 = vpop.f32.mrb[0].mxu0
        %v8472 = vadd.f32 0.0, %v8471
        %v8473 = vpop.f32.mrb[0].mxu0
        %v8474 = vadd.f32 0.0, %v8473
        %8475 = vmatprep.mubr.f32.mxu0 %v8272
        %8476 = vmatmul.mubr.f32.gmra.mrb[0].mxu0 %v8254
        %v8477 = vpop.f32.mrb[0].mxu0
        %v8478 = vadd.f32 0.0, %v8477
        %v8479 = vpop.f32.mrb[0].mxu0
        %v8480 = vadd.f32 0.0, %v8479
        %8481 = vmatprep.mubr.f32.mxu0 %v8275
        %8482 = vmatmul.mubr.f32.gmra.mrb[0].mxu0 %v8256
        %v8483 = vpop.f32.mrb[0].mxu0
        %v8484 = vadd.f32 0.0, %v8483
        %v8485 = vpop.f32.mrb[0].mxu0
        %v8486 = vadd.f32 0.0, %v8485
        %8487 = vmatprep.mubr.f32.mxu0 %v8278
        %8488 = vmatmul.mubr.f32.gmra.mrb[0].mxu0 %v8258
        %v8489 = vpop.f32.mrb[0].mxu0
        %v8490 = vadd.f32 0.0, %v8489
        %v8491 = vpop.f32.mrb[0].mxu0
        %v8492 = vadd.f32 0.0, %v8491
        %8493 = vmatprep.mubr.f32.mxu0 %v8281
        %8494 = vmatmul.mubr.f32.gmra.mrb[0].mxu0 %v8260
        %v8495 = vpop.f32.mrb[0].mxu0
        %v8496 = vadd.f32 0.0, %v8495
        %v8497 = vpop.f32.mrb[0].mxu0
        %v8498 = vadd.f32 0.0, %v8497
        %8499 = vmatprep.mubr.f32.mxu0 %v8284
        %8500 = vmatmul.mubr.f32.gmra.mrb[0].mxu0 %v8262
        %v8501 = vpop.f32.mrb[0].mxu0
        %v8502 = vadd.f32 0.0, %v8501
        %v8503 = vpop.f32.mrb[0].mxu0
        %v8504 = vadd.f32 0.0, %v8503
        %8505 = vmatprep.mubr.f32.mxu0 %v8287
        %8506 = vmatmul.mubr.f32.gmra.mrb[0].mxu0 %v8264
        %v8507 = vpop.f32.mrb[0].mxu0
        %v8508 = vadd.f32 0.0, %v8507
        %v8509 = vpop.f32.mrb[0].mxu0
        %v8510 = vadd.f32 0.0, %v8509
        %8511 = vmatprep.mubr.f32.mxu0 %v8290
        %8512 = vmatmul.mubr.f32.gmra.mrb[0].mxu0 %v8266
        %v8513 = vpop.f32.mrb[0].mxu0
        %v8514 = vadd.f32 0.0, %v8513
        %v8515 = vpop.f32.mrb[0].mxu0
        %v8516 = vadd.f32 0.0, %v8515
        %8517 = vdwg.mxu0
        %8518 = vmatprep.subr.mxu0 %v503
        %8519 = vmatpush1.msra.mxu0 %v502
        %8520 = vmatprep.subr.mxu0 %v511
        %8521 = vmatpush1.msra.mxu0 %v510
        %8522 = vmatprep.subr.mxu0 %v519
        %8523 = vmatpush1.msra.mxu0 %v518
        %8524 = vmatprep.subr.mxu0 %v527
        %8525 = vmatpush1.msra.mxu0 %v526
        %8526 = vmatprep.subr.mxu0 %v535
        %8527 = vmatpush1.msra.mxu0 %v534
        %8528 = vmatprep.subr.mxu0 %v543
        %8529 = vmatpush1.msra.mxu0 %v542
        %8530 = vmatprep.subr.mxu0 %v551
        %8531 = vmatpush1.msra.mxu0 %v550
        %8532 = vmatprep.subr.mxu0 %v559
        %8533 = vmatpush1.msra.mxu0 %v558
        %8534 = vmatprep.subr.mxu0 %v567
        %8535 = vmatpush1.msra.mxu0 %v566
        %8536 = vmatprep.subr.mxu0 %v575
        %8537 = vmatpush1.msra.mxu0 %v574
        %8538 = vmatprep.subr.mxu0 %v583
        %8539 = vmatpush1.msra.mxu0 %v582
        %8540 = vmatprep.subr.mxu0 %v591
        %8541 = vmatpush1.msra.mxu0 %v590
        %8542 = vmatprep.subr.mxu0 %v599
        %8543 = vmatpush1.msra.mxu0 %v598
        %8544 = vmatprep.subr.mxu0 %v607
        %8545 = vmatpush1.msra.mxu0 %v606
        %8546 = vmatprep.subr.mxu0 %v615
        %8547 = vmatpush1.msra.mxu0 %v614
        %8548 = vmatprep.subr.mxu0 %v623
        %8549 = vmatpush1.msra.mxu0 %v622
        %8550 = vmatprep.subr.mxu0 %v631
        %8551 = vmatpush1.msra.mxu0 %v630
        %8552 = vmatprep.subr.mxu0 %v639
        %8553 = vmatpush1.msra.mxu0 %v638
        %8554 = vmatprep.subr.mxu0 %v647
        %8555 = vmatpush1.msra.mxu0 %v646
        %8556 = vmatprep.subr.mxu0 %v655
        %8557 = vmatpush1.msra.mxu0 %v654
        %8558 = vmatprep.subr.mxu0 0.0
        %8559 = vmatpush1.msra.mxu0 0.0
        %8560 = vmatprep.subr.mxu0 0.0
        %8561 = vmatpush1.msra.mxu0 0.0
        %8562 = vmatprep.subr.mxu0 0.0
        %8563 = vmatpush1.msra.mxu0 0.0
        %8564 = vmatprep.subr.mxu0 0.0
        %8565 = vmatpush1.msra.mxu0 0.0
        %8566 = vmatprep.subr.mxu0 0.0
        %8567 = vmatpush1.msra.mxu0 0.0
        %8568 = vmatprep.subr.mxu0 0.0
        %8569 = vmatpush1.msra.mxu0 0.0
        %8570 = vmatprep.subr.mxu0 0.0
        %8571 = vmatpush1.msra.mxu0 0.0
        %8572 = vmatprep.subr.mxu0 0.0
        %8573 = vmatpush1.msra.mxu0 0.0
        %8574 = vmatprep.subr.mxu0 0.0
        %8575 = vmatpush1.msra.mxu0 0.0
        %8576 = vmatprep.subr.mxu0 0.0
        %8577 = vmatpush1.msra.mxu0 0.0
        %8578 = vmatprep.subr.mxu0 0.0
        %8579 = vmatpush1.msra.mxu0 0.0
        %8580 = vmatprep.subr.mxu0 0.0
        %8581 = vmatpush1.msra.mxu0 0.0
        %8582 = vmatprep.mubr.f32.mxu0 %v8269
        %8583 = vmatmul.mubr.f32.gmra.mrb[0].mxu0 %v8252
        %v8584 = vpop.f32.mrb[0].mxu0
        %v8585 = vadd.f32 0.0, %v8584
        %v8586 = vpop.f32.mrb[0].mxu0
        %v8587 = vadd.f32 0.0, %v8586
        %8588 = vmatprep.mubr.f32.mxu0 %v8272
        %8589 = vmatmul.mubr.f32.gmra.mrb[0].mxu0 %v8254
        %v8590 = vpop.f32.mrb[0].mxu0
        %v8591 = vadd.f32 0.0, %v8590
        %v8592 = vpop.f32.mrb[0].mxu0
        %v8593 = vadd.f32 0.0, %v8592
        %8594 = vmatprep.mubr.f32.mxu0 %v8275
        %8595 = vmatmul.mubr.f32.gmra.mrb[0].mxu0 %v8256
        %v8596 = vpop.f32.mrb[0].mxu0
        %v8597 = vadd.f32 0.0, %v8596
        %v8598 = vpop.f32.mrb[0].mxu0
        %v8599 = vadd.f32 0.0, %v8598
        %8600 = vmatprep.mubr.f32.mxu0 %v8278
        %8601 = vmatmul.mubr.f32.gmra.mrb[0].mxu0 %v8258
        %v8602 = vpop.f32.mrb[0].mxu0
        %v8603 = vadd.f32 0.0, %v8602
        %v8604 = vpop.f32.mrb[0].mxu0
        %v8605 = vadd.f32 0.0, %v8604
        %8606 = vmatprep.mubr.f32.mxu0 %v8281
        %8607 = vmatmul.mubr.f32.gmra.mrb[0].mxu0 %v8260
        %v8608 = vpop.f32.mrb[0].mxu0
        %v8609 = vadd.f32 0.0, %v8608
        %v8610 = vpop.f32.mrb[0].mxu0
        %v8611 = vadd.f32 0.0, %v8610
        %8612 = vmatprep.mubr.f32.mxu0 %v8284
        %8613 = vmatmul.mubr.f32.gmra.mrb[0].mxu0 %v8262
        %v8614 = vpop.f32.mrb[0].mxu0
        %v8615 = vadd.f32 0.0, %v8614
        %v8616 = vpop.f32.mrb[0].mxu0
        %v8617 = vadd.f32 0.0, %v8616
        %8618 = vmatprep.mubr.f32.mxu0 %v8287
        %8619 = vmatmul.mubr.f32.gmra.mrb[0].mxu0 %v8264
        %v8620 = vpop.f32.mrb[0].mxu0
        %v8621 = vadd.f32 0.0, %v8620
        %v8622 = vpop.f32.mrb[0].mxu0
        %v8623 = vadd.f32 0.0, %v8622
        %8624 = vmatprep.mubr.f32.mxu0 %v8290
        %8625 = vmatmul.mubr.f32.gmra.mrb[0].mxu0 %v8266
        %v8626 = vpop.f32.mrb[0].mxu0
        %v8627 = vadd.f32 0.0, %v8626
        %v8628 = vpop.f32.mrb[0].mxu0
        %v8629 = vadd.f32 0.0, %v8628
        %8630 = vdwg.mxu0
        %8631 = vmatprep.subr.mxu0 %v505
        %8632 = vmatpush1.msra.mxu0 %v504
        %8633 = vmatprep.subr.mxu0 %v513
        %8634 = vmatpush1.msra.mxu0 %v512
        %8635 = vmatprep.subr.mxu0 %v521
        %8636 = vmatpush1.msra.mxu0 %v520
        %8637 = vmatprep.subr.mxu0 %v529
        %8638 = vmatpush1.msra.mxu0 %v528
        %8639 = vmatprep.subr.mxu0 %v537
        %8640 = vmatpush1.msra.mxu0 %v536
        %8641 = vmatprep.subr.mxu0 %v545
        %8642 = vmatpush1.msra.mxu0 %v544
        %8643 = vmatprep.subr.mxu0 %v553
        %8644 = vmatpush1.msra.mxu0 %v552
        %8645 = vmatprep.subr.mxu0 %v561
        %8646 = vmatpush1.msra.mxu0 %v560
        %8647 = vmatprep.subr.mxu0 %v569
        %8648 = vmatpush1.msra.mxu0 %v568
        %8649 = vmatprep.subr.mxu0 %v577
        %8650 = vmatpush1.msra.mxu0 %v576
        %8651 = vmatprep.subr.mxu0 %v585
        %8652 = vmatpush1.msra.mxu0 %v584
        %8653 = vmatprep.subr.mxu0 %v593
        %8654 = vmatpush1.msra.mxu0 %v592
        %8655 = vmatprep.subr.mxu0 %v601
        %8656 = vmatpush1.msra.mxu0 %v600
        %8657 = vmatprep.subr.mxu0 %v609
        %8658 = vmatpush1.msra.mxu0 %v608
        %8659 = vmatprep.subr.mxu0 %v617
        %8660 = vmatpush1.msra.mxu0 %v616
        %8661 = vmatprep.subr.mxu0 %v625
        %8662 = vmatpush1.msra.mxu0 %v624
        %8663 = vmatprep.subr.mxu0 %v633
        %8664 = vmatpush1.msra.mxu0 %v632
        %8665 = vmatprep.subr.mxu0 %v641
        %8666 = vmatpush1.msra.mxu0 %v640
        %8667 = vmatprep.subr.mxu0 %v649
        %8668 = vmatpush1.msra.mxu0 %v648
        %8669 = vmatprep.subr.mxu0 %v657
        %8670 = vmatpush1.msra.mxu0 %v656
        %8671 = vmatprep.subr.mxu0 0.0
        %8672 = vmatpush1.msra.mxu0 0.0
        %8673 = vmatprep.subr.mxu0 0.0
        %8674 = vmatpush1.msra.mxu0 0.0
        %8675 = vmatprep.subr.mxu0 0.0
        %8676 = vmatpush1.msra.mxu0 0.0
        %8677 = vmatprep.subr.mxu0 0.0
        %8678 = vmatpush1.msra.mxu0 0.0
        %8679 = vmatprep.subr.mxu0 0.0
        %8680 = vmatpush1.msra.mxu0 0.0
        %8681 = vmatprep.subr.mxu0 0.0
        %8682 = vmatpush1.msra.mxu0 0.0
        %8683 = vmatprep.subr.mxu0 0.0
        %8684 = vmatpush1.msra.mxu0 0.0
        %8685 = vmatprep.subr.mxu0 0.0
        %8686 = vmatpush1.msra.mxu0 0.0
        %8687 = vmatprep.subr.mxu0 0.0
        %8688 = vmatpush1.msra.mxu0 0.0
        %8689 = vmatprep.subr.mxu0 0.0
        %8690 = vmatpush1.msra.mxu0 0.0
        %8691 = vmatprep.subr.mxu0 0.0
        %8692 = vmatpush1.msra.mxu0 0.0
        %8693 = vmatprep.subr.mxu0 0.0
        %8694 = vmatpush1.msra.mxu0 0.0
        %8695 = vmatprep.mubr.f32.mxu0 %v8269
        %8696 = vmatmul.mubr.f32.gmra.mrb[0].mxu0 %v8252
        %v8697 = vpop.f32.mrb[0].mxu0
        %v8698 = vadd.f32 0.0, %v8697
        %v8699 = vpop.f32.mrb[0].mxu0
        %v8700 = vadd.f32 0.0, %v8699
        %8701 = vmatprep.mubr.f32.mxu0 %v8272
        %8702 = vmatmul.mubr.f32.gmra.mrb[0].mxu0 %v8254
        %v8703 = vpop.f32.mrb[0].mxu0
        %v8704 = vadd.f32 0.0, %v8703
        %v8705 = vpop.f32.mrb[0].mxu0
        %v8706 = vadd.f32 0.0, %v8705
        %8707 = vmatprep.mubr.f32.mxu0 %v8275
        %8708 = vmatmul.mubr.f32.gmra.mrb[0].mxu0 %v8256
        %v8709 = vpop.f32.mrb[0].mxu0
        %v8710 = vadd.f32 0.0, %v8709
        %v8711 = vpop.f32.mrb[0].mxu0
        %v8712 = vadd.f32 0.0, %v8711
        %8713 = vmatprep.mubr.f32.mxu0 %v8278
        %8714 = vmatmul.mubr.f32.gmra.mrb[0].mxu0 %v8258
        %v8715 = vpop.f32.mrb[0].mxu0
        %v8716 = vadd.f32 0.0, %v8715
        %v8717 = vpop.f32.mrb[0].mxu0
        %v8718 = vadd.f32 0.0, %v8717
        %8719 = vmatprep.mubr.f32.mxu0 %v8281
        %8720 = vmatmul.mubr.f32.gmra.mrb[0].mxu0 %v8260
        %v8721 = vpop.f32.mrb[0].mxu0
        %v8722 = vadd.f32 0.0, %v8721
        %v8723 = vpop.f32.mrb[0].mxu0
        %v8724 = vadd.f32 0.0, %v8723
        %8725 = vmatprep.mubr.f32.mxu0 %v8284
        %8726 = vmatmul.mubr.f32.gmra.mrb[0].mxu0 %v8262
        %v8727 = vpop.f32.mrb[0].mxu0
        %v8728 = vadd.f32 0.0, %v8727
        %v8729 = vpop.f32.mrb[0].mxu0
        %v8730 = vadd.f32 0.0, %v8729
        %8731 = vmatprep.mubr.f32.mxu0 %v8287
        %8732 = vmatmul.mubr.f32.gmra.mrb[0].mxu0 %v8264
        %v8733 = vpop.f32.mrb[0].mxu0
        %v8734 = vadd.f32 0.0, %v8733
        %v8735 = vpop.f32.mrb[0].mxu0
        %v8736 = vadd.f32 0.0, %v8735
        %8737 = vmatprep.mubr.f32.mxu0 %v8290
        %8738 = vmatmul.mubr.f32.gmra.mrb[0].mxu0 %v8266
        %v8739 = vpop.f32.mrb[0].mxu0
        %v8740 = vadd.f32 0.0, %v8739
        %v8741 = vpop.f32.mrb[0].mxu0
        %v8742 = vadd.f32 0.0, %v8741
        %8743 = vdwg.mxu0
        %8808 = vrot.lane.b32.xlu0 %v8359, 97
        %v8809 = vpop.permute.xlu0 %8808
        %8810 = vrot.lane.b32.xlu0 %v8361, 97
        %v8811 = vpop.permute.xlu0 %8810
        %8812 = vrot.lane.b32.xlu0 %v8472, 97
        %v8813 = vpop.permute.xlu0 %8812
        %8814 = vrot.lane.b32.xlu0 %v8474, 97
        %v8815 = vpop.permute.xlu0 %8814
        %8816 = vrot.lane.b32.xlu0 %v8585, 97
        %v8817 = vpop.permute.xlu0 %8816
        %8818 = vrot.lane.b32.xlu0 %v8587, 97
        %v8819 = vpop.permute.xlu0 %8818
        %8820 = vrot.lane.b32.xlu0 %v8698, 97
        %v8821 = vpop.permute.xlu0 %8820
        %8822 = vrot.lane.b32.xlu0 %v8700, 97
        %v8823 = vpop.permute.xlu0 %8822
        %8824 = vrot.lane.b32.xlu0 %v8365, 97
        %v8825 = vpop.permute.xlu0 %8824
        %8826 = vrot.lane.b32.xlu0 %v8367, 97
        %v8827 = vpop.permute.xlu0 %8826
        %8828 = vrot.lane.b32.xlu0 %v8478, 97
        %v8829 = vpop.permute.xlu0 %8828
        %8830 = vrot.lane.b32.xlu0 %v8480, 97
        %v8831 = vpop.permute.xlu0 %8830
        %8832 = vrot.lane.b32.xlu0 %v8591, 97
        %v8833 = vpop.permute.xlu0 %8832
        %8834 = vrot.lane.b32.xlu0 %v8593, 97
        %v8835 = vpop.permute.xlu0 %8834
        %8836 = vrot.lane.b32.xlu0 %v8704, 97
        %v8837 = vpop.permute.xlu0 %8836
        %8838 = vrot.lane.b32.xlu0 %v8706, 97
        %v8839 = vpop.permute.xlu0 %8838
        %8840 = vrot.lane.b32.xlu0 %v8371, 97
        %v8841 = vpop.permute.xlu0 %8840
        %8842 = vrot.lane.b32.xlu0 %v8373, 97
        %v8843 = vpop.permute.xlu0 %8842
        %8844 = vrot.lane.b32.xlu0 %v8484, 97
        %v8845 = vpop.permute.xlu0 %8844
        %8846 = vrot.lane.b32.xlu0 %v8486, 97
        %v8847 = vpop.permute.xlu0 %8846
        %8848 = vrot.lane.b32.xlu0 %v8597, 97
        %v8849 = vpop.permute.xlu0 %8848
        %8850 = vrot.lane.b32.xlu0 %v8599, 97
        %v8851 = vpop.permute.xlu0 %8850
        %8852 = vrot.lane.b32.xlu0 %v8710, 97
        %v8853 = vpop.permute.xlu0 %8852
        %8854 = vrot.lane.b32.xlu0 %v8712, 97
        %v8855 = vpop.permute.xlu0 %8854
        %8856 = vrot.lane.b32.xlu0 %v8377, 97
        %v8857 = vpop.permute.xlu0 %8856
        %8858 = vrot.lane.b32.xlu0 %v8379, 97
        %v8859 = vpop.permute.xlu0 %8858
        %8860 = vrot.lane.b32.xlu0 %v8490, 97
        %v8861 = vpop.permute.xlu0 %8860
        %8862 = vrot.lane.b32.xlu0 %v8492, 97
        %v8863 = vpop.permute.xlu0 %8862
        %8864 = vrot.lane.b32.xlu0 %v8603, 97
        %v8865 = vpop.permute.xlu0 %8864
        %8866 = vrot.lane.b32.xlu0 %v8605, 97
        %v8867 = vpop.permute.xlu0 %8866
        %8868 = vrot.lane.b32.xlu0 %v8716, 97
        %v8869 = vpop.permute.xlu0 %8868
        %8870 = vrot.lane.b32.xlu0 %v8718, 97
        %v8871 = vpop.permute.xlu0 %8870
        %8872 = vrot.lane.b32.xlu0 %v8383, 97
        %v8873 = vpop.permute.xlu0 %8872
        %8874 = vrot.lane.b32.xlu0 %v8385, 97
        %v8875 = vpop.permute.xlu0 %8874
        %8876 = vrot.lane.b32.xlu0 %v8496, 97
        %v8877 = vpop.permute.xlu0 %8876
        %8878 = vrot.lane.b32.xlu0 %v8498, 97
        %v8879 = vpop.permute.xlu0 %8878
        %8880 = vrot.lane.b32.xlu0 %v8609, 97
        %v8881 = vpop.permute.xlu0 %8880
        %8882 = vrot.lane.b32.xlu0 %v8611, 97
        %v8883 = vpop.permute.xlu0 %8882
        %8884 = vrot.lane.b32.xlu0 %v8722, 97
        %v8885 = vpop.permute.xlu0 %8884
        %8886 = vrot.lane.b32.xlu0 %v8724, 97
        %v8887 = vpop.permute.xlu0 %8886
        %8888 = vrot.lane.b32.xlu0 %v8389, 97
        %v8889 = vpop.permute.xlu0 %8888
        %8890 = vrot.lane.b32.xlu0 %v8391, 97
        %v8891 = vpop.permute.xlu0 %8890
        %8892 = vrot.lane.b32.xlu0 %v8502, 97
        %v8893 = vpop.permute.xlu0 %8892
        %8894 = vrot.lane.b32.xlu0 %v8504, 97
        %v8895 = vpop.permute.xlu0 %8894
        %8896 = vrot.lane.b32.xlu0 %v8615, 97
        %v8897 = vpop.permute.xlu0 %8896
        %8898 = vrot.lane.b32.xlu0 %v8617, 97
        %v8899 = vpop.permute.xlu0 %8898
        %8900 = vrot.lane.b32.xlu0 %v8728, 97
        %v8901 = vpop.permute.xlu0 %8900
        %8902 = vrot.lane.b32.xlu0 %v8730, 97
        %v8903 = vpop.permute.xlu0 %8902
        %8904 = vrot.lane.b32.xlu0 %v8395, 97
        %v8905 = vpop.permute.xlu0 %8904
        %8906 = vrot.lane.b32.xlu0 %v8397, 97
        %v8907 = vpop.permute.xlu0 %8906
        %8908 = vrot.lane.b32.xlu0 %v8508, 97
        %v8909 = vpop.permute.xlu0 %8908
        %8910 = vrot.lane.b32.xlu0 %v8510, 97
        %v8911 = vpop.permute.xlu0 %8910
        %8912 = vrot.lane.b32.xlu0 %v8621, 97
        %v8913 = vpop.permute.xlu0 %8912
        %8914 = vrot.lane.b32.xlu0 %v8623, 97
        %v8915 = vpop.permute.xlu0 %8914
        %8916 = vrot.lane.b32.xlu0 %v8734, 97
        %v8917 = vpop.permute.xlu0 %8916
        %8918 = vrot.lane.b32.xlu0 %v8736, 97
        %v8919 = vpop.permute.xlu0 %8918
        %8920 = vrot.lane.b32.xlu0 %v8401, 97
        %v8921 = vpop.permute.xlu0 %8920
        %8922 = vrot.lane.b32.xlu0 %v8403, 97
        %v8923 = vpop.permute.xlu0 %8922
        %8924 = vrot.lane.b32.xlu0 %v8514, 97
        %v8925 = vpop.permute.xlu0 %8924
        %8926 = vrot.lane.b32.xlu0 %v8516, 97
        %v8927 = vpop.permute.xlu0 %8926
        %8928 = vrot.lane.b32.xlu0 %v8627, 97
        %v8929 = vpop.permute.xlu0 %8928
        %8930 = vrot.lane.b32.xlu0 %v8629, 97
        %v8931 = vpop.permute.xlu0 %8930
        %8932 = vrot.lane.b32.xlu0 %v8740, 97
        %v8933 = vpop.permute.xlu0 %8932
        %8934 = vrot.lane.b32.xlu0 %v8742, 97
        %v8935 = vpop.permute.xlu0 %8934
        %vm8936 = vcmask 793600
        %v8937 = vsel %vm8936, %v8809, %v8811
        %v8938 = vsel %vm8936, %v8811, %v8813
        %v8939 = vsel %vm8936, %v8813, %v8815
        %v8940 = vsel %vm8936, %v8815, %v8817
        %v8941 = vsel %vm8936, %v8817, %v8819
        %v8942 = vsel %vm8936, %v8819, %v8821
        %v8943 = vsel %vm8936, %v8821, %v8823
        %v8944 = vsel %vm8936, %v8825, %v8827
        %v8945 = vsel %vm8936, %v8827, %v8829
        %v8946 = vsel %vm8936, %v8829, %v8831
        %v8947 = vsel %vm8936, %v8831, %v8833
        %v8948 = vsel %vm8936, %v8833, %v8835
        %v8949 = vsel %vm8936, %v8835, %v8837
        %v8950 = vsel %vm8936, %v8837, %v8839
        %v8951 = vsel %vm8936, %v8841, %v8843
        %v8952 = vsel %vm8936, %v8843, %v8845
        %v8953 = vsel %vm8936, %v8845, %v8847
        %v8954 = vsel %vm8936, %v8847, %v8849
        %v8955 = vsel %vm8936, %v8849, %v8851
        %v8956 = vsel %vm8936, %v8851, %v8853
        %v8957 = vsel %vm8936, %v8853, %v8855
        %v8958 = vsel %vm8936, %v8857, %v8859
        %v8959 = vsel %vm8936, %v8859, %v8861
        %v8960 = vsel %vm8936, %v8861, %v8863
        %v8961 = vsel %vm8936, %v8863, %v8865
        %v8962 = vsel %vm8936, %v8865, %v8867
        %v8963 = vsel %vm8936, %v8867, %v8869
        %v8964 = vsel %vm8936, %v8869, %v8871
        %v8965 = vsel %vm8936, %v8873, %v8875
        %v8966 = vsel %vm8936, %v8875, %v8877
        %v8967 = vsel %vm8936, %v8877, %v8879
        %v8968 = vsel %vm8936, %v8879, %v8881
        %v8969 = vsel %vm8936, %v8881, %v8883
        %v8970 = vsel %vm8936, %v8883, %v8885
        %v8971 = vsel %vm8936, %v8885, %v8887
        %v8972 = vsel %vm8936, %v8889, %v8891
        %v8973 = vsel %vm8936, %v8891, %v8893
        %v8974 = vsel %vm8936, %v8893, %v8895
        %v8975 = vsel %vm8936, %v8895, %v8897
        %v8976 = vsel %vm8936, %v8897, %v8899
        %v8977 = vsel %vm8936, %v8899, %v8901
        %v8978 = vsel %vm8936, %v8901, %v8903
        %v8979 = vsel %vm8936, %v8905, %v8907
        %v8980 = vsel %vm8936, %v8907, %v8909
        %v8981 = vsel %vm8936, %v8909, %v8911
        %v8982 = vsel %vm8936, %v8911, %v8913
        %v8983 = vsel %vm8936, %v8913, %v8915
        %v8984 = vsel %vm8936, %v8915, %v8917
        %v8985 = vsel %vm8936, %v8917, %v8919
        %v8986 = vsel %vm8936, %v8921, %v8923
        %v8987 = vsel %vm8936, %v8923, %v8925
        %v8988 = vsel %vm8936, %v8925, %v8927
        %v8989 = vsel %vm8936, %v8927, %v8929
        %v8990 = vsel %vm8936, %v8929, %v8931
        %v8991 = vsel %vm8936, %v8931, %v8933
        %v8992 = vsel %vm8936, %v8933, %v8935
        %9049 = vrot.lane.b32.xlu0 %v8359, 101
        %v9050 = vpop.permute.xlu0 %9049
        %9051 = vrot.lane.b32.xlu0 %v8365, 101
        %v9052 = vpop.permute.xlu0 %9051
        %9053 = vrot.lane.b32.xlu0 %v8371, 101
        %v9054 = vpop.permute.xlu0 %9053
        %9055 = vrot.lane.b32.xlu0 %v8377, 101
        %v9056 = vpop.permute.xlu0 %9055
        %9057 = vrot.lane.b32.xlu0 %v8383, 101
        %v9058 = vpop.permute.xlu0 %9057
        %9059 = vrot.lane.b32.xlu0 %v8389, 101
        %v9060 = vpop.permute.xlu0 %9059
        %9061 = vrot.lane.b32.xlu0 %v8395, 101
        %v9062 = vpop.permute.xlu0 %9061
        %9063 = vrot.lane.b32.xlu0 %v8401, 101
        %v9064 = vpop.permute.xlu0 %9063
        %vm9073 = vcmask 826368
        %v9074 = vsel %vm9073, %v8943, %v9050
        %v9075 = vsel %vm9073, %v8950, %v9052
        %v9076 = vsel %vm9073, %v8957, %v9054
        %v9077 = vsel %vm9073, %v8964, %v9056
        %v9078 = vsel %vm9073, %v8971, %v9058
        %v9079 = vsel %vm9073, %v8978, %v9060
        %v9080 = vsel %vm9073, %v8985, %v9062
        %v9081 = vsel %vm9073, %v8992, %v9064
        %s9082 = scalar_lea.vmem %s8, 64
        %v9083 = vld [vmem:[%s9082] sm:$0xff]
        %v9085 = vlaneseq
        %v9086 = vshrl.u32 %v9085, 7
        %v9087 = vsub.s32 0, %v9086
        %v9088 = vrot.slane %v9083, %v9087
        %v9089 = vlaneseq
        %v9090 = vshrl.u32 %v9089, 7
        %v9091 = vsub.s32 1, %v9090
        %v9092 = vrot.slane %v9083, %v9091
        %v9093 = vlaneseq
        %v9094 = vshrl.u32 %v9093, 7
        %v9095 = vsub.s32 2, %v9094
        %v9096 = vrot.slane %v9083, %v9095
        %v9097 = vlaneseq
        %v9098 = vshrl.u32 %v9097, 7
        %v9099 = vsub.s32 3, %v9098
        %v9100 = vrot.slane %v9083, %v9099
        %v9101 = vlaneseq
        %v9102 = vshrl.u32 %v9101, 7
        %v9103 = vsub.s32 4, %v9102
        %v9104 = vrot.slane %v9083, %v9103
        %v9105 = vlaneseq
        %v9106 = vshrl.u32 %v9105, 7
        %v9107 = vsub.s32 5, %v9106
        %v9108 = vrot.slane %v9083, %v9107
        %v9109 = vlaneseq
        %v9110 = vshrl.u32 %v9109, 7
        %v9111 = vsub.s32 6, %v9110
        %v9112 = vrot.slane %v9083, %v9111
        %v9113 = vlaneseq
        %v9114 = vshrl.u32 %v9113, 7
        %v9115 = vsub.s32 7, %v9114
        %v9116 = vrot.slane %v9083, %v9115
        %v9125 = vmul.f32 %v8937, %v9088
        %v9126 = vmul.f32 %v8938, %v9092
        %v9127 = vmul.f32 %v8939, %v9096
        %v9128 = vmul.f32 %v8940, %v9100
        %v9129 = vmul.f32 %v8941, %v9104
        %v9130 = vmul.f32 %v8942, %v9108
        %v9131 = vmul.f32 %v9074, %v9112
        %v9132 = vmul.f32 %v9050, %v9116
        %v9133 = vmul.f32 %v8944, %v9088
        %v9134 = vmul.f32 %v8945, %v9092
        %v9135 = vmul.f32 %v8946, %v9096
        %v9136 = vmul.f32 %v8947, %v9100
        %v9137 = vmul.f32 %v8948, %v9104
        %v9138 = vmul.f32 %v8949, %v9108
        %v9139 = vmul.f32 %v9075, %v9112
        %v9140 = vmul.f32 %v9052, %v9116
        %v9141 = vmul.f32 %v8951, %v9088
        %v9142 = vmul.f32 %v8952, %v9092
        %v9143 = vmul.f32 %v8953, %v9096
        %v9144 = vmul.f32 %v8954, %v9100
        %v9145 = vmul.f32 %v8955, %v9104
        %v9146 = vmul.f32 %v8956, %v9108
        %v9147 = vmul.f32 %v9076, %v9112
        %v9148 = vmul.f32 %v9054, %v9116
        %v9149 = vmul.f32 %v8958, %v9088
        %v9150 = vmul.f32 %v8959, %v9092
        %v9151 = vmul.f32 %v8960, %v9096
        %v9152 = vmul.f32 %v8961, %v9100
        %v9153 = vmul.f32 %v8962, %v9104
        %v9154 = vmul.f32 %v8963, %v9108
        %v9155 = vmul.f32 %v9077, %v9112
        %v9156 = vmul.f32 %v9056, %v9116
        %v9157 = vmul.f32 %v8965, %v9088
        %v9158 = vmul.f32 %v8966, %v9092
        %v9159 = vmul.f32 %v8967, %v9096
        %v9160 = vmul.f32 %v8968, %v9100
        %v9161 = vmul.f32 %v8969, %v9104
        %v9162 = vmul.f32 %v8970, %v9108
        %v9163 = vmul.f32 %v9078, %v9112
        %v9164 = vmul.f32 %v9058, %v9116
        %v9165 = vmul.f32 %v8972, %v9088
        %v9166 = vmul.f32 %v8973, %v9092
        %v9167 = vmul.f32 %v8974, %v9096
        %v9168 = vmul.f32 %v8975, %v9100
        %v9169 = vmul.f32 %v8976, %v9104
        %v9170 = vmul.f32 %v8977, %v9108
        %v9171 = vmul.f32 %v9079, %v9112
        %v9172 = vmul.f32 %v9060, %v9116
        %v9173 = vmul.f32 %v8979, %v9088
        %v9174 = vmul.f32 %v8980, %v9092
        %v9175 = vmul.f32 %v8981, %v9096
        %v9176 = vmul.f32 %v8982, %v9100
        %v9177 = vmul.f32 %v8983, %v9104
        %v9178 = vmul.f32 %v8984, %v9108
        %v9179 = vmul.f32 %v9080, %v9112
        %v9180 = vmul.f32 %v9062, %v9116
        %v9181 = vmul.f32 %v8986, %v9088
        %v9182 = vmul.f32 %v8987, %v9092
        %v9183 = vmul.f32 %v8988, %v9096
        %v9184 = vmul.f32 %v8989, %v9100
        %v9185 = vmul.f32 %v8990, %v9104
        %v9186 = vmul.f32 %v8991, %v9108
        %v9187 = vmul.f32 %v9081, %v9112
        %v9188 = vmul.f32 %v9064, %v9116
        %v9189 = vadd.f32 %v8187, %v9125
        %v9190 = vadd.f32 %v8188, %v9126
        %v9191 = vadd.f32 %v8189, %v9127
        %v9192 = vadd.f32 %v8190, %v9128
        %v9193 = vadd.f32 %v8191, %v9129
        %v9194 = vadd.f32 %v8192, %v9130
        %v9195 = vadd.f32 %v8193, %v9131
        %v9196 = vadd.f32 %v8194, %v9132
        %v9197 = vadd.f32 %v8195, %v9133
        %v9198 = vadd.f32 %v8196, %v9134
        %v9199 = vadd.f32 %v8197, %v9135
        %v9200 = vadd.f32 %v8198, %v9136
        %v9201 = vadd.f32 %v8199, %v9137
        %v9202 = vadd.f32 %v8200, %v9138
        %v9203 = vadd.f32 %v8201, %v9139
        %v9204 = vadd.f32 %v8202, %v9140
        %v9205 = vadd.f32 %v8203, %v9141
        %v9206 = vadd.f32 %v8204, %v9142
        %v9207 = vadd.f32 %v8205, %v9143
        %v9208 = vadd.f32 %v8206, %v9144
        %v9209 = vadd.f32 %v8207, %v9145
        %v9210 = vadd.f32 %v8208, %v9146
        %v9211 = vadd.f32 %v8209, %v9147
        %v9212 = vadd.f32 %v8210, %v9148
        %v9213 = vadd.f32 %v8211, %v9149
        %v9214 = vadd.f32 %v8212, %v9150
        %v9215 = vadd.f32 %v8213, %v9151
        %v9216 = vadd.f32 %v8214, %v9152
        %v9217 = vadd.f32 %v8215, %v9153
        %v9218 = vadd.f32 %v8216, %v9154
        %v9219 = vadd.f32 %v8217, %v9155
        %v9220 = vadd.f32 %v8218, %v9156
        %v9221 = vadd.f32 %v8219, %v9157
        %v9222 = vadd.f32 %v8220, %v9158
        %v9223 = vadd.f32 %v8221, %v9159
        %v9224 = vadd.f32 %v8222, %v9160
        %v9225 = vadd.f32 %v8223, %v9161
        %v9226 = vadd.f32 %v8224, %v9162
        %v9227 = vadd.f32 %v8225, %v9163
        %v9228 = vadd.f32 %v8226, %v9164
        %v9229 = vadd.f32 %v8227, %v9165
        %v9230 = vadd.f32 %v8228, %v9166
        %v9231 = vadd.f32 %v8229, %v9167
        %v9232 = vadd.f32 %v8230, %v9168
        %v9233 = vadd.f32 %v8231, %v9169
        %v9234 = vadd.f32 %v8232, %v9170
        %v9235 = vadd.f32 %v8233, %v9171
        %v9236 = vadd.f32 %v8234, %v9172
        %v9237 = vadd.f32 %v8235, %v9173
        %v9238 = vadd.f32 %v8236, %v9174
        %v9239 = vadd.f32 %v8237, %v9175
        %v9240 = vadd.f32 %v8238, %v9176
        %v9241 = vadd.f32 %v8239, %v9177
        %v9242 = vadd.f32 %v8240, %v9178
        %v9243 = vadd.f32 %v8241, %v9179
        %v9244 = vadd.f32 %v8242, %v9180
        %v9245 = vadd.f32 %v8243, %v9181
        %v9246 = vadd.f32 %v8244, %v9182
        %v9247 = vadd.f32 %v8245, %v9183
        %v9248 = vadd.f32 %v8246, %v9184
        %v9249 = vadd.f32 %v8247, %v9185
        %v9250 = vadd.f32 %v8248, %v9186
        %v9251 = vadd.f32 %v8249, %v9187
        %v9252 = vadd.f32 %v8250, %v9188
        %s9253 = sld [smem:[#allocation2]]
        %vm9254 = vcmp.ge.f32.partialorder %v9189, 0.0
        %vm9255 = vcmp.ge.f32.partialorder %v9190, 0.0
        %vm9256 = vcmp.ge.f32.partialorder %v9191, 0.0
        %vm9257 = vcmp.ge.f32.partialorder %v9192, 0.0
        %vm9258 = vcmp.ge.f32.partialorder %v9193, 0.0
        %vm9259 = vcmp.ge.f32.partialorder %v9194, 0.0
        %vm9260 = vcmp.ge.f32.partialorder %v9195, 0.0
        %vm9261 = vcmp.ge.f32.partialorder %v9196, 0.0
        %vm9262 = vcmp.ge.f32.partialorder %v9197, 0.0
        %vm9263 = vcmp.ge.f32.partialorder %v9198, 0.0
        %vm9264 = vcmp.ge.f32.partialorder %v9199, 0.0
        %vm9265 = vcmp.ge.f32.partialorder %v9200, 0.0
        %vm9266 = vcmp.ge.f32.partialorder %v9201, 0.0
        %vm9267 = vcmp.ge.f32.partialorder %v9202, 0.0
        %vm9268 = vcmp.ge.f32.partialorder %v9203, 0.0
        %vm9269 = vcmp.ge.f32.partialorder %v9204, 0.0
        %vm9270 = vcmp.ge.f32.partialorder %v9205, 0.0
        %vm9271 = vcmp.ge.f32.partialorder %v9206, 0.0
        %vm9272 = vcmp.ge.f32.partialorder %v9207, 0.0
        %vm9273 = vcmp.ge.f32.partialorder %v9208, 0.0
        %vm9274 = vcmp.ge.f32.partialorder %v9209, 0.0
        %vm9275 = vcmp.ge.f32.partialorder %v9210, 0.0
        %vm9276 = vcmp.ge.f32.partialorder %v9211, 0.0
        %vm9277 = vcmp.ge.f32.partialorder %v9212, 0.0
        %vm9278 = vcmp.ge.f32.partialorder %v9213, 0.0
        %vm9279 = vcmp.ge.f32.partialorder %v9214, 0.0
        %vm9280 = vcmp.ge.f32.partialorder %v9215, 0.0
        %vm9281 = vcmp.ge.f32.partialorder %v9216, 0.0
        %vm9282 = vcmp.ge.f32.partialorder %v9217, 0.0
        %vm9283 = vcmp.ge.f32.partialorder %v9218, 0.0
        %vm9284 = vcmp.ge.f32.partialorder %v9219, 0.0
        %vm9285 = vcmp.ge.f32.partialorder %v9220, 0.0
        %vm9286 = vcmp.ge.f32.partialorder %v9221, 0.0
        %vm9287 = vcmp.ge.f32.partialorder %v9222, 0.0
        %vm9288 = vcmp.ge.f32.partialorder %v9223, 0.0
        %vm9289 = vcmp.ge.f32.partialorder %v9224, 0.0
        %vm9290 = vcmp.ge.f32.partialorder %v9225, 0.0
        %vm9291 = vcmp.ge.f32.partialorder %v9226, 0.0
        %vm9292 = vcmp.ge.f32.partialorder %v9227, 0.0
        %vm9293 = vcmp.ge.f32.partialorder %v9228, 0.0
        %vm9294 = vcmp.ge.f32.partialorder %v9229, 0.0
        %vm9295 = vcmp.ge.f32.partialorder %v9230, 0.0
        %vm9296 = vcmp.ge.f32.partialorder %v9231, 0.0
        %vm9297 = vcmp.ge.f32.partialorder %v9232, 0.0
        %vm9298 = vcmp.ge.f32.partialorder %v9233, 0.0
        %vm9299 = vcmp.ge.f32.partialorder %v9234, 0.0
        %vm9300 = vcmp.ge.f32.partialorder %v9235, 0.0
        %vm9301 = vcmp.ge.f32.partialorder %v9236, 0.0
        %vm9302 = vcmp.ge.f32.partialorder %v9237, 0.0
        %vm9303 = vcmp.ge.f32.partialorder %v9238, 0.0
        %vm9304 = vcmp.ge.f32.partialorder %v9239, 0.0
        %vm9305 = vcmp.ge.f32.partialorder %v9240, 0.0
        %vm9306 = vcmp.ge.f32.partialorder %v9241, 0.0
        %vm9307 = vcmp.ge.f32.partialorder %v9242, 0.0
        %vm9308 = vcmp.ge.f32.partialorder %v9243, 0.0
        %vm9309 = vcmp.ge.f32.partialorder %v9244, 0.0
        %vm9310 = vcmp.ge.f32.partialorder %v9245, 0.0
        %vm9311 = vcmp.ge.f32.partialorder %v9246, 0.0
        %vm9312 = vcmp.ge.f32.partialorder %v9247, 0.0
        %vm9313 = vcmp.ge.f32.partialorder %v9248, 0.0
        %vm9314 = vcmp.ge.f32.partialorder %v9249, 0.0
        %vm9315 = vcmp.ge.f32.partialorder %v9250, 0.0
        %vm9316 = vcmp.ge.f32.partialorder %v9251, 0.0
        %vm9317 = vcmp.ge.f32.partialorder %v9252, 0.0
        %v9318 = vstv %s9253
        %v9319 = vmul.f32 %v9318, %v9189
        %v9320 = vmul.f32 %v9318, %v9190
        %v9321 = vmul.f32 %v9318, %v9191
        %v9322 = vmul.f32 %v9318, %v9192
        %v9323 = vmul.f32 %v9318, %v9193
        %v9324 = vmul.f32 %v9318, %v9194
        %v9325 = vmul.f32 %v9318, %v9195
        %v9326 = vmul.f32 %v9318, %v9196
        %v9327 = vmul.f32 %v9318, %v9197
        %v9328 = vmul.f32 %v9318, %v9198
        %v9329 = vmul.f32 %v9318, %v9199
        %v9330 = vmul.f32 %v9318, %v9200
        %v9331 = vmul.f32 %v9318, %v9201
        %v9332 = vmul.f32 %v9318, %v9202
        %v9333 = vmul.f32 %v9318, %v9203
        %v9334 = vmul.f32 %v9318, %v9204
        %v9335 = vmul.f32 %v9318, %v9205
        %v9336 = vmul.f32 %v9318, %v9206
        %v9337 = vmul.f32 %v9318, %v9207
        %v9338 = vmul.f32 %v9318, %v9208
        %v9339 = vmul.f32 %v9318, %v9209
        %v9340 = vmul.f32 %v9318, %v9210
        %v9341 = vmul.f32 %v9318, %v9211
        %v9342 = vmul.f32 %v9318, %v9212
        %v9343 = vmul.f32 %v9318, %v9213
        %v9344 = vmul.f32 %v9318, %v9214
        %v9345 = vmul.f32 %v9318, %v9215
        %v9346 = vmul.f32 %v9318, %v9216
        %v9347 = vmul.f32 %v9318, %v9217
        %v9348 = vmul.f32 %v9318, %v9218
        %v9349 = vmul.f32 %v9318, %v9219
        %v9350 = vmul.f32 %v9318, %v9220
        %v9351 = vmul.f32 %v9318, %v9221
        %v9352 = vmul.f32 %v9318, %v9222
        %v9353 = vmul.f32 %v9318, %v9223
        %v9354 = vmul.f32 %v9318, %v9224
        %v9355 = vmul.f32 %v9318, %v9225
        %v9356 = vmul.f32 %v9318, %v9226
        %v9357 = vmul.f32 %v9318, %v9227
        %v9358 = vmul.f32 %v9318, %v9228
        %v9359 = vmul.f32 %v9318, %v9229
        %v9360 = vmul.f32 %v9318, %v9230
        %v9361 = vmul.f32 %v9318, %v9231
        %v9362 = vmul.f32 %v9318, %v9232
        %v9363 = vmul.f32 %v9318, %v9233
        %v9364 = vmul.f32 %v9318, %v9234
        %v9365 = vmul.f32 %v9318, %v9235
        %v9366 = vmul.f32 %v9318, %v9236
        %v9367 = vmul.f32 %v9318, %v9237
        %v9368 = vmul.f32 %v9318, %v9238
        %v9369 = vmul.f32 %v9318, %v9239
        %v9370 = vmul.f32 %v9318, %v9240
        %v9371 = vmul.f32 %v9318, %v9241
        %v9372 = vmul.f32 %v9318, %v9242
        %v9373 = vmul.f32 %v9318, %v9243
        %v9374 = vmul.f32 %v9318, %v9244
        %v9375 = vmul.f32 %v9318, %v9245
        %v9376 = vmul.f32 %v9318, %v9246
        %v9377 = vmul.f32 %v9318, %v9247
        %v9378 = vmul.f32 %v9318, %v9248
        %v9379 = vmul.f32 %v9318, %v9249
        %v9380 = vmul.f32 %v9318, %v9250
        %v9381 = vmul.f32 %v9318, %v9251
        %v9382 = vmul.f32 %v9318, %v9252
        %v9383 = vsel %vm9254, %v9189, %v9319
        %v9384 = vsel %vm9255, %v9190, %v9320
        %v9385 = vsel %vm9256, %v9191, %v9321
        %v9386 = vsel %vm9257, %v9192, %v9322
        %v9387 = vsel %vm9258, %v9193, %v9323
        %v9388 = vsel %vm9259, %v9194, %v9324
        %v9389 = vsel %vm9260, %v9195, %v9325
        %v9390 = vsel %vm9261, %v9196, %v9326
        %v9391 = vsel %vm9262, %v9197, %v9327
        %v9392 = vsel %vm9263, %v9198, %v9328
        %v9393 = vsel %vm9264, %v9199, %v9329
        %v9394 = vsel %vm9265, %v9200, %v9330
        %v9395 = vsel %vm9266, %v9201, %v9331
        %v9396 = vsel %vm9267, %v9202, %v9332
        %v9397 = vsel %vm9268, %v9203, %v9333
        %v9398 = vsel %vm9269, %v9204, %v9334
        %v9399 = vsel %vm9270, %v9205, %v9335
        %v9400 = vsel %vm9271, %v9206, %v9336
        %v9401 = vsel %vm9272, %v9207, %v9337
        %v9402 = vsel %vm9273, %v9208, %v9338
        %v9403 = vsel %vm9274, %v9209, %v9339
        %v9404 = vsel %vm9275, %v9210, %v9340
        %v9405 = vsel %vm9276, %v9211, %v9341
        %v9406 = vsel %vm9277, %v9212, %v9342
        %v9407 = vsel %vm9278, %v9213, %v9343
        %v9408 = vsel %vm9279, %v9214, %v9344
        %v9409 = vsel %vm9280, %v9215, %v9345
        %v9410 = vsel %vm9281, %v9216, %v9346
        %v9411 = vsel %vm9282, %v9217, %v9347
        %v9412 = vsel %vm9283, %v9218, %v9348
        %v9413 = vsel %vm9284, %v9219, %v9349
        %v9414 = vsel %vm9285, %v9220, %v9350
        %v9415 = vsel %vm9286, %v9221, %v9351
        %v9416 = vsel %vm9287, %v9222, %v9352
        %v9417 = vsel %vm9288, %v9223, %v9353
        %v9418 = vsel %vm9289, %v9224, %v9354
        %v9419 = vsel %vm9290, %v9225, %v9355
        %v9420 = vsel %vm9291, %v9226, %v9356
        %v9421 = vsel %vm9292, %v9227, %v9357
        %v9422 = vsel %vm9293, %v9228, %v9358
        %v9423 = vsel %vm9294, %v9229, %v9359
        %v9424 = vsel %vm9295, %v9230, %v9360
        %v9425 = vsel %vm9296, %v9231, %v9361
        %v9426 = vsel %vm9297, %v9232, %v9362
        %v9427 = vsel %vm9298, %v9233, %v9363
        %v9428 = vsel %vm9299, %v9234, %v9364
        %v9429 = vsel %vm9300, %v9235, %v9365
        %v9430 = vsel %vm9301, %v9236, %v9366
        %v9431 = vsel %vm9302, %v9237, %v9367
        %v9432 = vsel %vm9303, %v9238, %v9368
        %v9433 = vsel %vm9304, %v9239, %v9369
        %v9434 = vsel %vm9305, %v9240, %v9370
        %v9435 = vsel %vm9306, %v9241, %v9371
        %v9436 = vsel %vm9307, %v9242, %v9372
        %v9437 = vsel %vm9308, %v9243, %v9373
        %v9438 = vsel %vm9309, %v9244, %v9374
        %v9439 = vsel %vm9310, %v9245, %v9375
        %v9440 = vsel %vm9311, %v9246, %v9376
        %v9441 = vsel %vm9312, %v9247, %v9377
        %v9442 = vsel %vm9313, %v9248, %v9378
        %v9443 = vsel %vm9314, %v9249, %v9379
        %v9444 = vsel %vm9315, %v9250, %v9380
        %v9445 = vsel %vm9316, %v9251, %v9381
        %v9446 = vsel %vm9317, %v9252, %v9382
        %v9447 = vld [vmem:[#allocation12] sm:$0xff]
        %v9448 = vld [vmem:[#allocation12 + $0x8] sm:$0xff]
        %v9449 = vld [vmem:[#allocation12 + $0x10] sm:$0xff]
        %v9450 = vld [vmem:[#allocation12 + $0x18] sm:$0xff]
        %v9451 = vld [vmem:[#allocation12 + $0x20] sm:$0xff]
        %v9452 = vld [vmem:[#allocation12 + $0x28] sm:$0xff]
        %v9453 = vld [vmem:[#allocation12 + $0x30] sm:$0xff]
        %v9454 = vld [vmem:[#allocation12 + $0x38] sm:$0xff]
        %vm9455 = vcmask 523264
        %v9457 = vsel %vm9455, %v9447, 0
        %v9460 = vsel %vm9455, %v9448, 0
        %v9463 = vsel %vm9455, %v9449, 0
        %v9466 = vsel %vm9455, %v9450, 0
        %v9469 = vsel %vm9455, %v9451, 0
        %v9472 = vsel %vm9455, %v9452, 0
        %v9475 = vsel %vm9455, %v9453, 0
        %v9478 = vsel %vm9455, %v9454, 0
        %9480 = vmatprep.subr.mxu0 %v9384
        %9481 = vmatpush1.msra.mxu0 %v9383
        %9482 = vmatprep.subr.mxu0 %v9392
        %9483 = vmatpush1.msra.mxu0 %v9391
        %9484 = vmatprep.subr.mxu0 %v9400
        %9485 = vmatpush1.msra.mxu0 %v9399
        %9486 = vmatprep.subr.mxu0 %v9408
        %9487 = vmatpush1.msra.mxu0 %v9407
        %9488 = vmatprep.subr.mxu0 %v9416
        %9489 = vmatpush1.msra.mxu0 %v9415
        %9490 = vmatprep.subr.mxu0 %v9424
        %9491 = vmatpush1.msra.mxu0 %v9423
        %9492 = vmatprep.subr.mxu0 %v9432
        %9493 = vmatpush1.msra.mxu0 %v9431
        %9494 = vmatprep.subr.mxu0 %v9440
        %9495 = vmatpush1.msra.mxu0 %v9439
        %9496 = vmatprep.subr.mxu0 0.0
        %9497 = vmatpush1.msra.mxu0 0.0
        %9498 = vmatprep.subr.mxu0 0.0
        %9499 = vmatpush1.msra.mxu0 0.0
        %9500 = vmatprep.subr.mxu0 0.0
        %9501 = vmatpush1.msra.mxu0 0.0
        %9502 = vmatprep.subr.mxu0 0.0
        %9503 = vmatpush1.msra.mxu0 0.0
        %9504 = vmatprep.subr.mxu0 0.0
        %9505 = vmatpush1.msra.mxu0 0.0
        %9506 = vmatprep.subr.mxu0 0.0
        %9507 = vmatpush1.msra.mxu0 0.0
        %9508 = vmatprep.subr.mxu0 0.0
        %9509 = vmatpush1.msra.mxu0 0.0
        %9510 = vmatprep.subr.mxu0 0.0
        %9511 = vmatpush1.msra.mxu0 0.0
        %9512 = vmatprep.subr.mxu0 0.0
        %9513 = vmatpush1.msra.mxu0 0.0
        %9514 = vmatprep.subr.mxu0 0.0
        %9515 = vmatpush1.msra.mxu0 0.0
        %9516 = vmatprep.subr.mxu0 0.0
        %9517 = vmatpush1.msra.mxu0 0.0
        %9518 = vmatprep.subr.mxu0 0.0
        %9519 = vmatpush1.msra.mxu0 0.0
        %9520 = vmatprep.subr.mxu0 0.0
        %9521 = vmatpush1.msra.mxu0 0.0
        %9522 = vmatprep.subr.mxu0 0.0
        %9523 = vmatpush1.msra.mxu0 0.0
        %9524 = vmatprep.subr.mxu0 0.0
        %9525 = vmatpush1.msra.mxu0 0.0
        %9526 = vmatprep.subr.mxu0 0.0
        %9527 = vmatpush1.msra.mxu0 0.0
        %9528 = vmatprep.subr.mxu0 0.0
        %9529 = vmatpush1.msra.mxu0 0.0
        %9530 = vmatprep.subr.mxu0 0.0
        %9531 = vmatpush1.msra.mxu0 0.0
        %9532 = vmatprep.subr.mxu0 0.0
        %9533 = vmatpush1.msra.mxu0 0.0
        %9534 = vmatprep.subr.mxu0 0.0
        %9535 = vmatpush1.msra.mxu0 0.0
        %9536 = vmatprep.subr.mxu0 0.0
        %9537 = vmatpush1.msra.mxu0 0.0
        %9538 = vmatprep.subr.mxu0 0.0
        %9539 = vmatpush1.msra.mxu0 0.0
        %9540 = vmatprep.subr.mxu0 0.0
        %9541 = vmatpush1.msra.mxu0 0.0
        %9542 = vmatprep.subr.mxu0 0.0
        %9543 = vmatpush1.msra.mxu0 0.0
        %9544 = vmatprep.mubr.f32.mxu0 0.0
        %9545 = vmatmul.mubr.f32.gmra.mrb[0].mxu0 %v9457
        %v9546 = vpop.f32.mrb[0].mxu0
        %v9547 = vadd.f32 0.0, %v9546
        %v9548 = vpop.f32.mrb[0].mxu0
        %v9549 = vadd.f32 0.0, %v9548
        %9550 = vmatprep.mubr.f32.mxu0 0.0
        %9551 = vmatmul.mubr.f32.gmra.mrb[0].mxu0 %v9460
        %v9552 = vpop.f32.mrb[0].mxu0
        %v9553 = vadd.f32 0.0, %v9552
        %v9554 = vpop.f32.mrb[0].mxu0
        %v9555 = vadd.f32 0.0, %v9554
        %9556 = vmatprep.mubr.f32.mxu0 0.0
        %9557 = vmatmul.mubr.f32.gmra.mrb[0].mxu0 %v9463
        %v9558 = vpop.f32.mrb[0].mxu0
        %v9559 = vadd.f32 0.0, %v9558
        %v9560 = vpop.f32.mrb[0].mxu0
        %v9561 = vadd.f32 0.0, %v9560
        %9562 = vmatprep.mubr.f32.mxu0 0.0
        %9563 = vmatmul.mubr.f32.gmra.mrb[0].mxu0 %v9466
        %v9564 = vpop.f32.mrb[0].mxu0
        %v9565 = vadd.f32 0.0, %v9564
        %v9566 = vpop.f32.mrb[0].mxu0
        %v9567 = vadd.f32 0.0, %v9566
        %9568 = vmatprep.mubr.f32.mxu0 0.0
        %9569 = vmatmul.mubr.f32.gmra.mrb[0].mxu0 %v9469
        %v9570 = vpop.f32.mrb[0].mxu0
        %v9571 = vadd.f32 0.0, %v9570
        %v9572 = vpop.f32.mrb[0].mxu0
        %v9573 = vadd.f32 0.0, %v9572
        %9574 = vmatprep.mubr.f32.mxu0 0.0
        %9575 = vmatmul.mubr.f32.gmra.mrb[0].mxu0 %v9472
        %v9576 = vpop.f32.mrb[0].mxu0
        %v9577 = vadd.f32 0.0, %v9576
        %v9578 = vpop.f32.mrb[0].mxu0
        %v9579 = vadd.f32 0.0, %v9578
        %9580 = vmatprep.mubr.f32.mxu0 0.0
        %9581 = vmatmul.mubr.f32.gmra.mrb[0].mxu0 %v9475
        %v9582 = vpop.f32.mrb[0].mxu0
        %v9583 = vadd.f32 0.0, %v9582
        %v9584 = vpop.f32.mrb[0].mxu0
        %v9585 = vadd.f32 0.0, %v9584
        %9586 = vmatprep.mubr.f32.mxu0 0.0
        %9587 = vmatmul.mubr.f32.gmra.mrb[0].mxu0 %v9478
        %v9588 = vpop.f32.mrb[0].mxu0
        %v9589 = vadd.f32 0.0, %v9588
        %v9590 = vpop.f32.mrb[0].mxu0
        %v9591 = vadd.f32 0.0, %v9590
        %9592 = vdwg.mxu0
        %9593 = vmatprep.subr.mxu0 %v9386
        %9594 = vmatpush1.msra.mxu0 %v9385
        %9595 = vmatprep.subr.mxu0 %v9394
        %9596 = vmatpush1.msra.mxu0 %v9393
        %9597 = vmatprep.subr.mxu0 %v9402
        %9598 = vmatpush1.msra.mxu0 %v9401
        %9599 = vmatprep.subr.mxu0 %v9410
        %9600 = vmatpush1.msra.mxu0 %v9409
        %9601 = vmatprep.subr.mxu0 %v9418
        %9602 = vmatpush1.msra.mxu0 %v9417
        %9603 = vmatprep.subr.mxu0 %v9426
        %9604 = vmatpush1.msra.mxu0 %v9425
        %9605 = vmatprep.subr.mxu0 %v9434
        %9606 = vmatpush1.msra.mxu0 %v9433
        %9607 = vmatprep.subr.mxu0 %v9442
        %9608 = vmatpush1.msra.mxu0 %v9441
        %9609 = vmatprep.subr.mxu0 0.0
        %9610 = vmatpush1.msra.mxu0 0.0
        %9611 = vmatprep.subr.mxu0 0.0
        %9612 = vmatpush1.msra.mxu0 0.0
        %9613 = vmatprep.subr.mxu0 0.0
        %9614 = vmatpush1.msra.mxu0 0.0
        %9615 = vmatprep.subr.mxu0 0.0
        %9616 = vmatpush1.msra.mxu0 0.0
        %9617 = vmatprep.subr.mxu0 0.0
        %9618 = vmatpush1.msra.mxu0 0.0
        %9619 = vmatprep.subr.mxu0 0.0
        %9620 = vmatpush1.msra.mxu0 0.0
        %9621 = vmatprep.subr.mxu0 0.0
        %9622 = vmatpush1.msra.mxu0 0.0
        %9623 = vmatprep.subr.mxu0 0.0
        %9624 = vmatpush1.msra.mxu0 0.0
        %9625 = vmatprep.subr.mxu0 0.0
        %9626 = vmatpush1.msra.mxu0 0.0
        %9627 = vmatprep.subr.mxu0 0.0
        %9628 = vmatpush1.msra.mxu0 0.0
        %9629 = vmatprep.subr.mxu0 0.0
        %9630 = vmatpush1.msra.mxu0 0.0
        %9631 = vmatprep.subr.mxu0 0.0
        %9632 = vmatpush1.msra.mxu0 0.0
        %9633 = vmatprep.subr.mxu0 0.0
        %9634 = vmatpush1.msra.mxu0 0.0
        %9635 = vmatprep.subr.mxu0 0.0
        %9636 = vmatpush1.msra.mxu0 0.0
        %9637 = vmatprep.subr.mxu0 0.0
        %9638 = vmatpush1.msra.mxu0 0.0
        %9639 = vmatprep.subr.mxu0 0.0
        %9640 = vmatpush1.msra.mxu0 0.0
        %9641 = vmatprep.subr.mxu0 0.0
        %9642 = vmatpush1.msra.mxu0 0.0
        %9643 = vmatprep.subr.mxu0 0.0
        %9644 = vmatpush1.msra.mxu0 0.0
        %9645 = vmatprep.subr.mxu0 0.0
        %9646 = vmatpush1.msra.mxu0 0.0
        %9647 = vmatprep.subr.mxu0 0.0
        %9648 = vmatpush1.msra.mxu0 0.0
        %9649 = vmatprep.subr.mxu0 0.0
        %9650 = vmatpush1.msra.mxu0 0.0
        %9651 = vmatprep.subr.mxu0 0.0
        %9652 = vmatpush1.msra.mxu0 0.0
        %9653 = vmatprep.subr.mxu0 0.0
        %9654 = vmatpush1.msra.mxu0 0.0
        %9655 = vmatprep.subr.mxu0 0.0
        %9656 = vmatpush1.msra.mxu0 0.0
        %9657 = vmatprep.mubr.f32.mxu0 0.0
        %9658 = vmatmul.mubr.f32.gmra.mrb[0].mxu0 %v9457
        %v9659 = vpop.f32.mrb[0].mxu0
        %v9660 = vadd.f32 0.0, %v9659
        %v9661 = vpop.f32.mrb[0].mxu0
        %v9662 = vadd.f32 0.0, %v9661
        %9663 = vmatprep.mubr.f32.mxu0 0.0
        %9664 = vmatmul.mubr.f32.gmra.mrb[0].mxu0 %v9460
        %v9665 = vpop.f32.mrb[0].mxu0
        %v9666 = vadd.f32 0.0, %v9665
        %v9667 = vpop.f32.mrb[0].mxu0
        %v9668 = vadd.f32 0.0, %v9667
        %9669 = vmatprep.mubr.f32.mxu0 0.0
        %9670 = vmatmul.mubr.f32.gmra.mrb[0].mxu0 %v9463
        %v9671 = vpop.f32.mrb[0].mxu0
        %v9672 = vadd.f32 0.0, %v9671
        %v9673 = vpop.f32.mrb[0].mxu0
        %v9674 = vadd.f32 0.0, %v9673
        %9675 = vmatprep.mubr.f32.mxu0 0.0
        %9676 = vmatmul.mubr.f32.gmra.mrb[0].mxu0 %v9466
        %v9677 = vpop.f32.mrb[0].mxu0
        %v9678 = vadd.f32 0.0, %v9677
        %v9679 = vpop.f32.mrb[0].mxu0
        %v9680 = vadd.f32 0.0, %v9679
        %9681 = vmatprep.mubr.f32.mxu0 0.0
        %9682 = vmatmul.mubr.f32.gmra.mrb[0].mxu0 %v9469
        %v9683 = vpop.f32.mrb[0].mxu0
        %v9684 = vadd.f32 0.0, %v9683
        %v9685 = vpop.f32.mrb[0].mxu0
        %v9686 = vadd.f32 0.0, %v9685
        %9687 = vmatprep.mubr.f32.mxu0 0.0
        %9688 = vmatmul.mubr.f32.gmra.mrb[0].mxu0 %v9472
        %v9689 = vpop.f32.mrb[0].mxu0
        %v9690 = vadd.f32 0.0, %v9689
        %v9691 = vpop.f32.mrb[0].mxu0
        %v9692 = vadd.f32 0.0, %v9691
        %9693 = vmatprep.mubr.f32.mxu0 0.0
        %9694 = vmatmul.mubr.f32.gmra.mrb[0].mxu0 %v9475
        %v9695 = vpop.f32.mrb[0].mxu0
        %v9696 = vadd.f32 0.0, %v9695
        %v9697 = vpop.f32.mrb[0].mxu0
        %v9698 = vadd.f32 0.0, %v9697
        %9699 = vmatprep.mubr.f32.mxu0 0.0
        %9700 = vmatmul.mubr.f32.gmra.mrb[0].mxu0 %v9478
        %v9701 = vpop.f32.mrb[0].mxu0
        %v9702 = vadd.f32 0.0, %v9701
        %v9703 = vpop.f32.mrb[0].mxu0
        %v9704 = vadd.f32 0.0, %v9703
        %9705 = vdwg.mxu0
        %9706 = vmatprep.subr.mxu0 %v9388
        %9707 = vmatpush1.msra.mxu0 %v9387
        %9708 = vmatprep.subr.mxu0 %v9396
        %9709 = vmatpush1.msra.mxu0 %v9395
        %9710 = vmatprep.subr.mxu0 %v9404
        %9711 = vmatpush1.msra.mxu0 %v9403
        %9712 = vmatprep.subr.mxu0 %v9412
        %9713 = vmatpush1.msra.mxu0 %v9411
        %9714 = vmatprep.subr.mxu0 %v9420
        %9715 = vmatpush1.msra.mxu0 %v9419
        %9716 = vmatprep.subr.mxu0 %v9428
        %9717 = vmatpush1.msra.mxu0 %v9427
        %9718 = vmatprep.subr.mxu0 %v9436
        %9719 = vmatpush1.msra.mxu0 %v9435
        %9720 = vmatprep.subr.mxu0 %v9444
        %9721 = vmatpush1.msra.mxu0 %v9443
        %9722 = vmatprep.subr.mxu0 0.0
        %9723 = vmatpush1.msra.mxu0 0.0
        %9724 = vmatprep.subr.mxu0 0.0
        %9725 = vmatpush1.msra.mxu0 0.0
        %9726 = vmatprep.subr.mxu0 0.0
        %9727 = vmatpush1.msra.mxu0 0.0
        %9728 = vmatprep.subr.mxu0 0.0
        %9729 = vmatpush1.msra.mxu0 0.0
        %9730 = vmatprep.subr.mxu0 0.0
        %9731 = vmatpush1.msra.mxu0 0.0
        %9732 = vmatprep.subr.mxu0 0.0
        %9733 = vmatpush1.msra.mxu0 0.0
        %9734 = vmatprep.subr.mxu0 0.0
        %9735 = vmatpush1.msra.mxu0 0.0
        %9736 = vmatprep.subr.mxu0 0.0
        %9737 = vmatpush1.msra.mxu0 0.0
        %9738 = vmatprep.subr.mxu0 0.0
        %9739 = vmatpush1.msra.mxu0 0.0
        %9740 = vmatprep.subr.mxu0 0.0
        %9741 = vmatpush1.msra.mxu0 0.0
        %9742 = vmatprep.subr.mxu0 0.0
        %9743 = vmatpush1.msra.mxu0 0.0
        %9744 = vmatprep.subr.mxu0 0.0
        %9745 = vmatpush1.msra.mxu0 0.0
        %9746 = vmatprep.subr.mxu0 0.0
        %9747 = vmatpush1.msra.mxu0 0.0
        %9748 = vmatprep.subr.mxu0 0.0
        %9749 = vmatpush1.msra.mxu0 0.0
        %9750 = vmatprep.subr.mxu0 0.0
        %9751 = vmatpush1.msra.mxu0 0.0
        %9752 = vmatprep.subr.mxu0 0.0
        %9753 = vmatpush1.msra.mxu0 0.0
        %9754 = vmatprep.subr.mxu0 0.0
        %9755 = vmatpush1.msra.mxu0 0.0
        %9756 = vmatprep.subr.mxu0 0.0
        %9757 = vmatpush1.msra.mxu0 0.0
        %9758 = vmatprep.subr.mxu0 0.0
        %9759 = vmatpush1.msra.mxu0 0.0
        %9760 = vmatprep.subr.mxu0 0.0
        %9761 = vmatpush1.msra.mxu0 0.0
        %9762 = vmatprep.subr.mxu0 0.0
        %9763 = vmatpush1.msra.mxu0 0.0
        %9764 = vmatprep.subr.mxu0 0.0
        %9765 = vmatpush1.msra.mxu0 0.0
        %9766 = vmatprep.subr.mxu0 0.0
        %9767 = vmatpush1.msra.mxu0 0.0
        %9768 = vmatprep.subr.mxu0 0.0
        %9769 = vmatpush1.msra.mxu0 0.0
        %9770 = vmatprep.mubr.f32.mxu0 0.0
        %9771 = vmatmul.mubr.f32.gmra.mrb[0].mxu0 %v9457
        %v9772 = vpop.f32.mrb[0].mxu0
        %v9773 = vadd.f32 0.0, %v9772
        %v9774 = vpop.f32.mrb[0].mxu0
        %v9775 = vadd.f32 0.0, %v9774
        %9776 = vmatprep.mubr.f32.mxu0 0.0
        %9777 = vmatmul.mubr.f32.gmra.mrb[0].mxu0 %v9460
        %v9778 = vpop.f32.mrb[0].mxu0
        %v9779 = vadd.f32 0.0, %v9778
        %v9780 = vpop.f32.mrb[0].mxu0
        %v9781 = vadd.f32 0.0, %v9780
        %9782 = vmatprep.mubr.f32.mxu0 0.0
        %9783 = vmatmul.mubr.f32.gmra.mrb[0].mxu0 %v9463
        %v9784 = vpop.f32.mrb[0].mxu0
        %v9785 = vadd.f32 0.0, %v9784
        %v9786 = vpop.f32.mrb[0].mxu0
        %v9787 = vadd.f32 0.0, %v9786
        %9788 = vmatprep.mubr.f32.mxu0 0.0
        %9789 = vmatmul.mubr.f32.gmra.mrb[0].mxu0 %v9466
        %v9790 = vpop.f32.mrb[0].mxu0
        %v9791 = vadd.f32 0.0, %v9790
        %v9792 = vpop.f32.mrb[0].mxu0
        %v9793 = vadd.f32 0.0, %v9792
        %9794 = vmatprep.mubr.f32.mxu0 0.0
        %9795 = vmatmul.mubr.f32.gmra.mrb[0].mxu0 %v9469
        %v9796 = vpop.f32.mrb[0].mxu0
        %v9797 = vadd.f32 0.0, %v9796
        %v9798 = vpop.f32.mrb[0].mxu0
        %v9799 = vadd.f32 0.0, %v9798
        %9800 = vmatprep.mubr.f32.mxu0 0.0
        %9801 = vmatmul.mubr.f32.gmra.mrb[0].mxu0 %v9472
        %v9802 = vpop.f32.mrb[0].mxu0
        %v9803 = vadd.f32 0.0, %v9802
        %v9804 = vpop.f32.mrb[0].mxu0
        %v9805 = vadd.f32 0.0, %v9804
        %9806 = vmatprep.mubr.f32.mxu0 0.0
        %9807 = vmatmul.mubr.f32.gmra.mrb[0].mxu0 %v9475
        %v9808 = vpop.f32.mrb[0].mxu0
        %v9809 = vadd.f32 0.0, %v9808
        %v9810 = vpop.f32.mrb[0].mxu0
        %v9811 = vadd.f32 0.0, %v9810
        %9812 = vmatprep.mubr.f32.mxu0 0.0
        %9813 = vmatmul.mubr.f32.gmra.mrb[0].mxu0 %v9478
        %v9814 = vpop.f32.mrb[0].mxu0
        %v9815 = vadd.f32 0.0, %v9814
        %v9816 = vpop.f32.mrb[0].mxu0
        %v9817 = vadd.f32 0.0, %v9816
        %9818 = vdwg.mxu0
        %9819 = vmatprep.subr.mxu0 %v9390
        %9820 = vmatpush1.msra.mxu0 %v9389
        %9821 = vmatprep.subr.mxu0 %v9398
        %9822 = vmatpush1.msra.mxu0 %v9397
        %9823 = vmatprep.subr.mxu0 %v9406
        %9824 = vmatpush1.msra.mxu0 %v9405
        %9825 = vmatprep.subr.mxu0 %v9414
        %9826 = vmatpush1.msra.mxu0 %v9413
        %9827 = vmatprep.subr.mxu0 %v9422
        %9828 = vmatpush1.msra.mxu0 %v9421
        %9829 = vmatprep.subr.mxu0 %v9430
        %9830 = vmatpush1.msra.mxu0 %v9429
        %9831 = vmatprep.subr.mxu0 %v9438
        %9832 = vmatpush1.msra.mxu0 %v9437
        %9833 = vmatprep.subr.mxu0 %v9446
        %9834 = vmatpush1.msra.mxu0 %v9445
        %9835 = vmatprep.subr.mxu0 0.0
        %9836 = vmatpush1.msra.mxu0 0.0
        %9837 = vmatprep.subr.mxu0 0.0
        %9838 = vmatpush1.msra.mxu0 0.0
        %9839 = vmatprep.subr.mxu0 0.0
        %9840 = vmatpush1.msra.mxu0 0.0
        %9841 = vmatprep.subr.mxu0 0.0
        %9842 = vmatpush1.msra.mxu0 0.0
        %9843 = vmatprep.subr.mxu0 0.0
        %9844 = vmatpush1.msra.mxu0 0.0
        %9845 = vmatprep.subr.mxu0 0.0
        %9846 = vmatpush1.msra.mxu0 0.0
        %9847 = vmatprep.subr.mxu0 0.0
        %9848 = vmatpush1.msra.mxu0 0.0
        %9849 = vmatprep.subr.mxu0 0.0
        %9850 = vmatpush1.msra.mxu0 0.0
        %9851 = vmatprep.subr.mxu0 0.0
        %9852 = vmatpush1.msra.mxu0 0.0
        %9853 = vmatprep.subr.mxu0 0.0
        %9854 = vmatpush1.msra.mxu0 0.0
        %9855 = vmatprep.subr.mxu0 0.0
        %9856 = vmatpush1.msra.mxu0 0.0
        %9857 = vmatprep.subr.mxu0 0.0
        %9858 = vmatpush1.msra.mxu0 0.0
        %9859 = vmatprep.subr.mxu0 0.0
        %9860 = vmatpush1.msra.mxu0 0.0
        %9861 = vmatprep.subr.mxu0 0.0
        %9862 = vmatpush1.msra.mxu0 0.0
        %9863 = vmatprep.subr.mxu0 0.0
        %9864 = vmatpush1.msra.mxu0 0.0
        %9865 = vmatprep.subr.mxu0 0.0
        %9866 = vmatpush1.msra.mxu0 0.0
        %9867 = vmatprep.subr.mxu0 0.0
        %9868 = vmatpush1.msra.mxu0 0.0
        %9869 = vmatprep.subr.mxu0 0.0
        %9870 = vmatpush1.msra.mxu0 0.0
        %9871 = vmatprep.subr.mxu0 0.0
        %9872 = vmatpush1.msra.mxu0 0.0
        %9873 = vmatprep.subr.mxu0 0.0
        %9874 = vmatpush1.msra.mxu0 0.0
        %9875 = vmatprep.subr.mxu0 0.0
        %9876 = vmatpush1.msra.mxu0 0.0
        %9877 = vmatprep.subr.mxu0 0.0
        %9878 = vmatpush1.msra.mxu0 0.0
        %9879 = vmatprep.subr.mxu0 0.0
        %9880 = vmatpush1.msra.mxu0 0.0
        %9881 = vmatprep.subr.mxu0 0.0
        %9882 = vmatpush1.msra.mxu0 0.0
        %9883 = vmatprep.mubr.f32.mxu0 0.0
        %9884 = vmatmul.mubr.f32.gmra.mrb[0].mxu0 %v9457
        %v9885 = vpop.f32.mrb[0].mxu0
        %v9886 = vadd.f32 0.0, %v9885
        %v9887 = vpop.f32.mrb[0].mxu0
        %v9888 = vadd.f32 0.0, %v9887
        %9889 = vmatprep.mubr.f32.mxu0 0.0
        %9890 = vmatmul.mubr.f32.gmra.mrb[0].mxu0 %v9460
        %v9891 = vpop.f32.mrb[0].mxu0
        %v9892 = vadd.f32 0.0, %v9891
        %v9893 = vpop.f32.mrb[0].mxu0
        %v9894 = vadd.f32 0.0, %v9893
        %9895 = vmatprep.mubr.f32.mxu0 0.0
        %9896 = vmatmul.mubr.f32.gmra.mrb[0].mxu0 %v9463
        %v9897 = vpop.f32.mrb[0].mxu0
        %v9898 = vadd.f32 0.0, %v9897
        %v9899 = vpop.f32.mrb[0].mxu0
        %v9900 = vadd.f32 0.0, %v9899
        %9901 = vmatprep.mubr.f32.mxu0 0.0
        %9902 = vmatmul.mubr.f32.gmra.mrb[0].mxu0 %v9466
        %v9903 = vpop.f32.mrb[0].mxu0
        %v9904 = vadd.f32 0.0, %v9903
        %v9905 = vpop.f32.mrb[0].mxu0
        %v9906 = vadd.f32 0.0, %v9905
        %9907 = vmatprep.mubr.f32.mxu0 0.0
        %9908 = vmatmul.mubr.f32.gmra.mrb[0].mxu0 %v9469
        %v9909 = vpop.f32.mrb[0].mxu0
        %v9910 = vadd.f32 0.0, %v9909
        %v9911 = vpop.f32.mrb[0].mxu0
        %v9912 = vadd.f32 0.0, %v9911
        %9913 = vmatprep.mubr.f32.mxu0 0.0
        %9914 = vmatmul.mubr.f32.gmra.mrb[0].mxu0 %v9472
        %v9915 = vpop.f32.mrb[0].mxu0
        %v9916 = vadd.f32 0.0, %v9915
        %v9917 = vpop.f32.mrb[0].mxu0
        %v9918 = vadd.f32 0.0, %v9917
        %9919 = vmatprep.mubr.f32.mxu0 0.0
        %9920 = vmatmul.mubr.f32.gmra.mrb[0].mxu0 %v9475
        %v9921 = vpop.f32.mrb[0].mxu0
        %v9922 = vadd.f32 0.0, %v9921
        %v9923 = vpop.f32.mrb[0].mxu0
        %v9924 = vadd.f32 0.0, %v9923
        %9925 = vmatprep.mubr.f32.mxu0 0.0
        %9926 = vmatmul.mubr.f32.gmra.mrb[0].mxu0 %v9478
        %v9927 = vpop.f32.mrb[0].mxu0
        %v9928 = vadd.f32 0.0, %v9927
        %v9929 = vpop.f32.mrb[0].mxu0
        %v9930 = vadd.f32 0.0, %v9929
        %9931 = vdwg.mxu0
        %9932 = vst [vmem:[%s497] sm:$0xff] %v9547
        %9933 = vst [vmem:[%s497 + $0x8] sm:$0xff] %v9549
        %9934 = vst [vmem:[%s497 + $0x10] sm:$0xff] %v9660
        %9935 = vst [vmem:[%s497 + $0x18] sm:$0xff] %v9662
        %9936 = vst [vmem:[%s497 + $0x20] sm:$0xff] %v9773
        %9937 = vst [vmem:[%s497 + $0x28] sm:$0xff] %v9775
        %9938 = vst [vmem:[%s497 + $0x30] sm:$0xff] %v9886
        %vm9939 = vcmask 31744
        %9940 = vst.msk [vmem:[%s497 + $0x38] sm:$0xff] %vm9939, %v9888
        %9941 = vst [vmem:[%s497 + $0x40] sm:$0xff] %v9553
        %9942 = vst [vmem:[%s497 + $0x48] sm:$0xff] %v9555
        %9943 = vst [vmem:[%s497 + $0x50] sm:$0xff] %v9666
        %9944 = vst [vmem:[%s497 + $0x58] sm:$0xff] %v9668
        %9945 = vst [vmem:[%s497 + $0x60] sm:$0xff] %v9779
        %9946 = vst [vmem:[%s497 + $0x68] sm:$0xff] %v9781
        %9947 = vst [vmem:[%s497 + $0x70] sm:$0xff] %v9892
        %9948 = vst.msk [vmem:[%s497 + $0x78] sm:$0xff] %vm9939, %v9894
        %9949 = vst [vmem:[%s497 + $0x80] sm:$0xff] %v9559
        %9950 = vst [vmem:[%s497 + $0x88] sm:$0xff] %v9561
        %9951 = vst [vmem:[%s497 + $0x90] sm:$0xff] %v9672
        %9952 = vst [vmem:[%s497 + $0x98] sm:$0xff] %v9674
        %9953 = vst [vmem:[%s497 + $0xa0] sm:$0xff] %v9785
        %9954 = vst [vmem:[%s497 + $0xa8] sm:$0xff] %v9787
        %9955 = vst [vmem:[%s497 + $0xb0] sm:$0xff] %v9898
        %9956 = vst.msk [vmem:[%s497 + $0xb8] sm:$0xff] %vm9939, %v9900
        %9957 = vst [vmem:[%s497 + $0xc0] sm:$0xff] %v9565
        %9958 = vst [vmem:[%s497 + $0xc8] sm:$0xff] %v9567
        %9959 = vst [vmem:[%s497 + $0xd0] sm:$0xff] %v9678
        %9960 = vst [vmem:[%s497 + $0xd8] sm:$0xff] %v9680
        %9961 = vst [vmem:[%s497 + $0xe0] sm:$0xff] %v9791
        %9962 = vst [vmem:[%s497 + $0xe8] sm:$0xff] %v9793
        %9963 = vst [vmem:[%s497 + $0xf0] sm:$0xff] %v9904
        %9964 = vst.msk [vmem:[%s497 + $0xf8] sm:$0xff] %vm9939, %v9906
        %9965 = vst [vmem:[%s497 + $0x100] sm:$0xff] %v9571
        %9966 = vst [vmem:[%s497 + $0x108] sm:$0xff] %v9573
        %9967 = vst [vmem:[%s497 + $0x110] sm:$0xff] %v9684
        %9968 = vst [vmem:[%s497 + $0x118] sm:$0xff] %v9686
        %9969 = vst [vmem:[%s497 + $0x120] sm:$0xff] %v9797
        %9970 = vst [vmem:[%s497 + $0x128] sm:$0xff] %v9799
        %9971 = vst [vmem:[%s497 + $0x130] sm:$0xff] %v9910
        %9972 = vst.msk [vmem:[%s497 + $0x138] sm:$0xff] %vm9939, %v9912
        %9973 = vst [vmem:[%s497 + $0x140] sm:$0xff] %v9577
        %9974 = vst [vmem:[%s497 + $0x148] sm:$0xff] %v9579
        %9975 = vst [vmem:[%s497 + $0x150] sm:$0xff] %v9690
        %9976 = vst [vmem:[%s497 + $0x158] sm:$0xff] %v9692
        %9977 = vst [vmem:[%s497 + $0x160] sm:$0xff] %v9803
        %9978 = vst [vmem:[%s497 + $0x168] sm:$0xff] %v9805
        %9979 = vst [vmem:[%s497 + $0x170] sm:$0xff] %v9916
        %9980 = vst.msk [vmem:[%s497 + $0x178] sm:$0xff] %vm9939, %v9918
        %9981 = vst [vmem:[%s497 + $0x180] sm:$0xff] %v9583
        %9982 = vst [vmem:[%s497 + $0x188] sm:$0xff] %v9585
        %9983 = vst [vmem:[%s497 + $0x190] sm:$0xff] %v9696
        %9984 = vst [vmem:[%s497 + $0x198] sm:$0xff] %v9698
        %9985 = vst [vmem:[%s497 + $0x1a0] sm:$0xff] %v9809
        %9986 = vst [vmem:[%s497 + $0x1a8] sm:$0xff] %v9811
        %9987 = vst [vmem:[%s497 + $0x1b0] sm:$0xff] %v9922
        %9988 = vst.msk [vmem:[%s497 + $0x1b8] sm:$0xff] %vm9939, %v9924
        %9989 = vst [vmem:[%s497 + $0x1c0] sm:$0xff] %v9589
        %9990 = vst [vmem:[%s497 + $0x1c8] sm:$0xff] %v9591
        %9991 = vst [vmem:[%s497 + $0x1d0] sm:$0xff] %v9702
        %9992 = vst [vmem:[%s497 + $0x1d8] sm:$0xff] %v9704
        %9993 = vst [vmem:[%s497 + $0x1e0] sm:$0xff] %v9815
        %9994 = vst [vmem:[%s497 + $0x1e8] sm:$0xff] %v9817
        %9995 = vst [vmem:[%s497 + $0x1f0] sm:$0xff] %v9928
        %9996 = vst.msk [vmem:[%s497 + $0x1f8] sm:$0xff] %vm9939, %v9930
        %s9997 = sand.u32 %s251, 1
        %s9998 = scalar_lea.sflag [#allocation5], %s9997
        %s9999 = sand.u32 %s251, 1
        %s10000 = smul.addr %s9999, 512
        %s10001 = scalar_lea.vmem [#allocation14], %s10000
        // Predicated region
        $region81: #{tpu_custom_call.1} parent=55 // pred_check
          %p10002 = pneg %p261
        $region82: #{tpu_custom_call.1} parent=55 // pred_check_branch
          %10004 = sbr.rel (%p10002) target = $region84
        $region83: #{tpu_custom_call.1} parent=55 // pred_region
          %s10006 = ssub.s32 8192, 8192
          %10007 = vsyncadd %s9998, %s10006
          %s10008 = smul.addr %s34, 64
          %s10009 = smul.addr %s10008, 128
          %s10010 = scalar_lea.hbm %s9, %s10009
          %s10011 = sshll.u32 %s10001, 4
          %s10012 = int_to_ptr.vmem [resolvable:$true] %s10011
          %10017 = dma.vmem_to_hbm [thread:$0]  %s10012, 8192, %s10010, %s9998, 1024, 1024, 64
        $region84: #{tpu_custom_call.1} parent=55 // pred_fallthru
          _
      $region56: #{tpu_custom_call.1} parent=5 // pred_fallthru
        _
      %p10018 = scmp.le.s32.totalorder 2, %s29
      // Predicated region
      $region85: #{tpu_custom_call.1} parent=5 // pred_check
        %p10019 = pneg %p10018
      $region86: #{tpu_custom_call.1} parent=5 // pred_check_branch
        %10021 = sbr.rel (%p10019) target = $region88
      $region87: #{tpu_custom_call.1} parent=5 // pred_region
        %s10022 = ssub.s32 %s29, 2
        // Predicated region
        $region89: #{tpu_custom_call.1} parent=87 // pred_check
          %p10023 = pneg %p267
        $region90: #{tpu_custom_call.1} parent=87 // pred_check_branch
          %10025 = sbr.rel (%p10023) target = $region92
        $region91: #{tpu_custom_call.1} parent=87 // pred_region
          %s10026 = sand.u32 %s252, 1
          %s10027 = scalar_lea.sflag [#allocation5], %s10026
          %s10028 = sand.u32 %s252, 1
          %s10029 = smul.addr %s10028, 512
          %s10030 = scalar_lea.vmem [#allocation14], %s10029
          %10031 = dma.done %s10027, 8192
        $region92: #{tpu_custom_call.1} parent=87 // pred_fallthru
          _
      $region88: #{tpu_custom_call.1} parent=5 // pred_fallthru
        _
    $region6: #{tpu_custom_call.1} parent=1 // loop_footer
      %s33 = sadd.s32 1, %s29
    $region7: #{tpu_custom_call.1} parent=1 // loop_footer_branch
      %28 = sbr.rel target = $region3
    $region8: #{tpu_custom_call.1} parent=1 // loop_exit
      _
    %10032 = vsyncpa [#allocation4], 1
    %s10033 = scalar_lea.sflag [#allocation4], 1
    %10034 = vsyncpa %s10033, 1
    %10035 = vsyncpa [#allocation7], 1
    %s10036 = scalar_lea.sflag [#allocation7], 1
    %10037 = vsyncpa %s10036, 1
    %10038 = vsyncpa [#allocation10], 1
    %s10039 = scalar_lea.sflag [#allocation10], 1
    %10040 = vsyncpa %s10039, 1
    %10041 = vsyncpa [#allocation13], 1
    %10042 = vsyncpa [#allocation5], 1
    %s10043 = scalar_lea.sflag [#allocation5], 1
    %10044 = vsyncpa %s10043, 1

</llo_original>
